<compile_context>
chip_gen: v7x
topology: tpu7x:2x2x1
jax: 0.10.0
libtpu: 0.0.40
codegen_flags: <defaults>
</compile_context>

<pallas_src>
import jax
import jax.numpy as jnp
from jax.experimental import pallas as pl
from jax.experimental.pallas import tpu as pltpu

_EPS = 1e-5        # nn.InstanceNorm2d default eps
_SLOPE = 0.01      # nn.LeakyReLU default negative_slope
_LANE = 128
_CHUNK = 256       # in-kernel spatial tile (multiple of 128)


def _round_up(x, m):
    return (x + m - 1) // m * m


def _geom(H, W, chunk=_CHUNK):
    """Padded flat-spatial geometry: [P zeros | S pixels (tail to Sup) | P zeros]."""
    S = H * W
    P = max(_LANE, _round_up(W + 1, _LANE))     # zero margin >= W+1, lane aligned
    Sup = _round_up(S, chunk)
    Spad = P + Sup + P
    return S, P, Sup, Spad


def _make_masks(H, W, chunk=_CHUNK):
    """(3, Sup) f32 masks: [can-shift-left (dx=-1), can-shift-right (dx=+1), valid pixel]."""
    S, _, Sup, _ = _geom(H, W, chunk)
    pos = jnp.arange(Sup, dtype=jnp.int32)
    col = pos % W
    ml = (col > 0).astype(jnp.float32)
    mr = (col < W - 1).astype(jnp.float32)
    valid = (pos < S).astype(jnp.float32)
    return jnp.stack([ml, mr, valid], axis=0)


def _to_taps(w):
    """Torch conv weight (Cout, Cin, 3, 3) -> (9, Cout, Cin) per-tap matrices."""
    co, ci, kh, kw = w.shape
    return jnp.transpose(w, (2, 3, 0, 1)).reshape(kh * kw, co, ci)


def _build_conv3x3(N, Cin, Cout, H, W, *, instance_norm, leaky_relu, residual,
                   chunk=_CHUNK):
    """Fused 3x3 conv (+bias) [-> InstanceNorm] [+ residual] [-> LeakyReLU].

    Activations in/out: (N, C, Spad), padded flat spatial axis on lanes.
    """
    S, P, Sup, Spad = _geom(H, W, chunk)
    n_chunks = Sup // chunk
    taps = [(dy, dx) for dy in (-1, 0, 1) for dx in (-1, 0, 1)]

    def body(x_ref, w_ref, b_ref, m_ref, r_ref, o_ref):
        bias = b_ref[...]                                     # (Cout, 1)

        # Keep the output's zero margins clean (next layer's shifted reads
        # depend on them).
        zpad = jnp.zeros((Cout, P), dtype=o_ref.dtype)
        o_ref[0, :, 0:P] = zpad
        o_ref[0, :, P + Sup:Spad] = zpad

        ch_sum = jnp.zeros((Cout, 1), jnp.float32)
        ch_sq = jnp.zeros((Cout, 1), jnp.float32)

        # ---- pass 1: convolution + bias, aligned 256-lane spatial chunks ----
        for c in range(n_chunks):
            s0 = c * chunk
            ml = m_ref[0:1, s0:s0 + chunk]                    # (1, chunk)
            mr = m_ref[1:2, s0:s0 + chunk]
            acc = jnp.zeros((Cout, chunk), jnp.float32) + bias    # bias folded in
            for t, (dy, dx) in enumerate(taps):
                start = P + s0 + dy * W + dx                  # static lane offset
                src = x_ref[0, :, start:start + chunk]        # (Cin, chunk)
                if dx == -1:
                    src = src * ml
                elif dx == 1:
                    src = src * mr
                wt = w_ref[t]                                 # (Cout, Cin)
                if Cin == 1:
                    acc = acc + wt * src                      # VPU broadcast FMA
                else:
                    acc = acc + jnp.dot(wt, src,
                                        preferred_element_type=jnp.float32)
            tail = s0 + chunk > S
            if tail:                                          # zero the ragged tail
                acc = acc * m_ref[2:3, s0:s0 + chunk]
            if instance_norm:
                ch_sum = ch_sum + jnp.sum(acc, axis=1, keepdims=True)
                ch_sq = ch_sq + jnp.sum(acc * acc, axis=1, keepdims=True)
                o_ref[0, :, P + s0:P + s0 + chunk] = acc      # stash pre-norm
            else:
                y = acc
                if residual:
                    y = y + r_ref[0, :, P + s0:P + s0 + chunk]
                if leaky_relu:
                    y = jnp.maximum(y, _SLOPE * y)
                if tail:
                    y = y * m_ref[2:3, s0:s0 + chunk]
                o_ref[0, :, P + s0:P + s0 + chunk] = y

        # ---- pass 2: instance norm over the S valid pixels + epilogue -------
        if instance_norm:
            mean = ch_sum * (1.0 / S)
            var = ch_sq * (1.0 / S) - mean * mean
            inv = jax.lax.rsqrt(var + _EPS)
            for c in range(n_chunks):
                s0 = c * chunk
                y = o_ref[0, :, P + s0:P + s0 + chunk]
                y = (y - mean) * inv
                if residual:
                    y = y + r_ref[0, :, P + s0:P + s0 + chunk]
                if leaky_relu:
                    y = jnp.maximum(y, _SLOPE * y)
                if s0 + chunk > S:
                    y = y * m_ref[2:3, s0:s0 + chunk]
                o_ref[0, :, P + s0:P + s0 + chunk] = y

    if residual:
        def kernel(x_ref, w_ref, b_ref, m_ref, r_ref, o_ref):
            body(x_ref, w_ref, b_ref, m_ref, r_ref, o_ref)
    else:
        def kernel(x_ref, w_ref, b_ref, m_ref, o_ref):
            body(x_ref, w_ref, b_ref, m_ref, None, o_ref)

    in_specs = [
        pl.BlockSpec((1, Cin, Spad), lambda n: (n, 0, 0)),    # activations
        pl.BlockSpec((9, Cout, Cin), lambda n: (0, 0, 0)),    # per-tap weights
        pl.BlockSpec((Cout, 1), lambda n: (0, 0)),            # bias
        pl.BlockSpec((3, Sup), lambda n: (0, 0)),             # boundary masks
    ]
    if residual:
        in_specs.append(pl.BlockSpec((1, Cout, Spad), lambda n: (n, 0, 0)))

    return pl.pallas_call(
        kernel,
        out_shape=jax.ShapeDtypeStruct((N, Cout, Spad), jnp.float32),
        grid_spec=pltpu.PrefetchScalarGridSpec(
            num_scalar_prefetch=0,
            grid=(N,),
            in_specs=in_specs,
            out_specs=pl.BlockSpec((1, Cout, Spad), lambda n: (n, 0, 0)),
        ),
        compiler_params=pltpu.CompilerParams(
            dimension_semantics=("parallel",)),
    )


def _build_conv1x1(N, Cin, H, W, chunk=_CHUNK):
    """conv_2: 1x1 conv, Cin -> 1 output channel (pure channel reduction, no MXU)."""
    S, P, Sup, Spad = _geom(H, W, chunk)
    n_chunks = Sup // chunk

    def kernel(x_ref, w_ref, b_ref, o_ref):
        w = w_ref[...]                                        # (Cin, 1)
        b = b_ref[...]                                        # (1, 1)
        for c in range(n_chunks):
            s0 = c * chunk
            src = x_ref[0, :, P + s0:P + s0 + chunk]          # (Cin, chunk)
            y = jnp.sum(src * w, axis=0, keepdims=True) + b   # (1, chunk)
            o_ref[0, :, s0:s0 + chunk] = y

    return pl.pallas_call(
        kernel,
        out_shape=jax.ShapeDtypeStruct((N, 1, Sup), jnp.float32),
        grid_spec=pltpu.PrefetchScalarGridSpec(
            num_scalar_prefetch=0,
            grid=(N,),
            in_specs=[
                pl.BlockSpec((1, Cin, Spad), lambda n: (n, 0, 0)),
                pl.BlockSpec((Cin, 1), lambda n: (0, 0)),
                pl.BlockSpec((1, 1), lambda n: (0, 0)),
            ],
            out_specs=pl.BlockSpec((1, 1, Sup), lambda n: (n, 0, 0)),
        ),
        compiler_params=pltpu.CompilerParams(
            dimension_semantics=("parallel",)),
    )


class Refiner2Pallas:
    """Pallas/TPU forward of simgan Refiner2 (conv_1 -> resnet blocks -> conv_2)."""

    def __init__(self, key, H, W, block_num=8, nb_features=64):
        self.H, self.W = H, W
        self.block_num = block_num
        self.F = nb_features
        self._calls = None
        self._calls_batch = None

        def conv_param(k, cout, cin, ksz):
            kw_, kb_ = jax.random.split(k)
            std = 1.0 / float(cin * ksz * ksz) ** 0.5
            w = jax.random.normal(kw_, (cout, cin, ksz, ksz), jnp.float32) * std
            b = jax.random.normal(kb_, (cout,), jnp.float32) * std
            return w, b

        keys = iter(jax.random.split(key, 2 + 3 * block_num))
        raw = {}
        raw['conv1_w'], raw['conv1_b'] = conv_param(next(keys), nb_features, 1, 3)
        for i in range(block_num):
            for j in (1, 2, 3):
                w, b = conv_param(next(keys), nb_features, nb_features, 3)
                raw[f'b{i}_w{j}'], raw[f'b{i}_b{j}'] = w, b
        raw['conv2_w'], raw['conv2_b'] = conv_param(next(keys), 1, nb_features, 1)
        self.raw = raw

        # Kernel-layout parameters (built once, outside the hot path).
        kp = {'conv1_w': _to_taps(raw['conv1_w']),
              'conv1_b': raw['conv1_b'].reshape(-1, 1),
              'conv2_w': raw['conv2_w'].reshape(1, nb_features).T,   # (F, 1)
              'conv2_b': raw['conv2_b'].reshape(1, 1)}
        for i in range(block_num):
            for j in (1, 2, 3):
                kp[f'b{i}_w{j}'] = _to_taps(raw[f'b{i}_w{j}'])
                kp[f'b{i}_b{j}'] = raw[f'b{i}_b{j}'].reshape(-1, 1)
        self.kp = kp

    def _get_calls(self, N):
        if self._calls is None or self._calls_batch != N:
            F, H, W = self.F, self.H, self.W
            self._calls = dict(
                first=_build_conv3x3(N, 1, F, H, W, instance_norm=True,
                                     leaky_relu=True, residual=False),
                mid=_build_conv3x3(N, F, F, H, W, instance_norm=True,
                                   leaky_relu=True, residual=False),
                last3=_build_conv3x3(N, F, F, H, W, instance_norm=False,
                                     leaky_relu=True, residual=True),
                proj=_build_conv1x1(N, F, H, W),
            )
            self._calls_batch = N
        return self._calls

    def __call__(self, x):
        N, Cin, H, W = x.shape
        assert Cin == 1 and (H, W) == (self.H, self.W)
        S, P, Sup, Spad = _geom(H, W)
        calls = self._get_calls(N)
        kp = self.kp
        masks = _make_masks(H, W)

        # NCHW with C==1 -> (N, 1, H*W) is a pure reshape (no transpose), then
        # embed into the zero-margined flat-spatial layout.
        a = jnp.pad(x.reshape(N, 1, S).astype(jnp.float32),
                    ((0, 0), (0, 0), (P, Spad - P - S)))

        a = calls['first'](a, kp['conv1_w'], kp['conv1_b'], masks)
        for i in range(self.block_num):
            r = a
            a = calls['mid'](a, kp[f'b{i}_w1'], kp[f'b{i}_b1'], masks)
            a = calls['mid'](a, kp[f'b{i}_w2'], kp[f'b{i}_b2'], masks)
            a = calls['last3'](a, kp[f'b{i}_w3'], kp[f'b{i}_b3'], masks, r)
        y = calls['proj'](a, kp['conv2_w'], kp['conv2_b'])

        return y[:, :, :S].reshape(N, 1, H, W)


def refiner2_reference(x, raw, block_num):
    """Plain-JAX reference of Refiner2.forward (validation only)."""
    hi = jax.lax.Precision.HIGHEST

    def conv(h, w, b, pad):
        y = jax.lax.conv_general_dilated(
            h, w, window_strides=(1, 1),
            padding=((pad, pad), (pad, pad)),
            dimension_numbers=('NCHW', 'OIHW', 'NCHW'),
            precision=hi)
        return y + b[None, :, None, None]

    def inorm(h):
        m = jnp.mean(h, axis=(2, 3), keepdims=True)
        v = jnp.mean(jnp.square(h - m), axis=(2, 3), keepdims=True)
        return (h - m) * jax.lax.rsqrt(v + _EPS)

    def lrelu(h):
        return jnp.where(h >= 0, h, _SLOPE * h)

    a = lrelu(inorm(conv(x, raw['conv1_w'], raw['conv1_b'], 1)))
    for i in range(block_num):
        r = a
        h = lrelu(inorm(conv(a, raw[f'b{i}_w1'], raw[f'b{i}_b1'], 1)))
        h = lrelu(inorm(conv(h, raw[f'b{i}_w2'], raw[f'b{i}_b2'], 1)))
        h = conv(h, raw[f'b{i}_w3'], raw[f'b{i}_b3'], 1)
        a = lrelu(h + r)
    return conv(a, raw['conv2_w'], raw['conv2_b'], 0)


if __name__ == "__main__":
    # Small config consistent with the module: grayscale [1, 35, 55] images,
    # reduced refiner depth/width (module defaults block_num=8, nb_features=64
    # are also supported) to keep the demo fast.
    N, H, W = 2, 35, 55
    BLOCKS, FEATURES = 2, 32

    key = jax.random.PRNGKey(0)
    kx, kparams = jax.random.split(key)
    x = jax.random.normal(kx, (N, 1, H, W), dtype=jnp.float32)

    model = Refiner2Pallas(kparams, H, W, block_num=BLOCKS, nb_features=FEATURES)
    out = jax.block_until_ready(model(x))

    ref = refiner2_reference(x, model.raw, BLOCKS)
    assert out.shape == (N, 1, H, W)
    assert jnp.allclose(out, ref, atol=5e-3, rtol=5e-3), (
        f"max abs err {jnp.max(jnp.abs(out - ref)):.3e}")

    print("KERNEL_OK")
</pallas_src>

<mosaic_0001>
module attributes {stable_mosaic.version = 11 : i64} {
  func.func @kernel(%arg0: i32, %arg1: memref<1x1x2304xf32, #tpu.memory_space<vmem>>, %arg2: memref<9x32x1xf32, #tpu.memory_space<vmem>>, %arg3: memref<32x1xf32, #tpu.memory_space<vmem>>, %arg4: memref<3x2048xf32, #tpu.memory_space<vmem>>, %arg5: memref<1x32x2304xf32, #tpu.memory_space<vmem>>) attributes {dimension_semantics = [#tpu.dimension_semantics<parallel>], iteration_bounds = array<i64: 2>, scalar_prefetch = 0 : i64, scratch_operands = 0 : i64, tpu.core_type = #tpu.core_type<tc>, window_params = [{transform_indices = @transform_0, window_bounds = array<i64: 1, 1, 2304>}, {pipeline_mode = #tpu.pipeline_mode<synchronous>, transform_indices = @transform_1, window_bounds = array<i64: 9, 32, 1>}, {pipeline_mode = #tpu.pipeline_mode<synchronous>, transform_indices = @transform_2, window_bounds = array<i64: 32, 1>}, {pipeline_mode = #tpu.pipeline_mode<synchronous>, transform_indices = @transform_3, window_bounds = array<i64: 3, 2048>}, {transform_indices = @transform_4, window_bounds = array<i64: 1, 32, 2304>}]} {
    %c0 = arith.constant 0 : index
    %c0_0 = arith.constant 0 : index
    %0 = vector.load %arg3[%c0, %c0_0] : memref<32x1xf32, #tpu.memory_space<vmem>>, vector<32x1xf32>
    %cst = arith.constant 0.000000e+00 : f32
    %1 = vector.broadcast %cst : f32 to vector<32x128xf32>
    %c0_1 = arith.constant 0 : index
    %c0_2 = arith.constant 0 : index
    %c0_3 = arith.constant 0 : index
    %2 = vector.load %arg5[%c0_1, %c0_2, %c0_3] : memref<1x32x2304xf32, #tpu.memory_space<vmem>>, vector<1x32x128xf32>
    %3 = vector.shape_cast %2 : vector<1x32x128xf32> to vector<32x128xf32>
    %4 = vector.shape_cast %1 : vector<32x128xf32> to vector<1x32x128xf32>
    tpu.vector_store %arg5[%c0_1, %c0_2, %c0_3], %4 {strides = array<i32>} : memref<1x32x2304xf32, #tpu.memory_space<vmem>>, vector<1x32x128xf32>,
    %c0_4 = arith.constant 0 : index
    %c0_5 = arith.constant 0 : index
    %c2176 = arith.constant 2176 : index
    %5 = vector.load %arg5[%c0_4, %c0_5, %c2176] : memref<1x32x2304xf32, #tpu.memory_space<vmem>>, vector<1x32x128xf32>
    %6 = vector.shape_cast %5 : vector<1x32x128xf32> to vector<32x128xf32>
    %7 = vector.shape_cast %1 : vector<32x128xf32> to vector<1x32x128xf32>
    tpu.vector_store %arg5[%c0_4, %c0_5, %c2176], %7 {strides = array<i32>} : memref<1x32x2304xf32, #tpu.memory_space<vmem>>, vector<1x32x128xf32>,
    %cst_6 = arith.constant 0.000000e+00 : f32
    %8 = vector.broadcast %cst_6 : f32 to vector<32x1xf32>
    %cst_7 = arith.constant 0.000000e+00 : f32
    %9 = vector.broadcast %cst_7 : f32 to vector<32x1xf32>
    %c0_8 = arith.constant 0 : index
    %c0_9 = arith.constant 0 : index
    %10 = vector.load %arg4[%c0_8, %c0_9] : memref<3x2048xf32, #tpu.memory_space<vmem>>, vector<1x256xf32>
    %c1 = arith.constant 1 : index
    %c0_10 = arith.constant 0 : index
    %11 = vector.load %arg4[%c1, %c0_10] : memref<3x2048xf32, #tpu.memory_space<vmem>>, vector<1x256xf32>
    %cst_11 = arith.constant 0.000000e+00 : f32
    %12 = vector.broadcast %cst_11 : f32 to vector<32x256xf32>
    %13 = vector.broadcast %0 : vector<32x1xf32> to vector<32x256xf32>
    %14 = arith.addf %12, %13 : vector<32x256xf32>
    %c0_12 = arith.constant 0 : index
    %c0_13 = arith.constant 0 : index
    %c72 = arith.constant 72 : index
    %15 = vector.load %arg1[%c0_12, %c0_13, %c72] : memref<1x1x2304xf32, #tpu.memory_space<vmem>>, vector<1x1x256xf32>
    %16 = vector.shape_cast %15 : vector<1x1x256xf32> to vector<1x256xf32>
    %17 = arith.mulf %16, %10 : vector<1x256xf32>
    %c0_14 = arith.constant 0 : index
    %c0_15 = arith.constant 0 : index
    %c0_16 = arith.constant 0 : index
    %18 = vector.load %arg2[%c0_14, %c0_15, %c0_16] : memref<9x32x1xf32, #tpu.memory_space<vmem>>, vector<1x32x1xf32>
    %19 = vector.shape_cast %18 : vector<1x32x1xf32> to vector<32x1xf32>
    %20 = vector.broadcast %19 : vector<32x1xf32> to vector<32x256xf32>
    %21 = vector.broadcast %17 : vector<1x256xf32> to vector<32x256xf32>
    %22 = arith.mulf %20, %21 : vector<32x256xf32>
    %23 = arith.addf %14, %22 : vector<32x256xf32>
    %c0_17 = arith.constant 0 : index
    %c0_18 = arith.constant 0 : index
    %c73 = arith.constant 73 : index
    %24 = vector.load %arg1[%c0_17, %c0_18, %c73] : memref<1x1x2304xf32, #tpu.memory_space<vmem>>, vector<1x1x256xf32>
    %25 = vector.shape_cast %24 : vector<1x1x256xf32> to vector<1x256xf32>
    %c1_19 = arith.constant 1 : index
    %c0_20 = arith.constant 0 : index
    %c0_21 = arith.constant 0 : index
    %26 = vector.load %arg2[%c1_19, %c0_20, %c0_21] : memref<9x32x1xf32, #tpu.memory_space<vmem>>, vector<1x32x1xf32>
    %27 = vector.shape_cast %26 : vector<1x32x1xf32> to vector<32x1xf32>
    %28 = vector.broadcast %27 : vector<32x1xf32> to vector<32x256xf32>
    %29 = vector.broadcast %25 : vector<1x256xf32> to vector<32x256xf32>
    %30 = arith.mulf %28, %29 : vector<32x256xf32>
    %31 = arith.addf %23, %30 : vector<32x256xf32>
    %c0_22 = arith.constant 0 : index
    %c0_23 = arith.constant 0 : index
    %c74 = arith.constant 74 : index
    %32 = vector.load %arg1[%c0_22, %c0_23, %c74] : memref<1x1x2304xf32, #tpu.memory_space<vmem>>, vector<1x1x256xf32>
    %33 = vector.shape_cast %32 : vector<1x1x256xf32> to vector<1x256xf32>
    %34 = arith.mulf %33, %11 : vector<1x256xf32>
    %c2 = arith.constant 2 : index
    %c0_24 = arith.constant 0 : index
    %c0_25 = arith.constant 0 : index
    %35 = vector.load %arg2[%c2, %c0_24, %c0_25] : memref<9x32x1xf32, #tpu.memory_space<vmem>>, vector<1x32x1xf32>
    %36 = vector.shape_cast %35 : vector<1x32x1xf32> to vector<32x1xf32>
    %37 = vector.broadcast %36 : vector<32x1xf32> to vector<32x256xf32>
    %38 = vector.broadcast %34 : vector<1x256xf32> to vector<32x256xf32>
    %39 = arith.mulf %37, %38 : vector<32x256xf32>
    %40 = arith.addf %31, %39 : vector<32x256xf32>
    %c0_26 = arith.constant 0 : index
    %c0_27 = arith.constant 0 : index
    %c127 = arith.constant 127 : index
    %41 = vector.load %arg1[%c0_26, %c0_27, %c127] : memref<1x1x2304xf32, #tpu.memory_space<vmem>>, vector<1x1x256xf32>
    %42 = vector.shape_cast %41 : vector<1x1x256xf32> to vector<1x256xf32>
    %43 = arith.mulf %42, %10 : vector<1x256xf32>
    %c3 = arith.constant 3 : index
    %c0_28 = arith.constant 0 : index
    %c0_29 = arith.constant 0 : index
    %44 = vector.load %arg2[%c3, %c0_28, %c0_29] : memref<9x32x1xf32, #tpu.memory_space<vmem>>, vector<1x32x1xf32>
    %45 = vector.shape_cast %44 : vector<1x32x1xf32> to vector<32x1xf32>
    %46 = vector.broadcast %45 : vector<32x1xf32> to vector<32x256xf32>
    %47 = vector.broadcast %43 : vector<1x256xf32> to vector<32x256xf32>
    %48 = arith.mulf %46, %47 : vector<32x256xf32>
    %49 = arith.addf %40, %48 : vector<32x256xf32>
    %c0_30 = arith.constant 0 : index
    %c0_31 = arith.constant 0 : index
    %c128 = arith.constant 128 : index
    %50 = vector.load %arg1[%c0_30, %c0_31, %c128] : memref<1x1x2304xf32, #tpu.memory_space<vmem>>, vector<1x1x256xf32>
    %51 = vector.shape_cast %50 : vector<1x1x256xf32> to vector<1x256xf32>
    %c4 = arith.constant 4 : index
    %c0_32 = arith.constant 0 : index
    %c0_33 = arith.constant 0 : index
    %52 = vector.load %arg2[%c4, %c0_32, %c0_33] : memref<9x32x1xf32, #tpu.memory_space<vmem>>, vector<1x32x1xf32>
    %53 = vector.shape_cast %52 : vector<1x32x1xf32> to vector<32x1xf32>
    %54 = vector.broadcast %53 : vector<32x1xf32> to vector<32x256xf32>
    %55 = vector.broadcast %51 : vector<1x256xf32> to vector<32x256xf32>
    %56 = arith.mulf %54, %55 : vector<32x256xf32>
    %57 = arith.addf %49, %56 : vector<32x256xf32>
    %c0_34 = arith.constant 0 : index
    %c0_35 = arith.constant 0 : index
    %c129 = arith.constant 129 : index
    %58 = vector.load %arg1[%c0_34, %c0_35, %c129] : memref<1x1x2304xf32, #tpu.memory_space<vmem>>, vector<1x1x256xf32>
    %59 = vector.shape_cast %58 : vector<1x1x256xf32> to vector<1x256xf32>
    %60 = arith.mulf %59, %11 : vector<1x256xf32>
    %c5 = arith.constant 5 : index
    %c0_36 = arith.constant 0 : index
    %c0_37 = arith.constant 0 : index
    %61 = vector.load %arg2[%c5, %c0_36, %c0_37] : memref<9x32x1xf32, #tpu.memory_space<vmem>>, vector<1x32x1xf32>
    %62 = vector.shape_cast %61 : vector<1x32x1xf32> to vector<32x1xf32>
    %63 = vector.broadcast %62 : vector<32x1xf32> to vector<32x256xf32>
    %64 = vector.broadcast %60 : vector<1x256xf32> to vector<32x256xf32>
    %65 = arith.mulf %63, %64 : vector<32x256xf32>
    %66 = arith.addf %57, %65 : vector<32x256xf32>
    %c0_38 = arith.constant 0 : index
    %c0_39 = arith.constant 0 : index
    %c182 = arith.constant 182 : index
    %67 = vector.load %arg1[%c0_38, %c0_39, %c182] : memref<1x1x2304xf32, #tpu.memory_space<vmem>>, vector<1x1x256xf32>
    %68 = vector.shape_cast %67 : vector<1x1x256xf32> to vector<1x256xf32>
    %69 = arith.mulf %68, %10 : vector<1x256xf32>
    %c6 = arith.constant 6 : index
    %c0_40 = arith.constant 0 : index
    %c0_41 = arith.constant 0 : index
    %70 = vector.load %arg2[%c6, %c0_40, %c0_41] : memref<9x32x1xf32, #tpu.memory_space<vmem>>, vector<1x32x1xf32>
    %71 = vector.shape_cast %70 : vector<1x32x1xf32> to vector<32x1xf32>
    %72 = vector.broadcast %71 : vector<32x1xf32> to vector<32x256xf32>
    %73 = vector.broadcast %69 : vector<1x256xf32> to vector<32x256xf32>
    %74 = arith.mulf %72, %73 : vector<32x256xf32>
    %75 = arith.addf %66, %74 : vector<32x256xf32>
    %c0_42 = arith.constant 0 : index
    %c0_43 = arith.constant 0 : index
    %c183 = arith.constant 183 : index
    %76 = vector.load %arg1[%c0_42, %c0_43, %c183] : memref<1x1x2304xf32, #tpu.memory_space<vmem>>, vector<1x1x256xf32>
    %77 = vector.shape_cast %76 : vector<1x1x256xf32> to vector<1x256xf32>
    %c7 = arith.constant 7 : index
    %c0_44 = arith.constant 0 : index
    %c0_45 = arith.constant 0 : index
    %78 = vector.load %arg2[%c7, %c0_44, %c0_45] : memref<9x32x1xf32, #tpu.memory_space<vmem>>, vector<1x32x1xf32>
    %79 = vector.shape_cast %78 : vector<1x32x1xf32> to vector<32x1xf32>
    %80 = vector.broadcast %79 : vector<32x1xf32> to vector<32x256xf32>
    %81 = vector.broadcast %77 : vector<1x256xf32> to vector<32x256xf32>
    %82 = arith.mulf %80, %81 : vector<32x256xf32>
    %83 = arith.addf %75, %82 : vector<32x256xf32>
    %c0_46 = arith.constant 0 : index
    %c0_47 = arith.constant 0 : index
    %c184 = arith.constant 184 : index
    %84 = vector.load %arg1[%c0_46, %c0_47, %c184] : memref<1x1x2304xf32, #tpu.memory_space<vmem>>, vector<1x1x256xf32>
    %85 = vector.shape_cast %84 : vector<1x1x256xf32> to vector<1x256xf32>
    %86 = arith.mulf %85, %11 : vector<1x256xf32>
    %c8 = arith.constant 8 : index
    %c0_48 = arith.constant 0 : index
    %c0_49 = arith.constant 0 : index
    %87 = vector.load %arg2[%c8, %c0_48, %c0_49] : memref<9x32x1xf32, #tpu.memory_space<vmem>>, vector<1x32x1xf32>
    %88 = vector.shape_cast %87 : vector<1x32x1xf32> to vector<32x1xf32>
    %89 = vector.broadcast %88 : vector<32x1xf32> to vector<32x256xf32>
    %90 = vector.broadcast %86 : vector<1x256xf32> to vector<32x256xf32>
    %91 = arith.mulf %89, %90 : vector<32x256xf32>
    %92 = arith.addf %83, %91 : vector<32x256xf32>
    %cst_50 = arith.constant dense<0.000000e+00> : vector<32xf32>
    %93 = vector.multi_reduction <add>, %92, %cst_50 [1] : vector<32x256xf32> to vector<32xf32>
    %94 = vector.shape_cast %93 : vector<32xf32> to vector<32x1xf32>
    %95 = arith.addf %8, %94 : vector<32x1xf32>
    %96 = arith.mulf %92, %92 : vector<32x256xf32>
    %cst_51 = arith.constant dense<0.000000e+00> : vector<32xf32>
    %97 = vector.multi_reduction <add>, %96, %cst_51 [1] : vector<32x256xf32> to vector<32xf32>
    %98 = vector.shape_cast %97 : vector<32xf32> to vector<32x1xf32>
    %99 = arith.addf %9, %98 : vector<32x1xf32>
    %c0_52 = arith.constant 0 : index
    %c0_53 = arith.constant 0 : index
    %c128_54 = arith.constant 128 : index
    %100 = vector.load %arg5[%c0_52, %c0_53, %c128_54] : memref<1x32x2304xf32, #tpu.memory_space<vmem>>, vector<1x32x256xf32>
    %101 = vector.shape_cast %100 : vector<1x32x256xf32> to vector<32x256xf32>
    %102 = vector.shape_cast %92 : vector<32x256xf32> to vector<1x32x256xf32>
    tpu.vector_store %arg5[%c0_52, %c0_53, %c128_54], %102 {strides = array<i32>} : memref<1x32x2304xf32, #tpu.memory_space<vmem>>, vector<1x32x256xf32>,
    %c0_55 = arith.constant 0 : index
    %c256 = arith.constant 256 : index
    %103 = vector.load %arg4[%c0_55, %c256] : memref<3x2048xf32, #tpu.memory_space<vmem>>, vector<1x256xf32>
    %c1_56 = arith.constant 1 : index
    %c256_57 = arith.constant 256 : index
    %104 = vector.load %arg4[%c1_56, %c256_57] : memref<3x2048xf32, #tpu.memory_space<vmem>>, vector<1x256xf32>
    %cst_58 = arith.constant 0.000000e+00 : f32
    %105 = vector.broadcast %cst_58 : f32 to vector<32x256xf32>
    %106 = vector.broadcast %0 : vector<32x1xf32> to vector<32x256xf32>
    %107 = arith.addf %105, %106 : vector<32x256xf32>
    %c0_59 = arith.constant 0 : index
    %c0_60 = arith.constant 0 : index
    %c328 = arith.constant 328 : index
    %108 = vector.load %arg1[%c0_59, %c0_60, %c328] : memref<1x1x2304xf32, #tpu.memory_space<vmem>>, vector<1x1x256xf32>
    %109 = vector.shape_cast %108 : vector<1x1x256xf32> to vector<1x256xf32>
    %110 = arith.mulf %109, %103 : vector<1x256xf32>
    %c0_61 = arith.constant 0 : index
    %c0_62 = arith.constant 0 : index
    %c0_63 = arith.constant 0 : index
    %111 = vector.load %arg2[%c0_61, %c0_62, %c0_63] : memref<9x32x1xf32, #tpu.memory_space<vmem>>, vector<1x32x1xf32>
    %112 = vector.shape_cast %111 : vector<1x32x1xf32> to vector<32x1xf32>
    %113 = vector.broadcast %112 : vector<32x1xf32> to vector<32x256xf32>
    %114 = vector.broadcast %110 : vector<1x256xf32> to vector<32x256xf32>
    %115 = arith.mulf %113, %114 : vector<32x256xf32>
    %116 = arith.addf %107, %115 : vector<32x256xf32>
    %c0_64 = arith.constant 0 : index
    %c0_65 = arith.constant 0 : index
    %c329 = arith.constant 329 : index
    %117 = vector.load %arg1[%c0_64, %c0_65, %c329] : memref<1x1x2304xf32, #tpu.memory_space<vmem>>, vector<1x1x256xf32>
    %118 = vector.shape_cast %117 : vector<1x1x256xf32> to vector<1x256xf32>
    %c1_66 = arith.constant 1 : index
    %c0_67 = arith.constant 0 : index
    %c0_68 = arith.constant 0 : index
    %119 = vector.load %arg2[%c1_66, %c0_67, %c0_68] : memref<9x32x1xf32, #tpu.memory_space<vmem>>, vector<1x32x1xf32>
    %120 = vector.shape_cast %119 : vector<1x32x1xf32> to vector<32x1xf32>
    %121 = vector.broadcast %120 : vector<32x1xf32> to vector<32x256xf32>
    %122 = vector.broadcast %118 : vector<1x256xf32> to vector<32x256xf32>
    %123 = arith.mulf %121, %122 : vector<32x256xf32>
    %124 = arith.addf %116, %123 : vector<32x256xf32>
    %c0_69 = arith.constant 0 : index
    %c0_70 = arith.constant 0 : index
    %c330 = arith.constant 330 : index
    %125 = vector.load %arg1[%c0_69, %c0_70, %c330] : memref<1x1x2304xf32, #tpu.memory_space<vmem>>, vector<1x1x256xf32>
    %126 = vector.shape_cast %125 : vector<1x1x256xf32> to vector<1x256xf32>
    %127 = arith.mulf %126, %104 : vector<1x256xf32>
    %c2_71 = arith.constant 2 : index
    %c0_72 = arith.constant 0 : index
    %c0_73 = arith.constant 0 : index
    %128 = vector.load %arg2[%c2_71, %c0_72, %c0_73] : memref<9x32x1xf32, #tpu.memory_space<vmem>>, vector<1x32x1xf32>
    %129 = vector.shape_cast %128 : vector<1x32x1xf32> to vector<32x1xf32>
    %130 = vector.broadcast %129 : vector<32x1xf32> to vector<32x256xf32>
    %131 = vector.broadcast %127 : vector<1x256xf32> to vector<32x256xf32>
    %132 = arith.mulf %130, %131 : vector<32x256xf32>
    %133 = arith.addf %124, %132 : vector<32x256xf32>
    %c0_74 = arith.constant 0 : index
    %c0_75 = arith.constant 0 : index
    %c383 = arith.constant 383 : index
    %134 = vector.load %arg1[%c0_74, %c0_75, %c383] : memref<1x1x2304xf32, #tpu.memory_space<vmem>>, vector<1x1x256xf32>
    %135 = vector.shape_cast %134 : vector<1x1x256xf32> to vector<1x256xf32>
    %136 = arith.mulf %135, %103 : vector<1x256xf32>
    %c3_76 = arith.constant 3 : index
    %c0_77 = arith.constant 0 : index
    %c0_78 = arith.constant 0 : index
    %137 = vector.load %arg2[%c3_76, %c0_77, %c0_78] : memref<9x32x1xf32, #tpu.memory_space<vmem>>, vector<1x32x1xf32>
    %138 = vector.shape_cast %137 : vector<1x32x1xf32> to vector<32x1xf32>
    %139 = vector.broadcast %138 : vector<32x1xf32> to vector<32x256xf32>
    %140 = vector.broadcast %136 : vector<1x256xf32> to vector<32x256xf32>
    %141 = arith.mulf %139, %140 : vector<32x256xf32>
    %142 = arith.addf %133, %141 : vector<32x256xf32>
    %c0_79 = arith.constant 0 : index
    %c0_80 = arith.constant 0 : index
    %c384 = arith.constant 384 : index
    %143 = vector.load %arg1[%c0_79, %c0_80, %c384] : memref<1x1x2304xf32, #tpu.memory_space<vmem>>, vector<1x1x256xf32>
    %144 = vector.shape_cast %143 : vector<1x1x256xf32> to vector<1x256xf32>
    %c4_81 = arith.constant 4 : index
    %c0_82 = arith.constant 0 : index
    %c0_83 = arith.constant 0 : index
    %145 = vector.load %arg2[%c4_81, %c0_82, %c0_83] : memref<9x32x1xf32, #tpu.memory_space<vmem>>, vector<1x32x1xf32>
    %146 = vector.shape_cast %145 : vector<1x32x1xf32> to vector<32x1xf32>
    %147 = vector.broadcast %146 : vector<32x1xf32> to vector<32x256xf32>
    %148 = vector.broadcast %144 : vector<1x256xf32> to vector<32x256xf32>
    %149 = arith.mulf %147, %148 : vector<32x256xf32>
    %150 = arith.addf %142, %149 : vector<32x256xf32>
    %c0_84 = arith.constant 0 : index
    %c0_85 = arith.constant 0 : index
    %c385 = arith.constant 385 : index
    %151 = vector.load %arg1[%c0_84, %c0_85, %c385] : memref<1x1x2304xf32, #tpu.memory_space<vmem>>, vector<1x1x256xf32>
    %152 = vector.shape_cast %151 : vector<1x1x256xf32> to vector<1x256xf32>
    %153 = arith.mulf %152, %104 : vector<1x256xf32>
    %c5_86 = arith.constant 5 : index
    %c0_87 = arith.constant 0 : index
    %c0_88 = arith.constant 0 : index
    %154 = vector.load %arg2[%c5_86, %c0_87, %c0_88] : memref<9x32x1xf32, #tpu.memory_space<vmem>>, vector<1x32x1xf32>
    %155 = vector.shape_cast %154 : vector<1x32x1xf32> to vector<32x1xf32>
    %156 = vector.broadcast %155 : vector<32x1xf32> to vector<32x256xf32>
    %157 = vector.broadcast %153 : vector<1x256xf32> to vector<32x256xf32>
    %158 = arith.mulf %156, %157 : vector<32x256xf32>
    %159 = arith.addf %150, %158 : vector<32x256xf32>
    %c0_89 = arith.constant 0 : index
    %c0_90 = arith.constant 0 : index
    %c438 = arith.constant 438 : index
    %160 = vector.load %arg1[%c0_89, %c0_90, %c438] : memref<1x1x2304xf32, #tpu.memory_space<vmem>>, vector<1x1x256xf32>
    %161 = vector.shape_cast %160 : vector<1x1x256xf32> to vector<1x256xf32>
    %162 = arith.mulf %161, %103 : vector<1x256xf32>
    %c6_91 = arith.constant 6 : index
    %c0_92 = arith.constant 0 : index
    %c0_93 = arith.constant 0 : index
    %163 = vector.load %arg2[%c6_91, %c0_92, %c0_93] : memref<9x32x1xf32, #tpu.memory_space<vmem>>, vector<1x32x1xf32>
    %164 = vector.shape_cast %163 : vector<1x32x1xf32> to vector<32x1xf32>
    %165 = vector.broadcast %164 : vector<32x1xf32> to vector<32x256xf32>
    %166 = vector.broadcast %162 : vector<1x256xf32> to vector<32x256xf32>
    %167 = arith.mulf %165, %166 : vector<32x256xf32>
    %168 = arith.addf %159, %167 : vector<32x256xf32>
    %c0_94 = arith.constant 0 : index
    %c0_95 = arith.constant 0 : index
    %c439 = arith.constant 439 : index
    %169 = vector.load %arg1[%c0_94, %c0_95, %c439] : memref<1x1x2304xf32, #tpu.memory_space<vmem>>, vector<1x1x256xf32>
    %170 = vector.shape_cast %169 : vector<1x1x256xf32> to vector<1x256xf32>
    %c7_96 = arith.constant 7 : index
    %c0_97 = arith.constant 0 : index
    %c0_98 = arith.constant 0 : index
    %171 = vector.load %arg2[%c7_96, %c0_97, %c0_98] : memref<9x32x1xf32, #tpu.memory_space<vmem>>, vector<1x32x1xf32>
    %172 = vector.shape_cast %171 : vector<1x32x1xf32> to vector<32x1xf32>
    %173 = vector.broadcast %172 : vector<32x1xf32> to vector<32x256xf32>
    %174 = vector.broadcast %170 : vector<1x256xf32> to vector<32x256xf32>
    %175 = arith.mulf %173, %174 : vector<32x256xf32>
    %176 = arith.addf %168, %175 : vector<32x256xf32>
    %c0_99 = arith.constant 0 : index
    %c0_100 = arith.constant 0 : index
    %c440 = arith.constant 440 : index
    %177 = vector.load %arg1[%c0_99, %c0_100, %c440] : memref<1x1x2304xf32, #tpu.memory_space<vmem>>, vector<1x1x256xf32>
    %178 = vector.shape_cast %177 : vector<1x1x256xf32> to vector<1x256xf32>
    %179 = arith.mulf %178, %104 : vector<1x256xf32>
    %c8_101 = arith.constant 8 : index
    %c0_102 = arith.constant 0 : index
    %c0_103 = arith.constant 0 : index
    %180 = vector.load %arg2[%c8_101, %c0_102, %c0_103] : memref<9x32x1xf32, #tpu.memory_space<vmem>>, vector<1x32x1xf32>
    %181 = vector.shape_cast %180 : vector<1x32x1xf32> to vector<32x1xf32>
    %182 = vector.broadcast %181 : vector<32x1xf32> to vector<32x256xf32>
    %183 = vector.broadcast %179 : vector<1x256xf32> to vector<32x256xf32>
    %184 = arith.mulf %182, %183 : vector<32x256xf32>
    %185 = arith.addf %176, %184 : vector<32x256xf32>
    %cst_104 = arith.constant dense<0.000000e+00> : vector<32xf32>
    %186 = vector.multi_reduction <add>, %185, %cst_104 [1] : vector<32x256xf32> to vector<32xf32>
    %187 = vector.shape_cast %186 : vector<32xf32> to vector<32x1xf32>
    %188 = arith.addf %95, %187 : vector<32x1xf32>
    %189 = arith.mulf %185, %185 : vector<32x256xf32>
    %cst_105 = arith.constant dense<0.000000e+00> : vector<32xf32>
    %190 = vector.multi_reduction <add>, %189, %cst_105 [1] : vector<32x256xf32> to vector<32xf32>
    %191 = vector.shape_cast %190 : vector<32xf32> to vector<32x1xf32>
    %192 = arith.addf %99, %191 : vector<32x1xf32>
    %c0_106 = arith.constant 0 : index
    %c0_107 = arith.constant 0 : index
    %c384_108 = arith.constant 384 : index
    %193 = vector.load %arg5[%c0_106, %c0_107, %c384_108] : memref<1x32x2304xf32, #tpu.memory_space<vmem>>, vector<1x32x256xf32>
    %194 = vector.shape_cast %193 : vector<1x32x256xf32> to vector<32x256xf32>
    %195 = vector.shape_cast %185 : vector<32x256xf32> to vector<1x32x256xf32>
    tpu.vector_store %arg5[%c0_106, %c0_107, %c384_108], %195 {strides = array<i32>} : memref<1x32x2304xf32, #tpu.memory_space<vmem>>, vector<1x32x256xf32>,
    %c0_109 = arith.constant 0 : index
    %c512 = arith.constant 512 : index
    %196 = vector.load %arg4[%c0_109, %c512] : memref<3x2048xf32, #tpu.memory_space<vmem>>, vector<1x256xf32>
    %c1_110 = arith.constant 1 : index
    %c512_111 = arith.constant 512 : index
    %197 = vector.load %arg4[%c1_110, %c512_111] : memref<3x2048xf32, #tpu.memory_space<vmem>>, vector<1x256xf32>
    %cst_112 = arith.constant 0.000000e+00 : f32
    %198 = vector.broadcast %cst_112 : f32 to vector<32x256xf32>
    %199 = vector.broadcast %0 : vector<32x1xf32> to vector<32x256xf32>
    %200 = arith.addf %198, %199 : vector<32x256xf32>
    %c0_113 = arith.constant 0 : index
    %c0_114 = arith.constant 0 : index
    %c584 = arith.constant 584 : index
    %201 = vector.load %arg1[%c0_113, %c0_114, %c584] : memref<1x1x2304xf32, #tpu.memory_space<vmem>>, vector<1x1x256xf32>
    %202 = vector.shape_cast %201 : vector<1x1x256xf32> to vector<1x256xf32>
    %203 = arith.mulf %202, %196 : vector<1x256xf32>
    %c0_115 = arith.constant 0 : index
    %c0_116 = arith.constant 0 : index
    %c0_117 = arith.constant 0 : index
    %204 = vector.load %arg2[%c0_115, %c0_116, %c0_117] : memref<9x32x1xf32, #tpu.memory_space<vmem>>, vector<1x32x1xf32>
    %205 = vector.shape_cast %204 : vector<1x32x1xf32> to vector<32x1xf32>
    %206 = vector.broadcast %205 : vector<32x1xf32> to vector<32x256xf32>
    %207 = vector.broadcast %203 : vector<1x256xf32> to vector<32x256xf32>
    %208 = arith.mulf %206, %207 : vector<32x256xf32>
    %209 = arith.addf %200, %208 : vector<32x256xf32>
    %c0_118 = arith.constant 0 : index
    %c0_119 = arith.constant 0 : index
    %c585 = arith.constant 585 : index
    %210 = vector.load %arg1[%c0_118, %c0_119, %c585] : memref<1x1x2304xf32, #tpu.memory_space<vmem>>, vector<1x1x256xf32>
    %211 = vector.shape_cast %210 : vector<1x1x256xf32> to vector<1x256xf32>
    %c1_120 = arith.constant 1 : index
    %c0_121 = arith.constant 0 : index
    %c0_122 = arith.constant 0 : index
    %212 = vector.load %arg2[%c1_120, %c0_121, %c0_122] : memref<9x32x1xf32, #tpu.memory_space<vmem>>, vector<1x32x1xf32>
    %213 = vector.shape_cast %212 : vector<1x32x1xf32> to vector<32x1xf32>
    %214 = vector.broadcast %213 : vector<32x1xf32> to vector<32x256xf32>
    %215 = vector.broadcast %211 : vector<1x256xf32> to vector<32x256xf32>
    %216 = arith.mulf %214, %215 : vector<32x256xf32>
    %217 = arith.addf %209, %216 : vector<32x256xf32>
    %c0_123 = arith.constant 0 : index
    %c0_124 = arith.constant 0 : index
    %c586 = arith.constant 586 : index
    %218 = vector.load %arg1[%c0_123, %c0_124, %c586] : memref<1x1x2304xf32, #tpu.memory_space<vmem>>, vector<1x1x256xf32>
    %219 = vector.shape_cast %218 : vector<1x1x256xf32> to vector<1x256xf32>
    %220 = arith.mulf %219, %197 : vector<1x256xf32>
    %c2_125 = arith.constant 2 : index
    %c0_126 = arith.constant 0 : index
    %c0_127 = arith.constant 0 : index
    %221 = vector.load %arg2[%c2_125, %c0_126, %c0_127] : memref<9x32x1xf32, #tpu.memory_space<vmem>>, vector<1x32x1xf32>
    %222 = vector.shape_cast %221 : vector<1x32x1xf32> to vector<32x1xf32>
    %223 = vector.broadcast %222 : vector<32x1xf32> to vector<32x256xf32>
    %224 = vector.broadcast %220 : vector<1x256xf32> to vector<32x256xf32>
    %225 = arith.mulf %223, %224 : vector<32x256xf32>
    %226 = arith.addf %217, %225 : vector<32x256xf32>
    %c0_128 = arith.constant 0 : index
    %c0_129 = arith.constant 0 : index
    %c639 = arith.constant 639 : index
    %227 = vector.load %arg1[%c0_128, %c0_129, %c639] : memref<1x1x2304xf32, #tpu.memory_space<vmem>>, vector<1x1x256xf32>
    %228 = vector.shape_cast %227 : vector<1x1x256xf32> to vector<1x256xf32>
    %229 = arith.mulf %228, %196 : vector<1x256xf32>
    %c3_130 = arith.constant 3 : index
    %c0_131 = arith.constant 0 : index
    %c0_132 = arith.constant 0 : index
    %230 = vector.load %arg2[%c3_130, %c0_131, %c0_132] : memref<9x32x1xf32, #tpu.memory_space<vmem>>, vector<1x32x1xf32>
    %231 = vector.shape_cast %230 : vector<1x32x1xf32> to vector<32x1xf32>
    %232 = vector.broadcast %231 : vector<32x1xf32> to vector<32x256xf32>
    %233 = vector.broadcast %229 : vector<1x256xf32> to vector<32x256xf32>
    %234 = arith.mulf %232, %233 : vector<32x256xf32>
    %235 = arith.addf %226, %234 : vector<32x256xf32>
    %c0_133 = arith.constant 0 : index
    %c0_134 = arith.constant 0 : index
    %c640 = arith.constant 640 : index
    %236 = vector.load %arg1[%c0_133, %c0_134, %c640] : memref<1x1x2304xf32, #tpu.memory_space<vmem>>, vector<1x1x256xf32>
    %237 = vector.shape_cast %236 : vector<1x1x256xf32> to vector<1x256xf32>
    %c4_135 = arith.constant 4 : index
    %c0_136 = arith.constant 0 : index
    %c0_137 = arith.constant 0 : index
    %238 = vector.load %arg2[%c4_135, %c0_136, %c0_137] : memref<9x32x1xf32, #tpu.memory_space<vmem>>, vector<1x32x1xf32>
    %239 = vector.shape_cast %238 : vector<1x32x1xf32> to vector<32x1xf32>
    %240 = vector.broadcast %239 : vector<32x1xf32> to vector<32x256xf32>
    %241 = vector.broadcast %237 : vector<1x256xf32> to vector<32x256xf32>
    %242 = arith.mulf %240, %241 : vector<32x256xf32>
    %243 = arith.addf %235, %242 : vector<32x256xf32>
    %c0_138 = arith.constant 0 : index
    %c0_139 = arith.constant 0 : index
    %c641 = arith.constant 641 : index
    %244 = vector.load %arg1[%c0_138, %c0_139, %c641] : memref<1x1x2304xf32, #tpu.memory_space<vmem>>, vector<1x1x256xf32>
    %245 = vector.shape_cast %244 : vector<1x1x256xf32> to vector<1x256xf32>
    %246 = arith.mulf %245, %197 : vector<1x256xf32>
    %c5_140 = arith.constant 5 : index
    %c0_141 = arith.constant 0 : index
    %c0_142 = arith.constant 0 : index
    %247 = vector.load %arg2[%c5_140, %c0_141, %c0_142] : memref<9x32x1xf32, #tpu.memory_space<vmem>>, vector<1x32x1xf32>
    %248 = vector.shape_cast %247 : vector<1x32x1xf32> to vector<32x1xf32>
    %249 = vector.broadcast %248 : vector<32x1xf32> to vector<32x256xf32>
    %250 = vector.broadcast %246 : vector<1x256xf32> to vector<32x256xf32>
    %251 = arith.mulf %249, %250 : vector<32x256xf32>
    %252 = arith.addf %243, %251 : vector<32x256xf32>
    %c0_143 = arith.constant 0 : index
    %c0_144 = arith.constant 0 : index
    %c694 = arith.constant 694 : index
    %253 = vector.load %arg1[%c0_143, %c0_144, %c694] : memref<1x1x2304xf32, #tpu.memory_space<vmem>>, vector<1x1x256xf32>
    %254 = vector.shape_cast %253 : vector<1x1x256xf32> to vector<1x256xf32>
    %255 = arith.mulf %254, %196 : vector<1x256xf32>
    %c6_145 = arith.constant 6 : index
    %c0_146 = arith.constant 0 : index
    %c0_147 = arith.constant 0 : index
    %256 = vector.load %arg2[%c6_145, %c0_146, %c0_147] : memref<9x32x1xf32, #tpu.memory_space<vmem>>, vector<1x32x1xf32>
    %257 = vector.shape_cast %256 : vector<1x32x1xf32> to vector<32x1xf32>
    %258 = vector.broadcast %257 : vector<32x1xf32> to vector<32x256xf32>
    %259 = vector.broadcast %255 : vector<1x256xf32> to vector<32x256xf32>
    %260 = arith.mulf %258, %259 : vector<32x256xf32>
    %261 = arith.addf %252, %260 : vector<32x256xf32>
    %c0_148 = arith.constant 0 : index
    %c0_149 = arith.constant 0 : index
    %c695 = arith.constant 695 : index
    %262 = vector.load %arg1[%c0_148, %c0_149, %c695] : memref<1x1x2304xf32, #tpu.memory_space<vmem>>, vector<1x1x256xf32>
    %263 = vector.shape_cast %262 : vector<1x1x256xf32> to vector<1x256xf32>
    %c7_150 = arith.constant 7 : index
    %c0_151 = arith.constant 0 : index
    %c0_152 = arith.constant 0 : index
    %264 = vector.load %arg2[%c7_150, %c0_151, %c0_152] : memref<9x32x1xf32, #tpu.memory_space<vmem>>, vector<1x32x1xf32>
    %265 = vector.shape_cast %264 : vector<1x32x1xf32> to vector<32x1xf32>
    %266 = vector.broadcast %265 : vector<32x1xf32> to vector<32x256xf32>
    %267 = vector.broadcast %263 : vector<1x256xf32> to vector<32x256xf32>
    %268 = arith.mulf %266, %267 : vector<32x256xf32>
    %269 = arith.addf %261, %268 : vector<32x256xf32>
    %c0_153 = arith.constant 0 : index
    %c0_154 = arith.constant 0 : index
    %c696 = arith.constant 696 : index
    %270 = vector.load %arg1[%c0_153, %c0_154, %c696] : memref<1x1x2304xf32, #tpu.memory_space<vmem>>, vector<1x1x256xf32>
    %271 = vector.shape_cast %270 : vector<1x1x256xf32> to vector<1x256xf32>
    %272 = arith.mulf %271, %197 : vector<1x256xf32>
    %c8_155 = arith.constant 8 : index
    %c0_156 = arith.constant 0 : index
    %c0_157 = arith.constant 0 : index
    %273 = vector.load %arg2[%c8_155, %c0_156, %c0_157] : memref<9x32x1xf32, #tpu.memory_space<vmem>>, vector<1x32x1xf32>
    %274 = vector.shape_cast %273 : vector<1x32x1xf32> to vector<32x1xf32>
    %275 = vector.broadcast %274 : vector<32x1xf32> to vector<32x256xf32>
    %276 = vector.broadcast %272 : vector<1x256xf32> to vector<32x256xf32>
    %277 = arith.mulf %275, %276 : vector<32x256xf32>
    %278 = arith.addf %269, %277 : vector<32x256xf32>
    %cst_158 = arith.constant dense<0.000000e+00> : vector<32xf32>
    %279 = vector.multi_reduction <add>, %278, %cst_158 [1] : vector<32x256xf32> to vector<32xf32>
    %280 = vector.shape_cast %279 : vector<32xf32> to vector<32x1xf32>
    %281 = arith.addf %188, %280 : vector<32x1xf32>
    %282 = arith.mulf %278, %278 : vector<32x256xf32>
    %cst_159 = arith.constant dense<0.000000e+00> : vector<32xf32>
    %283 = vector.multi_reduction <add>, %282, %cst_159 [1] : vector<32x256xf32> to vector<32xf32>
    %284 = vector.shape_cast %283 : vector<32xf32> to vector<32x1xf32>
    %285 = arith.addf %192, %284 : vector<32x1xf32>
    %c0_160 = arith.constant 0 : index
    %c0_161 = arith.constant 0 : index
    %c640_162 = arith.constant 640 : index
    %286 = vector.load %arg5[%c0_160, %c0_161, %c640_162] : memref<1x32x2304xf32, #tpu.memory_space<vmem>>, vector<1x32x256xf32>
    %287 = vector.shape_cast %286 : vector<1x32x256xf32> to vector<32x256xf32>
    %288 = vector.shape_cast %278 : vector<32x256xf32> to vector<1x32x256xf32>
    tpu.vector_store %arg5[%c0_160, %c0_161, %c640_162], %288 {strides = array<i32>} : memref<1x32x2304xf32, #tpu.memory_space<vmem>>, vector<1x32x256xf32>,
    %c0_163 = arith.constant 0 : index
    %c768 = arith.constant 768 : index
    %289 = vector.load %arg4[%c0_163, %c768] : memref<3x2048xf32, #tpu.memory_space<vmem>>, vector<1x256xf32>
    %c1_164 = arith.constant 1 : index
    %c768_165 = arith.constant 768 : index
    %290 = vector.load %arg4[%c1_164, %c768_165] : memref<3x2048xf32, #tpu.memory_space<vmem>>, vector<1x256xf32>
    %cst_166 = arith.constant 0.000000e+00 : f32
    %291 = vector.broadcast %cst_166 : f32 to vector<32x256xf32>
    %292 = vector.broadcast %0 : vector<32x1xf32> to vector<32x256xf32>
    %293 = arith.addf %291, %292 : vector<32x256xf32>
    %c0_167 = arith.constant 0 : index
    %c0_168 = arith.constant 0 : index
    %c840 = arith.constant 840 : index
    %294 = vector.load %arg1[%c0_167, %c0_168, %c840] : memref<1x1x2304xf32, #tpu.memory_space<vmem>>, vector<1x1x256xf32>
    %295 = vector.shape_cast %294 : vector<1x1x256xf32> to vector<1x256xf32>
    %296 = arith.mulf %295, %289 : vector<1x256xf32>
    %c0_169 = arith.constant 0 : index
    %c0_170 = arith.constant 0 : index
    %c0_171 = arith.constant 0 : index
    %297 = vector.load %arg2[%c0_169, %c0_170, %c0_171] : memref<9x32x1xf32, #tpu.memory_space<vmem>>, vector<1x32x1xf32>
    %298 = vector.shape_cast %297 : vector<1x32x1xf32> to vector<32x1xf32>
    %299 = vector.broadcast %298 : vector<32x1xf32> to vector<32x256xf32>
    %300 = vector.broadcast %296 : vector<1x256xf32> to vector<32x256xf32>
    %301 = arith.mulf %299, %300 : vector<32x256xf32>
    %302 = arith.addf %293, %301 : vector<32x256xf32>
    %c0_172 = arith.constant 0 : index
    %c0_173 = arith.constant 0 : index
    %c841 = arith.constant 841 : index
    %303 = vector.load %arg1[%c0_172, %c0_173, %c841] : memref<1x1x2304xf32, #tpu.memory_space<vmem>>, vector<1x1x256xf32>
    %304 = vector.shape_cast %303 : vector<1x1x256xf32> to vector<1x256xf32>
    %c1_174 = arith.constant 1 : index
    %c0_175 = arith.constant 0 : index
    %c0_176 = arith.constant 0 : index
    %305 = vector.load %arg2[%c1_174, %c0_175, %c0_176] : memref<9x32x1xf32, #tpu.memory_space<vmem>>, vector<1x32x1xf32>
    %306 = vector.shape_cast %305 : vector<1x32x1xf32> to vector<32x1xf32>
    %307 = vector.broadcast %306 : vector<32x1xf32> to vector<32x256xf32>
    %308 = vector.broadcast %304 : vector<1x256xf32> to vector<32x256xf32>
    %309 = arith.mulf %307, %308 : vector<32x256xf32>
    %310 = arith.addf %302, %309 : vector<32x256xf32>
    %c0_177 = arith.constant 0 : index
    %c0_178 = arith.constant 0 : index
    %c842 = arith.constant 842 : index
    %311 = vector.load %arg1[%c0_177, %c0_178, %c842] : memref<1x1x2304xf32, #tpu.memory_space<vmem>>, vector<1x1x256xf32>
    %312 = vector.shape_cast %311 : vector<1x1x256xf32> to vector<1x256xf32>
    %313 = arith.mulf %312, %290 : vector<1x256xf32>
    %c2_179 = arith.constant 2 : index
    %c0_180 = arith.constant 0 : index
    %c0_181 = arith.constant 0 : index
    %314 = vector.load %arg2[%c2_179, %c0_180, %c0_181] : memref<9x32x1xf32, #tpu.memory_space<vmem>>, vector<1x32x1xf32>
    %315 = vector.shape_cast %314 : vector<1x32x1xf32> to vector<32x1xf32>
    %316 = vector.broadcast %315 : vector<32x1xf32> to vector<32x256xf32>
    %317 = vector.broadcast %313 : vector<1x256xf32> to vector<32x256xf32>
    %318 = arith.mulf %316, %317 : vector<32x256xf32>
    %319 = arith.addf %310, %318 : vector<32x256xf32>
    %c0_182 = arith.constant 0 : index
    %c0_183 = arith.constant 0 : index
    %c895 = arith.constant 895 : index
    %320 = vector.load %arg1[%c0_182, %c0_183, %c895] : memref<1x1x2304xf32, #tpu.memory_space<vmem>>, vector<1x1x256xf32>
    %321 = vector.shape_cast %320 : vector<1x1x256xf32> to vector<1x256xf32>
    %322 = arith.mulf %321, %289 : vector<1x256xf32>
    %c3_184 = arith.constant 3 : index
    %c0_185 = arith.constant 0 : index
    %c0_186 = arith.constant 0 : index
    %323 = vector.load %arg2[%c3_184, %c0_185, %c0_186] : memref<9x32x1xf32, #tpu.memory_space<vmem>>, vector<1x32x1xf32>
    %324 = vector.shape_cast %323 : vector<1x32x1xf32> to vector<32x1xf32>
    %325 = vector.broadcast %324 : vector<32x1xf32> to vector<32x256xf32>
    %326 = vector.broadcast %322 : vector<1x256xf32> to vector<32x256xf32>
    %327 = arith.mulf %325, %326 : vector<32x256xf32>
    %328 = arith.addf %319, %327 : vector<32x256xf32>
    %c0_187 = arith.constant 0 : index
    %c0_188 = arith.constant 0 : index
    %c896 = arith.constant 896 : index
    %329 = vector.load %arg1[%c0_187, %c0_188, %c896] : memref<1x1x2304xf32, #tpu.memory_space<vmem>>, vector<1x1x256xf32>
    %330 = vector.shape_cast %329 : vector<1x1x256xf32> to vector<1x256xf32>
    %c4_189 = arith.constant 4 : index
    %c0_190 = arith.constant 0 : index
    %c0_191 = arith.constant 0 : index
    %331 = vector.load %arg2[%c4_189, %c0_190, %c0_191] : memref<9x32x1xf32, #tpu.memory_space<vmem>>, vector<1x32x1xf32>
    %332 = vector.shape_cast %331 : vector<1x32x1xf32> to vector<32x1xf32>
    %333 = vector.broadcast %332 : vector<32x1xf32> to vector<32x256xf32>
    %334 = vector.broadcast %330 : vector<1x256xf32> to vector<32x256xf32>
    %335 = arith.mulf %333, %334 : vector<32x256xf32>
    %336 = arith.addf %328, %335 : vector<32x256xf32>
    %c0_192 = arith.constant 0 : index
    %c0_193 = arith.constant 0 : index
    %c897 = arith.constant 897 : index
    %337 = vector.load %arg1[%c0_192, %c0_193, %c897] : memref<1x1x2304xf32, #tpu.memory_space<vmem>>, vector<1x1x256xf32>
    %338 = vector.shape_cast %337 : vector<1x1x256xf32> to vector<1x256xf32>
    %339 = arith.mulf %338, %290 : vector<1x256xf32>
    %c5_194 = arith.constant 5 : index
    %c0_195 = arith.constant 0 : index
    %c0_196 = arith.constant 0 : index
    %340 = vector.load %arg2[%c5_194, %c0_195, %c0_196] : memref<9x32x1xf32, #tpu.memory_space<vmem>>, vector<1x32x1xf32>
    %341 = vector.shape_cast %340 : vector<1x32x1xf32> to vector<32x1xf32>
    %342 = vector.broadcast %341 : vector<32x1xf32> to vector<32x256xf32>
    %343 = vector.broadcast %339 : vector<1x256xf32> to vector<32x256xf32>
    %344 = arith.mulf %342, %343 : vector<32x256xf32>
    %345 = arith.addf %336, %344 : vector<32x256xf32>
    %c0_197 = arith.constant 0 : index
    %c0_198 = arith.constant 0 : index
    %c950 = arith.constant 950 : index
    %346 = vector.load %arg1[%c0_197, %c0_198, %c950] : memref<1x1x2304xf32, #tpu.memory_space<vmem>>, vector<1x1x256xf32>
    %347 = vector.shape_cast %346 : vector<1x1x256xf32> to vector<1x256xf32>
    %348 = arith.mulf %347, %289 : vector<1x256xf32>
    %c6_199 = arith.constant 6 : index
    %c0_200 = arith.constant 0 : index
    %c0_201 = arith.constant 0 : index
    %349 = vector.load %arg2[%c6_199, %c0_200, %c0_201] : memref<9x32x1xf32, #tpu.memory_space<vmem>>, vector<1x32x1xf32>
    %350 = vector.shape_cast %349 : vector<1x32x1xf32> to vector<32x1xf32>
    %351 = vector.broadcast %350 : vector<32x1xf32> to vector<32x256xf32>
    %352 = vector.broadcast %348 : vector<1x256xf32> to vector<32x256xf32>
    %353 = arith.mulf %351, %352 : vector<32x256xf32>
    %354 = arith.addf %345, %353 : vector<32x256xf32>
    %c0_202 = arith.constant 0 : index
    %c0_203 = arith.constant 0 : index
    %c951 = arith.constant 951 : index
    %355 = vector.load %arg1[%c0_202, %c0_203, %c951] : memref<1x1x2304xf32, #tpu.memory_space<vmem>>, vector<1x1x256xf32>
    %356 = vector.shape_cast %355 : vector<1x1x256xf32> to vector<1x256xf32>
    %c7_204 = arith.constant 7 : index
    %c0_205 = arith.constant 0 : index
    %c0_206 = arith.constant 0 : index
    %357 = vector.load %arg2[%c7_204, %c0_205, %c0_206] : memref<9x32x1xf32, #tpu.memory_space<vmem>>, vector<1x32x1xf32>
    %358 = vector.shape_cast %357 : vector<1x32x1xf32> to vector<32x1xf32>
    %359 = vector.broadcast %358 : vector<32x1xf32> to vector<32x256xf32>
    %360 = vector.broadcast %356 : vector<1x256xf32> to vector<32x256xf32>
    %361 = arith.mulf %359, %360 : vector<32x256xf32>
    %362 = arith.addf %354, %361 : vector<32x256xf32>
    %c0_207 = arith.constant 0 : index
    %c0_208 = arith.constant 0 : index
    %c952 = arith.constant 952 : index
    %363 = vector.load %arg1[%c0_207, %c0_208, %c952] : memref<1x1x2304xf32, #tpu.memory_space<vmem>>, vector<1x1x256xf32>
    %364 = vector.shape_cast %363 : vector<1x1x256xf32> to vector<1x256xf32>
    %365 = arith.mulf %364, %290 : vector<1x256xf32>
    %c8_209 = arith.constant 8 : index
    %c0_210 = arith.constant 0 : index
    %c0_211 = arith.constant 0 : index
    %366 = vector.load %arg2[%c8_209, %c0_210, %c0_211] : memref<9x32x1xf32, #tpu.memory_space<vmem>>, vector<1x32x1xf32>
    %367 = vector.shape_cast %366 : vector<1x32x1xf32> to vector<32x1xf32>
    %368 = vector.broadcast %367 : vector<32x1xf32> to vector<32x256xf32>
    %369 = vector.broadcast %365 : vector<1x256xf32> to vector<32x256xf32>
    %370 = arith.mulf %368, %369 : vector<32x256xf32>
    %371 = arith.addf %362, %370 : vector<32x256xf32>
    %cst_212 = arith.constant dense<0.000000e+00> : vector<32xf32>
    %372 = vector.multi_reduction <add>, %371, %cst_212 [1] : vector<32x256xf32> to vector<32xf32>
    %373 = vector.shape_cast %372 : vector<32xf32> to vector<32x1xf32>
    %374 = arith.addf %281, %373 : vector<32x1xf32>
    %375 = arith.mulf %371, %371 : vector<32x256xf32>
    %cst_213 = arith.constant dense<0.000000e+00> : vector<32xf32>
    %376 = vector.multi_reduction <add>, %375, %cst_213 [1] : vector<32x256xf32> to vector<32xf32>
    %377 = vector.shape_cast %376 : vector<32xf32> to vector<32x1xf32>
    %378 = arith.addf %285, %377 : vector<32x1xf32>
    %c0_214 = arith.constant 0 : index
    %c0_215 = arith.constant 0 : index
    %c896_216 = arith.constant 896 : index
    %379 = vector.load %arg5[%c0_214, %c0_215, %c896_216] : memref<1x32x2304xf32, #tpu.memory_space<vmem>>, vector<1x32x256xf32>
    %380 = vector.shape_cast %379 : vector<1x32x256xf32> to vector<32x256xf32>
    %381 = vector.shape_cast %371 : vector<32x256xf32> to vector<1x32x256xf32>
    tpu.vector_store %arg5[%c0_214, %c0_215, %c896_216], %381 {strides = array<i32>} : memref<1x32x2304xf32, #tpu.memory_space<vmem>>, vector<1x32x256xf32>,
    %c0_217 = arith.constant 0 : index
    %c1024 = arith.constant 1024 : index
    %382 = vector.load %arg4[%c0_217, %c1024] : memref<3x2048xf32, #tpu.memory_space<vmem>>, vector<1x256xf32>
    %c1_218 = arith.constant 1 : index
    %c1024_219 = arith.constant 1024 : index
    %383 = vector.load %arg4[%c1_218, %c1024_219] : memref<3x2048xf32, #tpu.memory_space<vmem>>, vector<1x256xf32>
    %cst_220 = arith.constant 0.000000e+00 : f32
    %384 = vector.broadcast %cst_220 : f32 to vector<32x256xf32>
    %385 = vector.broadcast %0 : vector<32x1xf32> to vector<32x256xf32>
    %386 = arith.addf %384, %385 : vector<32x256xf32>
    %c0_221 = arith.constant 0 : index
    %c0_222 = arith.constant 0 : index
    %c1096 = arith.constant 1096 : index
    %387 = vector.load %arg1[%c0_221, %c0_222, %c1096] : memref<1x1x2304xf32, #tpu.memory_space<vmem>>, vector<1x1x256xf32>
    %388 = vector.shape_cast %387 : vector<1x1x256xf32> to vector<1x256xf32>
    %389 = arith.mulf %388, %382 : vector<1x256xf32>
    %c0_223 = arith.constant 0 : index
    %c0_224 = arith.constant 0 : index
    %c0_225 = arith.constant 0 : index
    %390 = vector.load %arg2[%c0_223, %c0_224, %c0_225] : memref<9x32x1xf32, #tpu.memory_space<vmem>>, vector<1x32x1xf32>
    %391 = vector.shape_cast %390 : vector<1x32x1xf32> to vector<32x1xf32>
    %392 = vector.broadcast %391 : vector<32x1xf32> to vector<32x256xf32>
    %393 = vector.broadcast %389 : vector<1x256xf32> to vector<32x256xf32>
    %394 = arith.mulf %392, %393 : vector<32x256xf32>
    %395 = arith.addf %386, %394 : vector<32x256xf32>
    %c0_226 = arith.constant 0 : index
    %c0_227 = arith.constant 0 : index
    %c1097 = arith.constant 1097 : index
    %396 = vector.load %arg1[%c0_226, %c0_227, %c1097] : memref<1x1x2304xf32, #tpu.memory_space<vmem>>, vector<1x1x256xf32>
    %397 = vector.shape_cast %396 : vector<1x1x256xf32> to vector<1x256xf32>
    %c1_228 = arith.constant 1 : index
    %c0_229 = arith.constant 0 : index
    %c0_230 = arith.constant 0 : index
    %398 = vector.load %arg2[%c1_228, %c0_229, %c0_230] : memref<9x32x1xf32, #tpu.memory_space<vmem>>, vector<1x32x1xf32>
    %399 = vector.shape_cast %398 : vector<1x32x1xf32> to vector<32x1xf32>
    %400 = vector.broadcast %399 : vector<32x1xf32> to vector<32x256xf32>
    %401 = vector.broadcast %397 : vector<1x256xf32> to vector<32x256xf32>
    %402 = arith.mulf %400, %401 : vector<32x256xf32>
    %403 = arith.addf %395, %402 : vector<32x256xf32>
    %c0_231 = arith.constant 0 : index
    %c0_232 = arith.constant 0 : index
    %c1098 = arith.constant 1098 : index
    %404 = vector.load %arg1[%c0_231, %c0_232, %c1098] : memref<1x1x2304xf32, #tpu.memory_space<vmem>>, vector<1x1x256xf32>
    %405 = vector.shape_cast %404 : vector<1x1x256xf32> to vector<1x256xf32>
    %406 = arith.mulf %405, %383 : vector<1x256xf32>
    %c2_233 = arith.constant 2 : index
    %c0_234 = arith.constant 0 : index
    %c0_235 = arith.constant 0 : index
    %407 = vector.load %arg2[%c2_233, %c0_234, %c0_235] : memref<9x32x1xf32, #tpu.memory_space<vmem>>, vector<1x32x1xf32>
    %408 = vector.shape_cast %407 : vector<1x32x1xf32> to vector<32x1xf32>
    %409 = vector.broadcast %408 : vector<32x1xf32> to vector<32x256xf32>
    %410 = vector.broadcast %406 : vector<1x256xf32> to vector<32x256xf32>
    %411 = arith.mulf %409, %410 : vector<32x256xf32>
    %412 = arith.addf %403, %411 : vector<32x256xf32>
    %c0_236 = arith.constant 0 : index
    %c0_237 = arith.constant 0 : index
    %c1151 = arith.constant 1151 : index
    %413 = vector.load %arg1[%c0_236, %c0_237, %c1151] : memref<1x1x2304xf32, #tpu.memory_space<vmem>>, vector<1x1x256xf32>
    %414 = vector.shape_cast %413 : vector<1x1x256xf32> to vector<1x256xf32>
    %415 = arith.mulf %414, %382 : vector<1x256xf32>
    %c3_238 = arith.constant 3 : index
    %c0_239 = arith.constant 0 : index
    %c0_240 = arith.constant 0 : index
    %416 = vector.load %arg2[%c3_238, %c0_239, %c0_240] : memref<9x32x1xf32, #tpu.memory_space<vmem>>, vector<1x32x1xf32>
    %417 = vector.shape_cast %416 : vector<1x32x1xf32> to vector<32x1xf32>
    %418 = vector.broadcast %417 : vector<32x1xf32> to vector<32x256xf32>
    %419 = vector.broadcast %415 : vector<1x256xf32> to vector<32x256xf32>
    %420 = arith.mulf %418, %419 : vector<32x256xf32>
    %421 = arith.addf %412, %420 : vector<32x256xf32>
    %c0_241 = arith.constant 0 : index
    %c0_242 = arith.constant 0 : index
    %c1152 = arith.constant 1152 : index
    %422 = vector.load %arg1[%c0_241, %c0_242, %c1152] : memref<1x1x2304xf32, #tpu.memory_space<vmem>>, vector<1x1x256xf32>
    %423 = vector.shape_cast %422 : vector<1x1x256xf32> to vector<1x256xf32>
    %c4_243 = arith.constant 4 : index
    %c0_244 = arith.constant 0 : index
    %c0_245 = arith.constant 0 : index
    %424 = vector.load %arg2[%c4_243, %c0_244, %c0_245] : memref<9x32x1xf32, #tpu.memory_space<vmem>>, vector<1x32x1xf32>
    %425 = vector.shape_cast %424 : vector<1x32x1xf32> to vector<32x1xf32>
    %426 = vector.broadcast %425 : vector<32x1xf32> to vector<32x256xf32>
    %427 = vector.broadcast %423 : vector<1x256xf32> to vector<32x256xf32>
    %428 = arith.mulf %426, %427 : vector<32x256xf32>
    %429 = arith.addf %421, %428 : vector<32x256xf32>
    %c0_246 = arith.constant 0 : index
    %c0_247 = arith.constant 0 : index
    %c1153 = arith.constant 1153 : index
    %430 = vector.load %arg1[%c0_246, %c0_247, %c1153] : memref<1x1x2304xf32, #tpu.memory_space<vmem>>, vector<1x1x256xf32>
    %431 = vector.shape_cast %430 : vector<1x1x256xf32> to vector<1x256xf32>
    %432 = arith.mulf %431, %383 : vector<1x256xf32>
    %c5_248 = arith.constant 5 : index
    %c0_249 = arith.constant 0 : index
    %c0_250 = arith.constant 0 : index
    %433 = vector.load %arg2[%c5_248, %c0_249, %c0_250] : memref<9x32x1xf32, #tpu.memory_space<vmem>>, vector<1x32x1xf32>
    %434 = vector.shape_cast %433 : vector<1x32x1xf32> to vector<32x1xf32>
    %435 = vector.broadcast %434 : vector<32x1xf32> to vector<32x256xf32>
    %436 = vector.broadcast %432 : vector<1x256xf32> to vector<32x256xf32>
    %437 = arith.mulf %435, %436 : vector<32x256xf32>
    %438 = arith.addf %429, %437 : vector<32x256xf32>
    %c0_251 = arith.constant 0 : index
    %c0_252 = arith.constant 0 : index
    %c1206 = arith.constant 1206 : index
    %439 = vector.load %arg1[%c0_251, %c0_252, %c1206] : memref<1x1x2304xf32, #tpu.memory_space<vmem>>, vector<1x1x256xf32>
    %440 = vector.shape_cast %439 : vector<1x1x256xf32> to vector<1x256xf32>
    %441 = arith.mulf %440, %382 : vector<1x256xf32>
    %c6_253 = arith.constant 6 : index
    %c0_254 = arith.constant 0 : index
    %c0_255 = arith.constant 0 : index
    %442 = vector.load %arg2[%c6_253, %c0_254, %c0_255] : memref<9x32x1xf32, #tpu.memory_space<vmem>>, vector<1x32x1xf32>
    %443 = vector.shape_cast %442 : vector<1x32x1xf32> to vector<32x1xf32>
    %444 = vector.broadcast %443 : vector<32x1xf32> to vector<32x256xf32>
    %445 = vector.broadcast %441 : vector<1x256xf32> to vector<32x256xf32>
    %446 = arith.mulf %444, %445 : vector<32x256xf32>
    %447 = arith.addf %438, %446 : vector<32x256xf32>
    %c0_256 = arith.constant 0 : index
    %c0_257 = arith.constant 0 : index
    %c1207 = arith.constant 1207 : index
    %448 = vector.load %arg1[%c0_256, %c0_257, %c1207] : memref<1x1x2304xf32, #tpu.memory_space<vmem>>, vector<1x1x256xf32>
    %449 = vector.shape_cast %448 : vector<1x1x256xf32> to vector<1x256xf32>
    %c7_258 = arith.constant 7 : index
    %c0_259 = arith.constant 0 : index
    %c0_260 = arith.constant 0 : index
    %450 = vector.load %arg2[%c7_258, %c0_259, %c0_260] : memref<9x32x1xf32, #tpu.memory_space<vmem>>, vector<1x32x1xf32>
    %451 = vector.shape_cast %450 : vector<1x32x1xf32> to vector<32x1xf32>
    %452 = vector.broadcast %451 : vector<32x1xf32> to vector<32x256xf32>
    %453 = vector.broadcast %449 : vector<1x256xf32> to vector<32x256xf32>
    %454 = arith.mulf %452, %453 : vector<32x256xf32>
    %455 = arith.addf %447, %454 : vector<32x256xf32>
    %c0_261 = arith.constant 0 : index
    %c0_262 = arith.constant 0 : index
    %c1208 = arith.constant 1208 : index
    %456 = vector.load %arg1[%c0_261, %c0_262, %c1208] : memref<1x1x2304xf32, #tpu.memory_space<vmem>>, vector<1x1x256xf32>
    %457 = vector.shape_cast %456 : vector<1x1x256xf32> to vector<1x256xf32>
    %458 = arith.mulf %457, %383 : vector<1x256xf32>
    %c8_263 = arith.constant 8 : index
    %c0_264 = arith.constant 0 : index
    %c0_265 = arith.constant 0 : index
    %459 = vector.load %arg2[%c8_263, %c0_264, %c0_265] : memref<9x32x1xf32, #tpu.memory_space<vmem>>, vector<1x32x1xf32>
    %460 = vector.shape_cast %459 : vector<1x32x1xf32> to vector<32x1xf32>
    %461 = vector.broadcast %460 : vector<32x1xf32> to vector<32x256xf32>
    %462 = vector.broadcast %458 : vector<1x256xf32> to vector<32x256xf32>
    %463 = arith.mulf %461, %462 : vector<32x256xf32>
    %464 = arith.addf %455, %463 : vector<32x256xf32>
    %cst_266 = arith.constant dense<0.000000e+00> : vector<32xf32>
    %465 = vector.multi_reduction <add>, %464, %cst_266 [1] : vector<32x256xf32> to vector<32xf32>
    %466 = vector.shape_cast %465 : vector<32xf32> to vector<32x1xf32>
    %467 = arith.addf %374, %466 : vector<32x1xf32>
    %468 = arith.mulf %464, %464 : vector<32x256xf32>
    %cst_267 = arith.constant dense<0.000000e+00> : vector<32xf32>
    %469 = vector.multi_reduction <add>, %468, %cst_267 [1] : vector<32x256xf32> to vector<32xf32>
    %470 = vector.shape_cast %469 : vector<32xf32> to vector<32x1xf32>
    %471 = arith.addf %378, %470 : vector<32x1xf32>
    %c0_268 = arith.constant 0 : index
    %c0_269 = arith.constant 0 : index
    %c1152_270 = arith.constant 1152 : index
    %472 = vector.load %arg5[%c0_268, %c0_269, %c1152_270] : memref<1x32x2304xf32, #tpu.memory_space<vmem>>, vector<1x32x256xf32>
    %473 = vector.shape_cast %472 : vector<1x32x256xf32> to vector<32x256xf32>
    %474 = vector.shape_cast %464 : vector<32x256xf32> to vector<1x32x256xf32>
    tpu.vector_store %arg5[%c0_268, %c0_269, %c1152_270], %474 {strides = array<i32>} : memref<1x32x2304xf32, #tpu.memory_space<vmem>>, vector<1x32x256xf32>,
    %c0_271 = arith.constant 0 : index
    %c1280 = arith.constant 1280 : index
    %475 = vector.load %arg4[%c0_271, %c1280] : memref<3x2048xf32, #tpu.memory_space<vmem>>, vector<1x256xf32>
    %c1_272 = arith.constant 1 : index
    %c1280_273 = arith.constant 1280 : index
    %476 = vector.load %arg4[%c1_272, %c1280_273] : memref<3x2048xf32, #tpu.memory_space<vmem>>, vector<1x256xf32>
    %cst_274 = arith.constant 0.000000e+00 : f32
    %477 = vector.broadcast %cst_274 : f32 to vector<32x256xf32>
    %478 = vector.broadcast %0 : vector<32x1xf32> to vector<32x256xf32>
    %479 = arith.addf %477, %478 : vector<32x256xf32>
    %c0_275 = arith.constant 0 : index
    %c0_276 = arith.constant 0 : index
    %c1352 = arith.constant 1352 : index
    %480 = vector.load %arg1[%c0_275, %c0_276, %c1352] : memref<1x1x2304xf32, #tpu.memory_space<vmem>>, vector<1x1x256xf32>
    %481 = vector.shape_cast %480 : vector<1x1x256xf32> to vector<1x256xf32>
    %482 = arith.mulf %481, %475 : vector<1x256xf32>
    %c0_277 = arith.constant 0 : index
    %c0_278 = arith.constant 0 : index
    %c0_279 = arith.constant 0 : index
    %483 = vector.load %arg2[%c0_277, %c0_278, %c0_279] : memref<9x32x1xf32, #tpu.memory_space<vmem>>, vector<1x32x1xf32>
    %484 = vector.shape_cast %483 : vector<1x32x1xf32> to vector<32x1xf32>
    %485 = vector.broadcast %484 : vector<32x1xf32> to vector<32x256xf32>
    %486 = vector.broadcast %482 : vector<1x256xf32> to vector<32x256xf32>
    %487 = arith.mulf %485, %486 : vector<32x256xf32>
    %488 = arith.addf %479, %487 : vector<32x256xf32>
    %c0_280 = arith.constant 0 : index
    %c0_281 = arith.constant 0 : index
    %c1353 = arith.constant 1353 : index
    %489 = vector.load %arg1[%c0_280, %c0_281, %c1353] : memref<1x1x2304xf32, #tpu.memory_space<vmem>>, vector<1x1x256xf32>
    %490 = vector.shape_cast %489 : vector<1x1x256xf32> to vector<1x256xf32>
    %c1_282 = arith.constant 1 : index
    %c0_283 = arith.constant 0 : index
    %c0_284 = arith.constant 0 : index
    %491 = vector.load %arg2[%c1_282, %c0_283, %c0_284] : memref<9x32x1xf32, #tpu.memory_space<vmem>>, vector<1x32x1xf32>
    %492 = vector.shape_cast %491 : vector<1x32x1xf32> to vector<32x1xf32>
    %493 = vector.broadcast %492 : vector<32x1xf32> to vector<32x256xf32>
    %494 = vector.broadcast %490 : vector<1x256xf32> to vector<32x256xf32>
    %495 = arith.mulf %493, %494 : vector<32x256xf32>
    %496 = arith.addf %488, %495 : vector<32x256xf32>
    %c0_285 = arith.constant 0 : index
    %c0_286 = arith.constant 0 : index
    %c1354 = arith.constant 1354 : index
    %497 = vector.load %arg1[%c0_285, %c0_286, %c1354] : memref<1x1x2304xf32, #tpu.memory_space<vmem>>, vector<1x1x256xf32>
    %498 = vector.shape_cast %497 : vector<1x1x256xf32> to vector<1x256xf32>
    %499 = arith.mulf %498, %476 : vector<1x256xf32>
    %c2_287 = arith.constant 2 : index
    %c0_288 = arith.constant 0 : index
    %c0_289 = arith.constant 0 : index
    %500 = vector.load %arg2[%c2_287, %c0_288, %c0_289] : memref<9x32x1xf32, #tpu.memory_space<vmem>>, vector<1x32x1xf32>
    %501 = vector.shape_cast %500 : vector<1x32x1xf32> to vector<32x1xf32>
    %502 = vector.broadcast %501 : vector<32x1xf32> to vector<32x256xf32>
    %503 = vector.broadcast %499 : vector<1x256xf32> to vector<32x256xf32>
    %504 = arith.mulf %502, %503 : vector<32x256xf32>
    %505 = arith.addf %496, %504 : vector<32x256xf32>
    %c0_290 = arith.constant 0 : index
    %c0_291 = arith.constant 0 : index
    %c1407 = arith.constant 1407 : index
    %506 = vector.load %arg1[%c0_290, %c0_291, %c1407] : memref<1x1x2304xf32, #tpu.memory_space<vmem>>, vector<1x1x256xf32>
    %507 = vector.shape_cast %506 : vector<1x1x256xf32> to vector<1x256xf32>
    %508 = arith.mulf %507, %475 : vector<1x256xf32>
    %c3_292 = arith.constant 3 : index
    %c0_293 = arith.constant 0 : index
    %c0_294 = arith.constant 0 : index
    %509 = vector.load %arg2[%c3_292, %c0_293, %c0_294] : memref<9x32x1xf32, #tpu.memory_space<vmem>>, vector<1x32x1xf32>
    %510 = vector.shape_cast %509 : vector<1x32x1xf32> to vector<32x1xf32>
    %511 = vector.broadcast %510 : vector<32x1xf32> to vector<32x256xf32>
    %512 = vector.broadcast %508 : vector<1x256xf32> to vector<32x256xf32>
    %513 = arith.mulf %511, %512 : vector<32x256xf32>
    %514 = arith.addf %505, %513 : vector<32x256xf32>
    %c0_295 = arith.constant 0 : index
    %c0_296 = arith.constant 0 : index
    %c1408 = arith.constant 1408 : index
    %515 = vector.load %arg1[%c0_295, %c0_296, %c1408] : memref<1x1x2304xf32, #tpu.memory_space<vmem>>, vector<1x1x256xf32>
    %516 = vector.shape_cast %515 : vector<1x1x256xf32> to vector<1x256xf32>
    %c4_297 = arith.constant 4 : index
    %c0_298 = arith.constant 0 : index
    %c0_299 = arith.constant 0 : index
    %517 = vector.load %arg2[%c4_297, %c0_298, %c0_299] : memref<9x32x1xf32, #tpu.memory_space<vmem>>, vector<1x32x1xf32>
    %518 = vector.shape_cast %517 : vector<1x32x1xf32> to vector<32x1xf32>
    %519 = vector.broadcast %518 : vector<32x1xf32> to vector<32x256xf32>
    %520 = vector.broadcast %516 : vector<1x256xf32> to vector<32x256xf32>
    %521 = arith.mulf %519, %520 : vector<32x256xf32>
    %522 = arith.addf %514, %521 : vector<32x256xf32>
    %c0_300 = arith.constant 0 : index
    %c0_301 = arith.constant 0 : index
    %c1409 = arith.constant 1409 : index
    %523 = vector.load %arg1[%c0_300, %c0_301, %c1409] : memref<1x1x2304xf32, #tpu.memory_space<vmem>>, vector<1x1x256xf32>
    %524 = vector.shape_cast %523 : vector<1x1x256xf32> to vector<1x256xf32>
    %525 = arith.mulf %524, %476 : vector<1x256xf32>
    %c5_302 = arith.constant 5 : index
    %c0_303 = arith.constant 0 : index
    %c0_304 = arith.constant 0 : index
    %526 = vector.load %arg2[%c5_302, %c0_303, %c0_304] : memref<9x32x1xf32, #tpu.memory_space<vmem>>, vector<1x32x1xf32>
    %527 = vector.shape_cast %526 : vector<1x32x1xf32> to vector<32x1xf32>
    %528 = vector.broadcast %527 : vector<32x1xf32> to vector<32x256xf32>
    %529 = vector.broadcast %525 : vector<1x256xf32> to vector<32x256xf32>
    %530 = arith.mulf %528, %529 : vector<32x256xf32>
    %531 = arith.addf %522, %530 : vector<32x256xf32>
    %c0_305 = arith.constant 0 : index
    %c0_306 = arith.constant 0 : index
    %c1462 = arith.constant 1462 : index
    %532 = vector.load %arg1[%c0_305, %c0_306, %c1462] : memref<1x1x2304xf32, #tpu.memory_space<vmem>>, vector<1x1x256xf32>
    %533 = vector.shape_cast %532 : vector<1x1x256xf32> to vector<1x256xf32>
    %534 = arith.mulf %533, %475 : vector<1x256xf32>
    %c6_307 = arith.constant 6 : index
    %c0_308 = arith.constant 0 : index
    %c0_309 = arith.constant 0 : index
    %535 = vector.load %arg2[%c6_307, %c0_308, %c0_309] : memref<9x32x1xf32, #tpu.memory_space<vmem>>, vector<1x32x1xf32>
    %536 = vector.shape_cast %535 : vector<1x32x1xf32> to vector<32x1xf32>
    %537 = vector.broadcast %536 : vector<32x1xf32> to vector<32x256xf32>
    %538 = vector.broadcast %534 : vector<1x256xf32> to vector<32x256xf32>
    %539 = arith.mulf %537, %538 : vector<32x256xf32>
    %540 = arith.addf %531, %539 : vector<32x256xf32>
    %c0_310 = arith.constant 0 : index
    %c0_311 = arith.constant 0 : index
    %c1463 = arith.constant 1463 : index
    %541 = vector.load %arg1[%c0_310, %c0_311, %c1463] : memref<1x1x2304xf32, #tpu.memory_space<vmem>>, vector<1x1x256xf32>
    %542 = vector.shape_cast %541 : vector<1x1x256xf32> to vector<1x256xf32>
    %c7_312 = arith.constant 7 : index
    %c0_313 = arith.constant 0 : index
    %c0_314 = arith.constant 0 : index
    %543 = vector.load %arg2[%c7_312, %c0_313, %c0_314] : memref<9x32x1xf32, #tpu.memory_space<vmem>>, vector<1x32x1xf32>
    %544 = vector.shape_cast %543 : vector<1x32x1xf32> to vector<32x1xf32>
    %545 = vector.broadcast %544 : vector<32x1xf32> to vector<32x256xf32>
    %546 = vector.broadcast %542 : vector<1x256xf32> to vector<32x256xf32>
    %547 = arith.mulf %545, %546 : vector<32x256xf32>
    %548 = arith.addf %540, %547 : vector<32x256xf32>
    %c0_315 = arith.constant 0 : index
    %c0_316 = arith.constant 0 : index
    %c1464 = arith.constant 1464 : index
    %549 = vector.load %arg1[%c0_315, %c0_316, %c1464] : memref<1x1x2304xf32, #tpu.memory_space<vmem>>, vector<1x1x256xf32>
    %550 = vector.shape_cast %549 : vector<1x1x256xf32> to vector<1x256xf32>
    %551 = arith.mulf %550, %476 : vector<1x256xf32>
    %c8_317 = arith.constant 8 : index
    %c0_318 = arith.constant 0 : index
    %c0_319 = arith.constant 0 : index
    %552 = vector.load %arg2[%c8_317, %c0_318, %c0_319] : memref<9x32x1xf32, #tpu.memory_space<vmem>>, vector<1x32x1xf32>
    %553 = vector.shape_cast %552 : vector<1x32x1xf32> to vector<32x1xf32>
    %554 = vector.broadcast %553 : vector<32x1xf32> to vector<32x256xf32>
    %555 = vector.broadcast %551 : vector<1x256xf32> to vector<32x256xf32>
    %556 = arith.mulf %554, %555 : vector<32x256xf32>
    %557 = arith.addf %548, %556 : vector<32x256xf32>
    %cst_320 = arith.constant dense<0.000000e+00> : vector<32xf32>
    %558 = vector.multi_reduction <add>, %557, %cst_320 [1] : vector<32x256xf32> to vector<32xf32>
    %559 = vector.shape_cast %558 : vector<32xf32> to vector<32x1xf32>
    %560 = arith.addf %467, %559 : vector<32x1xf32>
    %561 = arith.mulf %557, %557 : vector<32x256xf32>
    %cst_321 = arith.constant dense<0.000000e+00> : vector<32xf32>
    %562 = vector.multi_reduction <add>, %561, %cst_321 [1] : vector<32x256xf32> to vector<32xf32>
    %563 = vector.shape_cast %562 : vector<32xf32> to vector<32x1xf32>
    %564 = arith.addf %471, %563 : vector<32x1xf32>
    %c0_322 = arith.constant 0 : index
    %c0_323 = arith.constant 0 : index
    %c1408_324 = arith.constant 1408 : index
    %565 = vector.load %arg5[%c0_322, %c0_323, %c1408_324] : memref<1x32x2304xf32, #tpu.memory_space<vmem>>, vector<1x32x256xf32>
    %566 = vector.shape_cast %565 : vector<1x32x256xf32> to vector<32x256xf32>
    %567 = vector.shape_cast %557 : vector<32x256xf32> to vector<1x32x256xf32>
    tpu.vector_store %arg5[%c0_322, %c0_323, %c1408_324], %567 {strides = array<i32>} : memref<1x32x2304xf32, #tpu.memory_space<vmem>>, vector<1x32x256xf32>,
    %c0_325 = arith.constant 0 : index
    %c1536 = arith.constant 1536 : index
    %568 = vector.load %arg4[%c0_325, %c1536] : memref<3x2048xf32, #tpu.memory_space<vmem>>, vector<1x256xf32>
    %c1_326 = arith.constant 1 : index
    %c1536_327 = arith.constant 1536 : index
    %569 = vector.load %arg4[%c1_326, %c1536_327] : memref<3x2048xf32, #tpu.memory_space<vmem>>, vector<1x256xf32>
    %cst_328 = arith.constant 0.000000e+00 : f32
    %570 = vector.broadcast %cst_328 : f32 to vector<32x256xf32>
    %571 = vector.broadcast %0 : vector<32x1xf32> to vector<32x256xf32>
    %572 = arith.addf %570, %571 : vector<32x256xf32>
    %c0_329 = arith.constant 0 : index
    %c0_330 = arith.constant 0 : index
    %c1608 = arith.constant 1608 : index
    %573 = vector.load %arg1[%c0_329, %c0_330, %c1608] : memref<1x1x2304xf32, #tpu.memory_space<vmem>>, vector<1x1x256xf32>
    %574 = vector.shape_cast %573 : vector<1x1x256xf32> to vector<1x256xf32>
    %575 = arith.mulf %574, %568 : vector<1x256xf32>
    %c0_331 = arith.constant 0 : index
    %c0_332 = arith.constant 0 : index
    %c0_333 = arith.constant 0 : index
    %576 = vector.load %arg2[%c0_331, %c0_332, %c0_333] : memref<9x32x1xf32, #tpu.memory_space<vmem>>, vector<1x32x1xf32>
    %577 = vector.shape_cast %576 : vector<1x32x1xf32> to vector<32x1xf32>
    %578 = vector.broadcast %577 : vector<32x1xf32> to vector<32x256xf32>
    %579 = vector.broadcast %575 : vector<1x256xf32> to vector<32x256xf32>
    %580 = arith.mulf %578, %579 : vector<32x256xf32>
    %581 = arith.addf %572, %580 : vector<32x256xf32>
    %c0_334 = arith.constant 0 : index
    %c0_335 = arith.constant 0 : index
    %c1609 = arith.constant 1609 : index
    %582 = vector.load %arg1[%c0_334, %c0_335, %c1609] : memref<1x1x2304xf32, #tpu.memory_space<vmem>>, vector<1x1x256xf32>
    %583 = vector.shape_cast %582 : vector<1x1x256xf32> to vector<1x256xf32>
    %c1_336 = arith.constant 1 : index
    %c0_337 = arith.constant 0 : index
    %c0_338 = arith.constant 0 : index
    %584 = vector.load %arg2[%c1_336, %c0_337, %c0_338] : memref<9x32x1xf32, #tpu.memory_space<vmem>>, vector<1x32x1xf32>
    %585 = vector.shape_cast %584 : vector<1x32x1xf32> to vector<32x1xf32>
    %586 = vector.broadcast %585 : vector<32x1xf32> to vector<32x256xf32>
    %587 = vector.broadcast %583 : vector<1x256xf32> to vector<32x256xf32>
    %588 = arith.mulf %586, %587 : vector<32x256xf32>
    %589 = arith.addf %581, %588 : vector<32x256xf32>
    %c0_339 = arith.constant 0 : index
    %c0_340 = arith.constant 0 : index
    %c1610 = arith.constant 1610 : index
    %590 = vector.load %arg1[%c0_339, %c0_340, %c1610] : memref<1x1x2304xf32, #tpu.memory_space<vmem>>, vector<1x1x256xf32>
    %591 = vector.shape_cast %590 : vector<1x1x256xf32> to vector<1x256xf32>
    %592 = arith.mulf %591, %569 : vector<1x256xf32>
    %c2_341 = arith.constant 2 : index
    %c0_342 = arith.constant 0 : index
    %c0_343 = arith.constant 0 : index
    %593 = vector.load %arg2[%c2_341, %c0_342, %c0_343] : memref<9x32x1xf32, #tpu.memory_space<vmem>>, vector<1x32x1xf32>
    %594 = vector.shape_cast %593 : vector<1x32x1xf32> to vector<32x1xf32>
    %595 = vector.broadcast %594 : vector<32x1xf32> to vector<32x256xf32>
    %596 = vector.broadcast %592 : vector<1x256xf32> to vector<32x256xf32>
    %597 = arith.mulf %595, %596 : vector<32x256xf32>
    %598 = arith.addf %589, %597 : vector<32x256xf32>
    %c0_344 = arith.constant 0 : index
    %c0_345 = arith.constant 0 : index
    %c1663 = arith.constant 1663 : index
    %599 = vector.load %arg1[%c0_344, %c0_345, %c1663] : memref<1x1x2304xf32, #tpu.memory_space<vmem>>, vector<1x1x256xf32>
    %600 = vector.shape_cast %599 : vector<1x1x256xf32> to vector<1x256xf32>
    %601 = arith.mulf %600, %568 : vector<1x256xf32>
    %c3_346 = arith.constant 3 : index
    %c0_347 = arith.constant 0 : index
    %c0_348 = arith.constant 0 : index
    %602 = vector.load %arg2[%c3_346, %c0_347, %c0_348] : memref<9x32x1xf32, #tpu.memory_space<vmem>>, vector<1x32x1xf32>
    %603 = vector.shape_cast %602 : vector<1x32x1xf32> to vector<32x1xf32>
    %604 = vector.broadcast %603 : vector<32x1xf32> to vector<32x256xf32>
    %605 = vector.broadcast %601 : vector<1x256xf32> to vector<32x256xf32>
    %606 = arith.mulf %604, %605 : vector<32x256xf32>
    %607 = arith.addf %598, %606 : vector<32x256xf32>
    %c0_349 = arith.constant 0 : index
    %c0_350 = arith.constant 0 : index
    %c1664 = arith.constant 1664 : index
    %608 = vector.load %arg1[%c0_349, %c0_350, %c1664] : memref<1x1x2304xf32, #tpu.memory_space<vmem>>, vector<1x1x256xf32>
    %609 = vector.shape_cast %608 : vector<1x1x256xf32> to vector<1x256xf32>
    %c4_351 = arith.constant 4 : index
    %c0_352 = arith.constant 0 : index
    %c0_353 = arith.constant 0 : index
    %610 = vector.load %arg2[%c4_351, %c0_352, %c0_353] : memref<9x32x1xf32, #tpu.memory_space<vmem>>, vector<1x32x1xf32>
    %611 = vector.shape_cast %610 : vector<1x32x1xf32> to vector<32x1xf32>
    %612 = vector.broadcast %611 : vector<32x1xf32> to vector<32x256xf32>
    %613 = vector.broadcast %609 : vector<1x256xf32> to vector<32x256xf32>
    %614 = arith.mulf %612, %613 : vector<32x256xf32>
    %615 = arith.addf %607, %614 : vector<32x256xf32>
    %c0_354 = arith.constant 0 : index
    %c0_355 = arith.constant 0 : index
    %c1665 = arith.constant 1665 : index
    %616 = vector.load %arg1[%c0_354, %c0_355, %c1665] : memref<1x1x2304xf32, #tpu.memory_space<vmem>>, vector<1x1x256xf32>
    %617 = vector.shape_cast %616 : vector<1x1x256xf32> to vector<1x256xf32>
    %618 = arith.mulf %617, %569 : vector<1x256xf32>
    %c5_356 = arith.constant 5 : index
    %c0_357 = arith.constant 0 : index
    %c0_358 = arith.constant 0 : index
    %619 = vector.load %arg2[%c5_356, %c0_357, %c0_358] : memref<9x32x1xf32, #tpu.memory_space<vmem>>, vector<1x32x1xf32>
    %620 = vector.shape_cast %619 : vector<1x32x1xf32> to vector<32x1xf32>
    %621 = vector.broadcast %620 : vector<32x1xf32> to vector<32x256xf32>
    %622 = vector.broadcast %618 : vector<1x256xf32> to vector<32x256xf32>
    %623 = arith.mulf %621, %622 : vector<32x256xf32>
    %624 = arith.addf %615, %623 : vector<32x256xf32>
    %c0_359 = arith.constant 0 : index
    %c0_360 = arith.constant 0 : index
    %c1718 = arith.constant 1718 : index
    %625 = vector.load %arg1[%c0_359, %c0_360, %c1718] : memref<1x1x2304xf32, #tpu.memory_space<vmem>>, vector<1x1x256xf32>
    %626 = vector.shape_cast %625 : vector<1x1x256xf32> to vector<1x256xf32>
    %627 = arith.mulf %626, %568 : vector<1x256xf32>
    %c6_361 = arith.constant 6 : index
    %c0_362 = arith.constant 0 : index
    %c0_363 = arith.constant 0 : index
    %628 = vector.load %arg2[%c6_361, %c0_362, %c0_363] : memref<9x32x1xf32, #tpu.memory_space<vmem>>, vector<1x32x1xf32>
    %629 = vector.shape_cast %628 : vector<1x32x1xf32> to vector<32x1xf32>
    %630 = vector.broadcast %629 : vector<32x1xf32> to vector<32x256xf32>
    %631 = vector.broadcast %627 : vector<1x256xf32> to vector<32x256xf32>
    %632 = arith.mulf %630, %631 : vector<32x256xf32>
    %633 = arith.addf %624, %632 : vector<32x256xf32>
    %c0_364 = arith.constant 0 : index
    %c0_365 = arith.constant 0 : index
    %c1719 = arith.constant 1719 : index
    %634 = vector.load %arg1[%c0_364, %c0_365, %c1719] : memref<1x1x2304xf32, #tpu.memory_space<vmem>>, vector<1x1x256xf32>
    %635 = vector.shape_cast %634 : vector<1x1x256xf32> to vector<1x256xf32>
    %c7_366 = arith.constant 7 : index
    %c0_367 = arith.constant 0 : index
    %c0_368 = arith.constant 0 : index
    %636 = vector.load %arg2[%c7_366, %c0_367, %c0_368] : memref<9x32x1xf32, #tpu.memory_space<vmem>>, vector<1x32x1xf32>
    %637 = vector.shape_cast %636 : vector<1x32x1xf32> to vector<32x1xf32>
    %638 = vector.broadcast %637 : vector<32x1xf32> to vector<32x256xf32>
    %639 = vector.broadcast %635 : vector<1x256xf32> to vector<32x256xf32>
    %640 = arith.mulf %638, %639 : vector<32x256xf32>
    %641 = arith.addf %633, %640 : vector<32x256xf32>
    %c0_369 = arith.constant 0 : index
    %c0_370 = arith.constant 0 : index
    %c1720 = arith.constant 1720 : index
    %642 = vector.load %arg1[%c0_369, %c0_370, %c1720] : memref<1x1x2304xf32, #tpu.memory_space<vmem>>, vector<1x1x256xf32>
    %643 = vector.shape_cast %642 : vector<1x1x256xf32> to vector<1x256xf32>
    %644 = arith.mulf %643, %569 : vector<1x256xf32>
    %c8_371 = arith.constant 8 : index
    %c0_372 = arith.constant 0 : index
    %c0_373 = arith.constant 0 : index
    %645 = vector.load %arg2[%c8_371, %c0_372, %c0_373] : memref<9x32x1xf32, #tpu.memory_space<vmem>>, vector<1x32x1xf32>
    %646 = vector.shape_cast %645 : vector<1x32x1xf32> to vector<32x1xf32>
    %647 = vector.broadcast %646 : vector<32x1xf32> to vector<32x256xf32>
    %648 = vector.broadcast %644 : vector<1x256xf32> to vector<32x256xf32>
    %649 = arith.mulf %647, %648 : vector<32x256xf32>
    %650 = arith.addf %641, %649 : vector<32x256xf32>
    %cst_374 = arith.constant dense<0.000000e+00> : vector<32xf32>
    %651 = vector.multi_reduction <add>, %650, %cst_374 [1] : vector<32x256xf32> to vector<32xf32>
    %652 = vector.shape_cast %651 : vector<32xf32> to vector<32x1xf32>
    %653 = arith.addf %560, %652 : vector<32x1xf32>
    %654 = arith.mulf %650, %650 : vector<32x256xf32>
    %cst_375 = arith.constant dense<0.000000e+00> : vector<32xf32>
    %655 = vector.multi_reduction <add>, %654, %cst_375 [1] : vector<32x256xf32> to vector<32xf32>
    %656 = vector.shape_cast %655 : vector<32xf32> to vector<32x1xf32>
    %657 = arith.addf %564, %656 : vector<32x1xf32>
    %c0_376 = arith.constant 0 : index
    %c0_377 = arith.constant 0 : index
    %c1664_378 = arith.constant 1664 : index
    %658 = vector.load %arg5[%c0_376, %c0_377, %c1664_378] : memref<1x32x2304xf32, #tpu.memory_space<vmem>>, vector<1x32x256xf32>
    %659 = vector.shape_cast %658 : vector<1x32x256xf32> to vector<32x256xf32>
    %660 = vector.shape_cast %650 : vector<32x256xf32> to vector<1x32x256xf32>
    tpu.vector_store %arg5[%c0_376, %c0_377, %c1664_378], %660 {strides = array<i32>} : memref<1x32x2304xf32, #tpu.memory_space<vmem>>, vector<1x32x256xf32>,
    %c0_379 = arith.constant 0 : index
    %c1792 = arith.constant 1792 : index
    %661 = vector.load %arg4[%c0_379, %c1792] : memref<3x2048xf32, #tpu.memory_space<vmem>>, vector<1x256xf32>
    %c1_380 = arith.constant 1 : index
    %c1792_381 = arith.constant 1792 : index
    %662 = vector.load %arg4[%c1_380, %c1792_381] : memref<3x2048xf32, #tpu.memory_space<vmem>>, vector<1x256xf32>
    %cst_382 = arith.constant 0.000000e+00 : f32
    %663 = vector.broadcast %cst_382 : f32 to vector<32x256xf32>
    %664 = vector.broadcast %0 : vector<32x1xf32> to vector<32x256xf32>
    %665 = arith.addf %663, %664 : vector<32x256xf32>
    %c0_383 = arith.constant 0 : index
    %c0_384 = arith.constant 0 : index
    %c1864 = arith.constant 1864 : index
    %666 = vector.load %arg1[%c0_383, %c0_384, %c1864] : memref<1x1x2304xf32, #tpu.memory_space<vmem>>, vector<1x1x256xf32>
    %667 = vector.shape_cast %666 : vector<1x1x256xf32> to vector<1x256xf32>
    %668 = arith.mulf %667, %661 : vector<1x256xf32>
    %c0_385 = arith.constant 0 : index
    %c0_386 = arith.constant 0 : index
    %c0_387 = arith.constant 0 : index
    %669 = vector.load %arg2[%c0_385, %c0_386, %c0_387] : memref<9x32x1xf32, #tpu.memory_space<vmem>>, vector<1x32x1xf32>
    %670 = vector.shape_cast %669 : vector<1x32x1xf32> to vector<32x1xf32>
    %671 = vector.broadcast %670 : vector<32x1xf32> to vector<32x256xf32>
    %672 = vector.broadcast %668 : vector<1x256xf32> to vector<32x256xf32>
    %673 = arith.mulf %671, %672 : vector<32x256xf32>
    %674 = arith.addf %665, %673 : vector<32x256xf32>
    %c0_388 = arith.constant 0 : index
    %c0_389 = arith.constant 0 : index
    %c1865 = arith.constant 1865 : index
    %675 = vector.load %arg1[%c0_388, %c0_389, %c1865] : memref<1x1x2304xf32, #tpu.memory_space<vmem>>, vector<1x1x256xf32>
    %676 = vector.shape_cast %675 : vector<1x1x256xf32> to vector<1x256xf32>
    %c1_390 = arith.constant 1 : index
    %c0_391 = arith.constant 0 : index
    %c0_392 = arith.constant 0 : index
    %677 = vector.load %arg2[%c1_390, %c0_391, %c0_392] : memref<9x32x1xf32, #tpu.memory_space<vmem>>, vector<1x32x1xf32>
    %678 = vector.shape_cast %677 : vector<1x32x1xf32> to vector<32x1xf32>
    %679 = vector.broadcast %678 : vector<32x1xf32> to vector<32x256xf32>
    %680 = vector.broadcast %676 : vector<1x256xf32> to vector<32x256xf32>
    %681 = arith.mulf %679, %680 : vector<32x256xf32>
    %682 = arith.addf %674, %681 : vector<32x256xf32>
    %c0_393 = arith.constant 0 : index
    %c0_394 = arith.constant 0 : index
    %c1866 = arith.constant 1866 : index
    %683 = vector.load %arg1[%c0_393, %c0_394, %c1866] : memref<1x1x2304xf32, #tpu.memory_space<vmem>>, vector<1x1x256xf32>
    %684 = vector.shape_cast %683 : vector<1x1x256xf32> to vector<1x256xf32>
    %685 = arith.mulf %684, %662 : vector<1x256xf32>
    %c2_395 = arith.constant 2 : index
    %c0_396 = arith.constant 0 : index
    %c0_397 = arith.constant 0 : index
    %686 = vector.load %arg2[%c2_395, %c0_396, %c0_397] : memref<9x32x1xf32, #tpu.memory_space<vmem>>, vector<1x32x1xf32>
    %687 = vector.shape_cast %686 : vector<1x32x1xf32> to vector<32x1xf32>
    %688 = vector.broadcast %687 : vector<32x1xf32> to vector<32x256xf32>
    %689 = vector.broadcast %685 : vector<1x256xf32> to vector<32x256xf32>
    %690 = arith.mulf %688, %689 : vector<32x256xf32>
    %691 = arith.addf %682, %690 : vector<32x256xf32>
    %c0_398 = arith.constant 0 : index
    %c0_399 = arith.constant 0 : index
    %c1919 = arith.constant 1919 : index
    %692 = vector.load %arg1[%c0_398, %c0_399, %c1919] : memref<1x1x2304xf32, #tpu.memory_space<vmem>>, vector<1x1x256xf32>
    %693 = vector.shape_cast %692 : vector<1x1x256xf32> to vector<1x256xf32>
    %694 = arith.mulf %693, %661 : vector<1x256xf32>
    %c3_400 = arith.constant 3 : index
    %c0_401 = arith.constant 0 : index
    %c0_402 = arith.constant 0 : index
    %695 = vector.load %arg2[%c3_400, %c0_401, %c0_402] : memref<9x32x1xf32, #tpu.memory_space<vmem>>, vector<1x32x1xf32>
    %696 = vector.shape_cast %695 : vector<1x32x1xf32> to vector<32x1xf32>
    %697 = vector.broadcast %696 : vector<32x1xf32> to vector<32x256xf32>
    %698 = vector.broadcast %694 : vector<1x256xf32> to vector<32x256xf32>
    %699 = arith.mulf %697, %698 : vector<32x256xf32>
    %700 = arith.addf %691, %699 : vector<32x256xf32>
    %c0_403 = arith.constant 0 : index
    %c0_404 = arith.constant 0 : index
    %c1920 = arith.constant 1920 : index
    %701 = vector.load %arg1[%c0_403, %c0_404, %c1920] : memref<1x1x2304xf32, #tpu.memory_space<vmem>>, vector<1x1x256xf32>
    %702 = vector.shape_cast %701 : vector<1x1x256xf32> to vector<1x256xf32>
    %c4_405 = arith.constant 4 : index
    %c0_406 = arith.constant 0 : index
    %c0_407 = arith.constant 0 : index
    %703 = vector.load %arg2[%c4_405, %c0_406, %c0_407] : memref<9x32x1xf32, #tpu.memory_space<vmem>>, vector<1x32x1xf32>
    %704 = vector.shape_cast %703 : vector<1x32x1xf32> to vector<32x1xf32>
    %705 = vector.broadcast %704 : vector<32x1xf32> to vector<32x256xf32>
    %706 = vector.broadcast %702 : vector<1x256xf32> to vector<32x256xf32>
    %707 = arith.mulf %705, %706 : vector<32x256xf32>
    %708 = arith.addf %700, %707 : vector<32x256xf32>
    %c0_408 = arith.constant 0 : index
    %c0_409 = arith.constant 0 : index
    %c1921 = arith.constant 1921 : index
    %709 = vector.load %arg1[%c0_408, %c0_409, %c1921] : memref<1x1x2304xf32, #tpu.memory_space<vmem>>, vector<1x1x256xf32>
    %710 = vector.shape_cast %709 : vector<1x1x256xf32> to vector<1x256xf32>
    %711 = arith.mulf %710, %662 : vector<1x256xf32>
    %c5_410 = arith.constant 5 : index
    %c0_411 = arith.constant 0 : index
    %c0_412 = arith.constant 0 : index
    %712 = vector.load %arg2[%c5_410, %c0_411, %c0_412] : memref<9x32x1xf32, #tpu.memory_space<vmem>>, vector<1x32x1xf32>
    %713 = vector.shape_cast %712 : vector<1x32x1xf32> to vector<32x1xf32>
    %714 = vector.broadcast %713 : vector<32x1xf32> to vector<32x256xf32>
    %715 = vector.broadcast %711 : vector<1x256xf32> to vector<32x256xf32>
    %716 = arith.mulf %714, %715 : vector<32x256xf32>
    %717 = arith.addf %708, %716 : vector<32x256xf32>
    %c0_413 = arith.constant 0 : index
    %c0_414 = arith.constant 0 : index
    %c1974 = arith.constant 1974 : index
    %718 = vector.load %arg1[%c0_413, %c0_414, %c1974] : memref<1x1x2304xf32, #tpu.memory_space<vmem>>, vector<1x1x256xf32>
    %719 = vector.shape_cast %718 : vector<1x1x256xf32> to vector<1x256xf32>
    %720 = arith.mulf %719, %661 : vector<1x256xf32>
    %c6_415 = arith.constant 6 : index
    %c0_416 = arith.constant 0 : index
    %c0_417 = arith.constant 0 : index
    %721 = vector.load %arg2[%c6_415, %c0_416, %c0_417] : memref<9x32x1xf32, #tpu.memory_space<vmem>>, vector<1x32x1xf32>
    %722 = vector.shape_cast %721 : vector<1x32x1xf32> to vector<32x1xf32>
    %723 = vector.broadcast %722 : vector<32x1xf32> to vector<32x256xf32>
    %724 = vector.broadcast %720 : vector<1x256xf32> to vector<32x256xf32>
    %725 = arith.mulf %723, %724 : vector<32x256xf32>
    %726 = arith.addf %717, %725 : vector<32x256xf32>
    %c0_418 = arith.constant 0 : index
    %c0_419 = arith.constant 0 : index
    %c1975 = arith.constant 1975 : index
    %727 = vector.load %arg1[%c0_418, %c0_419, %c1975] : memref<1x1x2304xf32, #tpu.memory_space<vmem>>, vector<1x1x256xf32>
    %728 = vector.shape_cast %727 : vector<1x1x256xf32> to vector<1x256xf32>
    %c7_420 = arith.constant 7 : index
    %c0_421 = arith.constant 0 : index
    %c0_422 = arith.constant 0 : index
    %729 = vector.load %arg2[%c7_420, %c0_421, %c0_422] : memref<9x32x1xf32, #tpu.memory_space<vmem>>, vector<1x32x1xf32>
    %730 = vector.shape_cast %729 : vector<1x32x1xf32> to vector<32x1xf32>
    %731 = vector.broadcast %730 : vector<32x1xf32> to vector<32x256xf32>
    %732 = vector.broadcast %728 : vector<1x256xf32> to vector<32x256xf32>
    %733 = arith.mulf %731, %732 : vector<32x256xf32>
    %734 = arith.addf %726, %733 : vector<32x256xf32>
    %c0_423 = arith.constant 0 : index
    %c0_424 = arith.constant 0 : index
    %c1976 = arith.constant 1976 : index
    %735 = vector.load %arg1[%c0_423, %c0_424, %c1976] : memref<1x1x2304xf32, #tpu.memory_space<vmem>>, vector<1x1x256xf32>
    %736 = vector.shape_cast %735 : vector<1x1x256xf32> to vector<1x256xf32>
    %737 = arith.mulf %736, %662 : vector<1x256xf32>
    %c8_425 = arith.constant 8 : index
    %c0_426 = arith.constant 0 : index
    %c0_427 = arith.constant 0 : index
    %738 = vector.load %arg2[%c8_425, %c0_426, %c0_427] : memref<9x32x1xf32, #tpu.memory_space<vmem>>, vector<1x32x1xf32>
    %739 = vector.shape_cast %738 : vector<1x32x1xf32> to vector<32x1xf32>
    %740 = vector.broadcast %739 : vector<32x1xf32> to vector<32x256xf32>
    %741 = vector.broadcast %737 : vector<1x256xf32> to vector<32x256xf32>
    %742 = arith.mulf %740, %741 : vector<32x256xf32>
    %743 = arith.addf %734, %742 : vector<32x256xf32>
    %c2_428 = arith.constant 2 : index
    %c1792_429 = arith.constant 1792 : index
    %744 = vector.load %arg4[%c2_428, %c1792_429] : memref<3x2048xf32, #tpu.memory_space<vmem>>, vector<1x256xf32>
    %745 = vector.broadcast %744 : vector<1x256xf32> to vector<32x256xf32>
    %746 = arith.mulf %743, %745 : vector<32x256xf32>
    %cst_430 = arith.constant dense<0.000000e+00> : vector<32xf32>
    %747 = vector.multi_reduction <add>, %746, %cst_430 [1] : vector<32x256xf32> to vector<32xf32>
    %748 = vector.shape_cast %747 : vector<32xf32> to vector<32x1xf32>
    %749 = arith.addf %653, %748 : vector<32x1xf32>
    %750 = arith.mulf %746, %746 : vector<32x256xf32>
    %cst_431 = arith.constant dense<0.000000e+00> : vector<32xf32>
    %751 = vector.multi_reduction <add>, %750, %cst_431 [1] : vector<32x256xf32> to vector<32xf32>
    %752 = vector.shape_cast %751 : vector<32xf32> to vector<32x1xf32>
    %753 = arith.addf %657, %752 : vector<32x1xf32>
    %c0_432 = arith.constant 0 : index
    %c0_433 = arith.constant 0 : index
    %c1920_434 = arith.constant 1920 : index
    %754 = vector.load %arg5[%c0_432, %c0_433, %c1920_434] : memref<1x32x2304xf32, #tpu.memory_space<vmem>>, vector<1x32x256xf32>
    %755 = vector.shape_cast %754 : vector<1x32x256xf32> to vector<32x256xf32>
    %756 = vector.shape_cast %746 : vector<32x256xf32> to vector<1x32x256xf32>
    tpu.vector_store %arg5[%c0_432, %c0_433, %c1920_434], %756 {strides = array<i32>} : memref<1x32x2304xf32, #tpu.memory_space<vmem>>, vector<1x32x256xf32>,
    %cst_435 = arith.constant 5.19480498E-4 : f32
    %757 = vector.broadcast %cst_435 : f32 to vector<32x1xf32>
    %758 = arith.mulf %749, %757 : vector<32x1xf32>
    %cst_436 = arith.constant 5.19480498E-4 : f32
    %759 = vector.broadcast %cst_436 : f32 to vector<32x1xf32>
    %760 = arith.mulf %753, %759 : vector<32x1xf32>
    %761 = arith.mulf %758, %758 : vector<32x1xf32>
    %762 = arith.subf %760, %761 : vector<32x1xf32>
    %cst_437 = arith.constant 9.99999974E-6 : f32
    %763 = vector.broadcast %cst_437 : f32 to vector<32x1xf32>
    %764 = arith.addf %762, %763 : vector<32x1xf32>
    %765 = math.rsqrt %764 : vector<32x1xf32>
    %c0_438 = arith.constant 0 : index
    %c0_439 = arith.constant 0 : index
    %c128_440 = arith.constant 128 : index
    %766 = vector.load %arg5[%c0_438, %c0_439, %c128_440] : memref<1x32x2304xf32, #tpu.memory_space<vmem>>, vector<1x32x256xf32>
    %767 = vector.shape_cast %766 : vector<1x32x256xf32> to vector<32x256xf32>
    %768 = vector.broadcast %758 : vector<32x1xf32> to vector<32x256xf32>
    %769 = arith.subf %767, %768 : vector<32x256xf32>
    %770 = vector.broadcast %765 : vector<32x1xf32> to vector<32x256xf32>
    %771 = arith.mulf %769, %770 : vector<32x256xf32>
    %cst_441 = arith.constant 0.00999999977 : f32
    %772 = vector.broadcast %cst_441 : f32 to vector<32x256xf32>
    %773 = arith.mulf %772, %771 : vector<32x256xf32>
    %774 = arith.maximumf %771, %773 : vector<32x256xf32>
    %c0_442 = arith.constant 0 : index
    %c0_443 = arith.constant 0 : index
    %c128_444 = arith.constant 128 : index
    %775 = vector.load %arg5[%c0_442, %c0_443, %c128_444] : memref<1x32x2304xf32, #tpu.memory_space<vmem>>, vector<1x32x256xf32>
    %776 = vector.shape_cast %775 : vector<1x32x256xf32> to vector<32x256xf32>
    %777 = vector.shape_cast %774 : vector<32x256xf32> to vector<1x32x256xf32>
    tpu.vector_store %arg5[%c0_442, %c0_443, %c128_444], %777 {strides = array<i32>} : memref<1x32x2304xf32, #tpu.memory_space<vmem>>, vector<1x32x256xf32>,
    %c0_445 = arith.constant 0 : index
    %c0_446 = arith.constant 0 : index
    %c384_447 = arith.constant 384 : index
    %778 = vector.load %arg5[%c0_445, %c0_446, %c384_447] : memref<1x32x2304xf32, #tpu.memory_space<vmem>>, vector<1x32x256xf32>
    %779 = vector.shape_cast %778 : vector<1x32x256xf32> to vector<32x256xf32>
    %780 = vector.broadcast %758 : vector<32x1xf32> to vector<32x256xf32>
    %781 = arith.subf %779, %780 : vector<32x256xf32>
    %782 = vector.broadcast %765 : vector<32x1xf32> to vector<32x256xf32>
    %783 = arith.mulf %781, %782 : vector<32x256xf32>
    %cst_448 = arith.constant 0.00999999977 : f32
    %784 = vector.broadcast %cst_448 : f32 to vector<32x256xf32>
    %785 = arith.mulf %784, %783 : vector<32x256xf32>
    %786 = arith.maximumf %783, %785 : vector<32x256xf32>
    %c0_449 = arith.constant 0 : index
    %c0_450 = arith.constant 0 : index
    %c384_451 = arith.constant 384 : index
    %787 = vector.load %arg5[%c0_449, %c0_450, %c384_451] : memref<1x32x2304xf32, #tpu.memory_space<vmem>>, vector<1x32x256xf32>
    %788 = vector.shape_cast %787 : vector<1x32x256xf32> to vector<32x256xf32>
    %789 = vector.shape_cast %786 : vector<32x256xf32> to vector<1x32x256xf32>
    tpu.vector_store %arg5[%c0_449, %c0_450, %c384_451], %789 {strides = array<i32>} : memref<1x32x2304xf32, #tpu.memory_space<vmem>>, vector<1x32x256xf32>,
    %c0_452 = arith.constant 0 : index
    %c0_453 = arith.constant 0 : index
    %c640_454 = arith.constant 640 : index
    %790 = vector.load %arg5[%c0_452, %c0_453, %c640_454] : memref<1x32x2304xf32, #tpu.memory_space<vmem>>, vector<1x32x256xf32>
    %791 = vector.shape_cast %790 : vector<1x32x256xf32> to vector<32x256xf32>
    %792 = vector.broadcast %758 : vector<32x1xf32> to vector<32x256xf32>
    %793 = arith.subf %791, %792 : vector<32x256xf32>
    %794 = vector.broadcast %765 : vector<32x1xf32> to vector<32x256xf32>
    %795 = arith.mulf %793, %794 : vector<32x256xf32>
    %cst_455 = arith.constant 0.00999999977 : f32
    %796 = vector.broadcast %cst_455 : f32 to vector<32x256xf32>
    %797 = arith.mulf %796, %795 : vector<32x256xf32>
    %798 = arith.maximumf %795, %797 : vector<32x256xf32>
    %c0_456 = arith.constant 0 : index
    %c0_457 = arith.constant 0 : index
    %c640_458 = arith.constant 640 : index
    %799 = vector.load %arg5[%c0_456, %c0_457, %c640_458] : memref<1x32x2304xf32, #tpu.memory_space<vmem>>, vector<1x32x256xf32>
    %800 = vector.shape_cast %799 : vector<1x32x256xf32> to vector<32x256xf32>
    %801 = vector.shape_cast %798 : vector<32x256xf32> to vector<1x32x256xf32>
    tpu.vector_store %arg5[%c0_456, %c0_457, %c640_458], %801 {strides = array<i32>} : memref<1x32x2304xf32, #tpu.memory_space<vmem>>, vector<1x32x256xf32>,
    %c0_459 = arith.constant 0 : index
    %c0_460 = arith.constant 0 : index
    %c896_461 = arith.constant 896 : index
    %802 = vector.load %arg5[%c0_459, %c0_460, %c896_461] : memref<1x32x2304xf32, #tpu.memory_space<vmem>>, vector<1x32x256xf32>
    %803 = vector.shape_cast %802 : vector<1x32x256xf32> to vector<32x256xf32>
    %804 = vector.broadcast %758 : vector<32x1xf32> to vector<32x256xf32>
    %805 = arith.subf %803, %804 : vector<32x256xf32>
    %806 = vector.broadcast %765 : vector<32x1xf32> to vector<32x256xf32>
    %807 = arith.mulf %805, %806 : vector<32x256xf32>
    %cst_462 = arith.constant 0.00999999977 : f32
    %808 = vector.broadcast %cst_462 : f32 to vector<32x256xf32>
    %809 = arith.mulf %808, %807 : vector<32x256xf32>
    %810 = arith.maximumf %807, %809 : vector<32x256xf32>
    %c0_463 = arith.constant 0 : index
    %c0_464 = arith.constant 0 : index
    %c896_465 = arith.constant 896 : index
    %811 = vector.load %arg5[%c0_463, %c0_464, %c896_465] : memref<1x32x2304xf32, #tpu.memory_space<vmem>>, vector<1x32x256xf32>
    %812 = vector.shape_cast %811 : vector<1x32x256xf32> to vector<32x256xf32>
    %813 = vector.shape_cast %810 : vector<32x256xf32> to vector<1x32x256xf32>
    tpu.vector_store %arg5[%c0_463, %c0_464, %c896_465], %813 {strides = array<i32>} : memref<1x32x2304xf32, #tpu.memory_space<vmem>>, vector<1x32x256xf32>,
    %c0_466 = arith.constant 0 : index
    %c0_467 = arith.constant 0 : index
    %c1152_468 = arith.constant 1152 : index
    %814 = vector.load %arg5[%c0_466, %c0_467, %c1152_468] : memref<1x32x2304xf32, #tpu.memory_space<vmem>>, vector<1x32x256xf32>
    %815 = vector.shape_cast %814 : vector<1x32x256xf32> to vector<32x256xf32>
    %816 = vector.broadcast %758 : vector<32x1xf32> to vector<32x256xf32>
    %817 = arith.subf %815, %816 : vector<32x256xf32>
    %818 = vector.broadcast %765 : vector<32x1xf32> to vector<32x256xf32>
    %819 = arith.mulf %817, %818 : vector<32x256xf32>
    %cst_469 = arith.constant 0.00999999977 : f32
    %820 = vector.broadcast %cst_469 : f32 to vector<32x256xf32>
    %821 = arith.mulf %820, %819 : vector<32x256xf32>
    %822 = arith.maximumf %819, %821 : vector<32x256xf32>
    %c0_470 = arith.constant 0 : index
    %c0_471 = arith.constant 0 : index
    %c1152_472 = arith.constant 1152 : index
    %823 = vector.load %arg5[%c0_470, %c0_471, %c1152_472] : memref<1x32x2304xf32, #tpu.memory_space<vmem>>, vector<1x32x256xf32>
    %824 = vector.shape_cast %823 : vector<1x32x256xf32> to vector<32x256xf32>
    %825 = vector.shape_cast %822 : vector<32x256xf32> to vector<1x32x256xf32>
    tpu.vector_store %arg5[%c0_470, %c0_471, %c1152_472], %825 {strides = array<i32>} : memref<1x32x2304xf32, #tpu.memory_space<vmem>>, vector<1x32x256xf32>,
    %c0_473 = arith.constant 0 : index
    %c0_474 = arith.constant 0 : index
    %c1408_475 = arith.constant 1408 : index
    %826 = vector.load %arg5[%c0_473, %c0_474, %c1408_475] : memref<1x32x2304xf32, #tpu.memory_space<vmem>>, vector<1x32x256xf32>
    %827 = vector.shape_cast %826 : vector<1x32x256xf32> to vector<32x256xf32>
    %828 = vector.broadcast %758 : vector<32x1xf32> to vector<32x256xf32>
    %829 = arith.subf %827, %828 : vector<32x256xf32>
    %830 = vector.broadcast %765 : vector<32x1xf32> to vector<32x256xf32>
    %831 = arith.mulf %829, %830 : vector<32x256xf32>
    %cst_476 = arith.constant 0.00999999977 : f32
    %832 = vector.broadcast %cst_476 : f32 to vector<32x256xf32>
    %833 = arith.mulf %832, %831 : vector<32x256xf32>
    %834 = arith.maximumf %831, %833 : vector<32x256xf32>
    %c0_477 = arith.constant 0 : index
    %c0_478 = arith.constant 0 : index
    %c1408_479 = arith.constant 1408 : index
    %835 = vector.load %arg5[%c0_477, %c0_478, %c1408_479] : memref<1x32x2304xf32, #tpu.memory_space<vmem>>, vector<1x32x256xf32>
    %836 = vector.shape_cast %835 : vector<1x32x256xf32> to vector<32x256xf32>
    %837 = vector.shape_cast %834 : vector<32x256xf32> to vector<1x32x256xf32>
    tpu.vector_store %arg5[%c0_477, %c0_478, %c1408_479], %837 {strides = array<i32>} : memref<1x32x2304xf32, #tpu.memory_space<vmem>>, vector<1x32x256xf32>,
    %c0_480 = arith.constant 0 : index
    %c0_481 = arith.constant 0 : index
    %c1664_482 = arith.constant 1664 : index
    %838 = vector.load %arg5[%c0_480, %c0_481, %c1664_482] : memref<1x32x2304xf32, #tpu.memory_space<vmem>>, vector<1x32x256xf32>
    %839 = vector.shape_cast %838 : vector<1x32x256xf32> to vector<32x256xf32>
    %840 = vector.broadcast %758 : vector<32x1xf32> to vector<32x256xf32>
    %841 = arith.subf %839, %840 : vector<32x256xf32>
    %842 = vector.broadcast %765 : vector<32x1xf32> to vector<32x256xf32>
    %843 = arith.mulf %841, %842 : vector<32x256xf32>
    %cst_483 = arith.constant 0.00999999977 : f32
    %844 = vector.broadcast %cst_483 : f32 to vector<32x256xf32>
    %845 = arith.mulf %844, %843 : vector<32x256xf32>
    %846 = arith.maximumf %843, %845 : vector<32x256xf32>
    %c0_484 = arith.constant 0 : index
    %c0_485 = arith.constant 0 : index
    %c1664_486 = arith.constant 1664 : index
    %847 = vector.load %arg5[%c0_484, %c0_485, %c1664_486] : memref<1x32x2304xf32, #tpu.memory_space<vmem>>, vector<1x32x256xf32>
    %848 = vector.shape_cast %847 : vector<1x32x256xf32> to vector<32x256xf32>
    %849 = vector.shape_cast %846 : vector<32x256xf32> to vector<1x32x256xf32>
    tpu.vector_store %arg5[%c0_484, %c0_485, %c1664_486], %849 {strides = array<i32>} : memref<1x32x2304xf32, #tpu.memory_space<vmem>>, vector<1x32x256xf32>,
    %c0_487 = arith.constant 0 : index
    %c0_488 = arith.constant 0 : index
    %c1920_489 = arith.constant 1920 : index
    %850 = vector.load %arg5[%c0_487, %c0_488, %c1920_489] : memref<1x32x2304xf32, #tpu.memory_space<vmem>>, vector<1x32x256xf32>
    %851 = vector.shape_cast %850 : vector<1x32x256xf32> to vector<32x256xf32>
    %852 = vector.broadcast %758 : vector<32x1xf32> to vector<32x256xf32>
    %853 = arith.subf %851, %852 : vector<32x256xf32>
    %854 = vector.broadcast %765 : vector<32x1xf32> to vector<32x256xf32>
    %855 = arith.mulf %853, %854 : vector<32x256xf32>
    %cst_490 = arith.constant 0.00999999977 : f32
    %856 = vector.broadcast %cst_490 : f32 to vector<32x256xf32>
    %857 = arith.mulf %856, %855 : vector<32x256xf32>
    %858 = arith.maximumf %855, %857 : vector<32x256xf32>
    %c2_491 = arith.constant 2 : index
    %c1792_492 = arith.constant 1792 : index
    %859 = vector.load %arg4[%c2_491, %c1792_492] : memref<3x2048xf32, #tpu.memory_space<vmem>>, vector<1x256xf32>
    %860 = vector.broadcast %859 : vector<1x256xf32> to vector<32x256xf32>
    %861 = arith.mulf %858, %860 : vector<32x256xf32>
    %c0_493 = arith.constant 0 : index
    %c0_494 = arith.constant 0 : index
    %c1920_495 = arith.constant 1920 : index
    %862 = vector.load %arg5[%c0_493, %c0_494, %c1920_495] : memref<1x32x2304xf32, #tpu.memory_space<vmem>>, vector<1x32x256xf32>
    %863 = vector.shape_cast %862 : vector<1x32x256xf32> to vector<32x256xf32>
    %864 = vector.shape_cast %861 : vector<32x256xf32> to vector<1x32x256xf32>
    tpu.vector_store %arg5[%c0_493, %c0_494, %c1920_495], %864 {strides = array<i32>} : memref<1x32x2304xf32, #tpu.memory_space<vmem>>, vector<1x32x256xf32>,
    return
  }
  func.func @transform_0(%arg0: i32) -> (i32, i32, i32) {
    %c0_i32 = arith.constant 0 : i32
    %c0_i32_0 = arith.constant 0 : i32
    %c0_i32_1 = arith.constant 0 : i32
    return %arg0, %c0_i32, %c0_i32_0 : i32, i32, i32
  }
  func.func @transform_1(%arg0: i32) -> (i32, i32, i32) {
    %c0_i32 = arith.constant 0 : i32
    %c0_i32_0 = arith.constant 0 : i32
    %c0_i32_1 = arith.constant 0 : i32
    %c0_i32_2 = arith.constant 0 : i32
    return %c0_i32, %c0_i32_0, %c0_i32_1 : i32, i32, i32
  }
  func.func @transform_2(%arg0: i32) -> (i32, i32) {
    %c0_i32 = arith.constant 0 : i32
    %c0_i32_0 = arith.constant 0 : i32
    %c0_i32_1 = arith.constant 0 : i32
    return %c0_i32, %c0_i32_0 : i32, i32
  }
  func.func @transform_3(%arg0: i32) -> (i32, i32) {
    %c0_i32 = arith.constant 0 : i32
    %c0_i32_0 = arith.constant 0 : i32
    %c0_i32_1 = arith.constant 0 : i32
    return %c0_i32, %c0_i32_0 : i32, i32
  }
  func.func @transform_4(%arg0: i32) -> (i32, i32, i32) {
    %c0_i32 = arith.constant 0 : i32
    %c0_i32_0 = arith.constant 0 : i32
    %c0_i32_1 = arith.constant 0 : i32
    return %arg0, %c0_i32, %c0_i32_0 : i32, i32, i32
  }
}

</mosaic_0001>

<llo_original>
// kernel: tpu_custom_call.1
$region0: #{tpu_custom_call.1}
  #allocation0 [shape = 'u32[]', space=smem, size = 0x4, offset = 0x4, fixed_abs, tag = 'smem constant byte address 0x4 - core index']
  #allocation1 [shape = 'u32[144,128]{1,0:T(1,128)}', space=vmem, size = 0x12000, scoped, tag = 'internal scratch']
  %s0 = inlined_call_operand.vmem [shape: f32[2,1,2304], index: 0, kind: input, shape index: {}]
  %s1 = inlined_call_operand.vmem [shape: f32[9,32,1], index: 1, kind: input, shape index: {}]
  %s2 = inlined_call_operand.vmem [shape: f32[32,1], index: 2, kind: input, shape index: {}]
  %s3 = inlined_call_operand.vmem [shape: f32[3,2048], index: 3, kind: input, shape index: {}]
  %s4 = inlined_call_operand.hbm [shape: f32[2,32,2304], index: 4, kind: output, shape index: {}]
  %s5 = sld [smem:[#allocation0]]
  $region49: #{tpu_custom_call.1} parent=0
    _
  %s7 = ssub.s32 1, %s5
  %s8 = scalar_select 0, %s7, %s5
  $region1: #{tpu_custom_call.1} parent=0
    #allocation2 [shape = 'u8[589824]{0}', space=vmem, size = 0x90000, scoped, tag = 'output window, operand 0']
    #allocation3 [shape = 's32[2]{0}', space=sflag, size = 0x8, scoped, tag = 'scoped memory for tpu_custom_call.1']
    %9 = vsyncpa [#allocation3], 0
    %s10 = scalar_lea.sflag [#allocation3], 1
    %11 = vsyncpa %s10, 0
    loop: start=0, step=1, limit=4
    $region2: #{tpu_custom_call.1} parent=1 // loop_pre_header
      _
    $region3: #{tpu_custom_call.1} parent=1 // loop_header
      %s13 = sphi 0, %s17
      %p14 = scmp.ge.s32.totalorder %s13, 4
      %s23 = sphi 0, %s25
      %s26 = sphi 0, %s23
      %s27 = sphi 0, %s26
      %s43 = sphi 0, %s27
      %s47 = sphi 0, %s47
      %s49 = sphi 0, %s47
      %s50 = sphi 0, %s49
      %s64 = sphi 0, %s50
      %s68 = sphi 0, %s68
      %s70 = sphi 0, %s68
      %s71 = sphi 0, %s70
      %s85 = sphi 0, %s71
      %s89 = sphi 0, %s89
      %s91 = sphi 0, %s89
      %s92 = sphi 0, %s91
      %s106 = sphi 0, %s92
      %s112 = sphi 0, %s114
      %s115 = sphi 0, %s112
      %s116 = sphi 0, %s115
      %s132 = sphi 0, %s116
    $region4: #{tpu_custom_call.1} parent=1 // loop_header_branch
      %16 = sbr.rel (%p14) target = $region8
    $region5: #{tpu_custom_call.1} parent=1 // loop_body
      %s18 = ssub.s32 %s13, 1
      %s19 = ssub.s32 %s13, 2
      %s20 = sadd.s32 %s13, 1
      %s21 = ssub.s32 %s13, %s20
      %p22 = scmp.eq.s32.totalorder %s21, 0
      %s24 = sadd.s32 %s23, 1
      %s25 = scalar_select %p22, %s23, %s24
      %p28 = pneg %p22
      %p29 = scmp.eq.s32.totalorder %s13, 1
      %p30 = por %p28, %p29
      %p31 = scmp.ne.s32.totalorder %s23, %s26
      %p32 = scmp.eq.s32.totalorder %s13, 0
      %p33 = por %p31, %p32
      %p34 = scmp.ne.s32.totalorder %s23, %s26
      %p35 = scmp.eq.s32.totalorder %s18, 1
      %p36 = por %p34, %p35
      %p37 = scmp.ne.s32.totalorder %s26, %s27
      %p38 = scmp.eq.s32.totalorder %s18, 0
      %p39 = por %p37, %p38
      %p40 = scmp.ne.s32.totalorder %s26, %s27
      %p41 = scmp.eq.s32.totalorder %s19, 1
      %p42 = por %p40, %p41
      %p44 = scmp.ne.s32.totalorder %s27, %s43
      %p45 = scmp.eq.s32.totalorder %s19, 0
      %p46 = por %p44, %p45
      %s48 = sadd.s32 %s47, 1
      %p51 = scmp.eq.s32.totalorder %s13, 1
      %p52 = scmp.ne.s32.totalorder %s47, %s49
      %p53 = scmp.eq.s32.totalorder %s13, 0
      %p54 = por %p52, %p53
      %p55 = scmp.ne.s32.totalorder %s47, %s49
      %p56 = scmp.eq.s32.totalorder %s18, 1
      %p57 = por %p55, %p56
      %p58 = scmp.ne.s32.totalorder %s49, %s50
      %p59 = scmp.eq.s32.totalorder %s18, 0
      %p60 = por %p58, %p59
      %p61 = scmp.ne.s32.totalorder %s49, %s50
      %p62 = scmp.eq.s32.totalorder %s19, 1
      %p63 = por %p61, %p62
      %p65 = scmp.ne.s32.totalorder %s50, %s64
      %p66 = scmp.eq.s32.totalorder %s19, 0
      %p67 = por %p65, %p66
      %s69 = sadd.s32 %s68, 1
      %p72 = scmp.eq.s32.totalorder %s13, 1
      %p73 = scmp.ne.s32.totalorder %s68, %s70
      %p74 = scmp.eq.s32.totalorder %s13, 0
      %p75 = por %p73, %p74
      %p76 = scmp.ne.s32.totalorder %s68, %s70
      %p77 = scmp.eq.s32.totalorder %s18, 1
      %p78 = por %p76, %p77
      %p79 = scmp.ne.s32.totalorder %s70, %s71
      %p80 = scmp.eq.s32.totalorder %s18, 0
      %p81 = por %p79, %p80
      %p82 = scmp.ne.s32.totalorder %s70, %s71
      %p83 = scmp.eq.s32.totalorder %s19, 1
      %p84 = por %p82, %p83
      %p86 = scmp.ne.s32.totalorder %s71, %s85
      %p87 = scmp.eq.s32.totalorder %s19, 0
      %p88 = por %p86, %p87
      %s90 = sadd.s32 %s89, 1
      %p93 = scmp.eq.s32.totalorder %s13, 1
      %p94 = scmp.ne.s32.totalorder %s89, %s91
      %p95 = scmp.eq.s32.totalorder %s13, 0
      %p96 = por %p94, %p95
      %p97 = scmp.ne.s32.totalorder %s89, %s91
      %p98 = scmp.eq.s32.totalorder %s18, 1
      %p99 = por %p97, %p98
      %p100 = scmp.ne.s32.totalorder %s91, %s92
      %p101 = scmp.eq.s32.totalorder %s18, 0
      %p102 = por %p100, %p101
      %p103 = scmp.ne.s32.totalorder %s91, %s92
      %p104 = scmp.eq.s32.totalorder %s19, 1
      %p105 = por %p103, %p104
      %p107 = scmp.ne.s32.totalorder %s92, %s106
      %p108 = scmp.eq.s32.totalorder %s19, 0
      %p109 = por %p107, %p108
      %s110 = ssub.s32 %s13, %s20
      %p111 = scmp.eq.s32.totalorder %s110, 0
      %s113 = sadd.s32 %s112, 1
      %s114 = scalar_select %p111, %s112, %s113
      %p117 = pneg %p111
      %p118 = scmp.eq.s32.totalorder %s13, 1
      %p119 = por %p117, %p118
      %p120 = scmp.ne.s32.totalorder %s112, %s115
      %p121 = scmp.eq.s32.totalorder %s13, 0
      %p122 = por %p120, %p121
      %p123 = scmp.ne.s32.totalorder %s112, %s115
      %p124 = scmp.eq.s32.totalorder %s18, 1
      %p125 = por %p123, %p124
      %p126 = scmp.ne.s32.totalorder %s115, %s116
      %p127 = scmp.eq.s32.totalorder %s18, 0
      %p128 = por %p126, %p127
      %p129 = scmp.ne.s32.totalorder %s115, %s116
      %p130 = scmp.eq.s32.totalorder %s19, 1
      %p131 = por %p129, %p130
      %p133 = scmp.ne.s32.totalorder %s116, %s132
      %p134 = scmp.eq.s32.totalorder %s19, 0
      %p135 = por %p133, %p134
      %p136 = scmp.le.s32.totalorder 1, %s13
      %p137 = scmp.lt.s32.totalorder %s13, 3
      %p138 = pnand %p136, %p137
      %p139 = pneg %p138
      // Predicated region
      $region9: #{tpu_custom_call.1} parent=5 // pred_check
        _
      $region10: #{tpu_custom_call.1} parent=5 // pred_check_branch
        %141 = sbr.rel (%p138) target = $region12
      $region11: #{tpu_custom_call.1} parent=5 // pred_region
        %s142 = ssub.s32 %s13, 1
        // Predicated region
        $region13: #{tpu_custom_call.1} parent=11 // pred_check
          %p143 = pneg %p60
        $region14: #{tpu_custom_call.1} parent=11 // pred_check_branch
          %145 = sbr.rel (%p143) target = $region16
        $region15: #{tpu_custom_call.1} parent=11 // pred_region
          _
        $region16: #{tpu_custom_call.1} parent=11 // pred_fallthru
          _
        // Predicated region
        $region17: #{tpu_custom_call.1} parent=11 // pred_check
          %p146 = pneg %p81
        $region18: #{tpu_custom_call.1} parent=11 // pred_check_branch
          %148 = sbr.rel (%p146) target = $region20
        $region19: #{tpu_custom_call.1} parent=11 // pred_region
          _
        $region20: #{tpu_custom_call.1} parent=11 // pred_fallthru
          _
        // Predicated region
        $region21: #{tpu_custom_call.1} parent=11 // pred_check
          %p149 = pneg %p102
        $region22: #{tpu_custom_call.1} parent=11 // pred_check_branch
          %151 = sbr.rel (%p149) target = $region24
        $region23: #{tpu_custom_call.1} parent=11 // pred_region
          _
        $region24: #{tpu_custom_call.1} parent=11 // pred_fallthru
          _
      $region12: #{tpu_custom_call.1} parent=5 // pred_fallthru
        _
      %p152 = scmp.lt.s32.totalorder %s13, 2
      // Predicated region
      $region25: #{tpu_custom_call.1} parent=5 // pred_check
        %p153 = pneg %p152
      $region26: #{tpu_custom_call.1} parent=5 // pred_check_branch
        %155 = sbr.rel (%p153) target = $region28
      $region27: #{tpu_custom_call.1} parent=5 // pred_region
        // Predicated region
        $region29: #{tpu_custom_call.1} parent=27 // pred_check
          %p156 = pneg %p33
        $region30: #{tpu_custom_call.1} parent=27 // pred_check_branch
          %158 = sbr.rel (%p156) target = $region32
        $region31: #{tpu_custom_call.1} parent=27 // pred_region
          %p159 = scmp.lt.s32.totalorder %s13, 1
          %s160 = scalar_select %p159, %s13, 1
          %s161 = smul.addr %s160, 18
          %s162 = scalar_lea.vmem %s0, %s161
        $region32: #{tpu_custom_call.1} parent=27 // pred_fallthru
          _
      $region28: #{tpu_custom_call.1} parent=5 // pred_fallthru
        _
      %p163 = scmp.le.s32.totalorder 1, %s13
      %p164 = scmp.lt.s32.totalorder %s13, 3
      %p165 = pnand %p163, %p164
      %p166 = pneg %p165
      // Predicated region
      $region33: #{tpu_custom_call.1} parent=5 // pred_check
        _
      $region34: #{tpu_custom_call.1} parent=5 // pred_check_branch
        %168 = sbr.rel (%p165) target = $region36
      $region35: #{tpu_custom_call.1} parent=5 // pred_region
        %s169 = ssub.s32 %s13, 1
        %p170 = scmp.lt.s32.totalorder %s18, 1
        %s171 = scalar_select %p170, %s18, 1
        %s172 = smul.addr %s171, 18
        %s173 = scalar_lea.vmem %s0, %s172
        %p174 = pneg %p39
        %p175 = pneg %p36
        %p176 = pneg %p60
        %p177 = pneg %p57
        %p178 = pneg %p81
        %p179 = pneg %p78
        %p180 = pneg %p102
        %p181 = pneg %p99
        %p182 = pneg %p128
        %p183 = pneg %p125
        %s184 = sand.u32 %s115, 1
        %s185 = scalar_lea.sflag [#allocation3], %s184
        %s186 = sand.u32 %s115, 1
        %s187 = smul.addr %s186, 576
        %s188 = scalar_lea.vmem [#allocation2], %s187
        %p189 = scmp.lt.s32.totalorder %s18, 1
        %s190 = scalar_select %p189, %s18, 1
        %s191 = smul.addr %s190, 18
        %s192 = scalar_lea.vmem %s0, %s191
        %v193 = vld [vmem:[%s2] sm:$0xff]
        %v194 = vld [vmem:[%s2 + $0x8] sm:$0xff]
        %v195 = vld [vmem:[%s2 + $0x10] sm:$0xff]
        %v196 = vld [vmem:[%s2 + $0x18] sm:$0xff]
        %197 = vst [vmem:[%s188] sm:$0xff] 0.0
        %198 = vst [vmem:[%s188 + $0x90] sm:$0xff] 0.0
        %199 = vst [vmem:[%s188 + $0x120] sm:$0xff] 0.0
        %200 = vst [vmem:[%s188 + $0x1b0] sm:$0xff] 0.0
        %201 = vst [vmem:[%s188 + $0x88] sm:$0xff] 0.0
        %202 = vst [vmem:[%s188 + $0x118] sm:$0xff] 0.0
        %203 = vst [vmem:[%s188 + $0x1a8] sm:$0xff] 0.0
        %204 = vst [vmem:[%s188 + $0x238] sm:$0xff] 0.0
        %v205 = vld [vmem:[%s3] ss:$4 sm:$0x3]
        %s206 = scalar_lea.vmem %s3, 1
        %v207 = vld [vmem:[%s206] ss:$4 sm:$0x3]
        %209 = vset.pattern.permute.xlu0 0
        %210 = vperm.xlu0 %209, %v193
        %v211 = vpop.permute.xlu0 %210
        %214 = vset.pattern.permute.xlu0 0
        %215 = vperm.xlu0 %214, %v194
        %v216 = vpop.permute.xlu0 %215
        %219 = vset.pattern.permute.xlu0 0
        %220 = vperm.xlu0 %219, %v195
        %v221 = vpop.permute.xlu0 %220
        %224 = vset.pattern.permute.xlu0 0
        %225 = vperm.xlu0 %224, %v196
        %v226 = vpop.permute.xlu0 %225
        %v228 = vadd.f32 %v211, 0.0
        %v229 = vadd.f32 %v216, 0.0
        %v230 = vadd.f32 %v221, 0.0
        %v231 = vadd.f32 %v226, 0.0
        %v232 = vld [vmem:[%s192] sm:$0x7]
        %234 = vrot.lane.b32.xlu0 %v205, 72
        %v235 = vpop.permute.xlu0 %234
        %v236 = vrot.slane %v235, 7
        %vm237 = vcmask 588800
        %v238 = vsel %vm237, %v236, %v235
        %v240 = vmul.f32 %v232, %v238
        %v241 = vld [vmem:[%s1] sm:$0xff]
        %v242 = vld [vmem:[%s1 + $0x8] sm:$0xff]
        %v243 = vld [vmem:[%s1 + $0x10] sm:$0xff]
        %v244 = vld [vmem:[%s1 + $0x18] sm:$0xff]
        %246 = vset.pattern.permute.xlu0 0
        %247 = vperm.xlu0 %246, %v241
        %v248 = vpop.permute.xlu0 %247
        %251 = vset.pattern.permute.xlu0 0
        %252 = vperm.xlu0 %251, %v242
        %v253 = vpop.permute.xlu0 %252
        %256 = vset.pattern.permute.xlu0 0
        %257 = vperm.xlu0 %256, %v243
        %v258 = vpop.permute.xlu0 %257
        %261 = vset.pattern.permute.xlu0 0
        %262 = vperm.xlu0 %261, %v244
        %v263 = vpop.permute.xlu0 %262
        %v266 = vlaneseq
        %v267 = vshrl.u32 %v266, 7
        %v268 = vsub.s32 0, %v267
        %v269 = vrot.slane %v240, %v268
        %v270 = vlaneseq
        %v271 = vshrl.u32 %v270, 7
        %v272 = vsub.s32 1, %v271
        %v273 = vrot.slane %v240, %v272
        %v274 = vlaneseq
        %v275 = vshrl.u32 %v274, 7
        %v276 = vsub.s32 2, %v275
        %v277 = vrot.slane %v240, %v276
        %v281 = vmul.f32 %v248, %v269
        %v282 = vmul.f32 %v248, %v273
        %v283 = vmul.f32 %v248, %v277
        %v284 = vmul.f32 %v253, %v269
        %v285 = vmul.f32 %v253, %v273
        %v286 = vmul.f32 %v253, %v277
        %v287 = vmul.f32 %v258, %v269
        %v288 = vmul.f32 %v258, %v273
        %v289 = vmul.f32 %v258, %v277
        %v290 = vmul.f32 %v263, %v269
        %v291 = vmul.f32 %v263, %v273
        %v292 = vmul.f32 %v263, %v277
        %v293 = vadd.f32 %v228, %v281
        %v294 = vadd.f32 %v228, %v282
        %v295 = vadd.f32 %v228, %v283
        %v296 = vadd.f32 %v229, %v284
        %v297 = vadd.f32 %v229, %v285
        %v298 = vadd.f32 %v229, %v286
        %v299 = vadd.f32 %v230, %v287
        %v300 = vadd.f32 %v230, %v288
        %v301 = vadd.f32 %v230, %v289
        %v302 = vadd.f32 %v231, %v290
        %v303 = vadd.f32 %v231, %v291
        %v304 = vadd.f32 %v231, %v292
        %s305 = scalar_lea.vmem %s1, 32
        %v306 = vld [vmem:[%s305] sm:$0xff]
        %v307 = vld [vmem:[%s305 + $0x8] sm:$0xff]
        %v308 = vld [vmem:[%s305 + $0x10] sm:$0xff]
        %v309 = vld [vmem:[%s305 + $0x18] sm:$0xff]
        %311 = vset.pattern.permute.xlu0 0
        %312 = vperm.xlu0 %311, %v306
        %v313 = vpop.permute.xlu0 %312
        %316 = vset.pattern.permute.xlu0 0
        %317 = vperm.xlu0 %316, %v307
        %v318 = vpop.permute.xlu0 %317
        %321 = vset.pattern.permute.xlu0 0
        %322 = vperm.xlu0 %321, %v308
        %v323 = vpop.permute.xlu0 %322
        %326 = vset.pattern.permute.xlu0 0
        %327 = vperm.xlu0 %326, %v309
        %v328 = vpop.permute.xlu0 %327
        %v331 = vlaneseq
        %v332 = vshrl.u32 %v331, 7
        %v333 = vsub.s32 0, %v332
        %v334 = vrot.slane %v232, %v333
        %v335 = vlaneseq
        %v336 = vshrl.u32 %v335, 7
        %v337 = vsub.s32 1, %v336
        %v338 = vrot.slane %v232, %v337
        %v339 = vlaneseq
        %v340 = vshrl.u32 %v339, 7
        %v341 = vsub.s32 2, %v340
        %v342 = vrot.slane %v232, %v341
        %v346 = vmul.f32 %v313, %v334
        %v347 = vmul.f32 %v313, %v338
        %v348 = vmul.f32 %v313, %v342
        %v349 = vmul.f32 %v318, %v334
        %v350 = vmul.f32 %v318, %v338
        %v351 = vmul.f32 %v318, %v342
        %v352 = vmul.f32 %v323, %v334
        %v353 = vmul.f32 %v323, %v338
        %v354 = vmul.f32 %v323, %v342
        %v355 = vmul.f32 %v328, %v334
        %v356 = vmul.f32 %v328, %v338
        %v357 = vmul.f32 %v328, %v342
        %370 = vrot.lane.b32.xlu0 %v346, 127
        %v371 = vpop.permute.xlu0 %370
        %372 = vrot.lane.b32.xlu0 %v347, 127
        %v373 = vpop.permute.xlu0 %372
        %374 = vrot.lane.b32.xlu0 %v348, 127
        %v375 = vpop.permute.xlu0 %374
        %376 = vrot.lane.b32.xlu0 %v349, 127
        %v377 = vpop.permute.xlu0 %376
        %378 = vrot.lane.b32.xlu0 %v350, 127
        %v379 = vpop.permute.xlu0 %378
        %380 = vrot.lane.b32.xlu0 %v351, 127
        %v381 = vpop.permute.xlu0 %380
        %382 = vrot.lane.b32.xlu0 %v352, 127
        %v383 = vpop.permute.xlu0 %382
        %384 = vrot.lane.b32.xlu0 %v353, 127
        %v385 = vpop.permute.xlu0 %384
        %386 = vrot.lane.b32.xlu0 %v354, 127
        %v387 = vpop.permute.xlu0 %386
        %388 = vrot.lane.b32.xlu0 %v355, 127
        %v389 = vpop.permute.xlu0 %388
        %390 = vrot.lane.b32.xlu0 %v356, 127
        %v391 = vpop.permute.xlu0 %390
        %392 = vrot.lane.b32.xlu0 %v357, 127
        %v393 = vpop.permute.xlu0 %392
        %vm394 = vcmask 1039360
        %v395 = vsel %vm394, %v371, %v373
        %v396 = vsel %vm394, %v373, %v375
        %v397 = vsel %vm394, %v377, %v379
        %v398 = vsel %vm394, %v379, %v381
        %v399 = vsel %vm394, %v383, %v385
        %v400 = vsel %vm394, %v385, %v387
        %v401 = vsel %vm394, %v389, %v391
        %v402 = vsel %vm394, %v391, %v393
        %v415 = vadd.f32 %v293, %v395
        %v416 = vadd.f32 %v294, %v396
        %v417 = vadd.f32 %v295, %v375
        %v418 = vadd.f32 %v296, %v397
        %v419 = vadd.f32 %v297, %v398
        %v420 = vadd.f32 %v298, %v381
        %v421 = vadd.f32 %v299, %v399
        %v422 = vadd.f32 %v300, %v400
        %v423 = vadd.f32 %v301, %v387
        %v424 = vadd.f32 %v302, %v401
        %v425 = vadd.f32 %v303, %v402
        %v426 = vadd.f32 %v304, %v393
        %428 = vrot.lane.b32.xlu0 %v207, 74
        %v429 = vpop.permute.xlu0 %428
        %v430 = vrot.slane %v429, 7
        %vm431 = vcmask 605184
        %v432 = vsel %vm431, %v430, %v429
        %v434 = vmul.f32 %v232, %v432
        %s435 = scalar_lea.vmem %s1, 64
        %v436 = vld [vmem:[%s435] sm:$0xff]
        %v437 = vld [vmem:[%s435 + $0x8] sm:$0xff]
        %v438 = vld [vmem:[%s435 + $0x10] sm:$0xff]
        %v439 = vld [vmem:[%s435 + $0x18] sm:$0xff]
        %441 = vset.pattern.permute.xlu0 0
        %442 = vperm.xlu0 %441, %v436
        %v443 = vpop.permute.xlu0 %442
        %446 = vset.pattern.permute.xlu0 0
        %447 = vperm.xlu0 %446, %v437
        %v448 = vpop.permute.xlu0 %447
        %451 = vset.pattern.permute.xlu0 0
        %452 = vperm.xlu0 %451, %v438
        %v453 = vpop.permute.xlu0 %452
        %456 = vset.pattern.permute.xlu0 0
        %457 = vperm.xlu0 %456, %v439
        %v458 = vpop.permute.xlu0 %457
        %v461 = vlaneseq
        %v462 = vshrl.u32 %v461, 7
        %v463 = vsub.s32 0, %v462
        %v464 = vrot.slane %v434, %v463
        %v465 = vlaneseq
        %v466 = vshrl.u32 %v465, 7
        %v467 = vsub.s32 1, %v466
        %v468 = vrot.slane %v434, %v467
        %v469 = vlaneseq
        %v470 = vshrl.u32 %v469, 7
        %v471 = vsub.s32 2, %v470
        %v472 = vrot.slane %v434, %v471
        %v476 = vmul.f32 %v443, %v464
        %v477 = vmul.f32 %v443, %v468
        %v478 = vmul.f32 %v443, %v472
        %v479 = vmul.f32 %v448, %v464
        %v480 = vmul.f32 %v448, %v468
        %v481 = vmul.f32 %v448, %v472
        %v482 = vmul.f32 %v453, %v464
        %v483 = vmul.f32 %v453, %v468
        %v484 = vmul.f32 %v453, %v472
        %v485 = vmul.f32 %v458, %v464
        %v486 = vmul.f32 %v458, %v468
        %v487 = vmul.f32 %v458, %v472
        %500 = vrot.lane.b32.xlu0 %v476, 126
        %v501 = vpop.permute.xlu0 %500
        %502 = vrot.lane.b32.xlu0 %v477, 126
        %v503 = vpop.permute.xlu0 %502
        %504 = vrot.lane.b32.xlu0 %v478, 126
        %v505 = vpop.permute.xlu0 %504
        %506 = vrot.lane.b32.xlu0 %v479, 126
        %v507 = vpop.permute.xlu0 %506
        %508 = vrot.lane.b32.xlu0 %v480, 126
        %v509 = vpop.permute.xlu0 %508
        %510 = vrot.lane.b32.xlu0 %v481, 126
        %v511 = vpop.permute.xlu0 %510
        %512 = vrot.lane.b32.xlu0 %v482, 126
        %v513 = vpop.permute.xlu0 %512
        %514 = vrot.lane.b32.xlu0 %v483, 126
        %v515 = vpop.permute.xlu0 %514
        %516 = vrot.lane.b32.xlu0 %v484, 126
        %v517 = vpop.permute.xlu0 %516
        %518 = vrot.lane.b32.xlu0 %v485, 126
        %v519 = vpop.permute.xlu0 %518
        %520 = vrot.lane.b32.xlu0 %v486, 126
        %v521 = vpop.permute.xlu0 %520
        %522 = vrot.lane.b32.xlu0 %v487, 126
        %v523 = vpop.permute.xlu0 %522
        %vm524 = vcmask 1031168
        %v525 = vsel %vm524, %v501, %v503
        %v526 = vsel %vm524, %v503, %v505
        %v527 = vsel %vm524, %v507, %v509
        %v528 = vsel %vm524, %v509, %v511
        %v529 = vsel %vm524, %v513, %v515
        %v530 = vsel %vm524, %v515, %v517
        %v531 = vsel %vm524, %v519, %v521
        %v532 = vsel %vm524, %v521, %v523
        %v545 = vadd.f32 %v415, %v525
        %v546 = vadd.f32 %v416, %v526
        %v547 = vadd.f32 %v417, %v505
        %v548 = vadd.f32 %v418, %v527
        %v549 = vadd.f32 %v419, %v528
        %v550 = vadd.f32 %v420, %v511
        %v551 = vadd.f32 %v421, %v529
        %v552 = vadd.f32 %v422, %v530
        %v553 = vadd.f32 %v423, %v517
        %v554 = vadd.f32 %v424, %v531
        %v555 = vadd.f32 %v425, %v532
        %v556 = vadd.f32 %v426, %v523
        %557 = vrot.lane.b32.xlu0 %v205, 127
        %v558 = vpop.permute.xlu0 %557
        %v559 = vrot.slane %v558, 7
        %v560 = vsel %vm394, %v559, %v558
        %v562 = vmul.f32 %v232, %v560
        %s563 = scalar_lea.vmem %s1, 96
        %v564 = vld [vmem:[%s563] sm:$0xff]
        %v565 = vld [vmem:[%s563 + $0x8] sm:$0xff]
        %v566 = vld [vmem:[%s563 + $0x10] sm:$0xff]
        %v567 = vld [vmem:[%s563 + $0x18] sm:$0xff]
        %569 = vset.pattern.permute.xlu0 0
        %570 = vperm.xlu0 %569, %v564
        %v571 = vpop.permute.xlu0 %570
        %574 = vset.pattern.permute.xlu0 0
        %575 = vperm.xlu0 %574, %v565
        %v576 = vpop.permute.xlu0 %575
        %579 = vset.pattern.permute.xlu0 0
        %580 = vperm.xlu0 %579, %v566
        %v581 = vpop.permute.xlu0 %580
        %584 = vset.pattern.permute.xlu0 0
        %585 = vperm.xlu0 %584, %v567
        %v586 = vpop.permute.xlu0 %585
        %v589 = vlaneseq
        %v590 = vshrl.u32 %v589, 7
        %v591 = vsub.s32 0, %v590
        %v592 = vrot.slane %v562, %v591
        %v593 = vlaneseq
        %v594 = vshrl.u32 %v593, 7
        %v595 = vsub.s32 1, %v594
        %v596 = vrot.slane %v562, %v595
        %v597 = vlaneseq
        %v598 = vshrl.u32 %v597, 7
        %v599 = vsub.s32 2, %v598
        %v600 = vrot.slane %v562, %v599
        %v604 = vmul.f32 %v571, %v592
        %v605 = vmul.f32 %v571, %v596
        %v606 = vmul.f32 %v571, %v600
        %v607 = vmul.f32 %v576, %v592
        %v608 = vmul.f32 %v576, %v596
        %v609 = vmul.f32 %v576, %v600
        %v610 = vmul.f32 %v581, %v592
        %v611 = vmul.f32 %v581, %v596
        %v612 = vmul.f32 %v581, %v600
        %v613 = vmul.f32 %v586, %v592
        %v614 = vmul.f32 %v586, %v596
        %v615 = vmul.f32 %v586, %v600
        %628 = vrot.lane.b32.xlu0 %v604, 73
        %v629 = vpop.permute.xlu0 %628
        %630 = vrot.lane.b32.xlu0 %v605, 73
        %v631 = vpop.permute.xlu0 %630
        %632 = vrot.lane.b32.xlu0 %v606, 73
        %v633 = vpop.permute.xlu0 %632
        %634 = vrot.lane.b32.xlu0 %v607, 73
        %v635 = vpop.permute.xlu0 %634
        %636 = vrot.lane.b32.xlu0 %v608, 73
        %v637 = vpop.permute.xlu0 %636
        %638 = vrot.lane.b32.xlu0 %v609, 73
        %v639 = vpop.permute.xlu0 %638
        %640 = vrot.lane.b32.xlu0 %v610, 73
        %v641 = vpop.permute.xlu0 %640
        %642 = vrot.lane.b32.xlu0 %v611, 73
        %v643 = vpop.permute.xlu0 %642
        %644 = vrot.lane.b32.xlu0 %v612, 73
        %v645 = vpop.permute.xlu0 %644
        %646 = vrot.lane.b32.xlu0 %v613, 73
        %v647 = vpop.permute.xlu0 %646
        %648 = vrot.lane.b32.xlu0 %v614, 73
        %v649 = vpop.permute.xlu0 %648
        %650 = vrot.lane.b32.xlu0 %v615, 73
        %v651 = vpop.permute.xlu0 %650
        %vm652 = vcmask 596992
        %v653 = vsel %vm652, %v629, %v631
        %v654 = vsel %vm652, %v631, %v633
        %v655 = vsel %vm652, %v635, %v637
        %v656 = vsel %vm652, %v637, %v639
        %v657 = vsel %vm652, %v641, %v643
        %v658 = vsel %vm652, %v643, %v645
        %v659 = vsel %vm652, %v647, %v649
        %v660 = vsel %vm652, %v649, %v651
        %v673 = vadd.f32 %v545, %v653
        %v674 = vadd.f32 %v546, %v654
        %v675 = vadd.f32 %v547, %v633
        %v676 = vadd.f32 %v548, %v655
        %v677 = vadd.f32 %v549, %v656
        %v678 = vadd.f32 %v550, %v639
        %v679 = vadd.f32 %v551, %v657
        %v680 = vadd.f32 %v552, %v658
        %v681 = vadd.f32 %v553, %v645
        %v682 = vadd.f32 %v554, %v659
        %v683 = vadd.f32 %v555, %v660
        %v684 = vadd.f32 %v556, %v651
        %v685 = vld [vmem:[%s192 + $0x1] sm:$0x3]
        %s686 = scalar_lea.vmem %s1, 128
        %v687 = vld [vmem:[%s686] sm:$0xff]
        %v688 = vld [vmem:[%s686 + $0x8] sm:$0xff]
        %v689 = vld [vmem:[%s686 + $0x10] sm:$0xff]
        %v690 = vld [vmem:[%s686 + $0x18] sm:$0xff]
        %692 = vset.pattern.permute.xlu0 0
        %693 = vperm.xlu0 %692, %v687
        %v694 = vpop.permute.xlu0 %693
        %697 = vset.pattern.permute.xlu0 0
        %698 = vperm.xlu0 %697, %v688
        %v699 = vpop.permute.xlu0 %698
        %702 = vset.pattern.permute.xlu0 0
        %703 = vperm.xlu0 %702, %v689
        %v704 = vpop.permute.xlu0 %703
        %707 = vset.pattern.permute.xlu0 0
        %708 = vperm.xlu0 %707, %v690
        %v709 = vpop.permute.xlu0 %708
        %v712 = vlaneseq
        %v713 = vshrl.u32 %v712, 7
        %v714 = vsub.s32 0, %v713
        %v715 = vrot.slane %v685, %v714
        %v716 = vlaneseq
        %v717 = vshrl.u32 %v716, 7
        %v718 = vsub.s32 1, %v717
        %v719 = vrot.slane %v685, %v718
        %v722 = vmul.f32 %v694, %v715
        %v723 = vmul.f32 %v694, %v719
        %v724 = vmul.f32 %v699, %v715
        %v725 = vmul.f32 %v699, %v719
        %v726 = vmul.f32 %v704, %v715
        %v727 = vmul.f32 %v704, %v719
        %v728 = vmul.f32 %v709, %v715
        %v729 = vmul.f32 %v709, %v719
        %738 = vrot.lane.b32.xlu0 %v722, 72
        %v739 = vpop.permute.xlu0 %738
        %740 = vrot.lane.b32.xlu0 %v723, 72
        %v741 = vpop.permute.xlu0 %740
        %742 = vrot.lane.b32.xlu0 %v724, 72
        %v743 = vpop.permute.xlu0 %742
        %744 = vrot.lane.b32.xlu0 %v725, 72
        %v745 = vpop.permute.xlu0 %744
        %746 = vrot.lane.b32.xlu0 %v726, 72
        %v747 = vpop.permute.xlu0 %746
        %748 = vrot.lane.b32.xlu0 %v727, 72
        %v749 = vpop.permute.xlu0 %748
        %750 = vrot.lane.b32.xlu0 %v728, 72
        %v751 = vpop.permute.xlu0 %750
        %752 = vrot.lane.b32.xlu0 %v729, 72
        %v753 = vpop.permute.xlu0 %752
        %v754 = vsel %vm237, %v739, %v741
        %v755 = vsel %vm237, %v743, %v745
        %v756 = vsel %vm237, %v747, %v749
        %v757 = vsel %vm237, %v751, %v753
        %v770 = vadd.f32 %v673, %v739
        %v771 = vadd.f32 %v674, %v754
        %v772 = vadd.f32 %v675, %v741
        %v773 = vadd.f32 %v676, %v743
        %v774 = vadd.f32 %v677, %v755
        %v775 = vadd.f32 %v678, %v745
        %v776 = vadd.f32 %v679, %v747
        %v777 = vadd.f32 %v680, %v756
        %v778 = vadd.f32 %v681, %v749
        %v779 = vadd.f32 %v682, %v751
        %v780 = vadd.f32 %v683, %v757
        %v781 = vadd.f32 %v684, %v753
        %v782 = vld [vmem:[%s192 + $0x1] sm:$0x7]
        %783 = vrot.lane.b32.xlu0 %v207, 1
        %v784 = vpop.permute.xlu0 %783
        %v785 = vrot.slane %v784, 7
        %vm786 = vcmask 7168
        %v787 = vsel %vm786, %v785, %v784
        %v789 = vmul.f32 %v782, %v787
        %s790 = scalar_lea.vmem %s1, 160
        %v791 = vld [vmem:[%s790] sm:$0xff]
        %v792 = vld [vmem:[%s790 + $0x8] sm:$0xff]
        %v793 = vld [vmem:[%s790 + $0x10] sm:$0xff]
        %v794 = vld [vmem:[%s790 + $0x18] sm:$0xff]
        %796 = vset.pattern.permute.xlu0 0
        %797 = vperm.xlu0 %796, %v791
        %v798 = vpop.permute.xlu0 %797
        %801 = vset.pattern.permute.xlu0 0
        %802 = vperm.xlu0 %801, %v792
        %v803 = vpop.permute.xlu0 %802
        %806 = vset.pattern.permute.xlu0 0
        %807 = vperm.xlu0 %806, %v793
        %v808 = vpop.permute.xlu0 %807
        %811 = vset.pattern.permute.xlu0 0
        %812 = vperm.xlu0 %811, %v794
        %v813 = vpop.permute.xlu0 %812
        %v816 = vlaneseq
        %v817 = vshrl.u32 %v816, 7
        %v818 = vsub.s32 0, %v817
        %v819 = vrot.slane %v789, %v818
        %v820 = vlaneseq
        %v821 = vshrl.u32 %v820, 7
        %v822 = vsub.s32 1, %v821
        %v823 = vrot.slane %v789, %v822
        %v824 = vlaneseq
        %v825 = vshrl.u32 %v824, 7
        %v826 = vsub.s32 2, %v825
        %v827 = vrot.slane %v789, %v826
        %v831 = vmul.f32 %v798, %v819
        %v832 = vmul.f32 %v798, %v823
        %v833 = vmul.f32 %v798, %v827
        %v834 = vmul.f32 %v803, %v819
        %v835 = vmul.f32 %v803, %v823
        %v836 = vmul.f32 %v803, %v827
        %v837 = vmul.f32 %v808, %v819
        %v838 = vmul.f32 %v808, %v823
        %v839 = vmul.f32 %v808, %v827
        %v840 = vmul.f32 %v813, %v819
        %v841 = vmul.f32 %v813, %v823
        %v842 = vmul.f32 %v813, %v827
        %855 = vrot.lane.b32.xlu0 %v831, 71
        %v856 = vpop.permute.xlu0 %855
        %857 = vrot.lane.b32.xlu0 %v832, 71
        %v858 = vpop.permute.xlu0 %857
        %859 = vrot.lane.b32.xlu0 %v833, 71
        %v860 = vpop.permute.xlu0 %859
        %861 = vrot.lane.b32.xlu0 %v834, 71
        %v862 = vpop.permute.xlu0 %861
        %863 = vrot.lane.b32.xlu0 %v835, 71
        %v864 = vpop.permute.xlu0 %863
        %865 = vrot.lane.b32.xlu0 %v836, 71
        %v866 = vpop.permute.xlu0 %865
        %867 = vrot.lane.b32.xlu0 %v837, 71
        %v868 = vpop.permute.xlu0 %867
        %869 = vrot.lane.b32.xlu0 %v838, 71
        %v870 = vpop.permute.xlu0 %869
        %871 = vrot.lane.b32.xlu0 %v839, 71
        %v872 = vpop.permute.xlu0 %871
        %873 = vrot.lane.b32.xlu0 %v840, 71
        %v874 = vpop.permute.xlu0 %873
        %875 = vrot.lane.b32.xlu0 %v841, 71
        %v876 = vpop.permute.xlu0 %875
        %877 = vrot.lane.b32.xlu0 %v842, 71
        %v878 = vpop.permute.xlu0 %877
        %vm879 = vcmask 580608
        %v880 = vsel %vm879, %v856, %v858
        %v881 = vsel %vm879, %v858, %v860
        %v882 = vsel %vm879, %v862, %v864
        %v883 = vsel %vm879, %v864, %v866
        %v884 = vsel %vm879, %v868, %v870
        %v885 = vsel %vm879, %v870, %v872
        %v886 = vsel %vm879, %v874, %v876
        %v887 = vsel %vm879, %v876, %v878
        %v900 = vadd.f32 %v770, %v856
        %v901 = vadd.f32 %v771, %v880
        %v902 = vadd.f32 %v772, %v881
        %v903 = vadd.f32 %v773, %v862
        %v904 = vadd.f32 %v774, %v882
        %v905 = vadd.f32 %v775, %v883
        %v906 = vadd.f32 %v776, %v868
        %v907 = vadd.f32 %v777, %v884
        %v908 = vadd.f32 %v778, %v885
        %v909 = vadd.f32 %v779, %v874
        %v910 = vadd.f32 %v780, %v886
        %v911 = vadd.f32 %v781, %v887
        %912 = vrot.lane.b32.xlu0 %v205, 54
        %v913 = vpop.permute.xlu0 %912
        %v914 = vrot.slane %v913, 7
        %vm915 = vcmask 441344
        %v916 = vsel %vm915, %v914, %v913
        %v918 = vmul.f32 %v782, %v916
        %s919 = scalar_lea.vmem %s1, 192
        %v920 = vld [vmem:[%s919] sm:$0xff]
        %v921 = vld [vmem:[%s919 + $0x8] sm:$0xff]
        %v922 = vld [vmem:[%s919 + $0x10] sm:$0xff]
        %v923 = vld [vmem:[%s919 + $0x18] sm:$0xff]
        %925 = vset.pattern.permute.xlu0 0
        %926 = vperm.xlu0 %925, %v920
        %v927 = vpop.permute.xlu0 %926
        %930 = vset.pattern.permute.xlu0 0
        %931 = vperm.xlu0 %930, %v921
        %v932 = vpop.permute.xlu0 %931
        %935 = vset.pattern.permute.xlu0 0
        %936 = vperm.xlu0 %935, %v922
        %v937 = vpop.permute.xlu0 %936
        %940 = vset.pattern.permute.xlu0 0
        %941 = vperm.xlu0 %940, %v923
        %v942 = vpop.permute.xlu0 %941
        %v945 = vlaneseq
        %v946 = vshrl.u32 %v945, 7
        %v947 = vsub.s32 0, %v946
        %v948 = vrot.slane %v918, %v947
        %v949 = vlaneseq
        %v950 = vshrl.u32 %v949, 7
        %v951 = vsub.s32 1, %v950
        %v952 = vrot.slane %v918, %v951
        %v953 = vlaneseq
        %v954 = vshrl.u32 %v953, 7
        %v955 = vsub.s32 2, %v954
        %v956 = vrot.slane %v918, %v955
        %v960 = vmul.f32 %v927, %v948
        %v961 = vmul.f32 %v927, %v952
        %v962 = vmul.f32 %v927, %v956
        %v963 = vmul.f32 %v932, %v948
        %v964 = vmul.f32 %v932, %v952
        %v965 = vmul.f32 %v932, %v956
        %v966 = vmul.f32 %v937, %v948
        %v967 = vmul.f32 %v937, %v952
        %v968 = vmul.f32 %v937, %v956
        %v969 = vmul.f32 %v942, %v948
        %v970 = vmul.f32 %v942, %v952
        %v971 = vmul.f32 %v942, %v956
        %984 = vrot.lane.b32.xlu0 %v960, 18
        %v985 = vpop.permute.xlu0 %984
        %986 = vrot.lane.b32.xlu0 %v961, 18
        %v987 = vpop.permute.xlu0 %986
        %988 = vrot.lane.b32.xlu0 %v962, 18
        %v989 = vpop.permute.xlu0 %988
        %990 = vrot.lane.b32.xlu0 %v963, 18
        %v991 = vpop.permute.xlu0 %990
        %992 = vrot.lane.b32.xlu0 %v964, 18
        %v993 = vpop.permute.xlu0 %992
        %994 = vrot.lane.b32.xlu0 %v965, 18
        %v995 = vpop.permute.xlu0 %994
        %996 = vrot.lane.b32.xlu0 %v966, 18
        %v997 = vpop.permute.xlu0 %996
        %998 = vrot.lane.b32.xlu0 %v967, 18
        %v999 = vpop.permute.xlu0 %998
        %1000 = vrot.lane.b32.xlu0 %v968, 18
        %v1001 = vpop.permute.xlu0 %1000
        %1002 = vrot.lane.b32.xlu0 %v969, 18
        %v1003 = vpop.permute.xlu0 %1002
        %1004 = vrot.lane.b32.xlu0 %v970, 18
        %v1005 = vpop.permute.xlu0 %1004
        %1006 = vrot.lane.b32.xlu0 %v971, 18
        %v1007 = vpop.permute.xlu0 %1006
        %vm1008 = vcmask 146432
        %v1009 = vsel %vm1008, %v985, %v987
        %v1010 = vsel %vm1008, %v987, %v989
        %v1011 = vsel %vm1008, %v991, %v993
        %v1012 = vsel %vm1008, %v993, %v995
        %v1013 = vsel %vm1008, %v997, %v999
        %v1014 = vsel %vm1008, %v999, %v1001
        %v1015 = vsel %vm1008, %v1003, %v1005
        %v1016 = vsel %vm1008, %v1005, %v1007
        %v1029 = vadd.f32 %v900, %v985
        %v1030 = vadd.f32 %v901, %v1009
        %v1031 = vadd.f32 %v902, %v1010
        %v1032 = vadd.f32 %v903, %v991
        %v1033 = vadd.f32 %v904, %v1011
        %v1034 = vadd.f32 %v905, %v1012
        %v1035 = vadd.f32 %v906, %v997
        %v1036 = vadd.f32 %v907, %v1013
        %v1037 = vadd.f32 %v908, %v1014
        %v1038 = vadd.f32 %v909, %v1003
        %v1039 = vadd.f32 %v910, %v1015
        %v1040 = vadd.f32 %v911, %v1016
        %s1041 = scalar_lea.vmem %s1, 224
        %v1042 = vld [vmem:[%s1041] sm:$0xff]
        %v1043 = vld [vmem:[%s1041 + $0x8] sm:$0xff]
        %v1044 = vld [vmem:[%s1041 + $0x10] sm:$0xff]
        %v1045 = vld [vmem:[%s1041 + $0x18] sm:$0xff]
        %1047 = vset.pattern.permute.xlu0 0
        %1048 = vperm.xlu0 %1047, %v1042
        %v1049 = vpop.permute.xlu0 %1048
        %1052 = vset.pattern.permute.xlu0 0
        %1053 = vperm.xlu0 %1052, %v1043
        %v1054 = vpop.permute.xlu0 %1053
        %1057 = vset.pattern.permute.xlu0 0
        %1058 = vperm.xlu0 %1057, %v1044
        %v1059 = vpop.permute.xlu0 %1058
        %1062 = vset.pattern.permute.xlu0 0
        %1063 = vperm.xlu0 %1062, %v1045
        %v1064 = vpop.permute.xlu0 %1063
        %v1067 = vlaneseq
        %v1068 = vshrl.u32 %v1067, 7
        %v1069 = vsub.s32 0, %v1068
        %v1070 = vrot.slane %v782, %v1069
        %v1071 = vlaneseq
        %v1072 = vshrl.u32 %v1071, 7
        %v1073 = vsub.s32 1, %v1072
        %v1074 = vrot.slane %v782, %v1073
        %v1075 = vlaneseq
        %v1076 = vshrl.u32 %v1075, 7
        %v1077 = vsub.s32 2, %v1076
        %v1078 = vrot.slane %v782, %v1077
        %v1082 = vmul.f32 %v1049, %v1070
        %v1083 = vmul.f32 %v1049, %v1074
        %v1084 = vmul.f32 %v1049, %v1078
        %v1085 = vmul.f32 %v1054, %v1070
        %v1086 = vmul.f32 %v1054, %v1074
        %v1087 = vmul.f32 %v1054, %v1078
        %v1088 = vmul.f32 %v1059, %v1070
        %v1089 = vmul.f32 %v1059, %v1074
        %v1090 = vmul.f32 %v1059, %v1078
        %v1091 = vmul.f32 %v1064, %v1070
        %v1092 = vmul.f32 %v1064, %v1074
        %v1093 = vmul.f32 %v1064, %v1078
        %1106 = vrot.lane.b32.xlu0 %v1082, 17
        %v1107 = vpop.permute.xlu0 %1106
        %1108 = vrot.lane.b32.xlu0 %v1083, 17
        %v1109 = vpop.permute.xlu0 %1108
        %1110 = vrot.lane.b32.xlu0 %v1084, 17
        %v1111 = vpop.permute.xlu0 %1110
        %1112 = vrot.lane.b32.xlu0 %v1085, 17
        %v1113 = vpop.permute.xlu0 %1112
        %1114 = vrot.lane.b32.xlu0 %v1086, 17
        %v1115 = vpop.permute.xlu0 %1114
        %1116 = vrot.lane.b32.xlu0 %v1087, 17
        %v1117 = vpop.permute.xlu0 %1116
        %1118 = vrot.lane.b32.xlu0 %v1088, 17
        %v1119 = vpop.permute.xlu0 %1118
        %1120 = vrot.lane.b32.xlu0 %v1089, 17
        %v1121 = vpop.permute.xlu0 %1120
        %1122 = vrot.lane.b32.xlu0 %v1090, 17
        %v1123 = vpop.permute.xlu0 %1122
        %1124 = vrot.lane.b32.xlu0 %v1091, 17
        %v1125 = vpop.permute.xlu0 %1124
        %1126 = vrot.lane.b32.xlu0 %v1092, 17
        %v1127 = vpop.permute.xlu0 %1126
        %1128 = vrot.lane.b32.xlu0 %v1093, 17
        %v1129 = vpop.permute.xlu0 %1128
        %vm1130 = vcmask 138240
        %v1131 = vsel %vm1130, %v1107, %v1109
        %v1132 = vsel %vm1130, %v1109, %v1111
        %v1133 = vsel %vm1130, %v1113, %v1115
        %v1134 = vsel %vm1130, %v1115, %v1117
        %v1135 = vsel %vm1130, %v1119, %v1121
        %v1136 = vsel %vm1130, %v1121, %v1123
        %v1137 = vsel %vm1130, %v1125, %v1127
        %v1138 = vsel %vm1130, %v1127, %v1129
        %v1151 = vadd.f32 %v1029, %v1107
        %v1152 = vadd.f32 %v1030, %v1131
        %v1153 = vadd.f32 %v1031, %v1132
        %v1154 = vadd.f32 %v1032, %v1113
        %v1155 = vadd.f32 %v1033, %v1133
        %v1156 = vadd.f32 %v1034, %v1134
        %v1157 = vadd.f32 %v1035, %v1119
        %v1158 = vadd.f32 %v1036, %v1135
        %v1159 = vadd.f32 %v1037, %v1136
        %v1160 = vadd.f32 %v1038, %v1125
        %v1161 = vadd.f32 %v1039, %v1137
        %v1162 = vadd.f32 %v1040, %v1138
        %1163 = vrot.lane.b32.xlu0 %v207, 56
        %v1164 = vpop.permute.xlu0 %1163
        %v1165 = vrot.slane %v1164, 7
        %vm1166 = vcmask 457728
        %v1167 = vsel %vm1166, %v1165, %v1164
        %v1169 = vmul.f32 %v782, %v1167
        %s1170 = scalar_lea.vmem %s1, 256
        %v1171 = vld [vmem:[%s1170] sm:$0xff]
        %v1172 = vld [vmem:[%s1170 + $0x8] sm:$0xff]
        %v1173 = vld [vmem:[%s1170 + $0x10] sm:$0xff]
        %v1174 = vld [vmem:[%s1170 + $0x18] sm:$0xff]
        %1176 = vset.pattern.permute.xlu0 0
        %1177 = vperm.xlu0 %1176, %v1171
        %v1178 = vpop.permute.xlu0 %1177
        %1181 = vset.pattern.permute.xlu0 0
        %1182 = vperm.xlu0 %1181, %v1172
        %v1183 = vpop.permute.xlu0 %1182
        %1186 = vset.pattern.permute.xlu0 0
        %1187 = vperm.xlu0 %1186, %v1173
        %v1188 = vpop.permute.xlu0 %1187
        %1191 = vset.pattern.permute.xlu0 0
        %1192 = vperm.xlu0 %1191, %v1174
        %v1193 = vpop.permute.xlu0 %1192
        %v1196 = vlaneseq
        %v1197 = vshrl.u32 %v1196, 7
        %v1198 = vsub.s32 0, %v1197
        %v1199 = vrot.slane %v1169, %v1198
        %v1200 = vlaneseq
        %v1201 = vshrl.u32 %v1200, 7
        %v1202 = vsub.s32 1, %v1201
        %v1203 = vrot.slane %v1169, %v1202
        %v1204 = vlaneseq
        %v1205 = vshrl.u32 %v1204, 7
        %v1206 = vsub.s32 2, %v1205
        %v1207 = vrot.slane %v1169, %v1206
        %v1211 = vmul.f32 %v1178, %v1199
        %v1212 = vmul.f32 %v1178, %v1203
        %v1213 = vmul.f32 %v1178, %v1207
        %v1214 = vmul.f32 %v1183, %v1199
        %v1215 = vmul.f32 %v1183, %v1203
        %v1216 = vmul.f32 %v1183, %v1207
        %v1217 = vmul.f32 %v1188, %v1199
        %v1218 = vmul.f32 %v1188, %v1203
        %v1219 = vmul.f32 %v1188, %v1207
        %v1220 = vmul.f32 %v1193, %v1199
        %v1221 = vmul.f32 %v1193, %v1203
        %v1222 = vmul.f32 %v1193, %v1207
        %1235 = vrot.lane.b32.xlu0 %v1211, 16
        %v1236 = vpop.permute.xlu0 %1235
        %1237 = vrot.lane.b32.xlu0 %v1212, 16
        %v1238 = vpop.permute.xlu0 %1237
        %1239 = vrot.lane.b32.xlu0 %v1213, 16
        %v1240 = vpop.permute.xlu0 %1239
        %1241 = vrot.lane.b32.xlu0 %v1214, 16
        %v1242 = vpop.permute.xlu0 %1241
        %1243 = vrot.lane.b32.xlu0 %v1215, 16
        %v1244 = vpop.permute.xlu0 %1243
        %1245 = vrot.lane.b32.xlu0 %v1216, 16
        %v1246 = vpop.permute.xlu0 %1245
        %1247 = vrot.lane.b32.xlu0 %v1217, 16
        %v1248 = vpop.permute.xlu0 %1247
        %1249 = vrot.lane.b32.xlu0 %v1218, 16
        %v1250 = vpop.permute.xlu0 %1249
        %1251 = vrot.lane.b32.xlu0 %v1219, 16
        %v1252 = vpop.permute.xlu0 %1251
        %1253 = vrot.lane.b32.xlu0 %v1220, 16
        %v1254 = vpop.permute.xlu0 %1253
        %1255 = vrot.lane.b32.xlu0 %v1221, 16
        %v1256 = vpop.permute.xlu0 %1255
        %1257 = vrot.lane.b32.xlu0 %v1222, 16
        %v1258 = vpop.permute.xlu0 %1257
        %vm1259 = vcmask 130048
        %v1260 = vsel %vm1259, %v1236, %v1238
        %v1261 = vsel %vm1259, %v1238, %v1240
        %v1262 = vsel %vm1259, %v1242, %v1244
        %v1263 = vsel %vm1259, %v1244, %v1246
        %v1264 = vsel %vm1259, %v1248, %v1250
        %v1265 = vsel %vm1259, %v1250, %v1252
        %v1266 = vsel %vm1259, %v1254, %v1256
        %v1267 = vsel %vm1259, %v1256, %v1258
        %v1280 = vadd.f32 %v1151, %v1236
        %v1281 = vadd.f32 %v1152, %v1260
        %v1282 = vadd.f32 %v1153, %v1261
        %v1283 = vadd.f32 %v1154, %v1242
        %v1284 = vadd.f32 %v1155, %v1262
        %v1285 = vadd.f32 %v1156, %v1263
        %v1286 = vadd.f32 %v1157, %v1248
        %v1287 = vadd.f32 %v1158, %v1264
        %v1288 = vadd.f32 %v1159, %v1265
        %v1289 = vadd.f32 %v1160, %v1254
        %v1290 = vadd.f32 %v1161, %v1266
        %v1291 = vadd.f32 %v1162, %v1267
        %1304 = vrot.lane.b32.xlu0 %v1280, 56
        %v1305 = vpop.permute.xlu0 %1304
        %1306 = vrot.lane.b32.xlu0 %v1281, 56
        %v1307 = vpop.permute.xlu0 %1306
        %1308 = vrot.lane.b32.xlu0 %v1282, 56
        %v1309 = vpop.permute.xlu0 %1308
        %1310 = vrot.lane.b32.xlu0 %v1283, 56
        %v1311 = vpop.permute.xlu0 %1310
        %1312 = vrot.lane.b32.xlu0 %v1284, 56
        %v1313 = vpop.permute.xlu0 %1312
        %1314 = vrot.lane.b32.xlu0 %v1285, 56
        %v1315 = vpop.permute.xlu0 %1314
        %1316 = vrot.lane.b32.xlu0 %v1286, 56
        %v1317 = vpop.permute.xlu0 %1316
        %1318 = vrot.lane.b32.xlu0 %v1287, 56
        %v1319 = vpop.permute.xlu0 %1318
        %1320 = vrot.lane.b32.xlu0 %v1288, 56
        %v1321 = vpop.permute.xlu0 %1320
        %1322 = vrot.lane.b32.xlu0 %v1289, 56
        %v1323 = vpop.permute.xlu0 %1322
        %1324 = vrot.lane.b32.xlu0 %v1290, 56
        %v1325 = vpop.permute.xlu0 %1324
        %1326 = vrot.lane.b32.xlu0 %v1291, 56
        %v1327 = vpop.permute.xlu0 %1326
        %v1328 = vsel %vm1166, %v1305, %v1307
        %v1329 = vsel %vm1166, %v1307, %v1309
        %v1330 = vsel %vm1166, %v1311, %v1313
        %v1331 = vsel %vm1166, %v1313, %v1315
        %v1332 = vsel %vm1166, %v1317, %v1319
        %v1333 = vsel %vm1166, %v1319, %v1321
        %v1334 = vsel %vm1166, %v1323, %v1325
        %v1335 = vsel %vm1166, %v1325, %v1327
        %v1344 = vadd.f32 %v1328, %v1329
        %1345 = vadd.xlane.f32.xlu0 %v1344
        %v1346 = vpop.xlane.xlu0 %1345
        %v1347 = vadd.f32 %v1330, %v1331
        %1348 = vadd.xlane.f32.xlu0 %v1347
        %v1349 = vpop.xlane.xlu0 %1348
        %v1350 = vadd.f32 %v1332, %v1333
        %1351 = vadd.xlane.f32.xlu0 %v1350
        %v1352 = vpop.xlane.xlu0 %1351
        %v1353 = vadd.f32 %v1334, %v1335
        %1354 = vadd.xlane.f32.xlu0 %v1353
        %v1355 = vpop.xlane.xlu0 %1354
        %v1356 = vadd.f32 %v1346, 0.0
        %v1357 = vadd.f32 %v1349, 0.0
        %v1358 = vadd.f32 %v1352, 0.0
        %v1359 = vadd.f32 %v1355, 0.0
        %v1360 = vmul.f32 %v1280, %v1280
        %v1361 = vmul.f32 %v1281, %v1281
        %v1362 = vmul.f32 %v1282, %v1282
        %v1363 = vmul.f32 %v1283, %v1283
        %v1364 = vmul.f32 %v1284, %v1284
        %v1365 = vmul.f32 %v1285, %v1285
        %v1366 = vmul.f32 %v1286, %v1286
        %v1367 = vmul.f32 %v1287, %v1287
        %v1368 = vmul.f32 %v1288, %v1288
        %v1369 = vmul.f32 %v1289, %v1289
        %v1370 = vmul.f32 %v1290, %v1290
        %v1371 = vmul.f32 %v1291, %v1291
        %1384 = vrot.lane.b32.xlu0 %v1360, 56
        %v1385 = vpop.permute.xlu0 %1384
        %1386 = vrot.lane.b32.xlu0 %v1361, 56
        %v1387 = vpop.permute.xlu0 %1386
        %1388 = vrot.lane.b32.xlu0 %v1362, 56
        %v1389 = vpop.permute.xlu0 %1388
        %1390 = vrot.lane.b32.xlu0 %v1363, 56
        %v1391 = vpop.permute.xlu0 %1390
        %1392 = vrot.lane.b32.xlu0 %v1364, 56
        %v1393 = vpop.permute.xlu0 %1392
        %1394 = vrot.lane.b32.xlu0 %v1365, 56
        %v1395 = vpop.permute.xlu0 %1394
        %1396 = vrot.lane.b32.xlu0 %v1366, 56
        %v1397 = vpop.permute.xlu0 %1396
        %1398 = vrot.lane.b32.xlu0 %v1367, 56
        %v1399 = vpop.permute.xlu0 %1398
        %1400 = vrot.lane.b32.xlu0 %v1368, 56
        %v1401 = vpop.permute.xlu0 %1400
        %1402 = vrot.lane.b32.xlu0 %v1369, 56
        %v1403 = vpop.permute.xlu0 %1402
        %1404 = vrot.lane.b32.xlu0 %v1370, 56
        %v1405 = vpop.permute.xlu0 %1404
        %1406 = vrot.lane.b32.xlu0 %v1371, 56
        %v1407 = vpop.permute.xlu0 %1406
        %v1408 = vsel %vm1166, %v1385, %v1387
        %v1409 = vsel %vm1166, %v1387, %v1389
        %v1410 = vsel %vm1166, %v1391, %v1393
        %v1411 = vsel %vm1166, %v1393, %v1395
        %v1412 = vsel %vm1166, %v1397, %v1399
        %v1413 = vsel %vm1166, %v1399, %v1401
        %v1414 = vsel %vm1166, %v1403, %v1405
        %v1415 = vsel %vm1166, %v1405, %v1407
        %v1424 = vadd.f32 %v1408, %v1409
        %1425 = vadd.xlane.f32.xlu0 %v1424
        %v1426 = vpop.xlane.xlu0 %1425
        %v1427 = vadd.f32 %v1410, %v1411
        %1428 = vadd.xlane.f32.xlu0 %v1427
        %v1429 = vpop.xlane.xlu0 %1428
        %v1430 = vadd.f32 %v1412, %v1413
        %1431 = vadd.xlane.f32.xlu0 %v1430
        %v1432 = vpop.xlane.xlu0 %1431
        %v1433 = vadd.f32 %v1414, %v1415
        %1434 = vadd.xlane.f32.xlu0 %v1433
        %v1435 = vpop.xlane.xlu0 %1434
        %v1436 = vadd.f32 %v1426, 0.0
        %v1437 = vadd.f32 %v1429, 0.0
        %v1438 = vadd.f32 %v1432, 0.0
        %v1439 = vadd.f32 %v1435, 0.0
        %1440 = vst [vmem:[%s188 + $0x8] sm:$0xff] %v1328
        %1441 = vst [vmem:[%s188 + $0x10] sm:$0xff] %v1329
        %1442 = vst [vmem:[%s188 + $0x98] sm:$0xff] %v1330
        %1443 = vst [vmem:[%s188 + $0xa0] sm:$0xff] %v1331
        %1444 = vst [vmem:[%s188 + $0x128] sm:$0xff] %v1332
        %1445 = vst [vmem:[%s188 + $0x130] sm:$0xff] %v1333
        %1446 = vst [vmem:[%s188 + $0x1b8] sm:$0xff] %v1334
        %1447 = vst [vmem:[%s188 + $0x1c0] sm:$0xff] %v1335
        %s1448 = scalar_lea.vmem %s3, 8
        %v1449 = vld [vmem:[%s1448] ss:$4 sm:$0x3]
        %s1450 = scalar_lea.vmem %s3, 9
        %v1451 = vld [vmem:[%s1450] ss:$4 sm:$0x3]
        %v1452 = vld [vmem:[%s192 + $0x2] sm:$0x7]
        %1454 = vrot.lane.b32.xlu0 %v1449, 72
        %v1455 = vpop.permute.xlu0 %1454
        %v1456 = vrot.slane %v1455, 7
        %v1457 = vsel %vm237, %v1456, %v1455
        %v1459 = vmul.f32 %v1452, %v1457
        %v1460 = vld [vmem:[%s1] sm:$0xff]
        %v1461 = vld [vmem:[%s1 + $0x8] sm:$0xff]
        %v1462 = vld [vmem:[%s1 + $0x10] sm:$0xff]
        %v1463 = vld [vmem:[%s1 + $0x18] sm:$0xff]
        %1465 = vset.pattern.permute.xlu0 0
        %1466 = vperm.xlu0 %1465, %v1460
        %v1467 = vpop.permute.xlu0 %1466
        %1470 = vset.pattern.permute.xlu0 0
        %1471 = vperm.xlu0 %1470, %v1461
        %v1472 = vpop.permute.xlu0 %1471
        %1475 = vset.pattern.permute.xlu0 0
        %1476 = vperm.xlu0 %1475, %v1462
        %v1477 = vpop.permute.xlu0 %1476
        %1480 = vset.pattern.permute.xlu0 0
        %1481 = vperm.xlu0 %1480, %v1463
        %v1482 = vpop.permute.xlu0 %1481
        %v1485 = vlaneseq
        %v1486 = vshrl.u32 %v1485, 7
        %v1487 = vsub.s32 0, %v1486
        %v1488 = vrot.slane %v1459, %v1487
        %v1489 = vlaneseq
        %v1490 = vshrl.u32 %v1489, 7
        %v1491 = vsub.s32 1, %v1490
        %v1492 = vrot.slane %v1459, %v1491
        %v1493 = vlaneseq
        %v1494 = vshrl.u32 %v1493, 7
        %v1495 = vsub.s32 2, %v1494
        %v1496 = vrot.slane %v1459, %v1495
        %v1500 = vmul.f32 %v1467, %v1488
        %v1501 = vmul.f32 %v1467, %v1492
        %v1502 = vmul.f32 %v1467, %v1496
        %v1503 = vmul.f32 %v1472, %v1488
        %v1504 = vmul.f32 %v1472, %v1492
        %v1505 = vmul.f32 %v1472, %v1496
        %v1506 = vmul.f32 %v1477, %v1488
        %v1507 = vmul.f32 %v1477, %v1492
        %v1508 = vmul.f32 %v1477, %v1496
        %v1509 = vmul.f32 %v1482, %v1488
        %v1510 = vmul.f32 %v1482, %v1492
        %v1511 = vmul.f32 %v1482, %v1496
        %v1512 = vadd.f32 %v228, %v1500
        %v1513 = vadd.f32 %v228, %v1501
        %v1514 = vadd.f32 %v228, %v1502
        %v1515 = vadd.f32 %v229, %v1503
        %v1516 = vadd.f32 %v229, %v1504
        %v1517 = vadd.f32 %v229, %v1505
        %v1518 = vadd.f32 %v230, %v1506
        %v1519 = vadd.f32 %v230, %v1507
        %v1520 = vadd.f32 %v230, %v1508
        %v1521 = vadd.f32 %v231, %v1509
        %v1522 = vadd.f32 %v231, %v1510
        %v1523 = vadd.f32 %v231, %v1511
        %v1524 = vld [vmem:[%s305] sm:$0xff]
        %v1525 = vld [vmem:[%s305 + $0x8] sm:$0xff]
        %v1526 = vld [vmem:[%s305 + $0x10] sm:$0xff]
        %v1527 = vld [vmem:[%s305 + $0x18] sm:$0xff]
        %1529 = vset.pattern.permute.xlu0 0
        %1530 = vperm.xlu0 %1529, %v1524
        %v1531 = vpop.permute.xlu0 %1530
        %1534 = vset.pattern.permute.xlu0 0
        %1535 = vperm.xlu0 %1534, %v1525
        %v1536 = vpop.permute.xlu0 %1535
        %1539 = vset.pattern.permute.xlu0 0
        %1540 = vperm.xlu0 %1539, %v1526
        %v1541 = vpop.permute.xlu0 %1540
        %1544 = vset.pattern.permute.xlu0 0
        %1545 = vperm.xlu0 %1544, %v1527
        %v1546 = vpop.permute.xlu0 %1545
        %v1549 = vlaneseq
        %v1550 = vshrl.u32 %v1549, 7
        %v1551 = vsub.s32 0, %v1550
        %v1552 = vrot.slane %v1452, %v1551
        %v1553 = vlaneseq
        %v1554 = vshrl.u32 %v1553, 7
        %v1555 = vsub.s32 1, %v1554
        %v1556 = vrot.slane %v1452, %v1555
        %v1557 = vlaneseq
        %v1558 = vshrl.u32 %v1557, 7
        %v1559 = vsub.s32 2, %v1558
        %v1560 = vrot.slane %v1452, %v1559
        %v1564 = vmul.f32 %v1531, %v1552
        %v1565 = vmul.f32 %v1531, %v1556
        %v1566 = vmul.f32 %v1531, %v1560
        %v1567 = vmul.f32 %v1536, %v1552
        %v1568 = vmul.f32 %v1536, %v1556
        %v1569 = vmul.f32 %v1536, %v1560
        %v1570 = vmul.f32 %v1541, %v1552
        %v1571 = vmul.f32 %v1541, %v1556
        %v1572 = vmul.f32 %v1541, %v1560
        %v1573 = vmul.f32 %v1546, %v1552
        %v1574 = vmul.f32 %v1546, %v1556
        %v1575 = vmul.f32 %v1546, %v1560
        %1588 = vrot.lane.b32.xlu0 %v1564, 127
        %v1589 = vpop.permute.xlu0 %1588
        %1590 = vrot.lane.b32.xlu0 %v1565, 127
        %v1591 = vpop.permute.xlu0 %1590
        %1592 = vrot.lane.b32.xlu0 %v1566, 127
        %v1593 = vpop.permute.xlu0 %1592
        %1594 = vrot.lane.b32.xlu0 %v1567, 127
        %v1595 = vpop.permute.xlu0 %1594
        %1596 = vrot.lane.b32.xlu0 %v1568, 127
        %v1597 = vpop.permute.xlu0 %1596
        %1598 = vrot.lane.b32.xlu0 %v1569, 127
        %v1599 = vpop.permute.xlu0 %1598
        %1600 = vrot.lane.b32.xlu0 %v1570, 127
        %v1601 = vpop.permute.xlu0 %1600
        %1602 = vrot.lane.b32.xlu0 %v1571, 127
        %v1603 = vpop.permute.xlu0 %1602
        %1604 = vrot.lane.b32.xlu0 %v1572, 127
        %v1605 = vpop.permute.xlu0 %1604
        %1606 = vrot.lane.b32.xlu0 %v1573, 127
        %v1607 = vpop.permute.xlu0 %1606
        %1608 = vrot.lane.b32.xlu0 %v1574, 127
        %v1609 = vpop.permute.xlu0 %1608
        %1610 = vrot.lane.b32.xlu0 %v1575, 127
        %v1611 = vpop.permute.xlu0 %1610
        %v1612 = vsel %vm394, %v1589, %v1591
        %v1613 = vsel %vm394, %v1591, %v1593
        %v1614 = vsel %vm394, %v1595, %v1597
        %v1615 = vsel %vm394, %v1597, %v1599
        %v1616 = vsel %vm394, %v1601, %v1603
        %v1617 = vsel %vm394, %v1603, %v1605
        %v1618 = vsel %vm394, %v1607, %v1609
        %v1619 = vsel %vm394, %v1609, %v1611
        %v1632 = vadd.f32 %v1512, %v1612
        %v1633 = vadd.f32 %v1513, %v1613
        %v1634 = vadd.f32 %v1514, %v1593
        %v1635 = vadd.f32 %v1515, %v1614
        %v1636 = vadd.f32 %v1516, %v1615
        %v1637 = vadd.f32 %v1517, %v1599
        %v1638 = vadd.f32 %v1518, %v1616
        %v1639 = vadd.f32 %v1519, %v1617
        %v1640 = vadd.f32 %v1520, %v1605
        %v1641 = vadd.f32 %v1521, %v1618
        %v1642 = vadd.f32 %v1522, %v1619
        %v1643 = vadd.f32 %v1523, %v1611
        %1645 = vrot.lane.b32.xlu0 %v1451, 74
        %v1646 = vpop.permute.xlu0 %1645
        %v1647 = vrot.slane %v1646, 7
        %v1648 = vsel %vm431, %v1647, %v1646
        %v1650 = vmul.f32 %v1452, %v1648
        %v1651 = vld [vmem:[%s435] sm:$0xff]
        %v1652 = vld [vmem:[%s435 + $0x8] sm:$0xff]
        %v1653 = vld [vmem:[%s435 + $0x10] sm:$0xff]
        %v1654 = vld [vmem:[%s435 + $0x18] sm:$0xff]
        %1656 = vset.pattern.permute.xlu0 0
        %1657 = vperm.xlu0 %1656, %v1651
        %v1658 = vpop.permute.xlu0 %1657
        %1661 = vset.pattern.permute.xlu0 0
        %1662 = vperm.xlu0 %1661, %v1652
        %v1663 = vpop.permute.xlu0 %1662
        %1666 = vset.pattern.permute.xlu0 0
        %1667 = vperm.xlu0 %1666, %v1653
        %v1668 = vpop.permute.xlu0 %1667
        %1671 = vset.pattern.permute.xlu0 0
        %1672 = vperm.xlu0 %1671, %v1654
        %v1673 = vpop.permute.xlu0 %1672
        %v1676 = vlaneseq
        %v1677 = vshrl.u32 %v1676, 7
        %v1678 = vsub.s32 0, %v1677
        %v1679 = vrot.slane %v1650, %v1678
        %v1680 = vlaneseq
        %v1681 = vshrl.u32 %v1680, 7
        %v1682 = vsub.s32 1, %v1681
        %v1683 = vrot.slane %v1650, %v1682
        %v1684 = vlaneseq
        %v1685 = vshrl.u32 %v1684, 7
        %v1686 = vsub.s32 2, %v1685
        %v1687 = vrot.slane %v1650, %v1686
        %v1691 = vmul.f32 %v1658, %v1679
        %v1692 = vmul.f32 %v1658, %v1683
        %v1693 = vmul.f32 %v1658, %v1687
        %v1694 = vmul.f32 %v1663, %v1679
        %v1695 = vmul.f32 %v1663, %v1683
        %v1696 = vmul.f32 %v1663, %v1687
        %v1697 = vmul.f32 %v1668, %v1679
        %v1698 = vmul.f32 %v1668, %v1683
        %v1699 = vmul.f32 %v1668, %v1687
        %v1700 = vmul.f32 %v1673, %v1679
        %v1701 = vmul.f32 %v1673, %v1683
        %v1702 = vmul.f32 %v1673, %v1687
        %1715 = vrot.lane.b32.xlu0 %v1691, 126
        %v1716 = vpop.permute.xlu0 %1715
        %1717 = vrot.lane.b32.xlu0 %v1692, 126
        %v1718 = vpop.permute.xlu0 %1717
        %1719 = vrot.lane.b32.xlu0 %v1693, 126
        %v1720 = vpop.permute.xlu0 %1719
        %1721 = vrot.lane.b32.xlu0 %v1694, 126
        %v1722 = vpop.permute.xlu0 %1721
        %1723 = vrot.lane.b32.xlu0 %v1695, 126
        %v1724 = vpop.permute.xlu0 %1723
        %1725 = vrot.lane.b32.xlu0 %v1696, 126
        %v1726 = vpop.permute.xlu0 %1725
        %1727 = vrot.lane.b32.xlu0 %v1697, 126
        %v1728 = vpop.permute.xlu0 %1727
        %1729 = vrot.lane.b32.xlu0 %v1698, 126
        %v1730 = vpop.permute.xlu0 %1729
        %1731 = vrot.lane.b32.xlu0 %v1699, 126
        %v1732 = vpop.permute.xlu0 %1731
        %1733 = vrot.lane.b32.xlu0 %v1700, 126
        %v1734 = vpop.permute.xlu0 %1733
        %1735 = vrot.lane.b32.xlu0 %v1701, 126
        %v1736 = vpop.permute.xlu0 %1735
        %1737 = vrot.lane.b32.xlu0 %v1702, 126
        %v1738 = vpop.permute.xlu0 %1737
        %v1739 = vsel %vm524, %v1716, %v1718
        %v1740 = vsel %vm524, %v1718, %v1720
        %v1741 = vsel %vm524, %v1722, %v1724
        %v1742 = vsel %vm524, %v1724, %v1726
        %v1743 = vsel %vm524, %v1728, %v1730
        %v1744 = vsel %vm524, %v1730, %v1732
        %v1745 = vsel %vm524, %v1734, %v1736
        %v1746 = vsel %vm524, %v1736, %v1738
        %v1759 = vadd.f32 %v1632, %v1739
        %v1760 = vadd.f32 %v1633, %v1740
        %v1761 = vadd.f32 %v1634, %v1720
        %v1762 = vadd.f32 %v1635, %v1741
        %v1763 = vadd.f32 %v1636, %v1742
        %v1764 = vadd.f32 %v1637, %v1726
        %v1765 = vadd.f32 %v1638, %v1743
        %v1766 = vadd.f32 %v1639, %v1744
        %v1767 = vadd.f32 %v1640, %v1732
        %v1768 = vadd.f32 %v1641, %v1745
        %v1769 = vadd.f32 %v1642, %v1746
        %v1770 = vadd.f32 %v1643, %v1738
        %1771 = vrot.lane.b32.xlu0 %v1449, 127
        %v1772 = vpop.permute.xlu0 %1771
        %v1773 = vrot.slane %v1772, 7
        %v1774 = vsel %vm394, %v1773, %v1772
        %v1776 = vmul.f32 %v1452, %v1774
        %v1777 = vld [vmem:[%s563] sm:$0xff]
        %v1778 = vld [vmem:[%s563 + $0x8] sm:$0xff]
        %v1779 = vld [vmem:[%s563 + $0x10] sm:$0xff]
        %v1780 = vld [vmem:[%s563 + $0x18] sm:$0xff]
        %1782 = vset.pattern.permute.xlu0 0
        %1783 = vperm.xlu0 %1782, %v1777
        %v1784 = vpop.permute.xlu0 %1783
        %1787 = vset.pattern.permute.xlu0 0
        %1788 = vperm.xlu0 %1787, %v1778
        %v1789 = vpop.permute.xlu0 %1788
        %1792 = vset.pattern.permute.xlu0 0
        %1793 = vperm.xlu0 %1792, %v1779
        %v1794 = vpop.permute.xlu0 %1793
        %1797 = vset.pattern.permute.xlu0 0
        %1798 = vperm.xlu0 %1797, %v1780
        %v1799 = vpop.permute.xlu0 %1798
        %v1802 = vlaneseq
        %v1803 = vshrl.u32 %v1802, 7
        %v1804 = vsub.s32 0, %v1803
        %v1805 = vrot.slane %v1776, %v1804
        %v1806 = vlaneseq
        %v1807 = vshrl.u32 %v1806, 7
        %v1808 = vsub.s32 1, %v1807
        %v1809 = vrot.slane %v1776, %v1808
        %v1810 = vlaneseq
        %v1811 = vshrl.u32 %v1810, 7
        %v1812 = vsub.s32 2, %v1811
        %v1813 = vrot.slane %v1776, %v1812
        %v1817 = vmul.f32 %v1784, %v1805
        %v1818 = vmul.f32 %v1784, %v1809
        %v1819 = vmul.f32 %v1784, %v1813
        %v1820 = vmul.f32 %v1789, %v1805
        %v1821 = vmul.f32 %v1789, %v1809
        %v1822 = vmul.f32 %v1789, %v1813
        %v1823 = vmul.f32 %v1794, %v1805
        %v1824 = vmul.f32 %v1794, %v1809
        %v1825 = vmul.f32 %v1794, %v1813
        %v1826 = vmul.f32 %v1799, %v1805
        %v1827 = vmul.f32 %v1799, %v1809
        %v1828 = vmul.f32 %v1799, %v1813
        %1841 = vrot.lane.b32.xlu0 %v1817, 73
        %v1842 = vpop.permute.xlu0 %1841
        %1843 = vrot.lane.b32.xlu0 %v1818, 73
        %v1844 = vpop.permute.xlu0 %1843
        %1845 = vrot.lane.b32.xlu0 %v1819, 73
        %v1846 = vpop.permute.xlu0 %1845
        %1847 = vrot.lane.b32.xlu0 %v1820, 73
        %v1848 = vpop.permute.xlu0 %1847
        %1849 = vrot.lane.b32.xlu0 %v1821, 73
        %v1850 = vpop.permute.xlu0 %1849
        %1851 = vrot.lane.b32.xlu0 %v1822, 73
        %v1852 = vpop.permute.xlu0 %1851
        %1853 = vrot.lane.b32.xlu0 %v1823, 73
        %v1854 = vpop.permute.xlu0 %1853
        %1855 = vrot.lane.b32.xlu0 %v1824, 73
        %v1856 = vpop.permute.xlu0 %1855
        %1857 = vrot.lane.b32.xlu0 %v1825, 73
        %v1858 = vpop.permute.xlu0 %1857
        %1859 = vrot.lane.b32.xlu0 %v1826, 73
        %v1860 = vpop.permute.xlu0 %1859
        %1861 = vrot.lane.b32.xlu0 %v1827, 73
        %v1862 = vpop.permute.xlu0 %1861
        %1863 = vrot.lane.b32.xlu0 %v1828, 73
        %v1864 = vpop.permute.xlu0 %1863
        %v1865 = vsel %vm652, %v1842, %v1844
        %v1866 = vsel %vm652, %v1844, %v1846
        %v1867 = vsel %vm652, %v1848, %v1850
        %v1868 = vsel %vm652, %v1850, %v1852
        %v1869 = vsel %vm652, %v1854, %v1856
        %v1870 = vsel %vm652, %v1856, %v1858
        %v1871 = vsel %vm652, %v1860, %v1862
        %v1872 = vsel %vm652, %v1862, %v1864
        %v1885 = vadd.f32 %v1759, %v1865
        %v1886 = vadd.f32 %v1760, %v1866
        %v1887 = vadd.f32 %v1761, %v1846
        %v1888 = vadd.f32 %v1762, %v1867
        %v1889 = vadd.f32 %v1763, %v1868
        %v1890 = vadd.f32 %v1764, %v1852
        %v1891 = vadd.f32 %v1765, %v1869
        %v1892 = vadd.f32 %v1766, %v1870
        %v1893 = vadd.f32 %v1767, %v1858
        %v1894 = vadd.f32 %v1768, %v1871
        %v1895 = vadd.f32 %v1769, %v1872
        %v1896 = vadd.f32 %v1770, %v1864
        %v1897 = vld [vmem:[%s192 + $0x3] sm:$0x3]
        %v1898 = vld [vmem:[%s686] sm:$0xff]
        %v1899 = vld [vmem:[%s686 + $0x8] sm:$0xff]
        %v1900 = vld [vmem:[%s686 + $0x10] sm:$0xff]
        %v1901 = vld [vmem:[%s686 + $0x18] sm:$0xff]
        %1903 = vset.pattern.permute.xlu0 0
        %1904 = vperm.xlu0 %1903, %v1898
        %v1905 = vpop.permute.xlu0 %1904
        %1908 = vset.pattern.permute.xlu0 0
        %1909 = vperm.xlu0 %1908, %v1899
        %v1910 = vpop.permute.xlu0 %1909
        %1913 = vset.pattern.permute.xlu0 0
        %1914 = vperm.xlu0 %1913, %v1900
        %v1915 = vpop.permute.xlu0 %1914
        %1918 = vset.pattern.permute.xlu0 0
        %1919 = vperm.xlu0 %1918, %v1901
        %v1920 = vpop.permute.xlu0 %1919
        %v1923 = vlaneseq
        %v1924 = vshrl.u32 %v1923, 7
        %v1925 = vsub.s32 0, %v1924
        %v1926 = vrot.slane %v1897, %v1925
        %v1927 = vlaneseq
        %v1928 = vshrl.u32 %v1927, 7
        %v1929 = vsub.s32 1, %v1928
        %v1930 = vrot.slane %v1897, %v1929
        %v1933 = vmul.f32 %v1905, %v1926
        %v1934 = vmul.f32 %v1905, %v1930
        %v1935 = vmul.f32 %v1910, %v1926
        %v1936 = vmul.f32 %v1910, %v1930
        %v1937 = vmul.f32 %v1915, %v1926
        %v1938 = vmul.f32 %v1915, %v1930
        %v1939 = vmul.f32 %v1920, %v1926
        %v1940 = vmul.f32 %v1920, %v1930
        %1949 = vrot.lane.b32.xlu0 %v1933, 72
        %v1950 = vpop.permute.xlu0 %1949
        %1951 = vrot.lane.b32.xlu0 %v1934, 72
        %v1952 = vpop.permute.xlu0 %1951
        %1953 = vrot.lane.b32.xlu0 %v1935, 72
        %v1954 = vpop.permute.xlu0 %1953
        %1955 = vrot.lane.b32.xlu0 %v1936, 72
        %v1956 = vpop.permute.xlu0 %1955
        %1957 = vrot.lane.b32.xlu0 %v1937, 72
        %v1958 = vpop.permute.xlu0 %1957
        %1959 = vrot.lane.b32.xlu0 %v1938, 72
        %v1960 = vpop.permute.xlu0 %1959
        %1961 = vrot.lane.b32.xlu0 %v1939, 72
        %v1962 = vpop.permute.xlu0 %1961
        %1963 = vrot.lane.b32.xlu0 %v1940, 72
        %v1964 = vpop.permute.xlu0 %1963
        %v1965 = vsel %vm237, %v1950, %v1952
        %v1966 = vsel %vm237, %v1954, %v1956
        %v1967 = vsel %vm237, %v1958, %v1960
        %v1968 = vsel %vm237, %v1962, %v1964
        %v1981 = vadd.f32 %v1885, %v1950
        %v1982 = vadd.f32 %v1886, %v1965
        %v1983 = vadd.f32 %v1887, %v1952
        %v1984 = vadd.f32 %v1888, %v1954
        %v1985 = vadd.f32 %v1889, %v1966
        %v1986 = vadd.f32 %v1890, %v1956
        %v1987 = vadd.f32 %v1891, %v1958
        %v1988 = vadd.f32 %v1892, %v1967
        %v1989 = vadd.f32 %v1893, %v1960
        %v1990 = vadd.f32 %v1894, %v1962
        %v1991 = vadd.f32 %v1895, %v1968
        %v1992 = vadd.f32 %v1896, %v1964
        %v1993 = vld [vmem:[%s192 + $0x3] sm:$0x7]
        %1994 = vrot.lane.b32.xlu0 %v1451, 1
        %v1995 = vpop.permute.xlu0 %1994
        %v1996 = vrot.slane %v1995, 7
        %v1997 = vsel %vm786, %v1996, %v1995
        %v1999 = vmul.f32 %v1993, %v1997
        %v2000 = vld [vmem:[%s790] sm:$0xff]
        %v2001 = vld [vmem:[%s790 + $0x8] sm:$0xff]
        %v2002 = vld [vmem:[%s790 + $0x10] sm:$0xff]
        %v2003 = vld [vmem:[%s790 + $0x18] sm:$0xff]
        %2005 = vset.pattern.permute.xlu0 0
        %2006 = vperm.xlu0 %2005, %v2000
        %v2007 = vpop.permute.xlu0 %2006
        %2010 = vset.pattern.permute.xlu0 0
        %2011 = vperm.xlu0 %2010, %v2001
        %v2012 = vpop.permute.xlu0 %2011
        %2015 = vset.pattern.permute.xlu0 0
        %2016 = vperm.xlu0 %2015, %v2002
        %v2017 = vpop.permute.xlu0 %2016
        %2020 = vset.pattern.permute.xlu0 0
        %2021 = vperm.xlu0 %2020, %v2003
        %v2022 = vpop.permute.xlu0 %2021
        %v2025 = vlaneseq
        %v2026 = vshrl.u32 %v2025, 7
        %v2027 = vsub.s32 0, %v2026
        %v2028 = vrot.slane %v1999, %v2027
        %v2029 = vlaneseq
        %v2030 = vshrl.u32 %v2029, 7
        %v2031 = vsub.s32 1, %v2030
        %v2032 = vrot.slane %v1999, %v2031
        %v2033 = vlaneseq
        %v2034 = vshrl.u32 %v2033, 7
        %v2035 = vsub.s32 2, %v2034
        %v2036 = vrot.slane %v1999, %v2035
        %v2040 = vmul.f32 %v2007, %v2028
        %v2041 = vmul.f32 %v2007, %v2032
        %v2042 = vmul.f32 %v2007, %v2036
        %v2043 = vmul.f32 %v2012, %v2028
        %v2044 = vmul.f32 %v2012, %v2032
        %v2045 = vmul.f32 %v2012, %v2036
        %v2046 = vmul.f32 %v2017, %v2028
        %v2047 = vmul.f32 %v2017, %v2032
        %v2048 = vmul.f32 %v2017, %v2036
        %v2049 = vmul.f32 %v2022, %v2028
        %v2050 = vmul.f32 %v2022, %v2032
        %v2051 = vmul.f32 %v2022, %v2036
        %2064 = vrot.lane.b32.xlu0 %v2040, 71
        %v2065 = vpop.permute.xlu0 %2064
        %2066 = vrot.lane.b32.xlu0 %v2041, 71
        %v2067 = vpop.permute.xlu0 %2066
        %2068 = vrot.lane.b32.xlu0 %v2042, 71
        %v2069 = vpop.permute.xlu0 %2068
        %2070 = vrot.lane.b32.xlu0 %v2043, 71
        %v2071 = vpop.permute.xlu0 %2070
        %2072 = vrot.lane.b32.xlu0 %v2044, 71
        %v2073 = vpop.permute.xlu0 %2072
        %2074 = vrot.lane.b32.xlu0 %v2045, 71
        %v2075 = vpop.permute.xlu0 %2074
        %2076 = vrot.lane.b32.xlu0 %v2046, 71
        %v2077 = vpop.permute.xlu0 %2076
        %2078 = vrot.lane.b32.xlu0 %v2047, 71
        %v2079 = vpop.permute.xlu0 %2078
        %2080 = vrot.lane.b32.xlu0 %v2048, 71
        %v2081 = vpop.permute.xlu0 %2080
        %2082 = vrot.lane.b32.xlu0 %v2049, 71
        %v2083 = vpop.permute.xlu0 %2082
        %2084 = vrot.lane.b32.xlu0 %v2050, 71
        %v2085 = vpop.permute.xlu0 %2084
        %2086 = vrot.lane.b32.xlu0 %v2051, 71
        %v2087 = vpop.permute.xlu0 %2086
        %v2088 = vsel %vm879, %v2065, %v2067
        %v2089 = vsel %vm879, %v2067, %v2069
        %v2090 = vsel %vm879, %v2071, %v2073
        %v2091 = vsel %vm879, %v2073, %v2075
        %v2092 = vsel %vm879, %v2077, %v2079
        %v2093 = vsel %vm879, %v2079, %v2081
        %v2094 = vsel %vm879, %v2083, %v2085
        %v2095 = vsel %vm879, %v2085, %v2087
        %v2108 = vadd.f32 %v1981, %v2065
        %v2109 = vadd.f32 %v1982, %v2088
        %v2110 = vadd.f32 %v1983, %v2089
        %v2111 = vadd.f32 %v1984, %v2071
        %v2112 = vadd.f32 %v1985, %v2090
        %v2113 = vadd.f32 %v1986, %v2091
        %v2114 = vadd.f32 %v1987, %v2077
        %v2115 = vadd.f32 %v1988, %v2092
        %v2116 = vadd.f32 %v1989, %v2093
        %v2117 = vadd.f32 %v1990, %v2083
        %v2118 = vadd.f32 %v1991, %v2094
        %v2119 = vadd.f32 %v1992, %v2095
        %2120 = vrot.lane.b32.xlu0 %v1449, 54
        %v2121 = vpop.permute.xlu0 %2120
        %v2122 = vrot.slane %v2121, 7
        %v2123 = vsel %vm915, %v2122, %v2121
        %v2125 = vmul.f32 %v1993, %v2123
        %v2126 = vld [vmem:[%s919] sm:$0xff]
        %v2127 = vld [vmem:[%s919 + $0x8] sm:$0xff]
        %v2128 = vld [vmem:[%s919 + $0x10] sm:$0xff]
        %v2129 = vld [vmem:[%s919 + $0x18] sm:$0xff]
        %2131 = vset.pattern.permute.xlu0 0
        %2132 = vperm.xlu0 %2131, %v2126
        %v2133 = vpop.permute.xlu0 %2132
        %2136 = vset.pattern.permute.xlu0 0
        %2137 = vperm.xlu0 %2136, %v2127
        %v2138 = vpop.permute.xlu0 %2137
        %2141 = vset.pattern.permute.xlu0 0
        %2142 = vperm.xlu0 %2141, %v2128
        %v2143 = vpop.permute.xlu0 %2142
        %2146 = vset.pattern.permute.xlu0 0
        %2147 = vperm.xlu0 %2146, %v2129
        %v2148 = vpop.permute.xlu0 %2147
        %v2151 = vlaneseq
        %v2152 = vshrl.u32 %v2151, 7
        %v2153 = vsub.s32 0, %v2152
        %v2154 = vrot.slane %v2125, %v2153
        %v2155 = vlaneseq
        %v2156 = vshrl.u32 %v2155, 7
        %v2157 = vsub.s32 1, %v2156
        %v2158 = vrot.slane %v2125, %v2157
        %v2159 = vlaneseq
        %v2160 = vshrl.u32 %v2159, 7
        %v2161 = vsub.s32 2, %v2160
        %v2162 = vrot.slane %v2125, %v2161
        %v2166 = vmul.f32 %v2133, %v2154
        %v2167 = vmul.f32 %v2133, %v2158
        %v2168 = vmul.f32 %v2133, %v2162
        %v2169 = vmul.f32 %v2138, %v2154
        %v2170 = vmul.f32 %v2138, %v2158
        %v2171 = vmul.f32 %v2138, %v2162
        %v2172 = vmul.f32 %v2143, %v2154
        %v2173 = vmul.f32 %v2143, %v2158
        %v2174 = vmul.f32 %v2143, %v2162
        %v2175 = vmul.f32 %v2148, %v2154
        %v2176 = vmul.f32 %v2148, %v2158
        %v2177 = vmul.f32 %v2148, %v2162
        %2190 = vrot.lane.b32.xlu0 %v2166, 18
        %v2191 = vpop.permute.xlu0 %2190
        %2192 = vrot.lane.b32.xlu0 %v2167, 18
        %v2193 = vpop.permute.xlu0 %2192
        %2194 = vrot.lane.b32.xlu0 %v2168, 18
        %v2195 = vpop.permute.xlu0 %2194
        %2196 = vrot.lane.b32.xlu0 %v2169, 18
        %v2197 = vpop.permute.xlu0 %2196
        %2198 = vrot.lane.b32.xlu0 %v2170, 18
        %v2199 = vpop.permute.xlu0 %2198
        %2200 = vrot.lane.b32.xlu0 %v2171, 18
        %v2201 = vpop.permute.xlu0 %2200
        %2202 = vrot.lane.b32.xlu0 %v2172, 18
        %v2203 = vpop.permute.xlu0 %2202
        %2204 = vrot.lane.b32.xlu0 %v2173, 18
        %v2205 = vpop.permute.xlu0 %2204
        %2206 = vrot.lane.b32.xlu0 %v2174, 18
        %v2207 = vpop.permute.xlu0 %2206
        %2208 = vrot.lane.b32.xlu0 %v2175, 18
        %v2209 = vpop.permute.xlu0 %2208
        %2210 = vrot.lane.b32.xlu0 %v2176, 18
        %v2211 = vpop.permute.xlu0 %2210
        %2212 = vrot.lane.b32.xlu0 %v2177, 18
        %v2213 = vpop.permute.xlu0 %2212
        %v2214 = vsel %vm1008, %v2191, %v2193
        %v2215 = vsel %vm1008, %v2193, %v2195
        %v2216 = vsel %vm1008, %v2197, %v2199
        %v2217 = vsel %vm1008, %v2199, %v2201
        %v2218 = vsel %vm1008, %v2203, %v2205
        %v2219 = vsel %vm1008, %v2205, %v2207
        %v2220 = vsel %vm1008, %v2209, %v2211
        %v2221 = vsel %vm1008, %v2211, %v2213
        %v2234 = vadd.f32 %v2108, %v2191
        %v2235 = vadd.f32 %v2109, %v2214
        %v2236 = vadd.f32 %v2110, %v2215
        %v2237 = vadd.f32 %v2111, %v2197
        %v2238 = vadd.f32 %v2112, %v2216
        %v2239 = vadd.f32 %v2113, %v2217
        %v2240 = vadd.f32 %v2114, %v2203
        %v2241 = vadd.f32 %v2115, %v2218
        %v2242 = vadd.f32 %v2116, %v2219
        %v2243 = vadd.f32 %v2117, %v2209
        %v2244 = vadd.f32 %v2118, %v2220
        %v2245 = vadd.f32 %v2119, %v2221
        %v2246 = vld [vmem:[%s1041] sm:$0xff]
        %v2247 = vld [vmem:[%s1041 + $0x8] sm:$0xff]
        %v2248 = vld [vmem:[%s1041 + $0x10] sm:$0xff]
        %v2249 = vld [vmem:[%s1041 + $0x18] sm:$0xff]
        %2251 = vset.pattern.permute.xlu0 0
        %2252 = vperm.xlu0 %2251, %v2246
        %v2253 = vpop.permute.xlu0 %2252
        %2256 = vset.pattern.permute.xlu0 0
        %2257 = vperm.xlu0 %2256, %v2247
        %v2258 = vpop.permute.xlu0 %2257
        %2261 = vset.pattern.permute.xlu0 0
        %2262 = vperm.xlu0 %2261, %v2248
        %v2263 = vpop.permute.xlu0 %2262
        %2266 = vset.pattern.permute.xlu0 0
        %2267 = vperm.xlu0 %2266, %v2249
        %v2268 = vpop.permute.xlu0 %2267
        %v2271 = vlaneseq
        %v2272 = vshrl.u32 %v2271, 7
        %v2273 = vsub.s32 0, %v2272
        %v2274 = vrot.slane %v1993, %v2273
        %v2275 = vlaneseq
        %v2276 = vshrl.u32 %v2275, 7
        %v2277 = vsub.s32 1, %v2276
        %v2278 = vrot.slane %v1993, %v2277
        %v2279 = vlaneseq
        %v2280 = vshrl.u32 %v2279, 7
        %v2281 = vsub.s32 2, %v2280
        %v2282 = vrot.slane %v1993, %v2281
        %v2286 = vmul.f32 %v2253, %v2274
        %v2287 = vmul.f32 %v2253, %v2278
        %v2288 = vmul.f32 %v2253, %v2282
        %v2289 = vmul.f32 %v2258, %v2274
        %v2290 = vmul.f32 %v2258, %v2278
        %v2291 = vmul.f32 %v2258, %v2282
        %v2292 = vmul.f32 %v2263, %v2274
        %v2293 = vmul.f32 %v2263, %v2278
        %v2294 = vmul.f32 %v2263, %v2282
        %v2295 = vmul.f32 %v2268, %v2274
        %v2296 = vmul.f32 %v2268, %v2278
        %v2297 = vmul.f32 %v2268, %v2282
        %2310 = vrot.lane.b32.xlu0 %v2286, 17
        %v2311 = vpop.permute.xlu0 %2310
        %2312 = vrot.lane.b32.xlu0 %v2287, 17
        %v2313 = vpop.permute.xlu0 %2312
        %2314 = vrot.lane.b32.xlu0 %v2288, 17
        %v2315 = vpop.permute.xlu0 %2314
        %2316 = vrot.lane.b32.xlu0 %v2289, 17
        %v2317 = vpop.permute.xlu0 %2316
        %2318 = vrot.lane.b32.xlu0 %v2290, 17
        %v2319 = vpop.permute.xlu0 %2318
        %2320 = vrot.lane.b32.xlu0 %v2291, 17
        %v2321 = vpop.permute.xlu0 %2320
        %2322 = vrot.lane.b32.xlu0 %v2292, 17
        %v2323 = vpop.permute.xlu0 %2322
        %2324 = vrot.lane.b32.xlu0 %v2293, 17
        %v2325 = vpop.permute.xlu0 %2324
        %2326 = vrot.lane.b32.xlu0 %v2294, 17
        %v2327 = vpop.permute.xlu0 %2326
        %2328 = vrot.lane.b32.xlu0 %v2295, 17
        %v2329 = vpop.permute.xlu0 %2328
        %2330 = vrot.lane.b32.xlu0 %v2296, 17
        %v2331 = vpop.permute.xlu0 %2330
        %2332 = vrot.lane.b32.xlu0 %v2297, 17
        %v2333 = vpop.permute.xlu0 %2332
        %v2334 = vsel %vm1130, %v2311, %v2313
        %v2335 = vsel %vm1130, %v2313, %v2315
        %v2336 = vsel %vm1130, %v2317, %v2319
        %v2337 = vsel %vm1130, %v2319, %v2321
        %v2338 = vsel %vm1130, %v2323, %v2325
        %v2339 = vsel %vm1130, %v2325, %v2327
        %v2340 = vsel %vm1130, %v2329, %v2331
        %v2341 = vsel %vm1130, %v2331, %v2333
        %v2354 = vadd.f32 %v2234, %v2311
        %v2355 = vadd.f32 %v2235, %v2334
        %v2356 = vadd.f32 %v2236, %v2335
        %v2357 = vadd.f32 %v2237, %v2317
        %v2358 = vadd.f32 %v2238, %v2336
        %v2359 = vadd.f32 %v2239, %v2337
        %v2360 = vadd.f32 %v2240, %v2323
        %v2361 = vadd.f32 %v2241, %v2338
        %v2362 = vadd.f32 %v2242, %v2339
        %v2363 = vadd.f32 %v2243, %v2329
        %v2364 = vadd.f32 %v2244, %v2340
        %v2365 = vadd.f32 %v2245, %v2341
        %2366 = vrot.lane.b32.xlu0 %v1451, 56
        %v2367 = vpop.permute.xlu0 %2366
        %v2368 = vrot.slane %v2367, 7
        %v2369 = vsel %vm1166, %v2368, %v2367
        %v2371 = vmul.f32 %v1993, %v2369
        %v2372 = vld [vmem:[%s1170] sm:$0xff]
        %v2373 = vld [vmem:[%s1170 + $0x8] sm:$0xff]
        %v2374 = vld [vmem:[%s1170 + $0x10] sm:$0xff]
        %v2375 = vld [vmem:[%s1170 + $0x18] sm:$0xff]
        %2377 = vset.pattern.permute.xlu0 0
        %2378 = vperm.xlu0 %2377, %v2372
        %v2379 = vpop.permute.xlu0 %2378
        %2382 = vset.pattern.permute.xlu0 0
        %2383 = vperm.xlu0 %2382, %v2373
        %v2384 = vpop.permute.xlu0 %2383
        %2387 = vset.pattern.permute.xlu0 0
        %2388 = vperm.xlu0 %2387, %v2374
        %v2389 = vpop.permute.xlu0 %2388
        %2392 = vset.pattern.permute.xlu0 0
        %2393 = vperm.xlu0 %2392, %v2375
        %v2394 = vpop.permute.xlu0 %2393
        %v2397 = vlaneseq
        %v2398 = vshrl.u32 %v2397, 7
        %v2399 = vsub.s32 0, %v2398
        %v2400 = vrot.slane %v2371, %v2399
        %v2401 = vlaneseq
        %v2402 = vshrl.u32 %v2401, 7
        %v2403 = vsub.s32 1, %v2402
        %v2404 = vrot.slane %v2371, %v2403
        %v2405 = vlaneseq
        %v2406 = vshrl.u32 %v2405, 7
        %v2407 = vsub.s32 2, %v2406
        %v2408 = vrot.slane %v2371, %v2407
        %v2412 = vmul.f32 %v2379, %v2400
        %v2413 = vmul.f32 %v2379, %v2404
        %v2414 = vmul.f32 %v2379, %v2408
        %v2415 = vmul.f32 %v2384, %v2400
        %v2416 = vmul.f32 %v2384, %v2404
        %v2417 = vmul.f32 %v2384, %v2408
        %v2418 = vmul.f32 %v2389, %v2400
        %v2419 = vmul.f32 %v2389, %v2404
        %v2420 = vmul.f32 %v2389, %v2408
        %v2421 = vmul.f32 %v2394, %v2400
        %v2422 = vmul.f32 %v2394, %v2404
        %v2423 = vmul.f32 %v2394, %v2408
        %2436 = vrot.lane.b32.xlu0 %v2412, 16
        %v2437 = vpop.permute.xlu0 %2436
        %2438 = vrot.lane.b32.xlu0 %v2413, 16
        %v2439 = vpop.permute.xlu0 %2438
        %2440 = vrot.lane.b32.xlu0 %v2414, 16
        %v2441 = vpop.permute.xlu0 %2440
        %2442 = vrot.lane.b32.xlu0 %v2415, 16
        %v2443 = vpop.permute.xlu0 %2442
        %2444 = vrot.lane.b32.xlu0 %v2416, 16
        %v2445 = vpop.permute.xlu0 %2444
        %2446 = vrot.lane.b32.xlu0 %v2417, 16
        %v2447 = vpop.permute.xlu0 %2446
        %2448 = vrot.lane.b32.xlu0 %v2418, 16
        %v2449 = vpop.permute.xlu0 %2448
        %2450 = vrot.lane.b32.xlu0 %v2419, 16
        %v2451 = vpop.permute.xlu0 %2450
        %2452 = vrot.lane.b32.xlu0 %v2420, 16
        %v2453 = vpop.permute.xlu0 %2452
        %2454 = vrot.lane.b32.xlu0 %v2421, 16
        %v2455 = vpop.permute.xlu0 %2454
        %2456 = vrot.lane.b32.xlu0 %v2422, 16
        %v2457 = vpop.permute.xlu0 %2456
        %2458 = vrot.lane.b32.xlu0 %v2423, 16
        %v2459 = vpop.permute.xlu0 %2458
        %v2460 = vsel %vm1259, %v2437, %v2439
        %v2461 = vsel %vm1259, %v2439, %v2441
        %v2462 = vsel %vm1259, %v2443, %v2445
        %v2463 = vsel %vm1259, %v2445, %v2447
        %v2464 = vsel %vm1259, %v2449, %v2451
        %v2465 = vsel %vm1259, %v2451, %v2453
        %v2466 = vsel %vm1259, %v2455, %v2457
        %v2467 = vsel %vm1259, %v2457, %v2459
        %v2480 = vadd.f32 %v2354, %v2437
        %v2481 = vadd.f32 %v2355, %v2460
        %v2482 = vadd.f32 %v2356, %v2461
        %v2483 = vadd.f32 %v2357, %v2443
        %v2484 = vadd.f32 %v2358, %v2462
        %v2485 = vadd.f32 %v2359, %v2463
        %v2486 = vadd.f32 %v2360, %v2449
        %v2487 = vadd.f32 %v2361, %v2464
        %v2488 = vadd.f32 %v2362, %v2465
        %v2489 = vadd.f32 %v2363, %v2455
        %v2490 = vadd.f32 %v2364, %v2466
        %v2491 = vadd.f32 %v2365, %v2467
        %2504 = vrot.lane.b32.xlu0 %v2480, 56
        %v2505 = vpop.permute.xlu0 %2504
        %2506 = vrot.lane.b32.xlu0 %v2481, 56
        %v2507 = vpop.permute.xlu0 %2506
        %2508 = vrot.lane.b32.xlu0 %v2482, 56
        %v2509 = vpop.permute.xlu0 %2508
        %2510 = vrot.lane.b32.xlu0 %v2483, 56
        %v2511 = vpop.permute.xlu0 %2510
        %2512 = vrot.lane.b32.xlu0 %v2484, 56
        %v2513 = vpop.permute.xlu0 %2512
        %2514 = vrot.lane.b32.xlu0 %v2485, 56
        %v2515 = vpop.permute.xlu0 %2514
        %2516 = vrot.lane.b32.xlu0 %v2486, 56
        %v2517 = vpop.permute.xlu0 %2516
        %2518 = vrot.lane.b32.xlu0 %v2487, 56
        %v2519 = vpop.permute.xlu0 %2518
        %2520 = vrot.lane.b32.xlu0 %v2488, 56
        %v2521 = vpop.permute.xlu0 %2520
        %2522 = vrot.lane.b32.xlu0 %v2489, 56
        %v2523 = vpop.permute.xlu0 %2522
        %2524 = vrot.lane.b32.xlu0 %v2490, 56
        %v2525 = vpop.permute.xlu0 %2524
        %2526 = vrot.lane.b32.xlu0 %v2491, 56
        %v2527 = vpop.permute.xlu0 %2526
        %v2528 = vsel %vm1166, %v2505, %v2507
        %v2529 = vsel %vm1166, %v2507, %v2509
        %v2530 = vsel %vm1166, %v2511, %v2513
        %v2531 = vsel %vm1166, %v2513, %v2515
        %v2532 = vsel %vm1166, %v2517, %v2519
        %v2533 = vsel %vm1166, %v2519, %v2521
        %v2534 = vsel %vm1166, %v2523, %v2525
        %v2535 = vsel %vm1166, %v2525, %v2527
        %v2544 = vadd.f32 %v2528, %v2529
        %2545 = vadd.xlane.f32.xlu0 %v2544
        %v2546 = vpop.xlane.xlu0 %2545
        %v2547 = vadd.f32 %v2530, %v2531
        %2548 = vadd.xlane.f32.xlu0 %v2547
        %v2549 = vpop.xlane.xlu0 %2548
        %v2550 = vadd.f32 %v2532, %v2533
        %2551 = vadd.xlane.f32.xlu0 %v2550
        %v2552 = vpop.xlane.xlu0 %2551
        %v2553 = vadd.f32 %v2534, %v2535
        %2554 = vadd.xlane.f32.xlu0 %v2553
        %v2555 = vpop.xlane.xlu0 %2554
        %v2556 = vadd.f32 %v1356, %v2546
        %v2557 = vadd.f32 %v1357, %v2549
        %v2558 = vadd.f32 %v1358, %v2552
        %v2559 = vadd.f32 %v1359, %v2555
        %v2560 = vmul.f32 %v2480, %v2480
        %v2561 = vmul.f32 %v2481, %v2481
        %v2562 = vmul.f32 %v2482, %v2482
        %v2563 = vmul.f32 %v2483, %v2483
        %v2564 = vmul.f32 %v2484, %v2484
        %v2565 = vmul.f32 %v2485, %v2485
        %v2566 = vmul.f32 %v2486, %v2486
        %v2567 = vmul.f32 %v2487, %v2487
        %v2568 = vmul.f32 %v2488, %v2488
        %v2569 = vmul.f32 %v2489, %v2489
        %v2570 = vmul.f32 %v2490, %v2490
        %v2571 = vmul.f32 %v2491, %v2491
        %2584 = vrot.lane.b32.xlu0 %v2560, 56
        %v2585 = vpop.permute.xlu0 %2584
        %2586 = vrot.lane.b32.xlu0 %v2561, 56
        %v2587 = vpop.permute.xlu0 %2586
        %2588 = vrot.lane.b32.xlu0 %v2562, 56
        %v2589 = vpop.permute.xlu0 %2588
        %2590 = vrot.lane.b32.xlu0 %v2563, 56
        %v2591 = vpop.permute.xlu0 %2590
        %2592 = vrot.lane.b32.xlu0 %v2564, 56
        %v2593 = vpop.permute.xlu0 %2592
        %2594 = vrot.lane.b32.xlu0 %v2565, 56
        %v2595 = vpop.permute.xlu0 %2594
        %2596 = vrot.lane.b32.xlu0 %v2566, 56
        %v2597 = vpop.permute.xlu0 %2596
        %2598 = vrot.lane.b32.xlu0 %v2567, 56
        %v2599 = vpop.permute.xlu0 %2598
        %2600 = vrot.lane.b32.xlu0 %v2568, 56
        %v2601 = vpop.permute.xlu0 %2600
        %2602 = vrot.lane.b32.xlu0 %v2569, 56
        %v2603 = vpop.permute.xlu0 %2602
        %2604 = vrot.lane.b32.xlu0 %v2570, 56
        %v2605 = vpop.permute.xlu0 %2604
        %2606 = vrot.lane.b32.xlu0 %v2571, 56
        %v2607 = vpop.permute.xlu0 %2606
        %v2608 = vsel %vm1166, %v2585, %v2587
        %v2609 = vsel %vm1166, %v2587, %v2589
        %v2610 = vsel %vm1166, %v2591, %v2593
        %v2611 = vsel %vm1166, %v2593, %v2595
        %v2612 = vsel %vm1166, %v2597, %v2599
        %v2613 = vsel %vm1166, %v2599, %v2601
        %v2614 = vsel %vm1166, %v2603, %v2605
        %v2615 = vsel %vm1166, %v2605, %v2607
        %v2624 = vadd.f32 %v2608, %v2609
        %2625 = vadd.xlane.f32.xlu0 %v2624
        %v2626 = vpop.xlane.xlu0 %2625
        %v2627 = vadd.f32 %v2610, %v2611
        %2628 = vadd.xlane.f32.xlu0 %v2627
        %v2629 = vpop.xlane.xlu0 %2628
        %v2630 = vadd.f32 %v2612, %v2613
        %2631 = vadd.xlane.f32.xlu0 %v2630
        %v2632 = vpop.xlane.xlu0 %2631
        %v2633 = vadd.f32 %v2614, %v2615
        %2634 = vadd.xlane.f32.xlu0 %v2633
        %v2635 = vpop.xlane.xlu0 %2634
        %v2636 = vadd.f32 %v1436, %v2626
        %v2637 = vadd.f32 %v1437, %v2629
        %v2638 = vadd.f32 %v1438, %v2632
        %v2639 = vadd.f32 %v1439, %v2635
        %2640 = vst [vmem:[%s188 + $0x18] sm:$0xff] %v2528
        %2641 = vst [vmem:[%s188 + $0x20] sm:$0xff] %v2529
        %2642 = vst [vmem:[%s188 + $0xa8] sm:$0xff] %v2530
        %2643 = vst [vmem:[%s188 + $0xb0] sm:$0xff] %v2531
        %2644 = vst [vmem:[%s188 + $0x138] sm:$0xff] %v2532
        %2645 = vst [vmem:[%s188 + $0x140] sm:$0xff] %v2533
        %2646 = vst [vmem:[%s188 + $0x1c8] sm:$0xff] %v2534
        %2647 = vst [vmem:[%s188 + $0x1d0] sm:$0xff] %v2535
        %s2648 = scalar_lea.vmem %s3, 16
        %v2649 = vld [vmem:[%s2648] ss:$4 sm:$0x3]
        %s2650 = scalar_lea.vmem %s3, 17
        %v2651 = vld [vmem:[%s2650] ss:$4 sm:$0x3]
        %v2652 = vld [vmem:[%s192 + $0x4] sm:$0x7]
        %2654 = vrot.lane.b32.xlu0 %v2649, 72
        %v2655 = vpop.permute.xlu0 %2654
        %v2656 = vrot.slane %v2655, 7
        %v2657 = vsel %vm237, %v2656, %v2655
        %v2659 = vmul.f32 %v2652, %v2657
        %v2660 = vld [vmem:[%s1] sm:$0xff]
        %v2661 = vld [vmem:[%s1 + $0x8] sm:$0xff]
        %v2662 = vld [vmem:[%s1 + $0x10] sm:$0xff]
        %v2663 = vld [vmem:[%s1 + $0x18] sm:$0xff]
        %2665 = vset.pattern.permute.xlu0 0
        %2666 = vperm.xlu0 %2665, %v2660
        %v2667 = vpop.permute.xlu0 %2666
        %2670 = vset.pattern.permute.xlu0 0
        %2671 = vperm.xlu0 %2670, %v2661
        %v2672 = vpop.permute.xlu0 %2671
        %2675 = vset.pattern.permute.xlu0 0
        %2676 = vperm.xlu0 %2675, %v2662
        %v2677 = vpop.permute.xlu0 %2676
        %2680 = vset.pattern.permute.xlu0 0
        %2681 = vperm.xlu0 %2680, %v2663
        %v2682 = vpop.permute.xlu0 %2681
        %v2685 = vlaneseq
        %v2686 = vshrl.u32 %v2685, 7
        %v2687 = vsub.s32 0, %v2686
        %v2688 = vrot.slane %v2659, %v2687
        %v2689 = vlaneseq
        %v2690 = vshrl.u32 %v2689, 7
        %v2691 = vsub.s32 1, %v2690
        %v2692 = vrot.slane %v2659, %v2691
        %v2693 = vlaneseq
        %v2694 = vshrl.u32 %v2693, 7
        %v2695 = vsub.s32 2, %v2694
        %v2696 = vrot.slane %v2659, %v2695
        %v2700 = vmul.f32 %v2667, %v2688
        %v2701 = vmul.f32 %v2667, %v2692
        %v2702 = vmul.f32 %v2667, %v2696
        %v2703 = vmul.f32 %v2672, %v2688
        %v2704 = vmul.f32 %v2672, %v2692
        %v2705 = vmul.f32 %v2672, %v2696
        %v2706 = vmul.f32 %v2677, %v2688
        %v2707 = vmul.f32 %v2677, %v2692
        %v2708 = vmul.f32 %v2677, %v2696
        %v2709 = vmul.f32 %v2682, %v2688
        %v2710 = vmul.f32 %v2682, %v2692
        %v2711 = vmul.f32 %v2682, %v2696
        %v2712 = vadd.f32 %v228, %v2700
        %v2713 = vadd.f32 %v228, %v2701
        %v2714 = vadd.f32 %v228, %v2702
        %v2715 = vadd.f32 %v229, %v2703
        %v2716 = vadd.f32 %v229, %v2704
        %v2717 = vadd.f32 %v229, %v2705
        %v2718 = vadd.f32 %v230, %v2706
        %v2719 = vadd.f32 %v230, %v2707
        %v2720 = vadd.f32 %v230, %v2708
        %v2721 = vadd.f32 %v231, %v2709
        %v2722 = vadd.f32 %v231, %v2710
        %v2723 = vadd.f32 %v231, %v2711
        %v2724 = vld [vmem:[%s305] sm:$0xff]
        %v2725 = vld [vmem:[%s305 + $0x8] sm:$0xff]
        %v2726 = vld [vmem:[%s305 + $0x10] sm:$0xff]
        %v2727 = vld [vmem:[%s305 + $0x18] sm:$0xff]
        %2729 = vset.pattern.permute.xlu0 0
        %2730 = vperm.xlu0 %2729, %v2724
        %v2731 = vpop.permute.xlu0 %2730
        %2734 = vset.pattern.permute.xlu0 0
        %2735 = vperm.xlu0 %2734, %v2725
        %v2736 = vpop.permute.xlu0 %2735
        %2739 = vset.pattern.permute.xlu0 0
        %2740 = vperm.xlu0 %2739, %v2726
        %v2741 = vpop.permute.xlu0 %2740
        %2744 = vset.pattern.permute.xlu0 0
        %2745 = vperm.xlu0 %2744, %v2727
        %v2746 = vpop.permute.xlu0 %2745
        %v2749 = vlaneseq
        %v2750 = vshrl.u32 %v2749, 7
        %v2751 = vsub.s32 0, %v2750
        %v2752 = vrot.slane %v2652, %v2751
        %v2753 = vlaneseq
        %v2754 = vshrl.u32 %v2753, 7
        %v2755 = vsub.s32 1, %v2754
        %v2756 = vrot.slane %v2652, %v2755
        %v2757 = vlaneseq
        %v2758 = vshrl.u32 %v2757, 7
        %v2759 = vsub.s32 2, %v2758
        %v2760 = vrot.slane %v2652, %v2759
        %v2764 = vmul.f32 %v2731, %v2752
        %v2765 = vmul.f32 %v2731, %v2756
        %v2766 = vmul.f32 %v2731, %v2760
        %v2767 = vmul.f32 %v2736, %v2752
        %v2768 = vmul.f32 %v2736, %v2756
        %v2769 = vmul.f32 %v2736, %v2760
        %v2770 = vmul.f32 %v2741, %v2752
        %v2771 = vmul.f32 %v2741, %v2756
        %v2772 = vmul.f32 %v2741, %v2760
        %v2773 = vmul.f32 %v2746, %v2752
        %v2774 = vmul.f32 %v2746, %v2756
        %v2775 = vmul.f32 %v2746, %v2760
        %2788 = vrot.lane.b32.xlu0 %v2764, 127
        %v2789 = vpop.permute.xlu0 %2788
        %2790 = vrot.lane.b32.xlu0 %v2765, 127
        %v2791 = vpop.permute.xlu0 %2790
        %2792 = vrot.lane.b32.xlu0 %v2766, 127
        %v2793 = vpop.permute.xlu0 %2792
        %2794 = vrot.lane.b32.xlu0 %v2767, 127
        %v2795 = vpop.permute.xlu0 %2794
        %2796 = vrot.lane.b32.xlu0 %v2768, 127
        %v2797 = vpop.permute.xlu0 %2796
        %2798 = vrot.lane.b32.xlu0 %v2769, 127
        %v2799 = vpop.permute.xlu0 %2798
        %2800 = vrot.lane.b32.xlu0 %v2770, 127
        %v2801 = vpop.permute.xlu0 %2800
        %2802 = vrot.lane.b32.xlu0 %v2771, 127
        %v2803 = vpop.permute.xlu0 %2802
        %2804 = vrot.lane.b32.xlu0 %v2772, 127
        %v2805 = vpop.permute.xlu0 %2804
        %2806 = vrot.lane.b32.xlu0 %v2773, 127
        %v2807 = vpop.permute.xlu0 %2806
        %2808 = vrot.lane.b32.xlu0 %v2774, 127
        %v2809 = vpop.permute.xlu0 %2808
        %2810 = vrot.lane.b32.xlu0 %v2775, 127
        %v2811 = vpop.permute.xlu0 %2810
        %v2812 = vsel %vm394, %v2789, %v2791
        %v2813 = vsel %vm394, %v2791, %v2793
        %v2814 = vsel %vm394, %v2795, %v2797
        %v2815 = vsel %vm394, %v2797, %v2799
        %v2816 = vsel %vm394, %v2801, %v2803
        %v2817 = vsel %vm394, %v2803, %v2805
        %v2818 = vsel %vm394, %v2807, %v2809
        %v2819 = vsel %vm394, %v2809, %v2811
        %v2832 = vadd.f32 %v2712, %v2812
        %v2833 = vadd.f32 %v2713, %v2813
        %v2834 = vadd.f32 %v2714, %v2793
        %v2835 = vadd.f32 %v2715, %v2814
        %v2836 = vadd.f32 %v2716, %v2815
        %v2837 = vadd.f32 %v2717, %v2799
        %v2838 = vadd.f32 %v2718, %v2816
        %v2839 = vadd.f32 %v2719, %v2817
        %v2840 = vadd.f32 %v2720, %v2805
        %v2841 = vadd.f32 %v2721, %v2818
        %v2842 = vadd.f32 %v2722, %v2819
        %v2843 = vadd.f32 %v2723, %v2811
        %2845 = vrot.lane.b32.xlu0 %v2651, 74
        %v2846 = vpop.permute.xlu0 %2845
        %v2847 = vrot.slane %v2846, 7
        %v2848 = vsel %vm431, %v2847, %v2846
        %v2850 = vmul.f32 %v2652, %v2848
        %v2851 = vld [vmem:[%s435] sm:$0xff]
        %v2852 = vld [vmem:[%s435 + $0x8] sm:$0xff]
        %v2853 = vld [vmem:[%s435 + $0x10] sm:$0xff]
        %v2854 = vld [vmem:[%s435 + $0x18] sm:$0xff]
        %2856 = vset.pattern.permute.xlu0 0
        %2857 = vperm.xlu0 %2856, %v2851
        %v2858 = vpop.permute.xlu0 %2857
        %2861 = vset.pattern.permute.xlu0 0
        %2862 = vperm.xlu0 %2861, %v2852
        %v2863 = vpop.permute.xlu0 %2862
        %2866 = vset.pattern.permute.xlu0 0
        %2867 = vperm.xlu0 %2866, %v2853
        %v2868 = vpop.permute.xlu0 %2867
        %2871 = vset.pattern.permute.xlu0 0
        %2872 = vperm.xlu0 %2871, %v2854
        %v2873 = vpop.permute.xlu0 %2872
        %v2876 = vlaneseq
        %v2877 = vshrl.u32 %v2876, 7
        %v2878 = vsub.s32 0, %v2877
        %v2879 = vrot.slane %v2850, %v2878
        %v2880 = vlaneseq
        %v2881 = vshrl.u32 %v2880, 7
        %v2882 = vsub.s32 1, %v2881
        %v2883 = vrot.slane %v2850, %v2882
        %v2884 = vlaneseq
        %v2885 = vshrl.u32 %v2884, 7
        %v2886 = vsub.s32 2, %v2885
        %v2887 = vrot.slane %v2850, %v2886
        %v2891 = vmul.f32 %v2858, %v2879
        %v2892 = vmul.f32 %v2858, %v2883
        %v2893 = vmul.f32 %v2858, %v2887
        %v2894 = vmul.f32 %v2863, %v2879
        %v2895 = vmul.f32 %v2863, %v2883
        %v2896 = vmul.f32 %v2863, %v2887
        %v2897 = vmul.f32 %v2868, %v2879
        %v2898 = vmul.f32 %v2868, %v2883
        %v2899 = vmul.f32 %v2868, %v2887
        %v2900 = vmul.f32 %v2873, %v2879
        %v2901 = vmul.f32 %v2873, %v2883
        %v2902 = vmul.f32 %v2873, %v2887
        %2915 = vrot.lane.b32.xlu0 %v2891, 126
        %v2916 = vpop.permute.xlu0 %2915
        %2917 = vrot.lane.b32.xlu0 %v2892, 126
        %v2918 = vpop.permute.xlu0 %2917
        %2919 = vrot.lane.b32.xlu0 %v2893, 126
        %v2920 = vpop.permute.xlu0 %2919
        %2921 = vrot.lane.b32.xlu0 %v2894, 126
        %v2922 = vpop.permute.xlu0 %2921
        %2923 = vrot.lane.b32.xlu0 %v2895, 126
        %v2924 = vpop.permute.xlu0 %2923
        %2925 = vrot.lane.b32.xlu0 %v2896, 126
        %v2926 = vpop.permute.xlu0 %2925
        %2927 = vrot.lane.b32.xlu0 %v2897, 126
        %v2928 = vpop.permute.xlu0 %2927
        %2929 = vrot.lane.b32.xlu0 %v2898, 126
        %v2930 = vpop.permute.xlu0 %2929
        %2931 = vrot.lane.b32.xlu0 %v2899, 126
        %v2932 = vpop.permute.xlu0 %2931
        %2933 = vrot.lane.b32.xlu0 %v2900, 126
        %v2934 = vpop.permute.xlu0 %2933
        %2935 = vrot.lane.b32.xlu0 %v2901, 126
        %v2936 = vpop.permute.xlu0 %2935
        %2937 = vrot.lane.b32.xlu0 %v2902, 126
        %v2938 = vpop.permute.xlu0 %2937
        %v2939 = vsel %vm524, %v2916, %v2918
        %v2940 = vsel %vm524, %v2918, %v2920
        %v2941 = vsel %vm524, %v2922, %v2924
        %v2942 = vsel %vm524, %v2924, %v2926
        %v2943 = vsel %vm524, %v2928, %v2930
        %v2944 = vsel %vm524, %v2930, %v2932
        %v2945 = vsel %vm524, %v2934, %v2936
        %v2946 = vsel %vm524, %v2936, %v2938
        %v2959 = vadd.f32 %v2832, %v2939
        %v2960 = vadd.f32 %v2833, %v2940
        %v2961 = vadd.f32 %v2834, %v2920
        %v2962 = vadd.f32 %v2835, %v2941
        %v2963 = vadd.f32 %v2836, %v2942
        %v2964 = vadd.f32 %v2837, %v2926
        %v2965 = vadd.f32 %v2838, %v2943
        %v2966 = vadd.f32 %v2839, %v2944
        %v2967 = vadd.f32 %v2840, %v2932
        %v2968 = vadd.f32 %v2841, %v2945
        %v2969 = vadd.f32 %v2842, %v2946
        %v2970 = vadd.f32 %v2843, %v2938
        %2971 = vrot.lane.b32.xlu0 %v2649, 127
        %v2972 = vpop.permute.xlu0 %2971
        %v2973 = vrot.slane %v2972, 7
        %v2974 = vsel %vm394, %v2973, %v2972
        %v2976 = vmul.f32 %v2652, %v2974
        %v2977 = vld [vmem:[%s563] sm:$0xff]
        %v2978 = vld [vmem:[%s563 + $0x8] sm:$0xff]
        %v2979 = vld [vmem:[%s563 + $0x10] sm:$0xff]
        %v2980 = vld [vmem:[%s563 + $0x18] sm:$0xff]
        %2982 = vset.pattern.permute.xlu0 0
        %2983 = vperm.xlu0 %2982, %v2977
        %v2984 = vpop.permute.xlu0 %2983
        %2987 = vset.pattern.permute.xlu0 0
        %2988 = vperm.xlu0 %2987, %v2978
        %v2989 = vpop.permute.xlu0 %2988
        %2992 = vset.pattern.permute.xlu0 0
        %2993 = vperm.xlu0 %2992, %v2979
        %v2994 = vpop.permute.xlu0 %2993
        %2997 = vset.pattern.permute.xlu0 0
        %2998 = vperm.xlu0 %2997, %v2980
        %v2999 = vpop.permute.xlu0 %2998
        %v3002 = vlaneseq
        %v3003 = vshrl.u32 %v3002, 7
        %v3004 = vsub.s32 0, %v3003
        %v3005 = vrot.slane %v2976, %v3004
        %v3006 = vlaneseq
        %v3007 = vshrl.u32 %v3006, 7
        %v3008 = vsub.s32 1, %v3007
        %v3009 = vrot.slane %v2976, %v3008
        %v3010 = vlaneseq
        %v3011 = vshrl.u32 %v3010, 7
        %v3012 = vsub.s32 2, %v3011
        %v3013 = vrot.slane %v2976, %v3012
        %v3017 = vmul.f32 %v2984, %v3005
        %v3018 = vmul.f32 %v2984, %v3009
        %v3019 = vmul.f32 %v2984, %v3013
        %v3020 = vmul.f32 %v2989, %v3005
        %v3021 = vmul.f32 %v2989, %v3009
        %v3022 = vmul.f32 %v2989, %v3013
        %v3023 = vmul.f32 %v2994, %v3005
        %v3024 = vmul.f32 %v2994, %v3009
        %v3025 = vmul.f32 %v2994, %v3013
        %v3026 = vmul.f32 %v2999, %v3005
        %v3027 = vmul.f32 %v2999, %v3009
        %v3028 = vmul.f32 %v2999, %v3013
        %3041 = vrot.lane.b32.xlu0 %v3017, 73
        %v3042 = vpop.permute.xlu0 %3041
        %3043 = vrot.lane.b32.xlu0 %v3018, 73
        %v3044 = vpop.permute.xlu0 %3043
        %3045 = vrot.lane.b32.xlu0 %v3019, 73
        %v3046 = vpop.permute.xlu0 %3045
        %3047 = vrot.lane.b32.xlu0 %v3020, 73
        %v3048 = vpop.permute.xlu0 %3047
        %3049 = vrot.lane.b32.xlu0 %v3021, 73
        %v3050 = vpop.permute.xlu0 %3049
        %3051 = vrot.lane.b32.xlu0 %v3022, 73
        %v3052 = vpop.permute.xlu0 %3051
        %3053 = vrot.lane.b32.xlu0 %v3023, 73
        %v3054 = vpop.permute.xlu0 %3053
        %3055 = vrot.lane.b32.xlu0 %v3024, 73
        %v3056 = vpop.permute.xlu0 %3055
        %3057 = vrot.lane.b32.xlu0 %v3025, 73
        %v3058 = vpop.permute.xlu0 %3057
        %3059 = vrot.lane.b32.xlu0 %v3026, 73
        %v3060 = vpop.permute.xlu0 %3059
        %3061 = vrot.lane.b32.xlu0 %v3027, 73
        %v3062 = vpop.permute.xlu0 %3061
        %3063 = vrot.lane.b32.xlu0 %v3028, 73
        %v3064 = vpop.permute.xlu0 %3063
        %v3065 = vsel %vm652, %v3042, %v3044
        %v3066 = vsel %vm652, %v3044, %v3046
        %v3067 = vsel %vm652, %v3048, %v3050
        %v3068 = vsel %vm652, %v3050, %v3052
        %v3069 = vsel %vm652, %v3054, %v3056
        %v3070 = vsel %vm652, %v3056, %v3058
        %v3071 = vsel %vm652, %v3060, %v3062
        %v3072 = vsel %vm652, %v3062, %v3064
        %v3085 = vadd.f32 %v2959, %v3065
        %v3086 = vadd.f32 %v2960, %v3066
        %v3087 = vadd.f32 %v2961, %v3046
        %v3088 = vadd.f32 %v2962, %v3067
        %v3089 = vadd.f32 %v2963, %v3068
        %v3090 = vadd.f32 %v2964, %v3052
        %v3091 = vadd.f32 %v2965, %v3069
        %v3092 = vadd.f32 %v2966, %v3070
        %v3093 = vadd.f32 %v2967, %v3058
        %v3094 = vadd.f32 %v2968, %v3071
        %v3095 = vadd.f32 %v2969, %v3072
        %v3096 = vadd.f32 %v2970, %v3064
        %v3097 = vld [vmem:[%s192 + $0x5] sm:$0x3]
        %v3098 = vld [vmem:[%s686] sm:$0xff]
        %v3099 = vld [vmem:[%s686 + $0x8] sm:$0xff]
        %v3100 = vld [vmem:[%s686 + $0x10] sm:$0xff]
        %v3101 = vld [vmem:[%s686 + $0x18] sm:$0xff]
        %3103 = vset.pattern.permute.xlu0 0
        %3104 = vperm.xlu0 %3103, %v3098
        %v3105 = vpop.permute.xlu0 %3104
        %3108 = vset.pattern.permute.xlu0 0
        %3109 = vperm.xlu0 %3108, %v3099
        %v3110 = vpop.permute.xlu0 %3109
        %3113 = vset.pattern.permute.xlu0 0
        %3114 = vperm.xlu0 %3113, %v3100
        %v3115 = vpop.permute.xlu0 %3114
        %3118 = vset.pattern.permute.xlu0 0
        %3119 = vperm.xlu0 %3118, %v3101
        %v3120 = vpop.permute.xlu0 %3119
        %v3123 = vlaneseq
        %v3124 = vshrl.u32 %v3123, 7
        %v3125 = vsub.s32 0, %v3124
        %v3126 = vrot.slane %v3097, %v3125
        %v3127 = vlaneseq
        %v3128 = vshrl.u32 %v3127, 7
        %v3129 = vsub.s32 1, %v3128
        %v3130 = vrot.slane %v3097, %v3129
        %v3133 = vmul.f32 %v3105, %v3126
        %v3134 = vmul.f32 %v3105, %v3130
        %v3135 = vmul.f32 %v3110, %v3126
        %v3136 = vmul.f32 %v3110, %v3130
        %v3137 = vmul.f32 %v3115, %v3126
        %v3138 = vmul.f32 %v3115, %v3130
        %v3139 = vmul.f32 %v3120, %v3126
        %v3140 = vmul.f32 %v3120, %v3130
        %3149 = vrot.lane.b32.xlu0 %v3133, 72
        %v3150 = vpop.permute.xlu0 %3149
        %3151 = vrot.lane.b32.xlu0 %v3134, 72
        %v3152 = vpop.permute.xlu0 %3151
        %3153 = vrot.lane.b32.xlu0 %v3135, 72
        %v3154 = vpop.permute.xlu0 %3153
        %3155 = vrot.lane.b32.xlu0 %v3136, 72
        %v3156 = vpop.permute.xlu0 %3155
        %3157 = vrot.lane.b32.xlu0 %v3137, 72
        %v3158 = vpop.permute.xlu0 %3157
        %3159 = vrot.lane.b32.xlu0 %v3138, 72
        %v3160 = vpop.permute.xlu0 %3159
        %3161 = vrot.lane.b32.xlu0 %v3139, 72
        %v3162 = vpop.permute.xlu0 %3161
        %3163 = vrot.lane.b32.xlu0 %v3140, 72
        %v3164 = vpop.permute.xlu0 %3163
        %v3165 = vsel %vm237, %v3150, %v3152
        %v3166 = vsel %vm237, %v3154, %v3156
        %v3167 = vsel %vm237, %v3158, %v3160
        %v3168 = vsel %vm237, %v3162, %v3164
        %v3181 = vadd.f32 %v3085, %v3150
        %v3182 = vadd.f32 %v3086, %v3165
        %v3183 = vadd.f32 %v3087, %v3152
        %v3184 = vadd.f32 %v3088, %v3154
        %v3185 = vadd.f32 %v3089, %v3166
        %v3186 = vadd.f32 %v3090, %v3156
        %v3187 = vadd.f32 %v3091, %v3158
        %v3188 = vadd.f32 %v3092, %v3167
        %v3189 = vadd.f32 %v3093, %v3160
        %v3190 = vadd.f32 %v3094, %v3162
        %v3191 = vadd.f32 %v3095, %v3168
        %v3192 = vadd.f32 %v3096, %v3164
        %v3193 = vld [vmem:[%s192 + $0x5] sm:$0x7]
        %3194 = vrot.lane.b32.xlu0 %v2651, 1
        %v3195 = vpop.permute.xlu0 %3194
        %v3196 = vrot.slane %v3195, 7
        %v3197 = vsel %vm786, %v3196, %v3195
        %v3199 = vmul.f32 %v3193, %v3197
        %v3200 = vld [vmem:[%s790] sm:$0xff]
        %v3201 = vld [vmem:[%s790 + $0x8] sm:$0xff]
        %v3202 = vld [vmem:[%s790 + $0x10] sm:$0xff]
        %v3203 = vld [vmem:[%s790 + $0x18] sm:$0xff]
        %3205 = vset.pattern.permute.xlu0 0
        %3206 = vperm.xlu0 %3205, %v3200
        %v3207 = vpop.permute.xlu0 %3206
        %3210 = vset.pattern.permute.xlu0 0
        %3211 = vperm.xlu0 %3210, %v3201
        %v3212 = vpop.permute.xlu0 %3211
        %3215 = vset.pattern.permute.xlu0 0
        %3216 = vperm.xlu0 %3215, %v3202
        %v3217 = vpop.permute.xlu0 %3216
        %3220 = vset.pattern.permute.xlu0 0
        %3221 = vperm.xlu0 %3220, %v3203
        %v3222 = vpop.permute.xlu0 %3221
        %v3225 = vlaneseq
        %v3226 = vshrl.u32 %v3225, 7
        %v3227 = vsub.s32 0, %v3226
        %v3228 = vrot.slane %v3199, %v3227
        %v3229 = vlaneseq
        %v3230 = vshrl.u32 %v3229, 7
        %v3231 = vsub.s32 1, %v3230
        %v3232 = vrot.slane %v3199, %v3231
        %v3233 = vlaneseq
        %v3234 = vshrl.u32 %v3233, 7
        %v3235 = vsub.s32 2, %v3234
        %v3236 = vrot.slane %v3199, %v3235
        %v3240 = vmul.f32 %v3207, %v3228
        %v3241 = vmul.f32 %v3207, %v3232
        %v3242 = vmul.f32 %v3207, %v3236
        %v3243 = vmul.f32 %v3212, %v3228
        %v3244 = vmul.f32 %v3212, %v3232
        %v3245 = vmul.f32 %v3212, %v3236
        %v3246 = vmul.f32 %v3217, %v3228
        %v3247 = vmul.f32 %v3217, %v3232
        %v3248 = vmul.f32 %v3217, %v3236
        %v3249 = vmul.f32 %v3222, %v3228
        %v3250 = vmul.f32 %v3222, %v3232
        %v3251 = vmul.f32 %v3222, %v3236
        %3264 = vrot.lane.b32.xlu0 %v3240, 71
        %v3265 = vpop.permute.xlu0 %3264
        %3266 = vrot.lane.b32.xlu0 %v3241, 71
        %v3267 = vpop.permute.xlu0 %3266
        %3268 = vrot.lane.b32.xlu0 %v3242, 71
        %v3269 = vpop.permute.xlu0 %3268
        %3270 = vrot.lane.b32.xlu0 %v3243, 71
        %v3271 = vpop.permute.xlu0 %3270
        %3272 = vrot.lane.b32.xlu0 %v3244, 71
        %v3273 = vpop.permute.xlu0 %3272
        %3274 = vrot.lane.b32.xlu0 %v3245, 71
        %v3275 = vpop.permute.xlu0 %3274
        %3276 = vrot.lane.b32.xlu0 %v3246, 71
        %v3277 = vpop.permute.xlu0 %3276
        %3278 = vrot.lane.b32.xlu0 %v3247, 71
        %v3279 = vpop.permute.xlu0 %3278
        %3280 = vrot.lane.b32.xlu0 %v3248, 71
        %v3281 = vpop.permute.xlu0 %3280
        %3282 = vrot.lane.b32.xlu0 %v3249, 71
        %v3283 = vpop.permute.xlu0 %3282
        %3284 = vrot.lane.b32.xlu0 %v3250, 71
        %v3285 = vpop.permute.xlu0 %3284
        %3286 = vrot.lane.b32.xlu0 %v3251, 71
        %v3287 = vpop.permute.xlu0 %3286
        %v3288 = vsel %vm879, %v3265, %v3267
        %v3289 = vsel %vm879, %v3267, %v3269
        %v3290 = vsel %vm879, %v3271, %v3273
        %v3291 = vsel %vm879, %v3273, %v3275
        %v3292 = vsel %vm879, %v3277, %v3279
        %v3293 = vsel %vm879, %v3279, %v3281
        %v3294 = vsel %vm879, %v3283, %v3285
        %v3295 = vsel %vm879, %v3285, %v3287
        %v3308 = vadd.f32 %v3181, %v3265
        %v3309 = vadd.f32 %v3182, %v3288
        %v3310 = vadd.f32 %v3183, %v3289
        %v3311 = vadd.f32 %v3184, %v3271
        %v3312 = vadd.f32 %v3185, %v3290
        %v3313 = vadd.f32 %v3186, %v3291
        %v3314 = vadd.f32 %v3187, %v3277
        %v3315 = vadd.f32 %v3188, %v3292
        %v3316 = vadd.f32 %v3189, %v3293
        %v3317 = vadd.f32 %v3190, %v3283
        %v3318 = vadd.f32 %v3191, %v3294
        %v3319 = vadd.f32 %v3192, %v3295
        %3320 = vrot.lane.b32.xlu0 %v2649, 54
        %v3321 = vpop.permute.xlu0 %3320
        %v3322 = vrot.slane %v3321, 7
        %v3323 = vsel %vm915, %v3322, %v3321
        %v3325 = vmul.f32 %v3193, %v3323
        %v3326 = vld [vmem:[%s919] sm:$0xff]
        %v3327 = vld [vmem:[%s919 + $0x8] sm:$0xff]
        %v3328 = vld [vmem:[%s919 + $0x10] sm:$0xff]
        %v3329 = vld [vmem:[%s919 + $0x18] sm:$0xff]
        %3331 = vset.pattern.permute.xlu0 0
        %3332 = vperm.xlu0 %3331, %v3326
        %v3333 = vpop.permute.xlu0 %3332
        %3336 = vset.pattern.permute.xlu0 0
        %3337 = vperm.xlu0 %3336, %v3327
        %v3338 = vpop.permute.xlu0 %3337
        %3341 = vset.pattern.permute.xlu0 0
        %3342 = vperm.xlu0 %3341, %v3328
        %v3343 = vpop.permute.xlu0 %3342
        %3346 = vset.pattern.permute.xlu0 0
        %3347 = vperm.xlu0 %3346, %v3329
        %v3348 = vpop.permute.xlu0 %3347
        %v3351 = vlaneseq
        %v3352 = vshrl.u32 %v3351, 7
        %v3353 = vsub.s32 0, %v3352
        %v3354 = vrot.slane %v3325, %v3353
        %v3355 = vlaneseq
        %v3356 = vshrl.u32 %v3355, 7
        %v3357 = vsub.s32 1, %v3356
        %v3358 = vrot.slane %v3325, %v3357
        %v3359 = vlaneseq
        %v3360 = vshrl.u32 %v3359, 7
        %v3361 = vsub.s32 2, %v3360
        %v3362 = vrot.slane %v3325, %v3361
        %v3366 = vmul.f32 %v3333, %v3354
        %v3367 = vmul.f32 %v3333, %v3358
        %v3368 = vmul.f32 %v3333, %v3362
        %v3369 = vmul.f32 %v3338, %v3354
        %v3370 = vmul.f32 %v3338, %v3358
        %v3371 = vmul.f32 %v3338, %v3362
        %v3372 = vmul.f32 %v3343, %v3354
        %v3373 = vmul.f32 %v3343, %v3358
        %v3374 = vmul.f32 %v3343, %v3362
        %v3375 = vmul.f32 %v3348, %v3354
        %v3376 = vmul.f32 %v3348, %v3358
        %v3377 = vmul.f32 %v3348, %v3362
        %3390 = vrot.lane.b32.xlu0 %v3366, 18
        %v3391 = vpop.permute.xlu0 %3390
        %3392 = vrot.lane.b32.xlu0 %v3367, 18
        %v3393 = vpop.permute.xlu0 %3392
        %3394 = vrot.lane.b32.xlu0 %v3368, 18
        %v3395 = vpop.permute.xlu0 %3394
        %3396 = vrot.lane.b32.xlu0 %v3369, 18
        %v3397 = vpop.permute.xlu0 %3396
        %3398 = vrot.lane.b32.xlu0 %v3370, 18
        %v3399 = vpop.permute.xlu0 %3398
        %3400 = vrot.lane.b32.xlu0 %v3371, 18
        %v3401 = vpop.permute.xlu0 %3400
        %3402 = vrot.lane.b32.xlu0 %v3372, 18
        %v3403 = vpop.permute.xlu0 %3402
        %3404 = vrot.lane.b32.xlu0 %v3373, 18
        %v3405 = vpop.permute.xlu0 %3404
        %3406 = vrot.lane.b32.xlu0 %v3374, 18
        %v3407 = vpop.permute.xlu0 %3406
        %3408 = vrot.lane.b32.xlu0 %v3375, 18
        %v3409 = vpop.permute.xlu0 %3408
        %3410 = vrot.lane.b32.xlu0 %v3376, 18
        %v3411 = vpop.permute.xlu0 %3410
        %3412 = vrot.lane.b32.xlu0 %v3377, 18
        %v3413 = vpop.permute.xlu0 %3412
        %v3414 = vsel %vm1008, %v3391, %v3393
        %v3415 = vsel %vm1008, %v3393, %v3395
        %v3416 = vsel %vm1008, %v3397, %v3399
        %v3417 = vsel %vm1008, %v3399, %v3401
        %v3418 = vsel %vm1008, %v3403, %v3405
        %v3419 = vsel %vm1008, %v3405, %v3407
        %v3420 = vsel %vm1008, %v3409, %v3411
        %v3421 = vsel %vm1008, %v3411, %v3413
        %v3434 = vadd.f32 %v3308, %v3391
        %v3435 = vadd.f32 %v3309, %v3414
        %v3436 = vadd.f32 %v3310, %v3415
        %v3437 = vadd.f32 %v3311, %v3397
        %v3438 = vadd.f32 %v3312, %v3416
        %v3439 = vadd.f32 %v3313, %v3417
        %v3440 = vadd.f32 %v3314, %v3403
        %v3441 = vadd.f32 %v3315, %v3418
        %v3442 = vadd.f32 %v3316, %v3419
        %v3443 = vadd.f32 %v3317, %v3409
        %v3444 = vadd.f32 %v3318, %v3420
        %v3445 = vadd.f32 %v3319, %v3421
        %v3446 = vld [vmem:[%s1041] sm:$0xff]
        %v3447 = vld [vmem:[%s1041 + $0x8] sm:$0xff]
        %v3448 = vld [vmem:[%s1041 + $0x10] sm:$0xff]
        %v3449 = vld [vmem:[%s1041 + $0x18] sm:$0xff]
        %3451 = vset.pattern.permute.xlu0 0
        %3452 = vperm.xlu0 %3451, %v3446
        %v3453 = vpop.permute.xlu0 %3452
        %3456 = vset.pattern.permute.xlu0 0
        %3457 = vperm.xlu0 %3456, %v3447
        %v3458 = vpop.permute.xlu0 %3457
        %3461 = vset.pattern.permute.xlu0 0
        %3462 = vperm.xlu0 %3461, %v3448
        %v3463 = vpop.permute.xlu0 %3462
        %3466 = vset.pattern.permute.xlu0 0
        %3467 = vperm.xlu0 %3466, %v3449
        %v3468 = vpop.permute.xlu0 %3467
        %v3471 = vlaneseq
        %v3472 = vshrl.u32 %v3471, 7
        %v3473 = vsub.s32 0, %v3472
        %v3474 = vrot.slane %v3193, %v3473
        %v3475 = vlaneseq
        %v3476 = vshrl.u32 %v3475, 7
        %v3477 = vsub.s32 1, %v3476
        %v3478 = vrot.slane %v3193, %v3477
        %v3479 = vlaneseq
        %v3480 = vshrl.u32 %v3479, 7
        %v3481 = vsub.s32 2, %v3480
        %v3482 = vrot.slane %v3193, %v3481
        %v3486 = vmul.f32 %v3453, %v3474
        %v3487 = vmul.f32 %v3453, %v3478
        %v3488 = vmul.f32 %v3453, %v3482
        %v3489 = vmul.f32 %v3458, %v3474
        %v3490 = vmul.f32 %v3458, %v3478
        %v3491 = vmul.f32 %v3458, %v3482
        %v3492 = vmul.f32 %v3463, %v3474
        %v3493 = vmul.f32 %v3463, %v3478
        %v3494 = vmul.f32 %v3463, %v3482
        %v3495 = vmul.f32 %v3468, %v3474
        %v3496 = vmul.f32 %v3468, %v3478
        %v3497 = vmul.f32 %v3468, %v3482
        %3510 = vrot.lane.b32.xlu0 %v3486, 17
        %v3511 = vpop.permute.xlu0 %3510
        %3512 = vrot.lane.b32.xlu0 %v3487, 17
        %v3513 = vpop.permute.xlu0 %3512
        %3514 = vrot.lane.b32.xlu0 %v3488, 17
        %v3515 = vpop.permute.xlu0 %3514
        %3516 = vrot.lane.b32.xlu0 %v3489, 17
        %v3517 = vpop.permute.xlu0 %3516
        %3518 = vrot.lane.b32.xlu0 %v3490, 17
        %v3519 = vpop.permute.xlu0 %3518
        %3520 = vrot.lane.b32.xlu0 %v3491, 17
        %v3521 = vpop.permute.xlu0 %3520
        %3522 = vrot.lane.b32.xlu0 %v3492, 17
        %v3523 = vpop.permute.xlu0 %3522
        %3524 = vrot.lane.b32.xlu0 %v3493, 17
        %v3525 = vpop.permute.xlu0 %3524
        %3526 = vrot.lane.b32.xlu0 %v3494, 17
        %v3527 = vpop.permute.xlu0 %3526
        %3528 = vrot.lane.b32.xlu0 %v3495, 17
        %v3529 = vpop.permute.xlu0 %3528
        %3530 = vrot.lane.b32.xlu0 %v3496, 17
        %v3531 = vpop.permute.xlu0 %3530
        %3532 = vrot.lane.b32.xlu0 %v3497, 17
        %v3533 = vpop.permute.xlu0 %3532
        %v3534 = vsel %vm1130, %v3511, %v3513
        %v3535 = vsel %vm1130, %v3513, %v3515
        %v3536 = vsel %vm1130, %v3517, %v3519
        %v3537 = vsel %vm1130, %v3519, %v3521
        %v3538 = vsel %vm1130, %v3523, %v3525
        %v3539 = vsel %vm1130, %v3525, %v3527
        %v3540 = vsel %vm1130, %v3529, %v3531
        %v3541 = vsel %vm1130, %v3531, %v3533
        %v3554 = vadd.f32 %v3434, %v3511
        %v3555 = vadd.f32 %v3435, %v3534
        %v3556 = vadd.f32 %v3436, %v3535
        %v3557 = vadd.f32 %v3437, %v3517
        %v3558 = vadd.f32 %v3438, %v3536
        %v3559 = vadd.f32 %v3439, %v3537
        %v3560 = vadd.f32 %v3440, %v3523
        %v3561 = vadd.f32 %v3441, %v3538
        %v3562 = vadd.f32 %v3442, %v3539
        %v3563 = vadd.f32 %v3443, %v3529
        %v3564 = vadd.f32 %v3444, %v3540
        %v3565 = vadd.f32 %v3445, %v3541
        %3566 = vrot.lane.b32.xlu0 %v2651, 56
        %v3567 = vpop.permute.xlu0 %3566
        %v3568 = vrot.slane %v3567, 7
        %v3569 = vsel %vm1166, %v3568, %v3567
        %v3571 = vmul.f32 %v3193, %v3569
        %v3572 = vld [vmem:[%s1170] sm:$0xff]
        %v3573 = vld [vmem:[%s1170 + $0x8] sm:$0xff]
        %v3574 = vld [vmem:[%s1170 + $0x10] sm:$0xff]
        %v3575 = vld [vmem:[%s1170 + $0x18] sm:$0xff]
        %3577 = vset.pattern.permute.xlu0 0
        %3578 = vperm.xlu0 %3577, %v3572
        %v3579 = vpop.permute.xlu0 %3578
        %3582 = vset.pattern.permute.xlu0 0
        %3583 = vperm.xlu0 %3582, %v3573
        %v3584 = vpop.permute.xlu0 %3583
        %3587 = vset.pattern.permute.xlu0 0
        %3588 = vperm.xlu0 %3587, %v3574
        %v3589 = vpop.permute.xlu0 %3588
        %3592 = vset.pattern.permute.xlu0 0
        %3593 = vperm.xlu0 %3592, %v3575
        %v3594 = vpop.permute.xlu0 %3593
        %v3597 = vlaneseq
        %v3598 = vshrl.u32 %v3597, 7
        %v3599 = vsub.s32 0, %v3598
        %v3600 = vrot.slane %v3571, %v3599
        %v3601 = vlaneseq
        %v3602 = vshrl.u32 %v3601, 7
        %v3603 = vsub.s32 1, %v3602
        %v3604 = vrot.slane %v3571, %v3603
        %v3605 = vlaneseq
        %v3606 = vshrl.u32 %v3605, 7
        %v3607 = vsub.s32 2, %v3606
        %v3608 = vrot.slane %v3571, %v3607
        %v3612 = vmul.f32 %v3579, %v3600
        %v3613 = vmul.f32 %v3579, %v3604
        %v3614 = vmul.f32 %v3579, %v3608
        %v3615 = vmul.f32 %v3584, %v3600
        %v3616 = vmul.f32 %v3584, %v3604
        %v3617 = vmul.f32 %v3584, %v3608
        %v3618 = vmul.f32 %v3589, %v3600
        %v3619 = vmul.f32 %v3589, %v3604
        %v3620 = vmul.f32 %v3589, %v3608
        %v3621 = vmul.f32 %v3594, %v3600
        %v3622 = vmul.f32 %v3594, %v3604
        %v3623 = vmul.f32 %v3594, %v3608
        %3636 = vrot.lane.b32.xlu0 %v3612, 16
        %v3637 = vpop.permute.xlu0 %3636
        %3638 = vrot.lane.b32.xlu0 %v3613, 16
        %v3639 = vpop.permute.xlu0 %3638
        %3640 = vrot.lane.b32.xlu0 %v3614, 16
        %v3641 = vpop.permute.xlu0 %3640
        %3642 = vrot.lane.b32.xlu0 %v3615, 16
        %v3643 = vpop.permute.xlu0 %3642
        %3644 = vrot.lane.b32.xlu0 %v3616, 16
        %v3645 = vpop.permute.xlu0 %3644
        %3646 = vrot.lane.b32.xlu0 %v3617, 16
        %v3647 = vpop.permute.xlu0 %3646
        %3648 = vrot.lane.b32.xlu0 %v3618, 16
        %v3649 = vpop.permute.xlu0 %3648
        %3650 = vrot.lane.b32.xlu0 %v3619, 16
        %v3651 = vpop.permute.xlu0 %3650
        %3652 = vrot.lane.b32.xlu0 %v3620, 16
        %v3653 = vpop.permute.xlu0 %3652
        %3654 = vrot.lane.b32.xlu0 %v3621, 16
        %v3655 = vpop.permute.xlu0 %3654
        %3656 = vrot.lane.b32.xlu0 %v3622, 16
        %v3657 = vpop.permute.xlu0 %3656
        %3658 = vrot.lane.b32.xlu0 %v3623, 16
        %v3659 = vpop.permute.xlu0 %3658
        %v3660 = vsel %vm1259, %v3637, %v3639
        %v3661 = vsel %vm1259, %v3639, %v3641
        %v3662 = vsel %vm1259, %v3643, %v3645
        %v3663 = vsel %vm1259, %v3645, %v3647
        %v3664 = vsel %vm1259, %v3649, %v3651
        %v3665 = vsel %vm1259, %v3651, %v3653
        %v3666 = vsel %vm1259, %v3655, %v3657
        %v3667 = vsel %vm1259, %v3657, %v3659
        %v3680 = vadd.f32 %v3554, %v3637
        %v3681 = vadd.f32 %v3555, %v3660
        %v3682 = vadd.f32 %v3556, %v3661
        %v3683 = vadd.f32 %v3557, %v3643
        %v3684 = vadd.f32 %v3558, %v3662
        %v3685 = vadd.f32 %v3559, %v3663
        %v3686 = vadd.f32 %v3560, %v3649
        %v3687 = vadd.f32 %v3561, %v3664
        %v3688 = vadd.f32 %v3562, %v3665
        %v3689 = vadd.f32 %v3563, %v3655
        %v3690 = vadd.f32 %v3564, %v3666
        %v3691 = vadd.f32 %v3565, %v3667
        %3704 = vrot.lane.b32.xlu0 %v3680, 56
        %v3705 = vpop.permute.xlu0 %3704
        %3706 = vrot.lane.b32.xlu0 %v3681, 56
        %v3707 = vpop.permute.xlu0 %3706
        %3708 = vrot.lane.b32.xlu0 %v3682, 56
        %v3709 = vpop.permute.xlu0 %3708
        %3710 = vrot.lane.b32.xlu0 %v3683, 56
        %v3711 = vpop.permute.xlu0 %3710
        %3712 = vrot.lane.b32.xlu0 %v3684, 56
        %v3713 = vpop.permute.xlu0 %3712
        %3714 = vrot.lane.b32.xlu0 %v3685, 56
        %v3715 = vpop.permute.xlu0 %3714
        %3716 = vrot.lane.b32.xlu0 %v3686, 56
        %v3717 = vpop.permute.xlu0 %3716
        %3718 = vrot.lane.b32.xlu0 %v3687, 56
        %v3719 = vpop.permute.xlu0 %3718
        %3720 = vrot.lane.b32.xlu0 %v3688, 56
        %v3721 = vpop.permute.xlu0 %3720
        %3722 = vrot.lane.b32.xlu0 %v3689, 56
        %v3723 = vpop.permute.xlu0 %3722
        %3724 = vrot.lane.b32.xlu0 %v3690, 56
        %v3725 = vpop.permute.xlu0 %3724
        %3726 = vrot.lane.b32.xlu0 %v3691, 56
        %v3727 = vpop.permute.xlu0 %3726
        %v3728 = vsel %vm1166, %v3705, %v3707
        %v3729 = vsel %vm1166, %v3707, %v3709
        %v3730 = vsel %vm1166, %v3711, %v3713
        %v3731 = vsel %vm1166, %v3713, %v3715
        %v3732 = vsel %vm1166, %v3717, %v3719
        %v3733 = vsel %vm1166, %v3719, %v3721
        %v3734 = vsel %vm1166, %v3723, %v3725
        %v3735 = vsel %vm1166, %v3725, %v3727
        %v3744 = vadd.f32 %v3728, %v3729
        %3745 = vadd.xlane.f32.xlu0 %v3744
        %v3746 = vpop.xlane.xlu0 %3745
        %v3747 = vadd.f32 %v3730, %v3731
        %3748 = vadd.xlane.f32.xlu0 %v3747
        %v3749 = vpop.xlane.xlu0 %3748
        %v3750 = vadd.f32 %v3732, %v3733
        %3751 = vadd.xlane.f32.xlu0 %v3750
        %v3752 = vpop.xlane.xlu0 %3751
        %v3753 = vadd.f32 %v3734, %v3735
        %3754 = vadd.xlane.f32.xlu0 %v3753
        %v3755 = vpop.xlane.xlu0 %3754
        %v3756 = vadd.f32 %v2556, %v3746
        %v3757 = vadd.f32 %v2557, %v3749
        %v3758 = vadd.f32 %v2558, %v3752
        %v3759 = vadd.f32 %v2559, %v3755
        %v3760 = vmul.f32 %v3680, %v3680
        %v3761 = vmul.f32 %v3681, %v3681
        %v3762 = vmul.f32 %v3682, %v3682
        %v3763 = vmul.f32 %v3683, %v3683
        %v3764 = vmul.f32 %v3684, %v3684
        %v3765 = vmul.f32 %v3685, %v3685
        %v3766 = vmul.f32 %v3686, %v3686
        %v3767 = vmul.f32 %v3687, %v3687
        %v3768 = vmul.f32 %v3688, %v3688
        %v3769 = vmul.f32 %v3689, %v3689
        %v3770 = vmul.f32 %v3690, %v3690
        %v3771 = vmul.f32 %v3691, %v3691
        %3784 = vrot.lane.b32.xlu0 %v3760, 56
        %v3785 = vpop.permute.xlu0 %3784
        %3786 = vrot.lane.b32.xlu0 %v3761, 56
        %v3787 = vpop.permute.xlu0 %3786
        %3788 = vrot.lane.b32.xlu0 %v3762, 56
        %v3789 = vpop.permute.xlu0 %3788
        %3790 = vrot.lane.b32.xlu0 %v3763, 56
        %v3791 = vpop.permute.xlu0 %3790
        %3792 = vrot.lane.b32.xlu0 %v3764, 56
        %v3793 = vpop.permute.xlu0 %3792
        %3794 = vrot.lane.b32.xlu0 %v3765, 56
        %v3795 = vpop.permute.xlu0 %3794
        %3796 = vrot.lane.b32.xlu0 %v3766, 56
        %v3797 = vpop.permute.xlu0 %3796
        %3798 = vrot.lane.b32.xlu0 %v3767, 56
        %v3799 = vpop.permute.xlu0 %3798
        %3800 = vrot.lane.b32.xlu0 %v3768, 56
        %v3801 = vpop.permute.xlu0 %3800
        %3802 = vrot.lane.b32.xlu0 %v3769, 56
        %v3803 = vpop.permute.xlu0 %3802
        %3804 = vrot.lane.b32.xlu0 %v3770, 56
        %v3805 = vpop.permute.xlu0 %3804
        %3806 = vrot.lane.b32.xlu0 %v3771, 56
        %v3807 = vpop.permute.xlu0 %3806
        %v3808 = vsel %vm1166, %v3785, %v3787
        %v3809 = vsel %vm1166, %v3787, %v3789
        %v3810 = vsel %vm1166, %v3791, %v3793
        %v3811 = vsel %vm1166, %v3793, %v3795
        %v3812 = vsel %vm1166, %v3797, %v3799
        %v3813 = vsel %vm1166, %v3799, %v3801
        %v3814 = vsel %vm1166, %v3803, %v3805
        %v3815 = vsel %vm1166, %v3805, %v3807
        %v3824 = vadd.f32 %v3808, %v3809
        %3825 = vadd.xlane.f32.xlu0 %v3824
        %v3826 = vpop.xlane.xlu0 %3825
        %v3827 = vadd.f32 %v3810, %v3811
        %3828 = vadd.xlane.f32.xlu0 %v3827
        %v3829 = vpop.xlane.xlu0 %3828
        %v3830 = vadd.f32 %v3812, %v3813
        %3831 = vadd.xlane.f32.xlu0 %v3830
        %v3832 = vpop.xlane.xlu0 %3831
        %v3833 = vadd.f32 %v3814, %v3815
        %3834 = vadd.xlane.f32.xlu0 %v3833
        %v3835 = vpop.xlane.xlu0 %3834
        %v3836 = vadd.f32 %v2636, %v3826
        %v3837 = vadd.f32 %v2637, %v3829
        %v3838 = vadd.f32 %v2638, %v3832
        %v3839 = vadd.f32 %v2639, %v3835
        %3840 = vst [vmem:[%s188 + $0x28] sm:$0xff] %v3728
        %3841 = vst [vmem:[%s188 + $0x30] sm:$0xff] %v3729
        %3842 = vst [vmem:[%s188 + $0xb8] sm:$0xff] %v3730
        %3843 = vst [vmem:[%s188 + $0xc0] sm:$0xff] %v3731
        %3844 = vst [vmem:[%s188 + $0x148] sm:$0xff] %v3732
        %3845 = vst [vmem:[%s188 + $0x150] sm:$0xff] %v3733
        %3846 = vst [vmem:[%s188 + $0x1d8] sm:$0xff] %v3734
        %3847 = vst [vmem:[%s188 + $0x1e0] sm:$0xff] %v3735
        %s3848 = scalar_lea.vmem %s3, 24
        %v3849 = vld [vmem:[%s3848] ss:$4 sm:$0x3]
        %s3850 = scalar_lea.vmem %s3, 25
        %v3851 = vld [vmem:[%s3850] ss:$4 sm:$0x3]
        %v3852 = vld [vmem:[%s192 + $0x6] sm:$0x7]
        %3854 = vrot.lane.b32.xlu0 %v3849, 72
        %v3855 = vpop.permute.xlu0 %3854
        %v3856 = vrot.slane %v3855, 7
        %v3857 = vsel %vm237, %v3856, %v3855
        %v3859 = vmul.f32 %v3852, %v3857
        %v3860 = vld [vmem:[%s1] sm:$0xff]
        %v3861 = vld [vmem:[%s1 + $0x8] sm:$0xff]
        %v3862 = vld [vmem:[%s1 + $0x10] sm:$0xff]
        %v3863 = vld [vmem:[%s1 + $0x18] sm:$0xff]
        %3865 = vset.pattern.permute.xlu0 0
        %3866 = vperm.xlu0 %3865, %v3860
        %v3867 = vpop.permute.xlu0 %3866
        %3870 = vset.pattern.permute.xlu0 0
        %3871 = vperm.xlu0 %3870, %v3861
        %v3872 = vpop.permute.xlu0 %3871
        %3875 = vset.pattern.permute.xlu0 0
        %3876 = vperm.xlu0 %3875, %v3862
        %v3877 = vpop.permute.xlu0 %3876
        %3880 = vset.pattern.permute.xlu0 0
        %3881 = vperm.xlu0 %3880, %v3863
        %v3882 = vpop.permute.xlu0 %3881
        %v3885 = vlaneseq
        %v3886 = vshrl.u32 %v3885, 7
        %v3887 = vsub.s32 0, %v3886
        %v3888 = vrot.slane %v3859, %v3887
        %v3889 = vlaneseq
        %v3890 = vshrl.u32 %v3889, 7
        %v3891 = vsub.s32 1, %v3890
        %v3892 = vrot.slane %v3859, %v3891
        %v3893 = vlaneseq
        %v3894 = vshrl.u32 %v3893, 7
        %v3895 = vsub.s32 2, %v3894
        %v3896 = vrot.slane %v3859, %v3895
        %v3900 = vmul.f32 %v3867, %v3888
        %v3901 = vmul.f32 %v3867, %v3892
        %v3902 = vmul.f32 %v3867, %v3896
        %v3903 = vmul.f32 %v3872, %v3888
        %v3904 = vmul.f32 %v3872, %v3892
        %v3905 = vmul.f32 %v3872, %v3896
        %v3906 = vmul.f32 %v3877, %v3888
        %v3907 = vmul.f32 %v3877, %v3892
        %v3908 = vmul.f32 %v3877, %v3896
        %v3909 = vmul.f32 %v3882, %v3888
        %v3910 = vmul.f32 %v3882, %v3892
        %v3911 = vmul.f32 %v3882, %v3896
        %v3912 = vadd.f32 %v228, %v3900
        %v3913 = vadd.f32 %v228, %v3901
        %v3914 = vadd.f32 %v228, %v3902
        %v3915 = vadd.f32 %v229, %v3903
        %v3916 = vadd.f32 %v229, %v3904
        %v3917 = vadd.f32 %v229, %v3905
        %v3918 = vadd.f32 %v230, %v3906
        %v3919 = vadd.f32 %v230, %v3907
        %v3920 = vadd.f32 %v230, %v3908
        %v3921 = vadd.f32 %v231, %v3909
        %v3922 = vadd.f32 %v231, %v3910
        %v3923 = vadd.f32 %v231, %v3911
        %v3924 = vld [vmem:[%s305] sm:$0xff]
        %v3925 = vld [vmem:[%s305 + $0x8] sm:$0xff]
        %v3926 = vld [vmem:[%s305 + $0x10] sm:$0xff]
        %v3927 = vld [vmem:[%s305 + $0x18] sm:$0xff]
        %3929 = vset.pattern.permute.xlu0 0
        %3930 = vperm.xlu0 %3929, %v3924
        %v3931 = vpop.permute.xlu0 %3930
        %3934 = vset.pattern.permute.xlu0 0
        %3935 = vperm.xlu0 %3934, %v3925
        %v3936 = vpop.permute.xlu0 %3935
        %3939 = vset.pattern.permute.xlu0 0
        %3940 = vperm.xlu0 %3939, %v3926
        %v3941 = vpop.permute.xlu0 %3940
        %3944 = vset.pattern.permute.xlu0 0
        %3945 = vperm.xlu0 %3944, %v3927
        %v3946 = vpop.permute.xlu0 %3945
        %v3949 = vlaneseq
        %v3950 = vshrl.u32 %v3949, 7
        %v3951 = vsub.s32 0, %v3950
        %v3952 = vrot.slane %v3852, %v3951
        %v3953 = vlaneseq
        %v3954 = vshrl.u32 %v3953, 7
        %v3955 = vsub.s32 1, %v3954
        %v3956 = vrot.slane %v3852, %v3955
        %v3957 = vlaneseq
        %v3958 = vshrl.u32 %v3957, 7
        %v3959 = vsub.s32 2, %v3958
        %v3960 = vrot.slane %v3852, %v3959
        %v3964 = vmul.f32 %v3931, %v3952
        %v3965 = vmul.f32 %v3931, %v3956
        %v3966 = vmul.f32 %v3931, %v3960
        %v3967 = vmul.f32 %v3936, %v3952
        %v3968 = vmul.f32 %v3936, %v3956
        %v3969 = vmul.f32 %v3936, %v3960
        %v3970 = vmul.f32 %v3941, %v3952
        %v3971 = vmul.f32 %v3941, %v3956
        %v3972 = vmul.f32 %v3941, %v3960
        %v3973 = vmul.f32 %v3946, %v3952
        %v3974 = vmul.f32 %v3946, %v3956
        %v3975 = vmul.f32 %v3946, %v3960
        %3988 = vrot.lane.b32.xlu0 %v3964, 127
        %v3989 = vpop.permute.xlu0 %3988
        %3990 = vrot.lane.b32.xlu0 %v3965, 127
        %v3991 = vpop.permute.xlu0 %3990
        %3992 = vrot.lane.b32.xlu0 %v3966, 127
        %v3993 = vpop.permute.xlu0 %3992
        %3994 = vrot.lane.b32.xlu0 %v3967, 127
        %v3995 = vpop.permute.xlu0 %3994
        %3996 = vrot.lane.b32.xlu0 %v3968, 127
        %v3997 = vpop.permute.xlu0 %3996
        %3998 = vrot.lane.b32.xlu0 %v3969, 127
        %v3999 = vpop.permute.xlu0 %3998
        %4000 = vrot.lane.b32.xlu0 %v3970, 127
        %v4001 = vpop.permute.xlu0 %4000
        %4002 = vrot.lane.b32.xlu0 %v3971, 127
        %v4003 = vpop.permute.xlu0 %4002
        %4004 = vrot.lane.b32.xlu0 %v3972, 127
        %v4005 = vpop.permute.xlu0 %4004
        %4006 = vrot.lane.b32.xlu0 %v3973, 127
        %v4007 = vpop.permute.xlu0 %4006
        %4008 = vrot.lane.b32.xlu0 %v3974, 127
        %v4009 = vpop.permute.xlu0 %4008
        %4010 = vrot.lane.b32.xlu0 %v3975, 127
        %v4011 = vpop.permute.xlu0 %4010
        %v4012 = vsel %vm394, %v3989, %v3991
        %v4013 = vsel %vm394, %v3991, %v3993
        %v4014 = vsel %vm394, %v3995, %v3997
        %v4015 = vsel %vm394, %v3997, %v3999
        %v4016 = vsel %vm394, %v4001, %v4003
        %v4017 = vsel %vm394, %v4003, %v4005
        %v4018 = vsel %vm394, %v4007, %v4009
        %v4019 = vsel %vm394, %v4009, %v4011
        %v4032 = vadd.f32 %v3912, %v4012
        %v4033 = vadd.f32 %v3913, %v4013
        %v4034 = vadd.f32 %v3914, %v3993
        %v4035 = vadd.f32 %v3915, %v4014
        %v4036 = vadd.f32 %v3916, %v4015
        %v4037 = vadd.f32 %v3917, %v3999
        %v4038 = vadd.f32 %v3918, %v4016
        %v4039 = vadd.f32 %v3919, %v4017
        %v4040 = vadd.f32 %v3920, %v4005
        %v4041 = vadd.f32 %v3921, %v4018
        %v4042 = vadd.f32 %v3922, %v4019
        %v4043 = vadd.f32 %v3923, %v4011
        %4045 = vrot.lane.b32.xlu0 %v3851, 74
        %v4046 = vpop.permute.xlu0 %4045
        %v4047 = vrot.slane %v4046, 7
        %v4048 = vsel %vm431, %v4047, %v4046
        %v4050 = vmul.f32 %v3852, %v4048
        %v4051 = vld [vmem:[%s435] sm:$0xff]
        %v4052 = vld [vmem:[%s435 + $0x8] sm:$0xff]
        %v4053 = vld [vmem:[%s435 + $0x10] sm:$0xff]
        %v4054 = vld [vmem:[%s435 + $0x18] sm:$0xff]
        %4056 = vset.pattern.permute.xlu0 0
        %4057 = vperm.xlu0 %4056, %v4051
        %v4058 = vpop.permute.xlu0 %4057
        %4061 = vset.pattern.permute.xlu0 0
        %4062 = vperm.xlu0 %4061, %v4052
        %v4063 = vpop.permute.xlu0 %4062
        %4066 = vset.pattern.permute.xlu0 0
        %4067 = vperm.xlu0 %4066, %v4053
        %v4068 = vpop.permute.xlu0 %4067
        %4071 = vset.pattern.permute.xlu0 0
        %4072 = vperm.xlu0 %4071, %v4054
        %v4073 = vpop.permute.xlu0 %4072
        %v4076 = vlaneseq
        %v4077 = vshrl.u32 %v4076, 7
        %v4078 = vsub.s32 0, %v4077
        %v4079 = vrot.slane %v4050, %v4078
        %v4080 = vlaneseq
        %v4081 = vshrl.u32 %v4080, 7
        %v4082 = vsub.s32 1, %v4081
        %v4083 = vrot.slane %v4050, %v4082
        %v4084 = vlaneseq
        %v4085 = vshrl.u32 %v4084, 7
        %v4086 = vsub.s32 2, %v4085
        %v4087 = vrot.slane %v4050, %v4086
        %v4091 = vmul.f32 %v4058, %v4079
        %v4092 = vmul.f32 %v4058, %v4083
        %v4093 = vmul.f32 %v4058, %v4087
        %v4094 = vmul.f32 %v4063, %v4079
        %v4095 = vmul.f32 %v4063, %v4083
        %v4096 = vmul.f32 %v4063, %v4087
        %v4097 = vmul.f32 %v4068, %v4079
        %v4098 = vmul.f32 %v4068, %v4083
        %v4099 = vmul.f32 %v4068, %v4087
        %v4100 = vmul.f32 %v4073, %v4079
        %v4101 = vmul.f32 %v4073, %v4083
        %v4102 = vmul.f32 %v4073, %v4087
        %4115 = vrot.lane.b32.xlu0 %v4091, 126
        %v4116 = vpop.permute.xlu0 %4115
        %4117 = vrot.lane.b32.xlu0 %v4092, 126
        %v4118 = vpop.permute.xlu0 %4117
        %4119 = vrot.lane.b32.xlu0 %v4093, 126
        %v4120 = vpop.permute.xlu0 %4119
        %4121 = vrot.lane.b32.xlu0 %v4094, 126
        %v4122 = vpop.permute.xlu0 %4121
        %4123 = vrot.lane.b32.xlu0 %v4095, 126
        %v4124 = vpop.permute.xlu0 %4123
        %4125 = vrot.lane.b32.xlu0 %v4096, 126
        %v4126 = vpop.permute.xlu0 %4125
        %4127 = vrot.lane.b32.xlu0 %v4097, 126
        %v4128 = vpop.permute.xlu0 %4127
        %4129 = vrot.lane.b32.xlu0 %v4098, 126
        %v4130 = vpop.permute.xlu0 %4129
        %4131 = vrot.lane.b32.xlu0 %v4099, 126
        %v4132 = vpop.permute.xlu0 %4131
        %4133 = vrot.lane.b32.xlu0 %v4100, 126
        %v4134 = vpop.permute.xlu0 %4133
        %4135 = vrot.lane.b32.xlu0 %v4101, 126
        %v4136 = vpop.permute.xlu0 %4135
        %4137 = vrot.lane.b32.xlu0 %v4102, 126
        %v4138 = vpop.permute.xlu0 %4137
        %v4139 = vsel %vm524, %v4116, %v4118
        %v4140 = vsel %vm524, %v4118, %v4120
        %v4141 = vsel %vm524, %v4122, %v4124
        %v4142 = vsel %vm524, %v4124, %v4126
        %v4143 = vsel %vm524, %v4128, %v4130
        %v4144 = vsel %vm524, %v4130, %v4132
        %v4145 = vsel %vm524, %v4134, %v4136
        %v4146 = vsel %vm524, %v4136, %v4138
        %v4159 = vadd.f32 %v4032, %v4139
        %v4160 = vadd.f32 %v4033, %v4140
        %v4161 = vadd.f32 %v4034, %v4120
        %v4162 = vadd.f32 %v4035, %v4141
        %v4163 = vadd.f32 %v4036, %v4142
        %v4164 = vadd.f32 %v4037, %v4126
        %v4165 = vadd.f32 %v4038, %v4143
        %v4166 = vadd.f32 %v4039, %v4144
        %v4167 = vadd.f32 %v4040, %v4132
        %v4168 = vadd.f32 %v4041, %v4145
        %v4169 = vadd.f32 %v4042, %v4146
        %v4170 = vadd.f32 %v4043, %v4138
        %4171 = vrot.lane.b32.xlu0 %v3849, 127
        %v4172 = vpop.permute.xlu0 %4171
        %v4173 = vrot.slane %v4172, 7
        %v4174 = vsel %vm394, %v4173, %v4172
        %v4176 = vmul.f32 %v3852, %v4174
        %v4177 = vld [vmem:[%s563] sm:$0xff]
        %v4178 = vld [vmem:[%s563 + $0x8] sm:$0xff]
        %v4179 = vld [vmem:[%s563 + $0x10] sm:$0xff]
        %v4180 = vld [vmem:[%s563 + $0x18] sm:$0xff]
        %4182 = vset.pattern.permute.xlu0 0
        %4183 = vperm.xlu0 %4182, %v4177
        %v4184 = vpop.permute.xlu0 %4183
        %4187 = vset.pattern.permute.xlu0 0
        %4188 = vperm.xlu0 %4187, %v4178
        %v4189 = vpop.permute.xlu0 %4188
        %4192 = vset.pattern.permute.xlu0 0
        %4193 = vperm.xlu0 %4192, %v4179
        %v4194 = vpop.permute.xlu0 %4193
        %4197 = vset.pattern.permute.xlu0 0
        %4198 = vperm.xlu0 %4197, %v4180
        %v4199 = vpop.permute.xlu0 %4198
        %v4202 = vlaneseq
        %v4203 = vshrl.u32 %v4202, 7
        %v4204 = vsub.s32 0, %v4203
        %v4205 = vrot.slane %v4176, %v4204
        %v4206 = vlaneseq
        %v4207 = vshrl.u32 %v4206, 7
        %v4208 = vsub.s32 1, %v4207
        %v4209 = vrot.slane %v4176, %v4208
        %v4210 = vlaneseq
        %v4211 = vshrl.u32 %v4210, 7
        %v4212 = vsub.s32 2, %v4211
        %v4213 = vrot.slane %v4176, %v4212
        %v4217 = vmul.f32 %v4184, %v4205
        %v4218 = vmul.f32 %v4184, %v4209
        %v4219 = vmul.f32 %v4184, %v4213
        %v4220 = vmul.f32 %v4189, %v4205
        %v4221 = vmul.f32 %v4189, %v4209
        %v4222 = vmul.f32 %v4189, %v4213
        %v4223 = vmul.f32 %v4194, %v4205
        %v4224 = vmul.f32 %v4194, %v4209
        %v4225 = vmul.f32 %v4194, %v4213
        %v4226 = vmul.f32 %v4199, %v4205
        %v4227 = vmul.f32 %v4199, %v4209
        %v4228 = vmul.f32 %v4199, %v4213
        %4241 = vrot.lane.b32.xlu0 %v4217, 73
        %v4242 = vpop.permute.xlu0 %4241
        %4243 = vrot.lane.b32.xlu0 %v4218, 73
        %v4244 = vpop.permute.xlu0 %4243
        %4245 = vrot.lane.b32.xlu0 %v4219, 73
        %v4246 = vpop.permute.xlu0 %4245
        %4247 = vrot.lane.b32.xlu0 %v4220, 73
        %v4248 = vpop.permute.xlu0 %4247
        %4249 = vrot.lane.b32.xlu0 %v4221, 73
        %v4250 = vpop.permute.xlu0 %4249
        %4251 = vrot.lane.b32.xlu0 %v4222, 73
        %v4252 = vpop.permute.xlu0 %4251
        %4253 = vrot.lane.b32.xlu0 %v4223, 73
        %v4254 = vpop.permute.xlu0 %4253
        %4255 = vrot.lane.b32.xlu0 %v4224, 73
        %v4256 = vpop.permute.xlu0 %4255
        %4257 = vrot.lane.b32.xlu0 %v4225, 73
        %v4258 = vpop.permute.xlu0 %4257
        %4259 = vrot.lane.b32.xlu0 %v4226, 73
        %v4260 = vpop.permute.xlu0 %4259
        %4261 = vrot.lane.b32.xlu0 %v4227, 73
        %v4262 = vpop.permute.xlu0 %4261
        %4263 = vrot.lane.b32.xlu0 %v4228, 73
        %v4264 = vpop.permute.xlu0 %4263
        %v4265 = vsel %vm652, %v4242, %v4244
        %v4266 = vsel %vm652, %v4244, %v4246
        %v4267 = vsel %vm652, %v4248, %v4250
        %v4268 = vsel %vm652, %v4250, %v4252
        %v4269 = vsel %vm652, %v4254, %v4256
        %v4270 = vsel %vm652, %v4256, %v4258
        %v4271 = vsel %vm652, %v4260, %v4262
        %v4272 = vsel %vm652, %v4262, %v4264
        %v4285 = vadd.f32 %v4159, %v4265
        %v4286 = vadd.f32 %v4160, %v4266
        %v4287 = vadd.f32 %v4161, %v4246
        %v4288 = vadd.f32 %v4162, %v4267
        %v4289 = vadd.f32 %v4163, %v4268
        %v4290 = vadd.f32 %v4164, %v4252
        %v4291 = vadd.f32 %v4165, %v4269
        %v4292 = vadd.f32 %v4166, %v4270
        %v4293 = vadd.f32 %v4167, %v4258
        %v4294 = vadd.f32 %v4168, %v4271
        %v4295 = vadd.f32 %v4169, %v4272
        %v4296 = vadd.f32 %v4170, %v4264
        %v4297 = vld [vmem:[%s192 + $0x7] sm:$0x3]
        %v4298 = vld [vmem:[%s686] sm:$0xff]
        %v4299 = vld [vmem:[%s686 + $0x8] sm:$0xff]
        %v4300 = vld [vmem:[%s686 + $0x10] sm:$0xff]
        %v4301 = vld [vmem:[%s686 + $0x18] sm:$0xff]
        %4303 = vset.pattern.permute.xlu0 0
        %4304 = vperm.xlu0 %4303, %v4298
        %v4305 = vpop.permute.xlu0 %4304
        %4308 = vset.pattern.permute.xlu0 0
        %4309 = vperm.xlu0 %4308, %v4299
        %v4310 = vpop.permute.xlu0 %4309
        %4313 = vset.pattern.permute.xlu0 0
        %4314 = vperm.xlu0 %4313, %v4300
        %v4315 = vpop.permute.xlu0 %4314
        %4318 = vset.pattern.permute.xlu0 0
        %4319 = vperm.xlu0 %4318, %v4301
        %v4320 = vpop.permute.xlu0 %4319
        %v4323 = vlaneseq
        %v4324 = vshrl.u32 %v4323, 7
        %v4325 = vsub.s32 0, %v4324
        %v4326 = vrot.slane %v4297, %v4325
        %v4327 = vlaneseq
        %v4328 = vshrl.u32 %v4327, 7
        %v4329 = vsub.s32 1, %v4328
        %v4330 = vrot.slane %v4297, %v4329
        %v4333 = vmul.f32 %v4305, %v4326
        %v4334 = vmul.f32 %v4305, %v4330
        %v4335 = vmul.f32 %v4310, %v4326
        %v4336 = vmul.f32 %v4310, %v4330
        %v4337 = vmul.f32 %v4315, %v4326
        %v4338 = vmul.f32 %v4315, %v4330
        %v4339 = vmul.f32 %v4320, %v4326
        %v4340 = vmul.f32 %v4320, %v4330
        %4349 = vrot.lane.b32.xlu0 %v4333, 72
        %v4350 = vpop.permute.xlu0 %4349
        %4351 = vrot.lane.b32.xlu0 %v4334, 72
        %v4352 = vpop.permute.xlu0 %4351
        %4353 = vrot.lane.b32.xlu0 %v4335, 72
        %v4354 = vpop.permute.xlu0 %4353
        %4355 = vrot.lane.b32.xlu0 %v4336, 72
        %v4356 = vpop.permute.xlu0 %4355
        %4357 = vrot.lane.b32.xlu0 %v4337, 72
        %v4358 = vpop.permute.xlu0 %4357
        %4359 = vrot.lane.b32.xlu0 %v4338, 72
        %v4360 = vpop.permute.xlu0 %4359
        %4361 = vrot.lane.b32.xlu0 %v4339, 72
        %v4362 = vpop.permute.xlu0 %4361
        %4363 = vrot.lane.b32.xlu0 %v4340, 72
        %v4364 = vpop.permute.xlu0 %4363
        %v4365 = vsel %vm237, %v4350, %v4352
        %v4366 = vsel %vm237, %v4354, %v4356
        %v4367 = vsel %vm237, %v4358, %v4360
        %v4368 = vsel %vm237, %v4362, %v4364
        %v4381 = vadd.f32 %v4285, %v4350
        %v4382 = vadd.f32 %v4286, %v4365
        %v4383 = vadd.f32 %v4287, %v4352
        %v4384 = vadd.f32 %v4288, %v4354
        %v4385 = vadd.f32 %v4289, %v4366
        %v4386 = vadd.f32 %v4290, %v4356
        %v4387 = vadd.f32 %v4291, %v4358
        %v4388 = vadd.f32 %v4292, %v4367
        %v4389 = vadd.f32 %v4293, %v4360
        %v4390 = vadd.f32 %v4294, %v4362
        %v4391 = vadd.f32 %v4295, %v4368
        %v4392 = vadd.f32 %v4296, %v4364
        %v4393 = vld [vmem:[%s192 + $0x7] sm:$0x7]
        %4394 = vrot.lane.b32.xlu0 %v3851, 1
        %v4395 = vpop.permute.xlu0 %4394
        %v4396 = vrot.slane %v4395, 7
        %v4397 = vsel %vm786, %v4396, %v4395
        %v4399 = vmul.f32 %v4393, %v4397
        %v4400 = vld [vmem:[%s790] sm:$0xff]
        %v4401 = vld [vmem:[%s790 + $0x8] sm:$0xff]
        %v4402 = vld [vmem:[%s790 + $0x10] sm:$0xff]
        %v4403 = vld [vmem:[%s790 + $0x18] sm:$0xff]
        %4405 = vset.pattern.permute.xlu0 0
        %4406 = vperm.xlu0 %4405, %v4400
        %v4407 = vpop.permute.xlu0 %4406
        %4410 = vset.pattern.permute.xlu0 0
        %4411 = vperm.xlu0 %4410, %v4401
        %v4412 = vpop.permute.xlu0 %4411
        %4415 = vset.pattern.permute.xlu0 0
        %4416 = vperm.xlu0 %4415, %v4402
        %v4417 = vpop.permute.xlu0 %4416
        %4420 = vset.pattern.permute.xlu0 0
        %4421 = vperm.xlu0 %4420, %v4403
        %v4422 = vpop.permute.xlu0 %4421
        %v4425 = vlaneseq
        %v4426 = vshrl.u32 %v4425, 7
        %v4427 = vsub.s32 0, %v4426
        %v4428 = vrot.slane %v4399, %v4427
        %v4429 = vlaneseq
        %v4430 = vshrl.u32 %v4429, 7
        %v4431 = vsub.s32 1, %v4430
        %v4432 = vrot.slane %v4399, %v4431
        %v4433 = vlaneseq
        %v4434 = vshrl.u32 %v4433, 7
        %v4435 = vsub.s32 2, %v4434
        %v4436 = vrot.slane %v4399, %v4435
        %v4440 = vmul.f32 %v4407, %v4428
        %v4441 = vmul.f32 %v4407, %v4432
        %v4442 = vmul.f32 %v4407, %v4436
        %v4443 = vmul.f32 %v4412, %v4428
        %v4444 = vmul.f32 %v4412, %v4432
        %v4445 = vmul.f32 %v4412, %v4436
        %v4446 = vmul.f32 %v4417, %v4428
        %v4447 = vmul.f32 %v4417, %v4432
        %v4448 = vmul.f32 %v4417, %v4436
        %v4449 = vmul.f32 %v4422, %v4428
        %v4450 = vmul.f32 %v4422, %v4432
        %v4451 = vmul.f32 %v4422, %v4436
        %4464 = vrot.lane.b32.xlu0 %v4440, 71
        %v4465 = vpop.permute.xlu0 %4464
        %4466 = vrot.lane.b32.xlu0 %v4441, 71
        %v4467 = vpop.permute.xlu0 %4466
        %4468 = vrot.lane.b32.xlu0 %v4442, 71
        %v4469 = vpop.permute.xlu0 %4468
        %4470 = vrot.lane.b32.xlu0 %v4443, 71
        %v4471 = vpop.permute.xlu0 %4470
        %4472 = vrot.lane.b32.xlu0 %v4444, 71
        %v4473 = vpop.permute.xlu0 %4472
        %4474 = vrot.lane.b32.xlu0 %v4445, 71
        %v4475 = vpop.permute.xlu0 %4474
        %4476 = vrot.lane.b32.xlu0 %v4446, 71
        %v4477 = vpop.permute.xlu0 %4476
        %4478 = vrot.lane.b32.xlu0 %v4447, 71
        %v4479 = vpop.permute.xlu0 %4478
        %4480 = vrot.lane.b32.xlu0 %v4448, 71
        %v4481 = vpop.permute.xlu0 %4480
        %4482 = vrot.lane.b32.xlu0 %v4449, 71
        %v4483 = vpop.permute.xlu0 %4482
        %4484 = vrot.lane.b32.xlu0 %v4450, 71
        %v4485 = vpop.permute.xlu0 %4484
        %4486 = vrot.lane.b32.xlu0 %v4451, 71
        %v4487 = vpop.permute.xlu0 %4486
        %v4488 = vsel %vm879, %v4465, %v4467
        %v4489 = vsel %vm879, %v4467, %v4469
        %v4490 = vsel %vm879, %v4471, %v4473
        %v4491 = vsel %vm879, %v4473, %v4475
        %v4492 = vsel %vm879, %v4477, %v4479
        %v4493 = vsel %vm879, %v4479, %v4481
        %v4494 = vsel %vm879, %v4483, %v4485
        %v4495 = vsel %vm879, %v4485, %v4487
        %v4508 = vadd.f32 %v4381, %v4465
        %v4509 = vadd.f32 %v4382, %v4488
        %v4510 = vadd.f32 %v4383, %v4489
        %v4511 = vadd.f32 %v4384, %v4471
        %v4512 = vadd.f32 %v4385, %v4490
        %v4513 = vadd.f32 %v4386, %v4491
        %v4514 = vadd.f32 %v4387, %v4477
        %v4515 = vadd.f32 %v4388, %v4492
        %v4516 = vadd.f32 %v4389, %v4493
        %v4517 = vadd.f32 %v4390, %v4483
        %v4518 = vadd.f32 %v4391, %v4494
        %v4519 = vadd.f32 %v4392, %v4495
        %4520 = vrot.lane.b32.xlu0 %v3849, 54
        %v4521 = vpop.permute.xlu0 %4520
        %v4522 = vrot.slane %v4521, 7
        %v4523 = vsel %vm915, %v4522, %v4521
        %v4525 = vmul.f32 %v4393, %v4523
        %v4526 = vld [vmem:[%s919] sm:$0xff]
        %v4527 = vld [vmem:[%s919 + $0x8] sm:$0xff]
        %v4528 = vld [vmem:[%s919 + $0x10] sm:$0xff]
        %v4529 = vld [vmem:[%s919 + $0x18] sm:$0xff]
        %4531 = vset.pattern.permute.xlu0 0
        %4532 = vperm.xlu0 %4531, %v4526
        %v4533 = vpop.permute.xlu0 %4532
        %4536 = vset.pattern.permute.xlu0 0
        %4537 = vperm.xlu0 %4536, %v4527
        %v4538 = vpop.permute.xlu0 %4537
        %4541 = vset.pattern.permute.xlu0 0
        %4542 = vperm.xlu0 %4541, %v4528
        %v4543 = vpop.permute.xlu0 %4542
        %4546 = vset.pattern.permute.xlu0 0
        %4547 = vperm.xlu0 %4546, %v4529
        %v4548 = vpop.permute.xlu0 %4547
        %v4551 = vlaneseq
        %v4552 = vshrl.u32 %v4551, 7
        %v4553 = vsub.s32 0, %v4552
        %v4554 = vrot.slane %v4525, %v4553
        %v4555 = vlaneseq
        %v4556 = vshrl.u32 %v4555, 7
        %v4557 = vsub.s32 1, %v4556
        %v4558 = vrot.slane %v4525, %v4557
        %v4559 = vlaneseq
        %v4560 = vshrl.u32 %v4559, 7
        %v4561 = vsub.s32 2, %v4560
        %v4562 = vrot.slane %v4525, %v4561
        %v4566 = vmul.f32 %v4533, %v4554
        %v4567 = vmul.f32 %v4533, %v4558
        %v4568 = vmul.f32 %v4533, %v4562
        %v4569 = vmul.f32 %v4538, %v4554
        %v4570 = vmul.f32 %v4538, %v4558
        %v4571 = vmul.f32 %v4538, %v4562
        %v4572 = vmul.f32 %v4543, %v4554
        %v4573 = vmul.f32 %v4543, %v4558
        %v4574 = vmul.f32 %v4543, %v4562
        %v4575 = vmul.f32 %v4548, %v4554
        %v4576 = vmul.f32 %v4548, %v4558
        %v4577 = vmul.f32 %v4548, %v4562
        %4590 = vrot.lane.b32.xlu0 %v4566, 18
        %v4591 = vpop.permute.xlu0 %4590
        %4592 = vrot.lane.b32.xlu0 %v4567, 18
        %v4593 = vpop.permute.xlu0 %4592
        %4594 = vrot.lane.b32.xlu0 %v4568, 18
        %v4595 = vpop.permute.xlu0 %4594
        %4596 = vrot.lane.b32.xlu0 %v4569, 18
        %v4597 = vpop.permute.xlu0 %4596
        %4598 = vrot.lane.b32.xlu0 %v4570, 18
        %v4599 = vpop.permute.xlu0 %4598
        %4600 = vrot.lane.b32.xlu0 %v4571, 18
        %v4601 = vpop.permute.xlu0 %4600
        %4602 = vrot.lane.b32.xlu0 %v4572, 18
        %v4603 = vpop.permute.xlu0 %4602
        %4604 = vrot.lane.b32.xlu0 %v4573, 18
        %v4605 = vpop.permute.xlu0 %4604
        %4606 = vrot.lane.b32.xlu0 %v4574, 18
        %v4607 = vpop.permute.xlu0 %4606
        %4608 = vrot.lane.b32.xlu0 %v4575, 18
        %v4609 = vpop.permute.xlu0 %4608
        %4610 = vrot.lane.b32.xlu0 %v4576, 18
        %v4611 = vpop.permute.xlu0 %4610
        %4612 = vrot.lane.b32.xlu0 %v4577, 18
        %v4613 = vpop.permute.xlu0 %4612
        %v4614 = vsel %vm1008, %v4591, %v4593
        %v4615 = vsel %vm1008, %v4593, %v4595
        %v4616 = vsel %vm1008, %v4597, %v4599
        %v4617 = vsel %vm1008, %v4599, %v4601
        %v4618 = vsel %vm1008, %v4603, %v4605
        %v4619 = vsel %vm1008, %v4605, %v4607
        %v4620 = vsel %vm1008, %v4609, %v4611
        %v4621 = vsel %vm1008, %v4611, %v4613
        %v4634 = vadd.f32 %v4508, %v4591
        %v4635 = vadd.f32 %v4509, %v4614
        %v4636 = vadd.f32 %v4510, %v4615
        %v4637 = vadd.f32 %v4511, %v4597
        %v4638 = vadd.f32 %v4512, %v4616
        %v4639 = vadd.f32 %v4513, %v4617
        %v4640 = vadd.f32 %v4514, %v4603
        %v4641 = vadd.f32 %v4515, %v4618
        %v4642 = vadd.f32 %v4516, %v4619
        %v4643 = vadd.f32 %v4517, %v4609
        %v4644 = vadd.f32 %v4518, %v4620
        %v4645 = vadd.f32 %v4519, %v4621
        %v4646 = vld [vmem:[%s1041] sm:$0xff]
        %v4647 = vld [vmem:[%s1041 + $0x8] sm:$0xff]
        %v4648 = vld [vmem:[%s1041 + $0x10] sm:$0xff]
        %v4649 = vld [vmem:[%s1041 + $0x18] sm:$0xff]
        %4651 = vset.pattern.permute.xlu0 0
        %4652 = vperm.xlu0 %4651, %v4646
        %v4653 = vpop.permute.xlu0 %4652
        %4656 = vset.pattern.permute.xlu0 0
        %4657 = vperm.xlu0 %4656, %v4647
        %v4658 = vpop.permute.xlu0 %4657
        %4661 = vset.pattern.permute.xlu0 0
        %4662 = vperm.xlu0 %4661, %v4648
        %v4663 = vpop.permute.xlu0 %4662
        %4666 = vset.pattern.permute.xlu0 0
        %4667 = vperm.xlu0 %4666, %v4649
        %v4668 = vpop.permute.xlu0 %4667
        %v4671 = vlaneseq
        %v4672 = vshrl.u32 %v4671, 7
        %v4673 = vsub.s32 0, %v4672
        %v4674 = vrot.slane %v4393, %v4673
        %v4675 = vlaneseq
        %v4676 = vshrl.u32 %v4675, 7
        %v4677 = vsub.s32 1, %v4676
        %v4678 = vrot.slane %v4393, %v4677
        %v4679 = vlaneseq
        %v4680 = vshrl.u32 %v4679, 7
        %v4681 = vsub.s32 2, %v4680
        %v4682 = vrot.slane %v4393, %v4681
        %v4686 = vmul.f32 %v4653, %v4674
        %v4687 = vmul.f32 %v4653, %v4678
        %v4688 = vmul.f32 %v4653, %v4682
        %v4689 = vmul.f32 %v4658, %v4674
        %v4690 = vmul.f32 %v4658, %v4678
        %v4691 = vmul.f32 %v4658, %v4682
        %v4692 = vmul.f32 %v4663, %v4674
        %v4693 = vmul.f32 %v4663, %v4678
        %v4694 = vmul.f32 %v4663, %v4682
        %v4695 = vmul.f32 %v4668, %v4674
        %v4696 = vmul.f32 %v4668, %v4678
        %v4697 = vmul.f32 %v4668, %v4682
        %4710 = vrot.lane.b32.xlu0 %v4686, 17
        %v4711 = vpop.permute.xlu0 %4710
        %4712 = vrot.lane.b32.xlu0 %v4687, 17
        %v4713 = vpop.permute.xlu0 %4712
        %4714 = vrot.lane.b32.xlu0 %v4688, 17
        %v4715 = vpop.permute.xlu0 %4714
        %4716 = vrot.lane.b32.xlu0 %v4689, 17
        %v4717 = vpop.permute.xlu0 %4716
        %4718 = vrot.lane.b32.xlu0 %v4690, 17
        %v4719 = vpop.permute.xlu0 %4718
        %4720 = vrot.lane.b32.xlu0 %v4691, 17
        %v4721 = vpop.permute.xlu0 %4720
        %4722 = vrot.lane.b32.xlu0 %v4692, 17
        %v4723 = vpop.permute.xlu0 %4722
        %4724 = vrot.lane.b32.xlu0 %v4693, 17
        %v4725 = vpop.permute.xlu0 %4724
        %4726 = vrot.lane.b32.xlu0 %v4694, 17
        %v4727 = vpop.permute.xlu0 %4726
        %4728 = vrot.lane.b32.xlu0 %v4695, 17
        %v4729 = vpop.permute.xlu0 %4728
        %4730 = vrot.lane.b32.xlu0 %v4696, 17
        %v4731 = vpop.permute.xlu0 %4730
        %4732 = vrot.lane.b32.xlu0 %v4697, 17
        %v4733 = vpop.permute.xlu0 %4732
        %v4734 = vsel %vm1130, %v4711, %v4713
        %v4735 = vsel %vm1130, %v4713, %v4715
        %v4736 = vsel %vm1130, %v4717, %v4719
        %v4737 = vsel %vm1130, %v4719, %v4721
        %v4738 = vsel %vm1130, %v4723, %v4725
        %v4739 = vsel %vm1130, %v4725, %v4727
        %v4740 = vsel %vm1130, %v4729, %v4731
        %v4741 = vsel %vm1130, %v4731, %v4733
        %v4754 = vadd.f32 %v4634, %v4711
        %v4755 = vadd.f32 %v4635, %v4734
        %v4756 = vadd.f32 %v4636, %v4735
        %v4757 = vadd.f32 %v4637, %v4717
        %v4758 = vadd.f32 %v4638, %v4736
        %v4759 = vadd.f32 %v4639, %v4737
        %v4760 = vadd.f32 %v4640, %v4723
        %v4761 = vadd.f32 %v4641, %v4738
        %v4762 = vadd.f32 %v4642, %v4739
        %v4763 = vadd.f32 %v4643, %v4729
        %v4764 = vadd.f32 %v4644, %v4740
        %v4765 = vadd.f32 %v4645, %v4741
        %4766 = vrot.lane.b32.xlu0 %v3851, 56
        %v4767 = vpop.permute.xlu0 %4766
        %v4768 = vrot.slane %v4767, 7
        %v4769 = vsel %vm1166, %v4768, %v4767
        %v4771 = vmul.f32 %v4393, %v4769
        %v4772 = vld [vmem:[%s1170] sm:$0xff]
        %v4773 = vld [vmem:[%s1170 + $0x8] sm:$0xff]
        %v4774 = vld [vmem:[%s1170 + $0x10] sm:$0xff]
        %v4775 = vld [vmem:[%s1170 + $0x18] sm:$0xff]
        %4777 = vset.pattern.permute.xlu0 0
        %4778 = vperm.xlu0 %4777, %v4772
        %v4779 = vpop.permute.xlu0 %4778
        %4782 = vset.pattern.permute.xlu0 0
        %4783 = vperm.xlu0 %4782, %v4773
        %v4784 = vpop.permute.xlu0 %4783
        %4787 = vset.pattern.permute.xlu0 0
        %4788 = vperm.xlu0 %4787, %v4774
        %v4789 = vpop.permute.xlu0 %4788
        %4792 = vset.pattern.permute.xlu0 0
        %4793 = vperm.xlu0 %4792, %v4775
        %v4794 = vpop.permute.xlu0 %4793
        %v4797 = vlaneseq
        %v4798 = vshrl.u32 %v4797, 7
        %v4799 = vsub.s32 0, %v4798
        %v4800 = vrot.slane %v4771, %v4799
        %v4801 = vlaneseq
        %v4802 = vshrl.u32 %v4801, 7
        %v4803 = vsub.s32 1, %v4802
        %v4804 = vrot.slane %v4771, %v4803
        %v4805 = vlaneseq
        %v4806 = vshrl.u32 %v4805, 7
        %v4807 = vsub.s32 2, %v4806
        %v4808 = vrot.slane %v4771, %v4807
        %v4812 = vmul.f32 %v4779, %v4800
        %v4813 = vmul.f32 %v4779, %v4804
        %v4814 = vmul.f32 %v4779, %v4808
        %v4815 = vmul.f32 %v4784, %v4800
        %v4816 = vmul.f32 %v4784, %v4804
        %v4817 = vmul.f32 %v4784, %v4808
        %v4818 = vmul.f32 %v4789, %v4800
        %v4819 = vmul.f32 %v4789, %v4804
        %v4820 = vmul.f32 %v4789, %v4808
        %v4821 = vmul.f32 %v4794, %v4800
        %v4822 = vmul.f32 %v4794, %v4804
        %v4823 = vmul.f32 %v4794, %v4808
        %4836 = vrot.lane.b32.xlu0 %v4812, 16
        %v4837 = vpop.permute.xlu0 %4836
        %4838 = vrot.lane.b32.xlu0 %v4813, 16
        %v4839 = vpop.permute.xlu0 %4838
        %4840 = vrot.lane.b32.xlu0 %v4814, 16
        %v4841 = vpop.permute.xlu0 %4840
        %4842 = vrot.lane.b32.xlu0 %v4815, 16
        %v4843 = vpop.permute.xlu0 %4842
        %4844 = vrot.lane.b32.xlu0 %v4816, 16
        %v4845 = vpop.permute.xlu0 %4844
        %4846 = vrot.lane.b32.xlu0 %v4817, 16
        %v4847 = vpop.permute.xlu0 %4846
        %4848 = vrot.lane.b32.xlu0 %v4818, 16
        %v4849 = vpop.permute.xlu0 %4848
        %4850 = vrot.lane.b32.xlu0 %v4819, 16
        %v4851 = vpop.permute.xlu0 %4850
        %4852 = vrot.lane.b32.xlu0 %v4820, 16
        %v4853 = vpop.permute.xlu0 %4852
        %4854 = vrot.lane.b32.xlu0 %v4821, 16
        %v4855 = vpop.permute.xlu0 %4854
        %4856 = vrot.lane.b32.xlu0 %v4822, 16
        %v4857 = vpop.permute.xlu0 %4856
        %4858 = vrot.lane.b32.xlu0 %v4823, 16
        %v4859 = vpop.permute.xlu0 %4858
        %v4860 = vsel %vm1259, %v4837, %v4839
        %v4861 = vsel %vm1259, %v4839, %v4841
        %v4862 = vsel %vm1259, %v4843, %v4845
        %v4863 = vsel %vm1259, %v4845, %v4847
        %v4864 = vsel %vm1259, %v4849, %v4851
        %v4865 = vsel %vm1259, %v4851, %v4853
        %v4866 = vsel %vm1259, %v4855, %v4857
        %v4867 = vsel %vm1259, %v4857, %v4859
        %v4880 = vadd.f32 %v4754, %v4837
        %v4881 = vadd.f32 %v4755, %v4860
        %v4882 = vadd.f32 %v4756, %v4861
        %v4883 = vadd.f32 %v4757, %v4843
        %v4884 = vadd.f32 %v4758, %v4862
        %v4885 = vadd.f32 %v4759, %v4863
        %v4886 = vadd.f32 %v4760, %v4849
        %v4887 = vadd.f32 %v4761, %v4864
        %v4888 = vadd.f32 %v4762, %v4865
        %v4889 = vadd.f32 %v4763, %v4855
        %v4890 = vadd.f32 %v4764, %v4866
        %v4891 = vadd.f32 %v4765, %v4867
        %4904 = vrot.lane.b32.xlu0 %v4880, 56
        %v4905 = vpop.permute.xlu0 %4904
        %4906 = vrot.lane.b32.xlu0 %v4881, 56
        %v4907 = vpop.permute.xlu0 %4906
        %4908 = vrot.lane.b32.xlu0 %v4882, 56
        %v4909 = vpop.permute.xlu0 %4908
        %4910 = vrot.lane.b32.xlu0 %v4883, 56
        %v4911 = vpop.permute.xlu0 %4910
        %4912 = vrot.lane.b32.xlu0 %v4884, 56
        %v4913 = vpop.permute.xlu0 %4912
        %4914 = vrot.lane.b32.xlu0 %v4885, 56
        %v4915 = vpop.permute.xlu0 %4914
        %4916 = vrot.lane.b32.xlu0 %v4886, 56
        %v4917 = vpop.permute.xlu0 %4916
        %4918 = vrot.lane.b32.xlu0 %v4887, 56
        %v4919 = vpop.permute.xlu0 %4918
        %4920 = vrot.lane.b32.xlu0 %v4888, 56
        %v4921 = vpop.permute.xlu0 %4920
        %4922 = vrot.lane.b32.xlu0 %v4889, 56
        %v4923 = vpop.permute.xlu0 %4922
        %4924 = vrot.lane.b32.xlu0 %v4890, 56
        %v4925 = vpop.permute.xlu0 %4924
        %4926 = vrot.lane.b32.xlu0 %v4891, 56
        %v4927 = vpop.permute.xlu0 %4926
        %v4928 = vsel %vm1166, %v4905, %v4907
        %v4929 = vsel %vm1166, %v4907, %v4909
        %v4930 = vsel %vm1166, %v4911, %v4913
        %v4931 = vsel %vm1166, %v4913, %v4915
        %v4932 = vsel %vm1166, %v4917, %v4919
        %v4933 = vsel %vm1166, %v4919, %v4921
        %v4934 = vsel %vm1166, %v4923, %v4925
        %v4935 = vsel %vm1166, %v4925, %v4927
        %v4944 = vadd.f32 %v4928, %v4929
        %4945 = vadd.xlane.f32.xlu0 %v4944
        %v4946 = vpop.xlane.xlu0 %4945
        %v4947 = vadd.f32 %v4930, %v4931
        %4948 = vadd.xlane.f32.xlu0 %v4947
        %v4949 = vpop.xlane.xlu0 %4948
        %v4950 = vadd.f32 %v4932, %v4933
        %4951 = vadd.xlane.f32.xlu0 %v4950
        %v4952 = vpop.xlane.xlu0 %4951
        %v4953 = vadd.f32 %v4934, %v4935
        %4954 = vadd.xlane.f32.xlu0 %v4953
        %v4955 = vpop.xlane.xlu0 %4954
        %v4956 = vadd.f32 %v3756, %v4946
        %v4957 = vadd.f32 %v3757, %v4949
        %v4958 = vadd.f32 %v3758, %v4952
        %v4959 = vadd.f32 %v3759, %v4955
        %v4960 = vmul.f32 %v4880, %v4880
        %v4961 = vmul.f32 %v4881, %v4881
        %v4962 = vmul.f32 %v4882, %v4882
        %v4963 = vmul.f32 %v4883, %v4883
        %v4964 = vmul.f32 %v4884, %v4884
        %v4965 = vmul.f32 %v4885, %v4885
        %v4966 = vmul.f32 %v4886, %v4886
        %v4967 = vmul.f32 %v4887, %v4887
        %v4968 = vmul.f32 %v4888, %v4888
        %v4969 = vmul.f32 %v4889, %v4889
        %v4970 = vmul.f32 %v4890, %v4890
        %v4971 = vmul.f32 %v4891, %v4891
        %4984 = vrot.lane.b32.xlu0 %v4960, 56
        %v4985 = vpop.permute.xlu0 %4984
        %4986 = vrot.lane.b32.xlu0 %v4961, 56
        %v4987 = vpop.permute.xlu0 %4986
        %4988 = vrot.lane.b32.xlu0 %v4962, 56
        %v4989 = vpop.permute.xlu0 %4988
        %4990 = vrot.lane.b32.xlu0 %v4963, 56
        %v4991 = vpop.permute.xlu0 %4990
        %4992 = vrot.lane.b32.xlu0 %v4964, 56
        %v4993 = vpop.permute.xlu0 %4992
        %4994 = vrot.lane.b32.xlu0 %v4965, 56
        %v4995 = vpop.permute.xlu0 %4994
        %4996 = vrot.lane.b32.xlu0 %v4966, 56
        %v4997 = vpop.permute.xlu0 %4996
        %4998 = vrot.lane.b32.xlu0 %v4967, 56
        %v4999 = vpop.permute.xlu0 %4998
        %5000 = vrot.lane.b32.xlu0 %v4968, 56
        %v5001 = vpop.permute.xlu0 %5000
        %5002 = vrot.lane.b32.xlu0 %v4969, 56
        %v5003 = vpop.permute.xlu0 %5002
        %5004 = vrot.lane.b32.xlu0 %v4970, 56
        %v5005 = vpop.permute.xlu0 %5004
        %5006 = vrot.lane.b32.xlu0 %v4971, 56
        %v5007 = vpop.permute.xlu0 %5006
        %v5008 = vsel %vm1166, %v4985, %v4987
        %v5009 = vsel %vm1166, %v4987, %v4989
        %v5010 = vsel %vm1166, %v4991, %v4993
        %v5011 = vsel %vm1166, %v4993, %v4995
        %v5012 = vsel %vm1166, %v4997, %v4999
        %v5013 = vsel %vm1166, %v4999, %v5001
        %v5014 = vsel %vm1166, %v5003, %v5005
        %v5015 = vsel %vm1166, %v5005, %v5007
        %v5024 = vadd.f32 %v5008, %v5009
        %5025 = vadd.xlane.f32.xlu0 %v5024
        %v5026 = vpop.xlane.xlu0 %5025
        %v5027 = vadd.f32 %v5010, %v5011
        %5028 = vadd.xlane.f32.xlu0 %v5027
        %v5029 = vpop.xlane.xlu0 %5028
        %v5030 = vadd.f32 %v5012, %v5013
        %5031 = vadd.xlane.f32.xlu0 %v5030
        %v5032 = vpop.xlane.xlu0 %5031
        %v5033 = vadd.f32 %v5014, %v5015
        %5034 = vadd.xlane.f32.xlu0 %v5033
        %v5035 = vpop.xlane.xlu0 %5034
        %v5036 = vadd.f32 %v3836, %v5026
        %v5037 = vadd.f32 %v3837, %v5029
        %v5038 = vadd.f32 %v3838, %v5032
        %v5039 = vadd.f32 %v3839, %v5035
        %5040 = vst [vmem:[%s188 + $0x38] sm:$0xff] %v4928
        %5041 = vst [vmem:[%s188 + $0x40] sm:$0xff] %v4929
        %5042 = vst [vmem:[%s188 + $0xc8] sm:$0xff] %v4930
        %5043 = vst [vmem:[%s188 + $0xd0] sm:$0xff] %v4931
        %5044 = vst [vmem:[%s188 + $0x158] sm:$0xff] %v4932
        %5045 = vst [vmem:[%s188 + $0x160] sm:$0xff] %v4933
        %5046 = vst [vmem:[%s188 + $0x1e8] sm:$0xff] %v4934
        %5047 = vst [vmem:[%s188 + $0x1f0] sm:$0xff] %v4935
        %s5048 = scalar_lea.vmem %s3, 32
        %v5049 = vld [vmem:[%s5048] ss:$4 sm:$0x3]
        %s5050 = scalar_lea.vmem %s3, 33
        %v5051 = vld [vmem:[%s5050] ss:$4 sm:$0x3]
        %v5052 = vld [vmem:[%s192 + $0x8] sm:$0x7]
        %5054 = vrot.lane.b32.xlu0 %v5049, 72
        %v5055 = vpop.permute.xlu0 %5054
        %v5056 = vrot.slane %v5055, 7
        %v5057 = vsel %vm237, %v5056, %v5055
        %v5059 = vmul.f32 %v5052, %v5057
        %v5060 = vld [vmem:[%s1] sm:$0xff]
        %v5061 = vld [vmem:[%s1 + $0x8] sm:$0xff]
        %v5062 = vld [vmem:[%s1 + $0x10] sm:$0xff]
        %v5063 = vld [vmem:[%s1 + $0x18] sm:$0xff]
        %5065 = vset.pattern.permute.xlu0 0
        %5066 = vperm.xlu0 %5065, %v5060
        %v5067 = vpop.permute.xlu0 %5066
        %5070 = vset.pattern.permute.xlu0 0
        %5071 = vperm.xlu0 %5070, %v5061
        %v5072 = vpop.permute.xlu0 %5071
        %5075 = vset.pattern.permute.xlu0 0
        %5076 = vperm.xlu0 %5075, %v5062
        %v5077 = vpop.permute.xlu0 %5076
        %5080 = vset.pattern.permute.xlu0 0
        %5081 = vperm.xlu0 %5080, %v5063
        %v5082 = vpop.permute.xlu0 %5081
        %v5085 = vlaneseq
        %v5086 = vshrl.u32 %v5085, 7
        %v5087 = vsub.s32 0, %v5086
        %v5088 = vrot.slane %v5059, %v5087
        %v5089 = vlaneseq
        %v5090 = vshrl.u32 %v5089, 7
        %v5091 = vsub.s32 1, %v5090
        %v5092 = vrot.slane %v5059, %v5091
        %v5093 = vlaneseq
        %v5094 = vshrl.u32 %v5093, 7
        %v5095 = vsub.s32 2, %v5094
        %v5096 = vrot.slane %v5059, %v5095
        %v5100 = vmul.f32 %v5067, %v5088
        %v5101 = vmul.f32 %v5067, %v5092
        %v5102 = vmul.f32 %v5067, %v5096
        %v5103 = vmul.f32 %v5072, %v5088
        %v5104 = vmul.f32 %v5072, %v5092
        %v5105 = vmul.f32 %v5072, %v5096
        %v5106 = vmul.f32 %v5077, %v5088
        %v5107 = vmul.f32 %v5077, %v5092
        %v5108 = vmul.f32 %v5077, %v5096
        %v5109 = vmul.f32 %v5082, %v5088
        %v5110 = vmul.f32 %v5082, %v5092
        %v5111 = vmul.f32 %v5082, %v5096
        %v5112 = vadd.f32 %v228, %v5100
        %v5113 = vadd.f32 %v228, %v5101
        %v5114 = vadd.f32 %v228, %v5102
        %v5115 = vadd.f32 %v229, %v5103
        %v5116 = vadd.f32 %v229, %v5104
        %v5117 = vadd.f32 %v229, %v5105
        %v5118 = vadd.f32 %v230, %v5106
        %v5119 = vadd.f32 %v230, %v5107
        %v5120 = vadd.f32 %v230, %v5108
        %v5121 = vadd.f32 %v231, %v5109
        %v5122 = vadd.f32 %v231, %v5110
        %v5123 = vadd.f32 %v231, %v5111
        %v5124 = vld [vmem:[%s305] sm:$0xff]
        %v5125 = vld [vmem:[%s305 + $0x8] sm:$0xff]
        %v5126 = vld [vmem:[%s305 + $0x10] sm:$0xff]
        %v5127 = vld [vmem:[%s305 + $0x18] sm:$0xff]
        %5129 = vset.pattern.permute.xlu0 0
        %5130 = vperm.xlu0 %5129, %v5124
        %v5131 = vpop.permute.xlu0 %5130
        %5134 = vset.pattern.permute.xlu0 0
        %5135 = vperm.xlu0 %5134, %v5125
        %v5136 = vpop.permute.xlu0 %5135
        %5139 = vset.pattern.permute.xlu0 0
        %5140 = vperm.xlu0 %5139, %v5126
        %v5141 = vpop.permute.xlu0 %5140
        %5144 = vset.pattern.permute.xlu0 0
        %5145 = vperm.xlu0 %5144, %v5127
        %v5146 = vpop.permute.xlu0 %5145
        %v5149 = vlaneseq
        %v5150 = vshrl.u32 %v5149, 7
        %v5151 = vsub.s32 0, %v5150
        %v5152 = vrot.slane %v5052, %v5151
        %v5153 = vlaneseq
        %v5154 = vshrl.u32 %v5153, 7
        %v5155 = vsub.s32 1, %v5154
        %v5156 = vrot.slane %v5052, %v5155
        %v5157 = vlaneseq
        %v5158 = vshrl.u32 %v5157, 7
        %v5159 = vsub.s32 2, %v5158
        %v5160 = vrot.slane %v5052, %v5159
        %v5164 = vmul.f32 %v5131, %v5152
        %v5165 = vmul.f32 %v5131, %v5156
        %v5166 = vmul.f32 %v5131, %v5160
        %v5167 = vmul.f32 %v5136, %v5152
        %v5168 = vmul.f32 %v5136, %v5156
        %v5169 = vmul.f32 %v5136, %v5160
        %v5170 = vmul.f32 %v5141, %v5152
        %v5171 = vmul.f32 %v5141, %v5156
        %v5172 = vmul.f32 %v5141, %v5160
        %v5173 = vmul.f32 %v5146, %v5152
        %v5174 = vmul.f32 %v5146, %v5156
        %v5175 = vmul.f32 %v5146, %v5160
        %5188 = vrot.lane.b32.xlu0 %v5164, 127
        %v5189 = vpop.permute.xlu0 %5188
        %5190 = vrot.lane.b32.xlu0 %v5165, 127
        %v5191 = vpop.permute.xlu0 %5190
        %5192 = vrot.lane.b32.xlu0 %v5166, 127
        %v5193 = vpop.permute.xlu0 %5192
        %5194 = vrot.lane.b32.xlu0 %v5167, 127
        %v5195 = vpop.permute.xlu0 %5194
        %5196 = vrot.lane.b32.xlu0 %v5168, 127
        %v5197 = vpop.permute.xlu0 %5196
        %5198 = vrot.lane.b32.xlu0 %v5169, 127
        %v5199 = vpop.permute.xlu0 %5198
        %5200 = vrot.lane.b32.xlu0 %v5170, 127
        %v5201 = vpop.permute.xlu0 %5200
        %5202 = vrot.lane.b32.xlu0 %v5171, 127
        %v5203 = vpop.permute.xlu0 %5202
        %5204 = vrot.lane.b32.xlu0 %v5172, 127
        %v5205 = vpop.permute.xlu0 %5204
        %5206 = vrot.lane.b32.xlu0 %v5173, 127
        %v5207 = vpop.permute.xlu0 %5206
        %5208 = vrot.lane.b32.xlu0 %v5174, 127
        %v5209 = vpop.permute.xlu0 %5208
        %5210 = vrot.lane.b32.xlu0 %v5175, 127
        %v5211 = vpop.permute.xlu0 %5210
        %v5212 = vsel %vm394, %v5189, %v5191
        %v5213 = vsel %vm394, %v5191, %v5193
        %v5214 = vsel %vm394, %v5195, %v5197
        %v5215 = vsel %vm394, %v5197, %v5199
        %v5216 = vsel %vm394, %v5201, %v5203
        %v5217 = vsel %vm394, %v5203, %v5205
        %v5218 = vsel %vm394, %v5207, %v5209
        %v5219 = vsel %vm394, %v5209, %v5211
        %v5232 = vadd.f32 %v5112, %v5212
        %v5233 = vadd.f32 %v5113, %v5213
        %v5234 = vadd.f32 %v5114, %v5193
        %v5235 = vadd.f32 %v5115, %v5214
        %v5236 = vadd.f32 %v5116, %v5215
        %v5237 = vadd.f32 %v5117, %v5199
        %v5238 = vadd.f32 %v5118, %v5216
        %v5239 = vadd.f32 %v5119, %v5217
        %v5240 = vadd.f32 %v5120, %v5205
        %v5241 = vadd.f32 %v5121, %v5218
        %v5242 = vadd.f32 %v5122, %v5219
        %v5243 = vadd.f32 %v5123, %v5211
        %5245 = vrot.lane.b32.xlu0 %v5051, 74
        %v5246 = vpop.permute.xlu0 %5245
        %v5247 = vrot.slane %v5246, 7
        %v5248 = vsel %vm431, %v5247, %v5246
        %v5250 = vmul.f32 %v5052, %v5248
        %v5251 = vld [vmem:[%s435] sm:$0xff]
        %v5252 = vld [vmem:[%s435 + $0x8] sm:$0xff]
        %v5253 = vld [vmem:[%s435 + $0x10] sm:$0xff]
        %v5254 = vld [vmem:[%s435 + $0x18] sm:$0xff]
        %5256 = vset.pattern.permute.xlu0 0
        %5257 = vperm.xlu0 %5256, %v5251
        %v5258 = vpop.permute.xlu0 %5257
        %5261 = vset.pattern.permute.xlu0 0
        %5262 = vperm.xlu0 %5261, %v5252
        %v5263 = vpop.permute.xlu0 %5262
        %5266 = vset.pattern.permute.xlu0 0
        %5267 = vperm.xlu0 %5266, %v5253
        %v5268 = vpop.permute.xlu0 %5267
        %5271 = vset.pattern.permute.xlu0 0
        %5272 = vperm.xlu0 %5271, %v5254
        %v5273 = vpop.permute.xlu0 %5272
        %v5276 = vlaneseq
        %v5277 = vshrl.u32 %v5276, 7
        %v5278 = vsub.s32 0, %v5277
        %v5279 = vrot.slane %v5250, %v5278
        %v5280 = vlaneseq
        %v5281 = vshrl.u32 %v5280, 7
        %v5282 = vsub.s32 1, %v5281
        %v5283 = vrot.slane %v5250, %v5282
        %v5284 = vlaneseq
        %v5285 = vshrl.u32 %v5284, 7
        %v5286 = vsub.s32 2, %v5285
        %v5287 = vrot.slane %v5250, %v5286
        %v5291 = vmul.f32 %v5258, %v5279
        %v5292 = vmul.f32 %v5258, %v5283
        %v5293 = vmul.f32 %v5258, %v5287
        %v5294 = vmul.f32 %v5263, %v5279
        %v5295 = vmul.f32 %v5263, %v5283
        %v5296 = vmul.f32 %v5263, %v5287
        %v5297 = vmul.f32 %v5268, %v5279
        %v5298 = vmul.f32 %v5268, %v5283
        %v5299 = vmul.f32 %v5268, %v5287
        %v5300 = vmul.f32 %v5273, %v5279
        %v5301 = vmul.f32 %v5273, %v5283
        %v5302 = vmul.f32 %v5273, %v5287
        %5315 = vrot.lane.b32.xlu0 %v5291, 126
        %v5316 = vpop.permute.xlu0 %5315
        %5317 = vrot.lane.b32.xlu0 %v5292, 126
        %v5318 = vpop.permute.xlu0 %5317
        %5319 = vrot.lane.b32.xlu0 %v5293, 126
        %v5320 = vpop.permute.xlu0 %5319
        %5321 = vrot.lane.b32.xlu0 %v5294, 126
        %v5322 = vpop.permute.xlu0 %5321
        %5323 = vrot.lane.b32.xlu0 %v5295, 126
        %v5324 = vpop.permute.xlu0 %5323
        %5325 = vrot.lane.b32.xlu0 %v5296, 126
        %v5326 = vpop.permute.xlu0 %5325
        %5327 = vrot.lane.b32.xlu0 %v5297, 126
        %v5328 = vpop.permute.xlu0 %5327
        %5329 = vrot.lane.b32.xlu0 %v5298, 126
        %v5330 = vpop.permute.xlu0 %5329
        %5331 = vrot.lane.b32.xlu0 %v5299, 126
        %v5332 = vpop.permute.xlu0 %5331
        %5333 = vrot.lane.b32.xlu0 %v5300, 126
        %v5334 = vpop.permute.xlu0 %5333
        %5335 = vrot.lane.b32.xlu0 %v5301, 126
        %v5336 = vpop.permute.xlu0 %5335
        %5337 = vrot.lane.b32.xlu0 %v5302, 126
        %v5338 = vpop.permute.xlu0 %5337
        %v5339 = vsel %vm524, %v5316, %v5318
        %v5340 = vsel %vm524, %v5318, %v5320
        %v5341 = vsel %vm524, %v5322, %v5324
        %v5342 = vsel %vm524, %v5324, %v5326
        %v5343 = vsel %vm524, %v5328, %v5330
        %v5344 = vsel %vm524, %v5330, %v5332
        %v5345 = vsel %vm524, %v5334, %v5336
        %v5346 = vsel %vm524, %v5336, %v5338
        %v5359 = vadd.f32 %v5232, %v5339
        %v5360 = vadd.f32 %v5233, %v5340
        %v5361 = vadd.f32 %v5234, %v5320
        %v5362 = vadd.f32 %v5235, %v5341
        %v5363 = vadd.f32 %v5236, %v5342
        %v5364 = vadd.f32 %v5237, %v5326
        %v5365 = vadd.f32 %v5238, %v5343
        %v5366 = vadd.f32 %v5239, %v5344
        %v5367 = vadd.f32 %v5240, %v5332
        %v5368 = vadd.f32 %v5241, %v5345
        %v5369 = vadd.f32 %v5242, %v5346
        %v5370 = vadd.f32 %v5243, %v5338
        %5371 = vrot.lane.b32.xlu0 %v5049, 127
        %v5372 = vpop.permute.xlu0 %5371
        %v5373 = vrot.slane %v5372, 7
        %v5374 = vsel %vm394, %v5373, %v5372
        %v5376 = vmul.f32 %v5052, %v5374
        %v5377 = vld [vmem:[%s563] sm:$0xff]
        %v5378 = vld [vmem:[%s563 + $0x8] sm:$0xff]
        %v5379 = vld [vmem:[%s563 + $0x10] sm:$0xff]
        %v5380 = vld [vmem:[%s563 + $0x18] sm:$0xff]
        %5382 = vset.pattern.permute.xlu0 0
        %5383 = vperm.xlu0 %5382, %v5377
        %v5384 = vpop.permute.xlu0 %5383
        %5387 = vset.pattern.permute.xlu0 0
        %5388 = vperm.xlu0 %5387, %v5378
        %v5389 = vpop.permute.xlu0 %5388
        %5392 = vset.pattern.permute.xlu0 0
        %5393 = vperm.xlu0 %5392, %v5379
        %v5394 = vpop.permute.xlu0 %5393
        %5397 = vset.pattern.permute.xlu0 0
        %5398 = vperm.xlu0 %5397, %v5380
        %v5399 = vpop.permute.xlu0 %5398
        %v5402 = vlaneseq
        %v5403 = vshrl.u32 %v5402, 7
        %v5404 = vsub.s32 0, %v5403
        %v5405 = vrot.slane %v5376, %v5404
        %v5406 = vlaneseq
        %v5407 = vshrl.u32 %v5406, 7
        %v5408 = vsub.s32 1, %v5407
        %v5409 = vrot.slane %v5376, %v5408
        %v5410 = vlaneseq
        %v5411 = vshrl.u32 %v5410, 7
        %v5412 = vsub.s32 2, %v5411
        %v5413 = vrot.slane %v5376, %v5412
        %v5417 = vmul.f32 %v5384, %v5405
        %v5418 = vmul.f32 %v5384, %v5409
        %v5419 = vmul.f32 %v5384, %v5413
        %v5420 = vmul.f32 %v5389, %v5405
        %v5421 = vmul.f32 %v5389, %v5409
        %v5422 = vmul.f32 %v5389, %v5413
        %v5423 = vmul.f32 %v5394, %v5405
        %v5424 = vmul.f32 %v5394, %v5409
        %v5425 = vmul.f32 %v5394, %v5413
        %v5426 = vmul.f32 %v5399, %v5405
        %v5427 = vmul.f32 %v5399, %v5409
        %v5428 = vmul.f32 %v5399, %v5413
        %5441 = vrot.lane.b32.xlu0 %v5417, 73
        %v5442 = vpop.permute.xlu0 %5441
        %5443 = vrot.lane.b32.xlu0 %v5418, 73
        %v5444 = vpop.permute.xlu0 %5443
        %5445 = vrot.lane.b32.xlu0 %v5419, 73
        %v5446 = vpop.permute.xlu0 %5445
        %5447 = vrot.lane.b32.xlu0 %v5420, 73
        %v5448 = vpop.permute.xlu0 %5447
        %5449 = vrot.lane.b32.xlu0 %v5421, 73
        %v5450 = vpop.permute.xlu0 %5449
        %5451 = vrot.lane.b32.xlu0 %v5422, 73
        %v5452 = vpop.permute.xlu0 %5451
        %5453 = vrot.lane.b32.xlu0 %v5423, 73
        %v5454 = vpop.permute.xlu0 %5453
        %5455 = vrot.lane.b32.xlu0 %v5424, 73
        %v5456 = vpop.permute.xlu0 %5455
        %5457 = vrot.lane.b32.xlu0 %v5425, 73
        %v5458 = vpop.permute.xlu0 %5457
        %5459 = vrot.lane.b32.xlu0 %v5426, 73
        %v5460 = vpop.permute.xlu0 %5459
        %5461 = vrot.lane.b32.xlu0 %v5427, 73
        %v5462 = vpop.permute.xlu0 %5461
        %5463 = vrot.lane.b32.xlu0 %v5428, 73
        %v5464 = vpop.permute.xlu0 %5463
        %v5465 = vsel %vm652, %v5442, %v5444
        %v5466 = vsel %vm652, %v5444, %v5446
        %v5467 = vsel %vm652, %v5448, %v5450
        %v5468 = vsel %vm652, %v5450, %v5452
        %v5469 = vsel %vm652, %v5454, %v5456
        %v5470 = vsel %vm652, %v5456, %v5458
        %v5471 = vsel %vm652, %v5460, %v5462
        %v5472 = vsel %vm652, %v5462, %v5464
        %v5485 = vadd.f32 %v5359, %v5465
        %v5486 = vadd.f32 %v5360, %v5466
        %v5487 = vadd.f32 %v5361, %v5446
        %v5488 = vadd.f32 %v5362, %v5467
        %v5489 = vadd.f32 %v5363, %v5468
        %v5490 = vadd.f32 %v5364, %v5452
        %v5491 = vadd.f32 %v5365, %v5469
        %v5492 = vadd.f32 %v5366, %v5470
        %v5493 = vadd.f32 %v5367, %v5458
        %v5494 = vadd.f32 %v5368, %v5471
        %v5495 = vadd.f32 %v5369, %v5472
        %v5496 = vadd.f32 %v5370, %v5464
        %v5497 = vld [vmem:[%s192 + $0x9] sm:$0x3]
        %v5498 = vld [vmem:[%s686] sm:$0xff]
        %v5499 = vld [vmem:[%s686 + $0x8] sm:$0xff]
        %v5500 = vld [vmem:[%s686 + $0x10] sm:$0xff]
        %v5501 = vld [vmem:[%s686 + $0x18] sm:$0xff]
        %5503 = vset.pattern.permute.xlu0 0
        %5504 = vperm.xlu0 %5503, %v5498
        %v5505 = vpop.permute.xlu0 %5504
        %5508 = vset.pattern.permute.xlu0 0
        %5509 = vperm.xlu0 %5508, %v5499
        %v5510 = vpop.permute.xlu0 %5509
        %5513 = vset.pattern.permute.xlu0 0
        %5514 = vperm.xlu0 %5513, %v5500
        %v5515 = vpop.permute.xlu0 %5514
        %5518 = vset.pattern.permute.xlu0 0
        %5519 = vperm.xlu0 %5518, %v5501
        %v5520 = vpop.permute.xlu0 %5519
        %v5523 = vlaneseq
        %v5524 = vshrl.u32 %v5523, 7
        %v5525 = vsub.s32 0, %v5524
        %v5526 = vrot.slane %v5497, %v5525
        %v5527 = vlaneseq
        %v5528 = vshrl.u32 %v5527, 7
        %v5529 = vsub.s32 1, %v5528
        %v5530 = vrot.slane %v5497, %v5529
        %v5533 = vmul.f32 %v5505, %v5526
        %v5534 = vmul.f32 %v5505, %v5530
        %v5535 = vmul.f32 %v5510, %v5526
        %v5536 = vmul.f32 %v5510, %v5530
        %v5537 = vmul.f32 %v5515, %v5526
        %v5538 = vmul.f32 %v5515, %v5530
        %v5539 = vmul.f32 %v5520, %v5526
        %v5540 = vmul.f32 %v5520, %v5530
        %5549 = vrot.lane.b32.xlu0 %v5533, 72
        %v5550 = vpop.permute.xlu0 %5549
        %5551 = vrot.lane.b32.xlu0 %v5534, 72
        %v5552 = vpop.permute.xlu0 %5551
        %5553 = vrot.lane.b32.xlu0 %v5535, 72
        %v5554 = vpop.permute.xlu0 %5553
        %5555 = vrot.lane.b32.xlu0 %v5536, 72
        %v5556 = vpop.permute.xlu0 %5555
        %5557 = vrot.lane.b32.xlu0 %v5537, 72
        %v5558 = vpop.permute.xlu0 %5557
        %5559 = vrot.lane.b32.xlu0 %v5538, 72
        %v5560 = vpop.permute.xlu0 %5559
        %5561 = vrot.lane.b32.xlu0 %v5539, 72
        %v5562 = vpop.permute.xlu0 %5561
        %5563 = vrot.lane.b32.xlu0 %v5540, 72
        %v5564 = vpop.permute.xlu0 %5563
        %v5565 = vsel %vm237, %v5550, %v5552
        %v5566 = vsel %vm237, %v5554, %v5556
        %v5567 = vsel %vm237, %v5558, %v5560
        %v5568 = vsel %vm237, %v5562, %v5564
        %v5581 = vadd.f32 %v5485, %v5550
        %v5582 = vadd.f32 %v5486, %v5565
        %v5583 = vadd.f32 %v5487, %v5552
        %v5584 = vadd.f32 %v5488, %v5554
        %v5585 = vadd.f32 %v5489, %v5566
        %v5586 = vadd.f32 %v5490, %v5556
        %v5587 = vadd.f32 %v5491, %v5558
        %v5588 = vadd.f32 %v5492, %v5567
        %v5589 = vadd.f32 %v5493, %v5560
        %v5590 = vadd.f32 %v5494, %v5562
        %v5591 = vadd.f32 %v5495, %v5568
        %v5592 = vadd.f32 %v5496, %v5564
        %v5593 = vld [vmem:[%s192 + $0x9] sm:$0x7]
        %5594 = vrot.lane.b32.xlu0 %v5051, 1
        %v5595 = vpop.permute.xlu0 %5594
        %v5596 = vrot.slane %v5595, 7
        %v5597 = vsel %vm786, %v5596, %v5595
        %v5599 = vmul.f32 %v5593, %v5597
        %v5600 = vld [vmem:[%s790] sm:$0xff]
        %v5601 = vld [vmem:[%s790 + $0x8] sm:$0xff]
        %v5602 = vld [vmem:[%s790 + $0x10] sm:$0xff]
        %v5603 = vld [vmem:[%s790 + $0x18] sm:$0xff]
        %5605 = vset.pattern.permute.xlu0 0
        %5606 = vperm.xlu0 %5605, %v5600
        %v5607 = vpop.permute.xlu0 %5606
        %5610 = vset.pattern.permute.xlu0 0
        %5611 = vperm.xlu0 %5610, %v5601
        %v5612 = vpop.permute.xlu0 %5611
        %5615 = vset.pattern.permute.xlu0 0
        %5616 = vperm.xlu0 %5615, %v5602
        %v5617 = vpop.permute.xlu0 %5616
        %5620 = vset.pattern.permute.xlu0 0
        %5621 = vperm.xlu0 %5620, %v5603
        %v5622 = vpop.permute.xlu0 %5621
        %v5625 = vlaneseq
        %v5626 = vshrl.u32 %v5625, 7
        %v5627 = vsub.s32 0, %v5626
        %v5628 = vrot.slane %v5599, %v5627
        %v5629 = vlaneseq
        %v5630 = vshrl.u32 %v5629, 7
        %v5631 = vsub.s32 1, %v5630
        %v5632 = vrot.slane %v5599, %v5631
        %v5633 = vlaneseq
        %v5634 = vshrl.u32 %v5633, 7
        %v5635 = vsub.s32 2, %v5634
        %v5636 = vrot.slane %v5599, %v5635
        %v5640 = vmul.f32 %v5607, %v5628
        %v5641 = vmul.f32 %v5607, %v5632
        %v5642 = vmul.f32 %v5607, %v5636
        %v5643 = vmul.f32 %v5612, %v5628
        %v5644 = vmul.f32 %v5612, %v5632
        %v5645 = vmul.f32 %v5612, %v5636
        %v5646 = vmul.f32 %v5617, %v5628
        %v5647 = vmul.f32 %v5617, %v5632
        %v5648 = vmul.f32 %v5617, %v5636
        %v5649 = vmul.f32 %v5622, %v5628
        %v5650 = vmul.f32 %v5622, %v5632
        %v5651 = vmul.f32 %v5622, %v5636
        %5664 = vrot.lane.b32.xlu0 %v5640, 71
        %v5665 = vpop.permute.xlu0 %5664
        %5666 = vrot.lane.b32.xlu0 %v5641, 71
        %v5667 = vpop.permute.xlu0 %5666
        %5668 = vrot.lane.b32.xlu0 %v5642, 71
        %v5669 = vpop.permute.xlu0 %5668
        %5670 = vrot.lane.b32.xlu0 %v5643, 71
        %v5671 = vpop.permute.xlu0 %5670
        %5672 = vrot.lane.b32.xlu0 %v5644, 71
        %v5673 = vpop.permute.xlu0 %5672
        %5674 = vrot.lane.b32.xlu0 %v5645, 71
        %v5675 = vpop.permute.xlu0 %5674
        %5676 = vrot.lane.b32.xlu0 %v5646, 71
        %v5677 = vpop.permute.xlu0 %5676
        %5678 = vrot.lane.b32.xlu0 %v5647, 71
        %v5679 = vpop.permute.xlu0 %5678
        %5680 = vrot.lane.b32.xlu0 %v5648, 71
        %v5681 = vpop.permute.xlu0 %5680
        %5682 = vrot.lane.b32.xlu0 %v5649, 71
        %v5683 = vpop.permute.xlu0 %5682
        %5684 = vrot.lane.b32.xlu0 %v5650, 71
        %v5685 = vpop.permute.xlu0 %5684
        %5686 = vrot.lane.b32.xlu0 %v5651, 71
        %v5687 = vpop.permute.xlu0 %5686
        %v5688 = vsel %vm879, %v5665, %v5667
        %v5689 = vsel %vm879, %v5667, %v5669
        %v5690 = vsel %vm879, %v5671, %v5673
        %v5691 = vsel %vm879, %v5673, %v5675
        %v5692 = vsel %vm879, %v5677, %v5679
        %v5693 = vsel %vm879, %v5679, %v5681
        %v5694 = vsel %vm879, %v5683, %v5685
        %v5695 = vsel %vm879, %v5685, %v5687
        %v5708 = vadd.f32 %v5581, %v5665
        %v5709 = vadd.f32 %v5582, %v5688
        %v5710 = vadd.f32 %v5583, %v5689
        %v5711 = vadd.f32 %v5584, %v5671
        %v5712 = vadd.f32 %v5585, %v5690
        %v5713 = vadd.f32 %v5586, %v5691
        %v5714 = vadd.f32 %v5587, %v5677
        %v5715 = vadd.f32 %v5588, %v5692
        %v5716 = vadd.f32 %v5589, %v5693
        %v5717 = vadd.f32 %v5590, %v5683
        %v5718 = vadd.f32 %v5591, %v5694
        %v5719 = vadd.f32 %v5592, %v5695
        %5720 = vrot.lane.b32.xlu0 %v5049, 54
        %v5721 = vpop.permute.xlu0 %5720
        %v5722 = vrot.slane %v5721, 7
        %v5723 = vsel %vm915, %v5722, %v5721
        %v5725 = vmul.f32 %v5593, %v5723
        %v5726 = vld [vmem:[%s919] sm:$0xff]
        %v5727 = vld [vmem:[%s919 + $0x8] sm:$0xff]
        %v5728 = vld [vmem:[%s919 + $0x10] sm:$0xff]
        %v5729 = vld [vmem:[%s919 + $0x18] sm:$0xff]
        %5731 = vset.pattern.permute.xlu0 0
        %5732 = vperm.xlu0 %5731, %v5726
        %v5733 = vpop.permute.xlu0 %5732
        %5736 = vset.pattern.permute.xlu0 0
        %5737 = vperm.xlu0 %5736, %v5727
        %v5738 = vpop.permute.xlu0 %5737
        %5741 = vset.pattern.permute.xlu0 0
        %5742 = vperm.xlu0 %5741, %v5728
        %v5743 = vpop.permute.xlu0 %5742
        %5746 = vset.pattern.permute.xlu0 0
        %5747 = vperm.xlu0 %5746, %v5729
        %v5748 = vpop.permute.xlu0 %5747
        %v5751 = vlaneseq
        %v5752 = vshrl.u32 %v5751, 7
        %v5753 = vsub.s32 0, %v5752
        %v5754 = vrot.slane %v5725, %v5753
        %v5755 = vlaneseq
        %v5756 = vshrl.u32 %v5755, 7
        %v5757 = vsub.s32 1, %v5756
        %v5758 = vrot.slane %v5725, %v5757
        %v5759 = vlaneseq
        %v5760 = vshrl.u32 %v5759, 7
        %v5761 = vsub.s32 2, %v5760
        %v5762 = vrot.slane %v5725, %v5761
        %v5766 = vmul.f32 %v5733, %v5754
        %v5767 = vmul.f32 %v5733, %v5758
        %v5768 = vmul.f32 %v5733, %v5762
        %v5769 = vmul.f32 %v5738, %v5754
        %v5770 = vmul.f32 %v5738, %v5758
        %v5771 = vmul.f32 %v5738, %v5762
        %v5772 = vmul.f32 %v5743, %v5754
        %v5773 = vmul.f32 %v5743, %v5758
        %v5774 = vmul.f32 %v5743, %v5762
        %v5775 = vmul.f32 %v5748, %v5754
        %v5776 = vmul.f32 %v5748, %v5758
        %v5777 = vmul.f32 %v5748, %v5762
        %5790 = vrot.lane.b32.xlu0 %v5766, 18
        %v5791 = vpop.permute.xlu0 %5790
        %5792 = vrot.lane.b32.xlu0 %v5767, 18
        %v5793 = vpop.permute.xlu0 %5792
        %5794 = vrot.lane.b32.xlu0 %v5768, 18
        %v5795 = vpop.permute.xlu0 %5794
        %5796 = vrot.lane.b32.xlu0 %v5769, 18
        %v5797 = vpop.permute.xlu0 %5796
        %5798 = vrot.lane.b32.xlu0 %v5770, 18
        %v5799 = vpop.permute.xlu0 %5798
        %5800 = vrot.lane.b32.xlu0 %v5771, 18
        %v5801 = vpop.permute.xlu0 %5800
        %5802 = vrot.lane.b32.xlu0 %v5772, 18
        %v5803 = vpop.permute.xlu0 %5802
        %5804 = vrot.lane.b32.xlu0 %v5773, 18
        %v5805 = vpop.permute.xlu0 %5804
        %5806 = vrot.lane.b32.xlu0 %v5774, 18
        %v5807 = vpop.permute.xlu0 %5806
        %5808 = vrot.lane.b32.xlu0 %v5775, 18
        %v5809 = vpop.permute.xlu0 %5808
        %5810 = vrot.lane.b32.xlu0 %v5776, 18
        %v5811 = vpop.permute.xlu0 %5810
        %5812 = vrot.lane.b32.xlu0 %v5777, 18
        %v5813 = vpop.permute.xlu0 %5812
        %v5814 = vsel %vm1008, %v5791, %v5793
        %v5815 = vsel %vm1008, %v5793, %v5795
        %v5816 = vsel %vm1008, %v5797, %v5799
        %v5817 = vsel %vm1008, %v5799, %v5801
        %v5818 = vsel %vm1008, %v5803, %v5805
        %v5819 = vsel %vm1008, %v5805, %v5807
        %v5820 = vsel %vm1008, %v5809, %v5811
        %v5821 = vsel %vm1008, %v5811, %v5813
        %v5834 = vadd.f32 %v5708, %v5791
        %v5835 = vadd.f32 %v5709, %v5814
        %v5836 = vadd.f32 %v5710, %v5815
        %v5837 = vadd.f32 %v5711, %v5797
        %v5838 = vadd.f32 %v5712, %v5816
        %v5839 = vadd.f32 %v5713, %v5817
        %v5840 = vadd.f32 %v5714, %v5803
        %v5841 = vadd.f32 %v5715, %v5818
        %v5842 = vadd.f32 %v5716, %v5819
        %v5843 = vadd.f32 %v5717, %v5809
        %v5844 = vadd.f32 %v5718, %v5820
        %v5845 = vadd.f32 %v5719, %v5821
        %v5846 = vld [vmem:[%s1041] sm:$0xff]
        %v5847 = vld [vmem:[%s1041 + $0x8] sm:$0xff]
        %v5848 = vld [vmem:[%s1041 + $0x10] sm:$0xff]
        %v5849 = vld [vmem:[%s1041 + $0x18] sm:$0xff]
        %5851 = vset.pattern.permute.xlu0 0
        %5852 = vperm.xlu0 %5851, %v5846
        %v5853 = vpop.permute.xlu0 %5852
        %5856 = vset.pattern.permute.xlu0 0
        %5857 = vperm.xlu0 %5856, %v5847
        %v5858 = vpop.permute.xlu0 %5857
        %5861 = vset.pattern.permute.xlu0 0
        %5862 = vperm.xlu0 %5861, %v5848
        %v5863 = vpop.permute.xlu0 %5862
        %5866 = vset.pattern.permute.xlu0 0
        %5867 = vperm.xlu0 %5866, %v5849
        %v5868 = vpop.permute.xlu0 %5867
        %v5871 = vlaneseq
        %v5872 = vshrl.u32 %v5871, 7
        %v5873 = vsub.s32 0, %v5872
        %v5874 = vrot.slane %v5593, %v5873
        %v5875 = vlaneseq
        %v5876 = vshrl.u32 %v5875, 7
        %v5877 = vsub.s32 1, %v5876
        %v5878 = vrot.slane %v5593, %v5877
        %v5879 = vlaneseq
        %v5880 = vshrl.u32 %v5879, 7
        %v5881 = vsub.s32 2, %v5880
        %v5882 = vrot.slane %v5593, %v5881
        %v5886 = vmul.f32 %v5853, %v5874
        %v5887 = vmul.f32 %v5853, %v5878
        %v5888 = vmul.f32 %v5853, %v5882
        %v5889 = vmul.f32 %v5858, %v5874
        %v5890 = vmul.f32 %v5858, %v5878
        %v5891 = vmul.f32 %v5858, %v5882
        %v5892 = vmul.f32 %v5863, %v5874
        %v5893 = vmul.f32 %v5863, %v5878
        %v5894 = vmul.f32 %v5863, %v5882
        %v5895 = vmul.f32 %v5868, %v5874
        %v5896 = vmul.f32 %v5868, %v5878
        %v5897 = vmul.f32 %v5868, %v5882
        %5910 = vrot.lane.b32.xlu0 %v5886, 17
        %v5911 = vpop.permute.xlu0 %5910
        %5912 = vrot.lane.b32.xlu0 %v5887, 17
        %v5913 = vpop.permute.xlu0 %5912
        %5914 = vrot.lane.b32.xlu0 %v5888, 17
        %v5915 = vpop.permute.xlu0 %5914
        %5916 = vrot.lane.b32.xlu0 %v5889, 17
        %v5917 = vpop.permute.xlu0 %5916
        %5918 = vrot.lane.b32.xlu0 %v5890, 17
        %v5919 = vpop.permute.xlu0 %5918
        %5920 = vrot.lane.b32.xlu0 %v5891, 17
        %v5921 = vpop.permute.xlu0 %5920
        %5922 = vrot.lane.b32.xlu0 %v5892, 17
        %v5923 = vpop.permute.xlu0 %5922
        %5924 = vrot.lane.b32.xlu0 %v5893, 17
        %v5925 = vpop.permute.xlu0 %5924
        %5926 = vrot.lane.b32.xlu0 %v5894, 17
        %v5927 = vpop.permute.xlu0 %5926
        %5928 = vrot.lane.b32.xlu0 %v5895, 17
        %v5929 = vpop.permute.xlu0 %5928
        %5930 = vrot.lane.b32.xlu0 %v5896, 17
        %v5931 = vpop.permute.xlu0 %5930
        %5932 = vrot.lane.b32.xlu0 %v5897, 17
        %v5933 = vpop.permute.xlu0 %5932
        %v5934 = vsel %vm1130, %v5911, %v5913
        %v5935 = vsel %vm1130, %v5913, %v5915
        %v5936 = vsel %vm1130, %v5917, %v5919
        %v5937 = vsel %vm1130, %v5919, %v5921
        %v5938 = vsel %vm1130, %v5923, %v5925
        %v5939 = vsel %vm1130, %v5925, %v5927
        %v5940 = vsel %vm1130, %v5929, %v5931
        %v5941 = vsel %vm1130, %v5931, %v5933
        %v5954 = vadd.f32 %v5834, %v5911
        %v5955 = vadd.f32 %v5835, %v5934
        %v5956 = vadd.f32 %v5836, %v5935
        %v5957 = vadd.f32 %v5837, %v5917
        %v5958 = vadd.f32 %v5838, %v5936
        %v5959 = vadd.f32 %v5839, %v5937
        %v5960 = vadd.f32 %v5840, %v5923
        %v5961 = vadd.f32 %v5841, %v5938
        %v5962 = vadd.f32 %v5842, %v5939
        %v5963 = vadd.f32 %v5843, %v5929
        %v5964 = vadd.f32 %v5844, %v5940
        %v5965 = vadd.f32 %v5845, %v5941
        %5966 = vrot.lane.b32.xlu0 %v5051, 56
        %v5967 = vpop.permute.xlu0 %5966
        %v5968 = vrot.slane %v5967, 7
        %v5969 = vsel %vm1166, %v5968, %v5967
        %v5971 = vmul.f32 %v5593, %v5969
        %v5972 = vld [vmem:[%s1170] sm:$0xff]
        %v5973 = vld [vmem:[%s1170 + $0x8] sm:$0xff]
        %v5974 = vld [vmem:[%s1170 + $0x10] sm:$0xff]
        %v5975 = vld [vmem:[%s1170 + $0x18] sm:$0xff]
        %5977 = vset.pattern.permute.xlu0 0
        %5978 = vperm.xlu0 %5977, %v5972
        %v5979 = vpop.permute.xlu0 %5978
        %5982 = vset.pattern.permute.xlu0 0
        %5983 = vperm.xlu0 %5982, %v5973
        %v5984 = vpop.permute.xlu0 %5983
        %5987 = vset.pattern.permute.xlu0 0
        %5988 = vperm.xlu0 %5987, %v5974
        %v5989 = vpop.permute.xlu0 %5988
        %5992 = vset.pattern.permute.xlu0 0
        %5993 = vperm.xlu0 %5992, %v5975
        %v5994 = vpop.permute.xlu0 %5993
        %v5997 = vlaneseq
        %v5998 = vshrl.u32 %v5997, 7
        %v5999 = vsub.s32 0, %v5998
        %v6000 = vrot.slane %v5971, %v5999
        %v6001 = vlaneseq
        %v6002 = vshrl.u32 %v6001, 7
        %v6003 = vsub.s32 1, %v6002
        %v6004 = vrot.slane %v5971, %v6003
        %v6005 = vlaneseq
        %v6006 = vshrl.u32 %v6005, 7
        %v6007 = vsub.s32 2, %v6006
        %v6008 = vrot.slane %v5971, %v6007
        %v6012 = vmul.f32 %v5979, %v6000
        %v6013 = vmul.f32 %v5979, %v6004
        %v6014 = vmul.f32 %v5979, %v6008
        %v6015 = vmul.f32 %v5984, %v6000
        %v6016 = vmul.f32 %v5984, %v6004
        %v6017 = vmul.f32 %v5984, %v6008
        %v6018 = vmul.f32 %v5989, %v6000
        %v6019 = vmul.f32 %v5989, %v6004
        %v6020 = vmul.f32 %v5989, %v6008
        %v6021 = vmul.f32 %v5994, %v6000
        %v6022 = vmul.f32 %v5994, %v6004
        %v6023 = vmul.f32 %v5994, %v6008
        %6036 = vrot.lane.b32.xlu0 %v6012, 16
        %v6037 = vpop.permute.xlu0 %6036
        %6038 = vrot.lane.b32.xlu0 %v6013, 16
        %v6039 = vpop.permute.xlu0 %6038
        %6040 = vrot.lane.b32.xlu0 %v6014, 16
        %v6041 = vpop.permute.xlu0 %6040
        %6042 = vrot.lane.b32.xlu0 %v6015, 16
        %v6043 = vpop.permute.xlu0 %6042
        %6044 = vrot.lane.b32.xlu0 %v6016, 16
        %v6045 = vpop.permute.xlu0 %6044
        %6046 = vrot.lane.b32.xlu0 %v6017, 16
        %v6047 = vpop.permute.xlu0 %6046
        %6048 = vrot.lane.b32.xlu0 %v6018, 16
        %v6049 = vpop.permute.xlu0 %6048
        %6050 = vrot.lane.b32.xlu0 %v6019, 16
        %v6051 = vpop.permute.xlu0 %6050
        %6052 = vrot.lane.b32.xlu0 %v6020, 16
        %v6053 = vpop.permute.xlu0 %6052
        %6054 = vrot.lane.b32.xlu0 %v6021, 16
        %v6055 = vpop.permute.xlu0 %6054
        %6056 = vrot.lane.b32.xlu0 %v6022, 16
        %v6057 = vpop.permute.xlu0 %6056
        %6058 = vrot.lane.b32.xlu0 %v6023, 16
        %v6059 = vpop.permute.xlu0 %6058
        %v6060 = vsel %vm1259, %v6037, %v6039
        %v6061 = vsel %vm1259, %v6039, %v6041
        %v6062 = vsel %vm1259, %v6043, %v6045
        %v6063 = vsel %vm1259, %v6045, %v6047
        %v6064 = vsel %vm1259, %v6049, %v6051
        %v6065 = vsel %vm1259, %v6051, %v6053
        %v6066 = vsel %vm1259, %v6055, %v6057
        %v6067 = vsel %vm1259, %v6057, %v6059
        %v6080 = vadd.f32 %v5954, %v6037
        %v6081 = vadd.f32 %v5955, %v6060
        %v6082 = vadd.f32 %v5956, %v6061
        %v6083 = vadd.f32 %v5957, %v6043
        %v6084 = vadd.f32 %v5958, %v6062
        %v6085 = vadd.f32 %v5959, %v6063
        %v6086 = vadd.f32 %v5960, %v6049
        %v6087 = vadd.f32 %v5961, %v6064
        %v6088 = vadd.f32 %v5962, %v6065
        %v6089 = vadd.f32 %v5963, %v6055
        %v6090 = vadd.f32 %v5964, %v6066
        %v6091 = vadd.f32 %v5965, %v6067
        %6104 = vrot.lane.b32.xlu0 %v6080, 56
        %v6105 = vpop.permute.xlu0 %6104
        %6106 = vrot.lane.b32.xlu0 %v6081, 56
        %v6107 = vpop.permute.xlu0 %6106
        %6108 = vrot.lane.b32.xlu0 %v6082, 56
        %v6109 = vpop.permute.xlu0 %6108
        %6110 = vrot.lane.b32.xlu0 %v6083, 56
        %v6111 = vpop.permute.xlu0 %6110
        %6112 = vrot.lane.b32.xlu0 %v6084, 56
        %v6113 = vpop.permute.xlu0 %6112
        %6114 = vrot.lane.b32.xlu0 %v6085, 56
        %v6115 = vpop.permute.xlu0 %6114
        %6116 = vrot.lane.b32.xlu0 %v6086, 56
        %v6117 = vpop.permute.xlu0 %6116
        %6118 = vrot.lane.b32.xlu0 %v6087, 56
        %v6119 = vpop.permute.xlu0 %6118
        %6120 = vrot.lane.b32.xlu0 %v6088, 56
        %v6121 = vpop.permute.xlu0 %6120
        %6122 = vrot.lane.b32.xlu0 %v6089, 56
        %v6123 = vpop.permute.xlu0 %6122
        %6124 = vrot.lane.b32.xlu0 %v6090, 56
        %v6125 = vpop.permute.xlu0 %6124
        %6126 = vrot.lane.b32.xlu0 %v6091, 56
        %v6127 = vpop.permute.xlu0 %6126
        %v6128 = vsel %vm1166, %v6105, %v6107
        %v6129 = vsel %vm1166, %v6107, %v6109
        %v6130 = vsel %vm1166, %v6111, %v6113
        %v6131 = vsel %vm1166, %v6113, %v6115
        %v6132 = vsel %vm1166, %v6117, %v6119
        %v6133 = vsel %vm1166, %v6119, %v6121
        %v6134 = vsel %vm1166, %v6123, %v6125
        %v6135 = vsel %vm1166, %v6125, %v6127
        %v6144 = vadd.f32 %v6128, %v6129
        %6145 = vadd.xlane.f32.xlu0 %v6144
        %v6146 = vpop.xlane.xlu0 %6145
        %v6147 = vadd.f32 %v6130, %v6131
        %6148 = vadd.xlane.f32.xlu0 %v6147
        %v6149 = vpop.xlane.xlu0 %6148
        %v6150 = vadd.f32 %v6132, %v6133
        %6151 = vadd.xlane.f32.xlu0 %v6150
        %v6152 = vpop.xlane.xlu0 %6151
        %v6153 = vadd.f32 %v6134, %v6135
        %6154 = vadd.xlane.f32.xlu0 %v6153
        %v6155 = vpop.xlane.xlu0 %6154
        %v6156 = vadd.f32 %v4956, %v6146
        %v6157 = vadd.f32 %v4957, %v6149
        %v6158 = vadd.f32 %v4958, %v6152
        %v6159 = vadd.f32 %v4959, %v6155
        %v6160 = vmul.f32 %v6080, %v6080
        %v6161 = vmul.f32 %v6081, %v6081
        %v6162 = vmul.f32 %v6082, %v6082
        %v6163 = vmul.f32 %v6083, %v6083
        %v6164 = vmul.f32 %v6084, %v6084
        %v6165 = vmul.f32 %v6085, %v6085
        %v6166 = vmul.f32 %v6086, %v6086
        %v6167 = vmul.f32 %v6087, %v6087
        %v6168 = vmul.f32 %v6088, %v6088
        %v6169 = vmul.f32 %v6089, %v6089
        %v6170 = vmul.f32 %v6090, %v6090
        %v6171 = vmul.f32 %v6091, %v6091
        %6184 = vrot.lane.b32.xlu0 %v6160, 56
        %v6185 = vpop.permute.xlu0 %6184
        %6186 = vrot.lane.b32.xlu0 %v6161, 56
        %v6187 = vpop.permute.xlu0 %6186
        %6188 = vrot.lane.b32.xlu0 %v6162, 56
        %v6189 = vpop.permute.xlu0 %6188
        %6190 = vrot.lane.b32.xlu0 %v6163, 56
        %v6191 = vpop.permute.xlu0 %6190
        %6192 = vrot.lane.b32.xlu0 %v6164, 56
        %v6193 = vpop.permute.xlu0 %6192
        %6194 = vrot.lane.b32.xlu0 %v6165, 56
        %v6195 = vpop.permute.xlu0 %6194
        %6196 = vrot.lane.b32.xlu0 %v6166, 56
        %v6197 = vpop.permute.xlu0 %6196
        %6198 = vrot.lane.b32.xlu0 %v6167, 56
        %v6199 = vpop.permute.xlu0 %6198
        %6200 = vrot.lane.b32.xlu0 %v6168, 56
        %v6201 = vpop.permute.xlu0 %6200
        %6202 = vrot.lane.b32.xlu0 %v6169, 56
        %v6203 = vpop.permute.xlu0 %6202
        %6204 = vrot.lane.b32.xlu0 %v6170, 56
        %v6205 = vpop.permute.xlu0 %6204
        %6206 = vrot.lane.b32.xlu0 %v6171, 56
        %v6207 = vpop.permute.xlu0 %6206
        %v6208 = vsel %vm1166, %v6185, %v6187
        %v6209 = vsel %vm1166, %v6187, %v6189
        %v6210 = vsel %vm1166, %v6191, %v6193
        %v6211 = vsel %vm1166, %v6193, %v6195
        %v6212 = vsel %vm1166, %v6197, %v6199
        %v6213 = vsel %vm1166, %v6199, %v6201
        %v6214 = vsel %vm1166, %v6203, %v6205
        %v6215 = vsel %vm1166, %v6205, %v6207
        %v6224 = vadd.f32 %v6208, %v6209
        %6225 = vadd.xlane.f32.xlu0 %v6224
        %v6226 = vpop.xlane.xlu0 %6225
        %v6227 = vadd.f32 %v6210, %v6211
        %6228 = vadd.xlane.f32.xlu0 %v6227
        %v6229 = vpop.xlane.xlu0 %6228
        %v6230 = vadd.f32 %v6212, %v6213
        %6231 = vadd.xlane.f32.xlu0 %v6230
        %v6232 = vpop.xlane.xlu0 %6231
        %v6233 = vadd.f32 %v6214, %v6215
        %6234 = vadd.xlane.f32.xlu0 %v6233
        %v6235 = vpop.xlane.xlu0 %6234
        %v6236 = vadd.f32 %v5036, %v6226
        %v6237 = vadd.f32 %v5037, %v6229
        %v6238 = vadd.f32 %v5038, %v6232
        %v6239 = vadd.f32 %v5039, %v6235
        %6240 = vst [vmem:[%s188 + $0x48] sm:$0xff] %v6128
        %6241 = vst [vmem:[%s188 + $0x50] sm:$0xff] %v6129
        %6242 = vst [vmem:[%s188 + $0xd8] sm:$0xff] %v6130
        %6243 = vst [vmem:[%s188 + $0xe0] sm:$0xff] %v6131
        %6244 = vst [vmem:[%s188 + $0x168] sm:$0xff] %v6132
        %6245 = vst [vmem:[%s188 + $0x170] sm:$0xff] %v6133
        %6246 = vst [vmem:[%s188 + $0x1f8] sm:$0xff] %v6134
        %6247 = vst [vmem:[%s188 + $0x200] sm:$0xff] %v6135
        %s6248 = scalar_lea.vmem %s3, 40
        %v6249 = vld [vmem:[%s6248] ss:$4 sm:$0x3]
        %s6250 = scalar_lea.vmem %s3, 41
        %v6251 = vld [vmem:[%s6250] ss:$4 sm:$0x3]
        %v6252 = vld [vmem:[%s192 + $0xa] sm:$0x7]
        %6254 = vrot.lane.b32.xlu0 %v6249, 72
        %v6255 = vpop.permute.xlu0 %6254
        %v6256 = vrot.slane %v6255, 7
        %v6257 = vsel %vm237, %v6256, %v6255
        %v6259 = vmul.f32 %v6252, %v6257
        %v6260 = vld [vmem:[%s1] sm:$0xff]
        %v6261 = vld [vmem:[%s1 + $0x8] sm:$0xff]
        %v6262 = vld [vmem:[%s1 + $0x10] sm:$0xff]
        %v6263 = vld [vmem:[%s1 + $0x18] sm:$0xff]
        %6265 = vset.pattern.permute.xlu0 0
        %6266 = vperm.xlu0 %6265, %v6260
        %v6267 = vpop.permute.xlu0 %6266
        %6270 = vset.pattern.permute.xlu0 0
        %6271 = vperm.xlu0 %6270, %v6261
        %v6272 = vpop.permute.xlu0 %6271
        %6275 = vset.pattern.permute.xlu0 0
        %6276 = vperm.xlu0 %6275, %v6262
        %v6277 = vpop.permute.xlu0 %6276
        %6280 = vset.pattern.permute.xlu0 0
        %6281 = vperm.xlu0 %6280, %v6263
        %v6282 = vpop.permute.xlu0 %6281
        %v6285 = vlaneseq
        %v6286 = vshrl.u32 %v6285, 7
        %v6287 = vsub.s32 0, %v6286
        %v6288 = vrot.slane %v6259, %v6287
        %v6289 = vlaneseq
        %v6290 = vshrl.u32 %v6289, 7
        %v6291 = vsub.s32 1, %v6290
        %v6292 = vrot.slane %v6259, %v6291
        %v6293 = vlaneseq
        %v6294 = vshrl.u32 %v6293, 7
        %v6295 = vsub.s32 2, %v6294
        %v6296 = vrot.slane %v6259, %v6295
        %v6300 = vmul.f32 %v6267, %v6288
        %v6301 = vmul.f32 %v6267, %v6292
        %v6302 = vmul.f32 %v6267, %v6296
        %v6303 = vmul.f32 %v6272, %v6288
        %v6304 = vmul.f32 %v6272, %v6292
        %v6305 = vmul.f32 %v6272, %v6296
        %v6306 = vmul.f32 %v6277, %v6288
        %v6307 = vmul.f32 %v6277, %v6292
        %v6308 = vmul.f32 %v6277, %v6296
        %v6309 = vmul.f32 %v6282, %v6288
        %v6310 = vmul.f32 %v6282, %v6292
        %v6311 = vmul.f32 %v6282, %v6296
        %v6312 = vadd.f32 %v228, %v6300
        %v6313 = vadd.f32 %v228, %v6301
        %v6314 = vadd.f32 %v228, %v6302
        %v6315 = vadd.f32 %v229, %v6303
        %v6316 = vadd.f32 %v229, %v6304
        %v6317 = vadd.f32 %v229, %v6305
        %v6318 = vadd.f32 %v230, %v6306
        %v6319 = vadd.f32 %v230, %v6307
        %v6320 = vadd.f32 %v230, %v6308
        %v6321 = vadd.f32 %v231, %v6309
        %v6322 = vadd.f32 %v231, %v6310
        %v6323 = vadd.f32 %v231, %v6311
        %v6324 = vld [vmem:[%s305] sm:$0xff]
        %v6325 = vld [vmem:[%s305 + $0x8] sm:$0xff]
        %v6326 = vld [vmem:[%s305 + $0x10] sm:$0xff]
        %v6327 = vld [vmem:[%s305 + $0x18] sm:$0xff]
        %6329 = vset.pattern.permute.xlu0 0
        %6330 = vperm.xlu0 %6329, %v6324
        %v6331 = vpop.permute.xlu0 %6330
        %6334 = vset.pattern.permute.xlu0 0
        %6335 = vperm.xlu0 %6334, %v6325
        %v6336 = vpop.permute.xlu0 %6335
        %6339 = vset.pattern.permute.xlu0 0
        %6340 = vperm.xlu0 %6339, %v6326
        %v6341 = vpop.permute.xlu0 %6340
        %6344 = vset.pattern.permute.xlu0 0
        %6345 = vperm.xlu0 %6344, %v6327
        %v6346 = vpop.permute.xlu0 %6345
        %v6349 = vlaneseq
        %v6350 = vshrl.u32 %v6349, 7
        %v6351 = vsub.s32 0, %v6350
        %v6352 = vrot.slane %v6252, %v6351
        %v6353 = vlaneseq
        %v6354 = vshrl.u32 %v6353, 7
        %v6355 = vsub.s32 1, %v6354
        %v6356 = vrot.slane %v6252, %v6355
        %v6357 = vlaneseq
        %v6358 = vshrl.u32 %v6357, 7
        %v6359 = vsub.s32 2, %v6358
        %v6360 = vrot.slane %v6252, %v6359
        %v6364 = vmul.f32 %v6331, %v6352
        %v6365 = vmul.f32 %v6331, %v6356
        %v6366 = vmul.f32 %v6331, %v6360
        %v6367 = vmul.f32 %v6336, %v6352
        %v6368 = vmul.f32 %v6336, %v6356
        %v6369 = vmul.f32 %v6336, %v6360
        %v6370 = vmul.f32 %v6341, %v6352
        %v6371 = vmul.f32 %v6341, %v6356
        %v6372 = vmul.f32 %v6341, %v6360
        %v6373 = vmul.f32 %v6346, %v6352
        %v6374 = vmul.f32 %v6346, %v6356
        %v6375 = vmul.f32 %v6346, %v6360
        %6388 = vrot.lane.b32.xlu0 %v6364, 127
        %v6389 = vpop.permute.xlu0 %6388
        %6390 = vrot.lane.b32.xlu0 %v6365, 127
        %v6391 = vpop.permute.xlu0 %6390
        %6392 = vrot.lane.b32.xlu0 %v6366, 127
        %v6393 = vpop.permute.xlu0 %6392
        %6394 = vrot.lane.b32.xlu0 %v6367, 127
        %v6395 = vpop.permute.xlu0 %6394
        %6396 = vrot.lane.b32.xlu0 %v6368, 127
        %v6397 = vpop.permute.xlu0 %6396
        %6398 = vrot.lane.b32.xlu0 %v6369, 127
        %v6399 = vpop.permute.xlu0 %6398
        %6400 = vrot.lane.b32.xlu0 %v6370, 127
        %v6401 = vpop.permute.xlu0 %6400
        %6402 = vrot.lane.b32.xlu0 %v6371, 127
        %v6403 = vpop.permute.xlu0 %6402
        %6404 = vrot.lane.b32.xlu0 %v6372, 127
        %v6405 = vpop.permute.xlu0 %6404
        %6406 = vrot.lane.b32.xlu0 %v6373, 127
        %v6407 = vpop.permute.xlu0 %6406
        %6408 = vrot.lane.b32.xlu0 %v6374, 127
        %v6409 = vpop.permute.xlu0 %6408
        %6410 = vrot.lane.b32.xlu0 %v6375, 127
        %v6411 = vpop.permute.xlu0 %6410
        %v6412 = vsel %vm394, %v6389, %v6391
        %v6413 = vsel %vm394, %v6391, %v6393
        %v6414 = vsel %vm394, %v6395, %v6397
        %v6415 = vsel %vm394, %v6397, %v6399
        %v6416 = vsel %vm394, %v6401, %v6403
        %v6417 = vsel %vm394, %v6403, %v6405
        %v6418 = vsel %vm394, %v6407, %v6409
        %v6419 = vsel %vm394, %v6409, %v6411
        %v6432 = vadd.f32 %v6312, %v6412
        %v6433 = vadd.f32 %v6313, %v6413
        %v6434 = vadd.f32 %v6314, %v6393
        %v6435 = vadd.f32 %v6315, %v6414
        %v6436 = vadd.f32 %v6316, %v6415
        %v6437 = vadd.f32 %v6317, %v6399
        %v6438 = vadd.f32 %v6318, %v6416
        %v6439 = vadd.f32 %v6319, %v6417
        %v6440 = vadd.f32 %v6320, %v6405
        %v6441 = vadd.f32 %v6321, %v6418
        %v6442 = vadd.f32 %v6322, %v6419
        %v6443 = vadd.f32 %v6323, %v6411
        %6445 = vrot.lane.b32.xlu0 %v6251, 74
        %v6446 = vpop.permute.xlu0 %6445
        %v6447 = vrot.slane %v6446, 7
        %v6448 = vsel %vm431, %v6447, %v6446
        %v6450 = vmul.f32 %v6252, %v6448
        %v6451 = vld [vmem:[%s435] sm:$0xff]
        %v6452 = vld [vmem:[%s435 + $0x8] sm:$0xff]
        %v6453 = vld [vmem:[%s435 + $0x10] sm:$0xff]
        %v6454 = vld [vmem:[%s435 + $0x18] sm:$0xff]
        %6456 = vset.pattern.permute.xlu0 0
        %6457 = vperm.xlu0 %6456, %v6451
        %v6458 = vpop.permute.xlu0 %6457
        %6461 = vset.pattern.permute.xlu0 0
        %6462 = vperm.xlu0 %6461, %v6452
        %v6463 = vpop.permute.xlu0 %6462
        %6466 = vset.pattern.permute.xlu0 0
        %6467 = vperm.xlu0 %6466, %v6453
        %v6468 = vpop.permute.xlu0 %6467
        %6471 = vset.pattern.permute.xlu0 0
        %6472 = vperm.xlu0 %6471, %v6454
        %v6473 = vpop.permute.xlu0 %6472
        %v6476 = vlaneseq
        %v6477 = vshrl.u32 %v6476, 7
        %v6478 = vsub.s32 0, %v6477
        %v6479 = vrot.slane %v6450, %v6478
        %v6480 = vlaneseq
        %v6481 = vshrl.u32 %v6480, 7
        %v6482 = vsub.s32 1, %v6481
        %v6483 = vrot.slane %v6450, %v6482
        %v6484 = vlaneseq
        %v6485 = vshrl.u32 %v6484, 7
        %v6486 = vsub.s32 2, %v6485
        %v6487 = vrot.slane %v6450, %v6486
        %v6491 = vmul.f32 %v6458, %v6479
        %v6492 = vmul.f32 %v6458, %v6483
        %v6493 = vmul.f32 %v6458, %v6487
        %v6494 = vmul.f32 %v6463, %v6479
        %v6495 = vmul.f32 %v6463, %v6483
        %v6496 = vmul.f32 %v6463, %v6487
        %v6497 = vmul.f32 %v6468, %v6479
        %v6498 = vmul.f32 %v6468, %v6483
        %v6499 = vmul.f32 %v6468, %v6487
        %v6500 = vmul.f32 %v6473, %v6479
        %v6501 = vmul.f32 %v6473, %v6483
        %v6502 = vmul.f32 %v6473, %v6487
        %6515 = vrot.lane.b32.xlu0 %v6491, 126
        %v6516 = vpop.permute.xlu0 %6515
        %6517 = vrot.lane.b32.xlu0 %v6492, 126
        %v6518 = vpop.permute.xlu0 %6517
        %6519 = vrot.lane.b32.xlu0 %v6493, 126
        %v6520 = vpop.permute.xlu0 %6519
        %6521 = vrot.lane.b32.xlu0 %v6494, 126
        %v6522 = vpop.permute.xlu0 %6521
        %6523 = vrot.lane.b32.xlu0 %v6495, 126
        %v6524 = vpop.permute.xlu0 %6523
        %6525 = vrot.lane.b32.xlu0 %v6496, 126
        %v6526 = vpop.permute.xlu0 %6525
        %6527 = vrot.lane.b32.xlu0 %v6497, 126
        %v6528 = vpop.permute.xlu0 %6527
        %6529 = vrot.lane.b32.xlu0 %v6498, 126
        %v6530 = vpop.permute.xlu0 %6529
        %6531 = vrot.lane.b32.xlu0 %v6499, 126
        %v6532 = vpop.permute.xlu0 %6531
        %6533 = vrot.lane.b32.xlu0 %v6500, 126
        %v6534 = vpop.permute.xlu0 %6533
        %6535 = vrot.lane.b32.xlu0 %v6501, 126
        %v6536 = vpop.permute.xlu0 %6535
        %6537 = vrot.lane.b32.xlu0 %v6502, 126
        %v6538 = vpop.permute.xlu0 %6537
        %v6539 = vsel %vm524, %v6516, %v6518
        %v6540 = vsel %vm524, %v6518, %v6520
        %v6541 = vsel %vm524, %v6522, %v6524
        %v6542 = vsel %vm524, %v6524, %v6526
        %v6543 = vsel %vm524, %v6528, %v6530
        %v6544 = vsel %vm524, %v6530, %v6532
        %v6545 = vsel %vm524, %v6534, %v6536
        %v6546 = vsel %vm524, %v6536, %v6538
        %v6559 = vadd.f32 %v6432, %v6539
        %v6560 = vadd.f32 %v6433, %v6540
        %v6561 = vadd.f32 %v6434, %v6520
        %v6562 = vadd.f32 %v6435, %v6541
        %v6563 = vadd.f32 %v6436, %v6542
        %v6564 = vadd.f32 %v6437, %v6526
        %v6565 = vadd.f32 %v6438, %v6543
        %v6566 = vadd.f32 %v6439, %v6544
        %v6567 = vadd.f32 %v6440, %v6532
        %v6568 = vadd.f32 %v6441, %v6545
        %v6569 = vadd.f32 %v6442, %v6546
        %v6570 = vadd.f32 %v6443, %v6538
        %6571 = vrot.lane.b32.xlu0 %v6249, 127
        %v6572 = vpop.permute.xlu0 %6571
        %v6573 = vrot.slane %v6572, 7
        %v6574 = vsel %vm394, %v6573, %v6572
        %v6576 = vmul.f32 %v6252, %v6574
        %v6577 = vld [vmem:[%s563] sm:$0xff]
        %v6578 = vld [vmem:[%s563 + $0x8] sm:$0xff]
        %v6579 = vld [vmem:[%s563 + $0x10] sm:$0xff]
        %v6580 = vld [vmem:[%s563 + $0x18] sm:$0xff]
        %6582 = vset.pattern.permute.xlu0 0
        %6583 = vperm.xlu0 %6582, %v6577
        %v6584 = vpop.permute.xlu0 %6583
        %6587 = vset.pattern.permute.xlu0 0
        %6588 = vperm.xlu0 %6587, %v6578
        %v6589 = vpop.permute.xlu0 %6588
        %6592 = vset.pattern.permute.xlu0 0
        %6593 = vperm.xlu0 %6592, %v6579
        %v6594 = vpop.permute.xlu0 %6593
        %6597 = vset.pattern.permute.xlu0 0
        %6598 = vperm.xlu0 %6597, %v6580
        %v6599 = vpop.permute.xlu0 %6598
        %v6602 = vlaneseq
        %v6603 = vshrl.u32 %v6602, 7
        %v6604 = vsub.s32 0, %v6603
        %v6605 = vrot.slane %v6576, %v6604
        %v6606 = vlaneseq
        %v6607 = vshrl.u32 %v6606, 7
        %v6608 = vsub.s32 1, %v6607
        %v6609 = vrot.slane %v6576, %v6608
        %v6610 = vlaneseq
        %v6611 = vshrl.u32 %v6610, 7
        %v6612 = vsub.s32 2, %v6611
        %v6613 = vrot.slane %v6576, %v6612
        %v6617 = vmul.f32 %v6584, %v6605
        %v6618 = vmul.f32 %v6584, %v6609
        %v6619 = vmul.f32 %v6584, %v6613
        %v6620 = vmul.f32 %v6589, %v6605
        %v6621 = vmul.f32 %v6589, %v6609
        %v6622 = vmul.f32 %v6589, %v6613
        %v6623 = vmul.f32 %v6594, %v6605
        %v6624 = vmul.f32 %v6594, %v6609
        %v6625 = vmul.f32 %v6594, %v6613
        %v6626 = vmul.f32 %v6599, %v6605
        %v6627 = vmul.f32 %v6599, %v6609
        %v6628 = vmul.f32 %v6599, %v6613
        %6641 = vrot.lane.b32.xlu0 %v6617, 73
        %v6642 = vpop.permute.xlu0 %6641
        %6643 = vrot.lane.b32.xlu0 %v6618, 73
        %v6644 = vpop.permute.xlu0 %6643
        %6645 = vrot.lane.b32.xlu0 %v6619, 73
        %v6646 = vpop.permute.xlu0 %6645
        %6647 = vrot.lane.b32.xlu0 %v6620, 73
        %v6648 = vpop.permute.xlu0 %6647
        %6649 = vrot.lane.b32.xlu0 %v6621, 73
        %v6650 = vpop.permute.xlu0 %6649
        %6651 = vrot.lane.b32.xlu0 %v6622, 73
        %v6652 = vpop.permute.xlu0 %6651
        %6653 = vrot.lane.b32.xlu0 %v6623, 73
        %v6654 = vpop.permute.xlu0 %6653
        %6655 = vrot.lane.b32.xlu0 %v6624, 73
        %v6656 = vpop.permute.xlu0 %6655
        %6657 = vrot.lane.b32.xlu0 %v6625, 73
        %v6658 = vpop.permute.xlu0 %6657
        %6659 = vrot.lane.b32.xlu0 %v6626, 73
        %v6660 = vpop.permute.xlu0 %6659
        %6661 = vrot.lane.b32.xlu0 %v6627, 73
        %v6662 = vpop.permute.xlu0 %6661
        %6663 = vrot.lane.b32.xlu0 %v6628, 73
        %v6664 = vpop.permute.xlu0 %6663
        %v6665 = vsel %vm652, %v6642, %v6644
        %v6666 = vsel %vm652, %v6644, %v6646
        %v6667 = vsel %vm652, %v6648, %v6650
        %v6668 = vsel %vm652, %v6650, %v6652
        %v6669 = vsel %vm652, %v6654, %v6656
        %v6670 = vsel %vm652, %v6656, %v6658
        %v6671 = vsel %vm652, %v6660, %v6662
        %v6672 = vsel %vm652, %v6662, %v6664
        %v6685 = vadd.f32 %v6559, %v6665
        %v6686 = vadd.f32 %v6560, %v6666
        %v6687 = vadd.f32 %v6561, %v6646
        %v6688 = vadd.f32 %v6562, %v6667
        %v6689 = vadd.f32 %v6563, %v6668
        %v6690 = vadd.f32 %v6564, %v6652
        %v6691 = vadd.f32 %v6565, %v6669
        %v6692 = vadd.f32 %v6566, %v6670
        %v6693 = vadd.f32 %v6567, %v6658
        %v6694 = vadd.f32 %v6568, %v6671
        %v6695 = vadd.f32 %v6569, %v6672
        %v6696 = vadd.f32 %v6570, %v6664
        %v6697 = vld [vmem:[%s192 + $0xb] sm:$0x3]
        %v6698 = vld [vmem:[%s686] sm:$0xff]
        %v6699 = vld [vmem:[%s686 + $0x8] sm:$0xff]
        %v6700 = vld [vmem:[%s686 + $0x10] sm:$0xff]
        %v6701 = vld [vmem:[%s686 + $0x18] sm:$0xff]
        %6703 = vset.pattern.permute.xlu0 0
        %6704 = vperm.xlu0 %6703, %v6698
        %v6705 = vpop.permute.xlu0 %6704
        %6708 = vset.pattern.permute.xlu0 0
        %6709 = vperm.xlu0 %6708, %v6699
        %v6710 = vpop.permute.xlu0 %6709
        %6713 = vset.pattern.permute.xlu0 0
        %6714 = vperm.xlu0 %6713, %v6700
        %v6715 = vpop.permute.xlu0 %6714
        %6718 = vset.pattern.permute.xlu0 0
        %6719 = vperm.xlu0 %6718, %v6701
        %v6720 = vpop.permute.xlu0 %6719
        %v6723 = vlaneseq
        %v6724 = vshrl.u32 %v6723, 7
        %v6725 = vsub.s32 0, %v6724
        %v6726 = vrot.slane %v6697, %v6725
        %v6727 = vlaneseq
        %v6728 = vshrl.u32 %v6727, 7
        %v6729 = vsub.s32 1, %v6728
        %v6730 = vrot.slane %v6697, %v6729
        %v6733 = vmul.f32 %v6705, %v6726
        %v6734 = vmul.f32 %v6705, %v6730
        %v6735 = vmul.f32 %v6710, %v6726
        %v6736 = vmul.f32 %v6710, %v6730
        %v6737 = vmul.f32 %v6715, %v6726
        %v6738 = vmul.f32 %v6715, %v6730
        %v6739 = vmul.f32 %v6720, %v6726
        %v6740 = vmul.f32 %v6720, %v6730
        %6749 = vrot.lane.b32.xlu0 %v6733, 72
        %v6750 = vpop.permute.xlu0 %6749
        %6751 = vrot.lane.b32.xlu0 %v6734, 72
        %v6752 = vpop.permute.xlu0 %6751
        %6753 = vrot.lane.b32.xlu0 %v6735, 72
        %v6754 = vpop.permute.xlu0 %6753
        %6755 = vrot.lane.b32.xlu0 %v6736, 72
        %v6756 = vpop.permute.xlu0 %6755
        %6757 = vrot.lane.b32.xlu0 %v6737, 72
        %v6758 = vpop.permute.xlu0 %6757
        %6759 = vrot.lane.b32.xlu0 %v6738, 72
        %v6760 = vpop.permute.xlu0 %6759
        %6761 = vrot.lane.b32.xlu0 %v6739, 72
        %v6762 = vpop.permute.xlu0 %6761
        %6763 = vrot.lane.b32.xlu0 %v6740, 72
        %v6764 = vpop.permute.xlu0 %6763
        %v6765 = vsel %vm237, %v6750, %v6752
        %v6766 = vsel %vm237, %v6754, %v6756
        %v6767 = vsel %vm237, %v6758, %v6760
        %v6768 = vsel %vm237, %v6762, %v6764
        %v6781 = vadd.f32 %v6685, %v6750
        %v6782 = vadd.f32 %v6686, %v6765
        %v6783 = vadd.f32 %v6687, %v6752
        %v6784 = vadd.f32 %v6688, %v6754
        %v6785 = vadd.f32 %v6689, %v6766
        %v6786 = vadd.f32 %v6690, %v6756
        %v6787 = vadd.f32 %v6691, %v6758
        %v6788 = vadd.f32 %v6692, %v6767
        %v6789 = vadd.f32 %v6693, %v6760
        %v6790 = vadd.f32 %v6694, %v6762
        %v6791 = vadd.f32 %v6695, %v6768
        %v6792 = vadd.f32 %v6696, %v6764
        %v6793 = vld [vmem:[%s192 + $0xb] sm:$0x7]
        %6794 = vrot.lane.b32.xlu0 %v6251, 1
        %v6795 = vpop.permute.xlu0 %6794
        %v6796 = vrot.slane %v6795, 7
        %v6797 = vsel %vm786, %v6796, %v6795
        %v6799 = vmul.f32 %v6793, %v6797
        %v6800 = vld [vmem:[%s790] sm:$0xff]
        %v6801 = vld [vmem:[%s790 + $0x8] sm:$0xff]
        %v6802 = vld [vmem:[%s790 + $0x10] sm:$0xff]
        %v6803 = vld [vmem:[%s790 + $0x18] sm:$0xff]
        %6805 = vset.pattern.permute.xlu0 0
        %6806 = vperm.xlu0 %6805, %v6800
        %v6807 = vpop.permute.xlu0 %6806
        %6810 = vset.pattern.permute.xlu0 0
        %6811 = vperm.xlu0 %6810, %v6801
        %v6812 = vpop.permute.xlu0 %6811
        %6815 = vset.pattern.permute.xlu0 0
        %6816 = vperm.xlu0 %6815, %v6802
        %v6817 = vpop.permute.xlu0 %6816
        %6820 = vset.pattern.permute.xlu0 0
        %6821 = vperm.xlu0 %6820, %v6803
        %v6822 = vpop.permute.xlu0 %6821
        %v6825 = vlaneseq
        %v6826 = vshrl.u32 %v6825, 7
        %v6827 = vsub.s32 0, %v6826
        %v6828 = vrot.slane %v6799, %v6827
        %v6829 = vlaneseq
        %v6830 = vshrl.u32 %v6829, 7
        %v6831 = vsub.s32 1, %v6830
        %v6832 = vrot.slane %v6799, %v6831
        %v6833 = vlaneseq
        %v6834 = vshrl.u32 %v6833, 7
        %v6835 = vsub.s32 2, %v6834
        %v6836 = vrot.slane %v6799, %v6835
        %v6840 = vmul.f32 %v6807, %v6828
        %v6841 = vmul.f32 %v6807, %v6832
        %v6842 = vmul.f32 %v6807, %v6836
        %v6843 = vmul.f32 %v6812, %v6828
        %v6844 = vmul.f32 %v6812, %v6832
        %v6845 = vmul.f32 %v6812, %v6836
        %v6846 = vmul.f32 %v6817, %v6828
        %v6847 = vmul.f32 %v6817, %v6832
        %v6848 = vmul.f32 %v6817, %v6836
        %v6849 = vmul.f32 %v6822, %v6828
        %v6850 = vmul.f32 %v6822, %v6832
        %v6851 = vmul.f32 %v6822, %v6836
        %6864 = vrot.lane.b32.xlu0 %v6840, 71
        %v6865 = vpop.permute.xlu0 %6864
        %6866 = vrot.lane.b32.xlu0 %v6841, 71
        %v6867 = vpop.permute.xlu0 %6866
        %6868 = vrot.lane.b32.xlu0 %v6842, 71
        %v6869 = vpop.permute.xlu0 %6868
        %6870 = vrot.lane.b32.xlu0 %v6843, 71
        %v6871 = vpop.permute.xlu0 %6870
        %6872 = vrot.lane.b32.xlu0 %v6844, 71
        %v6873 = vpop.permute.xlu0 %6872
        %6874 = vrot.lane.b32.xlu0 %v6845, 71
        %v6875 = vpop.permute.xlu0 %6874
        %6876 = vrot.lane.b32.xlu0 %v6846, 71
        %v6877 = vpop.permute.xlu0 %6876
        %6878 = vrot.lane.b32.xlu0 %v6847, 71
        %v6879 = vpop.permute.xlu0 %6878
        %6880 = vrot.lane.b32.xlu0 %v6848, 71
        %v6881 = vpop.permute.xlu0 %6880
        %6882 = vrot.lane.b32.xlu0 %v6849, 71
        %v6883 = vpop.permute.xlu0 %6882
        %6884 = vrot.lane.b32.xlu0 %v6850, 71
        %v6885 = vpop.permute.xlu0 %6884
        %6886 = vrot.lane.b32.xlu0 %v6851, 71
        %v6887 = vpop.permute.xlu0 %6886
        %v6888 = vsel %vm879, %v6865, %v6867
        %v6889 = vsel %vm879, %v6867, %v6869
        %v6890 = vsel %vm879, %v6871, %v6873
        %v6891 = vsel %vm879, %v6873, %v6875
        %v6892 = vsel %vm879, %v6877, %v6879
        %v6893 = vsel %vm879, %v6879, %v6881
        %v6894 = vsel %vm879, %v6883, %v6885
        %v6895 = vsel %vm879, %v6885, %v6887
        %v6908 = vadd.f32 %v6781, %v6865
        %v6909 = vadd.f32 %v6782, %v6888
        %v6910 = vadd.f32 %v6783, %v6889
        %v6911 = vadd.f32 %v6784, %v6871
        %v6912 = vadd.f32 %v6785, %v6890
        %v6913 = vadd.f32 %v6786, %v6891
        %v6914 = vadd.f32 %v6787, %v6877
        %v6915 = vadd.f32 %v6788, %v6892
        %v6916 = vadd.f32 %v6789, %v6893
        %v6917 = vadd.f32 %v6790, %v6883
        %v6918 = vadd.f32 %v6791, %v6894
        %v6919 = vadd.f32 %v6792, %v6895
        %6920 = vrot.lane.b32.xlu0 %v6249, 54
        %v6921 = vpop.permute.xlu0 %6920
        %v6922 = vrot.slane %v6921, 7
        %v6923 = vsel %vm915, %v6922, %v6921
        %v6925 = vmul.f32 %v6793, %v6923
        %v6926 = vld [vmem:[%s919] sm:$0xff]
        %v6927 = vld [vmem:[%s919 + $0x8] sm:$0xff]
        %v6928 = vld [vmem:[%s919 + $0x10] sm:$0xff]
        %v6929 = vld [vmem:[%s919 + $0x18] sm:$0xff]
        %6931 = vset.pattern.permute.xlu0 0
        %6932 = vperm.xlu0 %6931, %v6926
        %v6933 = vpop.permute.xlu0 %6932
        %6936 = vset.pattern.permute.xlu0 0
        %6937 = vperm.xlu0 %6936, %v6927
        %v6938 = vpop.permute.xlu0 %6937
        %6941 = vset.pattern.permute.xlu0 0
        %6942 = vperm.xlu0 %6941, %v6928
        %v6943 = vpop.permute.xlu0 %6942
        %6946 = vset.pattern.permute.xlu0 0
        %6947 = vperm.xlu0 %6946, %v6929
        %v6948 = vpop.permute.xlu0 %6947
        %v6951 = vlaneseq
        %v6952 = vshrl.u32 %v6951, 7
        %v6953 = vsub.s32 0, %v6952
        %v6954 = vrot.slane %v6925, %v6953
        %v6955 = vlaneseq
        %v6956 = vshrl.u32 %v6955, 7
        %v6957 = vsub.s32 1, %v6956
        %v6958 = vrot.slane %v6925, %v6957
        %v6959 = vlaneseq
        %v6960 = vshrl.u32 %v6959, 7
        %v6961 = vsub.s32 2, %v6960
        %v6962 = vrot.slane %v6925, %v6961
        %v6966 = vmul.f32 %v6933, %v6954
        %v6967 = vmul.f32 %v6933, %v6958
        %v6968 = vmul.f32 %v6933, %v6962
        %v6969 = vmul.f32 %v6938, %v6954
        %v6970 = vmul.f32 %v6938, %v6958
        %v6971 = vmul.f32 %v6938, %v6962
        %v6972 = vmul.f32 %v6943, %v6954
        %v6973 = vmul.f32 %v6943, %v6958
        %v6974 = vmul.f32 %v6943, %v6962
        %v6975 = vmul.f32 %v6948, %v6954
        %v6976 = vmul.f32 %v6948, %v6958
        %v6977 = vmul.f32 %v6948, %v6962
        %6990 = vrot.lane.b32.xlu0 %v6966, 18
        %v6991 = vpop.permute.xlu0 %6990
        %6992 = vrot.lane.b32.xlu0 %v6967, 18
        %v6993 = vpop.permute.xlu0 %6992
        %6994 = vrot.lane.b32.xlu0 %v6968, 18
        %v6995 = vpop.permute.xlu0 %6994
        %6996 = vrot.lane.b32.xlu0 %v6969, 18
        %v6997 = vpop.permute.xlu0 %6996
        %6998 = vrot.lane.b32.xlu0 %v6970, 18
        %v6999 = vpop.permute.xlu0 %6998
        %7000 = vrot.lane.b32.xlu0 %v6971, 18
        %v7001 = vpop.permute.xlu0 %7000
        %7002 = vrot.lane.b32.xlu0 %v6972, 18
        %v7003 = vpop.permute.xlu0 %7002
        %7004 = vrot.lane.b32.xlu0 %v6973, 18
        %v7005 = vpop.permute.xlu0 %7004
        %7006 = vrot.lane.b32.xlu0 %v6974, 18
        %v7007 = vpop.permute.xlu0 %7006
        %7008 = vrot.lane.b32.xlu0 %v6975, 18
        %v7009 = vpop.permute.xlu0 %7008
        %7010 = vrot.lane.b32.xlu0 %v6976, 18
        %v7011 = vpop.permute.xlu0 %7010
        %7012 = vrot.lane.b32.xlu0 %v6977, 18
        %v7013 = vpop.permute.xlu0 %7012
        %v7014 = vsel %vm1008, %v6991, %v6993
        %v7015 = vsel %vm1008, %v6993, %v6995
        %v7016 = vsel %vm1008, %v6997, %v6999
        %v7017 = vsel %vm1008, %v6999, %v7001
        %v7018 = vsel %vm1008, %v7003, %v7005
        %v7019 = vsel %vm1008, %v7005, %v7007
        %v7020 = vsel %vm1008, %v7009, %v7011
        %v7021 = vsel %vm1008, %v7011, %v7013
        %v7034 = vadd.f32 %v6908, %v6991
        %v7035 = vadd.f32 %v6909, %v7014
        %v7036 = vadd.f32 %v6910, %v7015
        %v7037 = vadd.f32 %v6911, %v6997
        %v7038 = vadd.f32 %v6912, %v7016
        %v7039 = vadd.f32 %v6913, %v7017
        %v7040 = vadd.f32 %v6914, %v7003
        %v7041 = vadd.f32 %v6915, %v7018
        %v7042 = vadd.f32 %v6916, %v7019
        %v7043 = vadd.f32 %v6917, %v7009
        %v7044 = vadd.f32 %v6918, %v7020
        %v7045 = vadd.f32 %v6919, %v7021
        %v7046 = vld [vmem:[%s1041] sm:$0xff]
        %v7047 = vld [vmem:[%s1041 + $0x8] sm:$0xff]
        %v7048 = vld [vmem:[%s1041 + $0x10] sm:$0xff]
        %v7049 = vld [vmem:[%s1041 + $0x18] sm:$0xff]
        %7051 = vset.pattern.permute.xlu0 0
        %7052 = vperm.xlu0 %7051, %v7046
        %v7053 = vpop.permute.xlu0 %7052
        %7056 = vset.pattern.permute.xlu0 0
        %7057 = vperm.xlu0 %7056, %v7047
        %v7058 = vpop.permute.xlu0 %7057
        %7061 = vset.pattern.permute.xlu0 0
        %7062 = vperm.xlu0 %7061, %v7048
        %v7063 = vpop.permute.xlu0 %7062
        %7066 = vset.pattern.permute.xlu0 0
        %7067 = vperm.xlu0 %7066, %v7049
        %v7068 = vpop.permute.xlu0 %7067
        %v7071 = vlaneseq
        %v7072 = vshrl.u32 %v7071, 7
        %v7073 = vsub.s32 0, %v7072
        %v7074 = vrot.slane %v6793, %v7073
        %v7075 = vlaneseq
        %v7076 = vshrl.u32 %v7075, 7
        %v7077 = vsub.s32 1, %v7076
        %v7078 = vrot.slane %v6793, %v7077
        %v7079 = vlaneseq
        %v7080 = vshrl.u32 %v7079, 7
        %v7081 = vsub.s32 2, %v7080
        %v7082 = vrot.slane %v6793, %v7081
        %v7086 = vmul.f32 %v7053, %v7074
        %v7087 = vmul.f32 %v7053, %v7078
        %v7088 = vmul.f32 %v7053, %v7082
        %v7089 = vmul.f32 %v7058, %v7074
        %v7090 = vmul.f32 %v7058, %v7078
        %v7091 = vmul.f32 %v7058, %v7082
        %v7092 = vmul.f32 %v7063, %v7074
        %v7093 = vmul.f32 %v7063, %v7078
        %v7094 = vmul.f32 %v7063, %v7082
        %v7095 = vmul.f32 %v7068, %v7074
        %v7096 = vmul.f32 %v7068, %v7078
        %v7097 = vmul.f32 %v7068, %v7082
        %7110 = vrot.lane.b32.xlu0 %v7086, 17
        %v7111 = vpop.permute.xlu0 %7110
        %7112 = vrot.lane.b32.xlu0 %v7087, 17
        %v7113 = vpop.permute.xlu0 %7112
        %7114 = vrot.lane.b32.xlu0 %v7088, 17
        %v7115 = vpop.permute.xlu0 %7114
        %7116 = vrot.lane.b32.xlu0 %v7089, 17
        %v7117 = vpop.permute.xlu0 %7116
        %7118 = vrot.lane.b32.xlu0 %v7090, 17
        %v7119 = vpop.permute.xlu0 %7118
        %7120 = vrot.lane.b32.xlu0 %v7091, 17
        %v7121 = vpop.permute.xlu0 %7120
        %7122 = vrot.lane.b32.xlu0 %v7092, 17
        %v7123 = vpop.permute.xlu0 %7122
        %7124 = vrot.lane.b32.xlu0 %v7093, 17
        %v7125 = vpop.permute.xlu0 %7124
        %7126 = vrot.lane.b32.xlu0 %v7094, 17
        %v7127 = vpop.permute.xlu0 %7126
        %7128 = vrot.lane.b32.xlu0 %v7095, 17
        %v7129 = vpop.permute.xlu0 %7128
        %7130 = vrot.lane.b32.xlu0 %v7096, 17
        %v7131 = vpop.permute.xlu0 %7130
        %7132 = vrot.lane.b32.xlu0 %v7097, 17
        %v7133 = vpop.permute.xlu0 %7132
        %v7134 = vsel %vm1130, %v7111, %v7113
        %v7135 = vsel %vm1130, %v7113, %v7115
        %v7136 = vsel %vm1130, %v7117, %v7119
        %v7137 = vsel %vm1130, %v7119, %v7121
        %v7138 = vsel %vm1130, %v7123, %v7125
        %v7139 = vsel %vm1130, %v7125, %v7127
        %v7140 = vsel %vm1130, %v7129, %v7131
        %v7141 = vsel %vm1130, %v7131, %v7133
        %v7154 = vadd.f32 %v7034, %v7111
        %v7155 = vadd.f32 %v7035, %v7134
        %v7156 = vadd.f32 %v7036, %v7135
        %v7157 = vadd.f32 %v7037, %v7117
        %v7158 = vadd.f32 %v7038, %v7136
        %v7159 = vadd.f32 %v7039, %v7137
        %v7160 = vadd.f32 %v7040, %v7123
        %v7161 = vadd.f32 %v7041, %v7138
        %v7162 = vadd.f32 %v7042, %v7139
        %v7163 = vadd.f32 %v7043, %v7129
        %v7164 = vadd.f32 %v7044, %v7140
        %v7165 = vadd.f32 %v7045, %v7141
        %7166 = vrot.lane.b32.xlu0 %v6251, 56
        %v7167 = vpop.permute.xlu0 %7166
        %v7168 = vrot.slane %v7167, 7
        %v7169 = vsel %vm1166, %v7168, %v7167
        %v7171 = vmul.f32 %v6793, %v7169
        %v7172 = vld [vmem:[%s1170] sm:$0xff]
        %v7173 = vld [vmem:[%s1170 + $0x8] sm:$0xff]
        %v7174 = vld [vmem:[%s1170 + $0x10] sm:$0xff]
        %v7175 = vld [vmem:[%s1170 + $0x18] sm:$0xff]
        %7177 = vset.pattern.permute.xlu0 0
        %7178 = vperm.xlu0 %7177, %v7172
        %v7179 = vpop.permute.xlu0 %7178
        %7182 = vset.pattern.permute.xlu0 0
        %7183 = vperm.xlu0 %7182, %v7173
        %v7184 = vpop.permute.xlu0 %7183
        %7187 = vset.pattern.permute.xlu0 0
        %7188 = vperm.xlu0 %7187, %v7174
        %v7189 = vpop.permute.xlu0 %7188
        %7192 = vset.pattern.permute.xlu0 0
        %7193 = vperm.xlu0 %7192, %v7175
        %v7194 = vpop.permute.xlu0 %7193
        %v7197 = vlaneseq
        %v7198 = vshrl.u32 %v7197, 7
        %v7199 = vsub.s32 0, %v7198
        %v7200 = vrot.slane %v7171, %v7199
        %v7201 = vlaneseq
        %v7202 = vshrl.u32 %v7201, 7
        %v7203 = vsub.s32 1, %v7202
        %v7204 = vrot.slane %v7171, %v7203
        %v7205 = vlaneseq
        %v7206 = vshrl.u32 %v7205, 7
        %v7207 = vsub.s32 2, %v7206
        %v7208 = vrot.slane %v7171, %v7207
        %v7212 = vmul.f32 %v7179, %v7200
        %v7213 = vmul.f32 %v7179, %v7204
        %v7214 = vmul.f32 %v7179, %v7208
        %v7215 = vmul.f32 %v7184, %v7200
        %v7216 = vmul.f32 %v7184, %v7204
        %v7217 = vmul.f32 %v7184, %v7208
        %v7218 = vmul.f32 %v7189, %v7200
        %v7219 = vmul.f32 %v7189, %v7204
        %v7220 = vmul.f32 %v7189, %v7208
        %v7221 = vmul.f32 %v7194, %v7200
        %v7222 = vmul.f32 %v7194, %v7204
        %v7223 = vmul.f32 %v7194, %v7208
        %7236 = vrot.lane.b32.xlu0 %v7212, 16
        %v7237 = vpop.permute.xlu0 %7236
        %7238 = vrot.lane.b32.xlu0 %v7213, 16
        %v7239 = vpop.permute.xlu0 %7238
        %7240 = vrot.lane.b32.xlu0 %v7214, 16
        %v7241 = vpop.permute.xlu0 %7240
        %7242 = vrot.lane.b32.xlu0 %v7215, 16
        %v7243 = vpop.permute.xlu0 %7242
        %7244 = vrot.lane.b32.xlu0 %v7216, 16
        %v7245 = vpop.permute.xlu0 %7244
        %7246 = vrot.lane.b32.xlu0 %v7217, 16
        %v7247 = vpop.permute.xlu0 %7246
        %7248 = vrot.lane.b32.xlu0 %v7218, 16
        %v7249 = vpop.permute.xlu0 %7248
        %7250 = vrot.lane.b32.xlu0 %v7219, 16
        %v7251 = vpop.permute.xlu0 %7250
        %7252 = vrot.lane.b32.xlu0 %v7220, 16
        %v7253 = vpop.permute.xlu0 %7252
        %7254 = vrot.lane.b32.xlu0 %v7221, 16
        %v7255 = vpop.permute.xlu0 %7254
        %7256 = vrot.lane.b32.xlu0 %v7222, 16
        %v7257 = vpop.permute.xlu0 %7256
        %7258 = vrot.lane.b32.xlu0 %v7223, 16
        %v7259 = vpop.permute.xlu0 %7258
        %v7260 = vsel %vm1259, %v7237, %v7239
        %v7261 = vsel %vm1259, %v7239, %v7241
        %v7262 = vsel %vm1259, %v7243, %v7245
        %v7263 = vsel %vm1259, %v7245, %v7247
        %v7264 = vsel %vm1259, %v7249, %v7251
        %v7265 = vsel %vm1259, %v7251, %v7253
        %v7266 = vsel %vm1259, %v7255, %v7257
        %v7267 = vsel %vm1259, %v7257, %v7259
        %v7280 = vadd.f32 %v7154, %v7237
        %v7281 = vadd.f32 %v7155, %v7260
        %v7282 = vadd.f32 %v7156, %v7261
        %v7283 = vadd.f32 %v7157, %v7243
        %v7284 = vadd.f32 %v7158, %v7262
        %v7285 = vadd.f32 %v7159, %v7263
        %v7286 = vadd.f32 %v7160, %v7249
        %v7287 = vadd.f32 %v7161, %v7264
        %v7288 = vadd.f32 %v7162, %v7265
        %v7289 = vadd.f32 %v7163, %v7255
        %v7290 = vadd.f32 %v7164, %v7266
        %v7291 = vadd.f32 %v7165, %v7267
        %7304 = vrot.lane.b32.xlu0 %v7280, 56
        %v7305 = vpop.permute.xlu0 %7304
        %7306 = vrot.lane.b32.xlu0 %v7281, 56
        %v7307 = vpop.permute.xlu0 %7306
        %7308 = vrot.lane.b32.xlu0 %v7282, 56
        %v7309 = vpop.permute.xlu0 %7308
        %7310 = vrot.lane.b32.xlu0 %v7283, 56
        %v7311 = vpop.permute.xlu0 %7310
        %7312 = vrot.lane.b32.xlu0 %v7284, 56
        %v7313 = vpop.permute.xlu0 %7312
        %7314 = vrot.lane.b32.xlu0 %v7285, 56
        %v7315 = vpop.permute.xlu0 %7314
        %7316 = vrot.lane.b32.xlu0 %v7286, 56
        %v7317 = vpop.permute.xlu0 %7316
        %7318 = vrot.lane.b32.xlu0 %v7287, 56
        %v7319 = vpop.permute.xlu0 %7318
        %7320 = vrot.lane.b32.xlu0 %v7288, 56
        %v7321 = vpop.permute.xlu0 %7320
        %7322 = vrot.lane.b32.xlu0 %v7289, 56
        %v7323 = vpop.permute.xlu0 %7322
        %7324 = vrot.lane.b32.xlu0 %v7290, 56
        %v7325 = vpop.permute.xlu0 %7324
        %7326 = vrot.lane.b32.xlu0 %v7291, 56
        %v7327 = vpop.permute.xlu0 %7326
        %v7328 = vsel %vm1166, %v7305, %v7307
        %v7329 = vsel %vm1166, %v7307, %v7309
        %v7330 = vsel %vm1166, %v7311, %v7313
        %v7331 = vsel %vm1166, %v7313, %v7315
        %v7332 = vsel %vm1166, %v7317, %v7319
        %v7333 = vsel %vm1166, %v7319, %v7321
        %v7334 = vsel %vm1166, %v7323, %v7325
        %v7335 = vsel %vm1166, %v7325, %v7327
        %v7344 = vadd.f32 %v7328, %v7329
        %7345 = vadd.xlane.f32.xlu0 %v7344
        %v7346 = vpop.xlane.xlu0 %7345
        %v7347 = vadd.f32 %v7330, %v7331
        %7348 = vadd.xlane.f32.xlu0 %v7347
        %v7349 = vpop.xlane.xlu0 %7348
        %v7350 = vadd.f32 %v7332, %v7333
        %7351 = vadd.xlane.f32.xlu0 %v7350
        %v7352 = vpop.xlane.xlu0 %7351
        %v7353 = vadd.f32 %v7334, %v7335
        %7354 = vadd.xlane.f32.xlu0 %v7353
        %v7355 = vpop.xlane.xlu0 %7354
        %v7356 = vadd.f32 %v6156, %v7346
        %v7357 = vadd.f32 %v6157, %v7349
        %v7358 = vadd.f32 %v6158, %v7352
        %v7359 = vadd.f32 %v6159, %v7355
        %v7360 = vmul.f32 %v7280, %v7280
        %v7361 = vmul.f32 %v7281, %v7281
        %v7362 = vmul.f32 %v7282, %v7282
        %v7363 = vmul.f32 %v7283, %v7283
        %v7364 = vmul.f32 %v7284, %v7284
        %v7365 = vmul.f32 %v7285, %v7285
        %v7366 = vmul.f32 %v7286, %v7286
        %v7367 = vmul.f32 %v7287, %v7287
        %v7368 = vmul.f32 %v7288, %v7288
        %v7369 = vmul.f32 %v7289, %v7289
        %v7370 = vmul.f32 %v7290, %v7290
        %v7371 = vmul.f32 %v7291, %v7291
        %7384 = vrot.lane.b32.xlu0 %v7360, 56
        %v7385 = vpop.permute.xlu0 %7384
        %7386 = vrot.lane.b32.xlu0 %v7361, 56
        %v7387 = vpop.permute.xlu0 %7386
        %7388 = vrot.lane.b32.xlu0 %v7362, 56
        %v7389 = vpop.permute.xlu0 %7388
        %7390 = vrot.lane.b32.xlu0 %v7363, 56
        %v7391 = vpop.permute.xlu0 %7390
        %7392 = vrot.lane.b32.xlu0 %v7364, 56
        %v7393 = vpop.permute.xlu0 %7392
        %7394 = vrot.lane.b32.xlu0 %v7365, 56
        %v7395 = vpop.permute.xlu0 %7394
        %7396 = vrot.lane.b32.xlu0 %v7366, 56
        %v7397 = vpop.permute.xlu0 %7396
        %7398 = vrot.lane.b32.xlu0 %v7367, 56
        %v7399 = vpop.permute.xlu0 %7398
        %7400 = vrot.lane.b32.xlu0 %v7368, 56
        %v7401 = vpop.permute.xlu0 %7400
        %7402 = vrot.lane.b32.xlu0 %v7369, 56
        %v7403 = vpop.permute.xlu0 %7402
        %7404 = vrot.lane.b32.xlu0 %v7370, 56
        %v7405 = vpop.permute.xlu0 %7404
        %7406 = vrot.lane.b32.xlu0 %v7371, 56
        %v7407 = vpop.permute.xlu0 %7406
        %v7408 = vsel %vm1166, %v7385, %v7387
        %v7409 = vsel %vm1166, %v7387, %v7389
        %v7410 = vsel %vm1166, %v7391, %v7393
        %v7411 = vsel %vm1166, %v7393, %v7395
        %v7412 = vsel %vm1166, %v7397, %v7399
        %v7413 = vsel %vm1166, %v7399, %v7401
        %v7414 = vsel %vm1166, %v7403, %v7405
        %v7415 = vsel %vm1166, %v7405, %v7407
        %v7424 = vadd.f32 %v7408, %v7409
        %7425 = vadd.xlane.f32.xlu0 %v7424
        %v7426 = vpop.xlane.xlu0 %7425
        %v7427 = vadd.f32 %v7410, %v7411
        %7428 = vadd.xlane.f32.xlu0 %v7427
        %v7429 = vpop.xlane.xlu0 %7428
        %v7430 = vadd.f32 %v7412, %v7413
        %7431 = vadd.xlane.f32.xlu0 %v7430
        %v7432 = vpop.xlane.xlu0 %7431
        %v7433 = vadd.f32 %v7414, %v7415
        %7434 = vadd.xlane.f32.xlu0 %v7433
        %v7435 = vpop.xlane.xlu0 %7434
        %v7436 = vadd.f32 %v6236, %v7426
        %v7437 = vadd.f32 %v6237, %v7429
        %v7438 = vadd.f32 %v6238, %v7432
        %v7439 = vadd.f32 %v6239, %v7435
        %7440 = vst [vmem:[%s188 + $0x58] sm:$0xff] %v7328
        %7441 = vst [vmem:[%s188 + $0x60] sm:$0xff] %v7329
        %7442 = vst [vmem:[%s188 + $0xe8] sm:$0xff] %v7330
        %7443 = vst [vmem:[%s188 + $0xf0] sm:$0xff] %v7331
        %7444 = vst [vmem:[%s188 + $0x178] sm:$0xff] %v7332
        %7445 = vst [vmem:[%s188 + $0x180] sm:$0xff] %v7333
        %7446 = vst [vmem:[%s188 + $0x208] sm:$0xff] %v7334
        %7447 = vst [vmem:[%s188 + $0x210] sm:$0xff] %v7335
        %s7448 = scalar_lea.vmem %s3, 48
        %v7449 = vld [vmem:[%s7448] ss:$4 sm:$0x3]
        %s7450 = scalar_lea.vmem %s3, 49
        %v7451 = vld [vmem:[%s7450] ss:$4 sm:$0x3]
        %v7452 = vld [vmem:[%s192 + $0xc] sm:$0x7]
        %7454 = vrot.lane.b32.xlu0 %v7449, 72
        %v7455 = vpop.permute.xlu0 %7454
        %v7456 = vrot.slane %v7455, 7
        %v7457 = vsel %vm237, %v7456, %v7455
        %v7459 = vmul.f32 %v7452, %v7457
        %v7460 = vld [vmem:[%s1] sm:$0xff]
        %v7461 = vld [vmem:[%s1 + $0x8] sm:$0xff]
        %v7462 = vld [vmem:[%s1 + $0x10] sm:$0xff]
        %v7463 = vld [vmem:[%s1 + $0x18] sm:$0xff]
        %7465 = vset.pattern.permute.xlu0 0
        %7466 = vperm.xlu0 %7465, %v7460
        %v7467 = vpop.permute.xlu0 %7466
        %7470 = vset.pattern.permute.xlu0 0
        %7471 = vperm.xlu0 %7470, %v7461
        %v7472 = vpop.permute.xlu0 %7471
        %7475 = vset.pattern.permute.xlu0 0
        %7476 = vperm.xlu0 %7475, %v7462
        %v7477 = vpop.permute.xlu0 %7476
        %7480 = vset.pattern.permute.xlu0 0
        %7481 = vperm.xlu0 %7480, %v7463
        %v7482 = vpop.permute.xlu0 %7481
        %v7485 = vlaneseq
        %v7486 = vshrl.u32 %v7485, 7
        %v7487 = vsub.s32 0, %v7486
        %v7488 = vrot.slane %v7459, %v7487
        %v7489 = vlaneseq
        %v7490 = vshrl.u32 %v7489, 7
        %v7491 = vsub.s32 1, %v7490
        %v7492 = vrot.slane %v7459, %v7491
        %v7493 = vlaneseq
        %v7494 = vshrl.u32 %v7493, 7
        %v7495 = vsub.s32 2, %v7494
        %v7496 = vrot.slane %v7459, %v7495
        %v7500 = vmul.f32 %v7467, %v7488
        %v7501 = vmul.f32 %v7467, %v7492
        %v7502 = vmul.f32 %v7467, %v7496
        %v7503 = vmul.f32 %v7472, %v7488
        %v7504 = vmul.f32 %v7472, %v7492
        %v7505 = vmul.f32 %v7472, %v7496
        %v7506 = vmul.f32 %v7477, %v7488
        %v7507 = vmul.f32 %v7477, %v7492
        %v7508 = vmul.f32 %v7477, %v7496
        %v7509 = vmul.f32 %v7482, %v7488
        %v7510 = vmul.f32 %v7482, %v7492
        %v7511 = vmul.f32 %v7482, %v7496
        %v7512 = vadd.f32 %v228, %v7500
        %v7513 = vadd.f32 %v228, %v7501
        %v7514 = vadd.f32 %v228, %v7502
        %v7515 = vadd.f32 %v229, %v7503
        %v7516 = vadd.f32 %v229, %v7504
        %v7517 = vadd.f32 %v229, %v7505
        %v7518 = vadd.f32 %v230, %v7506
        %v7519 = vadd.f32 %v230, %v7507
        %v7520 = vadd.f32 %v230, %v7508
        %v7521 = vadd.f32 %v231, %v7509
        %v7522 = vadd.f32 %v231, %v7510
        %v7523 = vadd.f32 %v231, %v7511
        %v7524 = vld [vmem:[%s305] sm:$0xff]
        %v7525 = vld [vmem:[%s305 + $0x8] sm:$0xff]
        %v7526 = vld [vmem:[%s305 + $0x10] sm:$0xff]
        %v7527 = vld [vmem:[%s305 + $0x18] sm:$0xff]
        %7529 = vset.pattern.permute.xlu0 0
        %7530 = vperm.xlu0 %7529, %v7524
        %v7531 = vpop.permute.xlu0 %7530
        %7534 = vset.pattern.permute.xlu0 0
        %7535 = vperm.xlu0 %7534, %v7525
        %v7536 = vpop.permute.xlu0 %7535
        %7539 = vset.pattern.permute.xlu0 0
        %7540 = vperm.xlu0 %7539, %v7526
        %v7541 = vpop.permute.xlu0 %7540
        %7544 = vset.pattern.permute.xlu0 0
        %7545 = vperm.xlu0 %7544, %v7527
        %v7546 = vpop.permute.xlu0 %7545
        %v7549 = vlaneseq
        %v7550 = vshrl.u32 %v7549, 7
        %v7551 = vsub.s32 0, %v7550
        %v7552 = vrot.slane %v7452, %v7551
        %v7553 = vlaneseq
        %v7554 = vshrl.u32 %v7553, 7
        %v7555 = vsub.s32 1, %v7554
        %v7556 = vrot.slane %v7452, %v7555
        %v7557 = vlaneseq
        %v7558 = vshrl.u32 %v7557, 7
        %v7559 = vsub.s32 2, %v7558
        %v7560 = vrot.slane %v7452, %v7559
        %v7564 = vmul.f32 %v7531, %v7552
        %v7565 = vmul.f32 %v7531, %v7556
        %v7566 = vmul.f32 %v7531, %v7560
        %v7567 = vmul.f32 %v7536, %v7552
        %v7568 = vmul.f32 %v7536, %v7556
        %v7569 = vmul.f32 %v7536, %v7560
        %v7570 = vmul.f32 %v7541, %v7552
        %v7571 = vmul.f32 %v7541, %v7556
        %v7572 = vmul.f32 %v7541, %v7560
        %v7573 = vmul.f32 %v7546, %v7552
        %v7574 = vmul.f32 %v7546, %v7556
        %v7575 = vmul.f32 %v7546, %v7560
        %7588 = vrot.lane.b32.xlu0 %v7564, 127
        %v7589 = vpop.permute.xlu0 %7588
        %7590 = vrot.lane.b32.xlu0 %v7565, 127
        %v7591 = vpop.permute.xlu0 %7590
        %7592 = vrot.lane.b32.xlu0 %v7566, 127
        %v7593 = vpop.permute.xlu0 %7592
        %7594 = vrot.lane.b32.xlu0 %v7567, 127
        %v7595 = vpop.permute.xlu0 %7594
        %7596 = vrot.lane.b32.xlu0 %v7568, 127
        %v7597 = vpop.permute.xlu0 %7596
        %7598 = vrot.lane.b32.xlu0 %v7569, 127
        %v7599 = vpop.permute.xlu0 %7598
        %7600 = vrot.lane.b32.xlu0 %v7570, 127
        %v7601 = vpop.permute.xlu0 %7600
        %7602 = vrot.lane.b32.xlu0 %v7571, 127
        %v7603 = vpop.permute.xlu0 %7602
        %7604 = vrot.lane.b32.xlu0 %v7572, 127
        %v7605 = vpop.permute.xlu0 %7604
        %7606 = vrot.lane.b32.xlu0 %v7573, 127
        %v7607 = vpop.permute.xlu0 %7606
        %7608 = vrot.lane.b32.xlu0 %v7574, 127
        %v7609 = vpop.permute.xlu0 %7608
        %7610 = vrot.lane.b32.xlu0 %v7575, 127
        %v7611 = vpop.permute.xlu0 %7610
        %v7612 = vsel %vm394, %v7589, %v7591
        %v7613 = vsel %vm394, %v7591, %v7593
        %v7614 = vsel %vm394, %v7595, %v7597
        %v7615 = vsel %vm394, %v7597, %v7599
        %v7616 = vsel %vm394, %v7601, %v7603
        %v7617 = vsel %vm394, %v7603, %v7605
        %v7618 = vsel %vm394, %v7607, %v7609
        %v7619 = vsel %vm394, %v7609, %v7611
        %v7632 = vadd.f32 %v7512, %v7612
        %v7633 = vadd.f32 %v7513, %v7613
        %v7634 = vadd.f32 %v7514, %v7593
        %v7635 = vadd.f32 %v7515, %v7614
        %v7636 = vadd.f32 %v7516, %v7615
        %v7637 = vadd.f32 %v7517, %v7599
        %v7638 = vadd.f32 %v7518, %v7616
        %v7639 = vadd.f32 %v7519, %v7617
        %v7640 = vadd.f32 %v7520, %v7605
        %v7641 = vadd.f32 %v7521, %v7618
        %v7642 = vadd.f32 %v7522, %v7619
        %v7643 = vadd.f32 %v7523, %v7611
        %7645 = vrot.lane.b32.xlu0 %v7451, 74
        %v7646 = vpop.permute.xlu0 %7645
        %v7647 = vrot.slane %v7646, 7
        %v7648 = vsel %vm431, %v7647, %v7646
        %v7650 = vmul.f32 %v7452, %v7648
        %v7651 = vld [vmem:[%s435] sm:$0xff]
        %v7652 = vld [vmem:[%s435 + $0x8] sm:$0xff]
        %v7653 = vld [vmem:[%s435 + $0x10] sm:$0xff]
        %v7654 = vld [vmem:[%s435 + $0x18] sm:$0xff]
        %7656 = vset.pattern.permute.xlu0 0
        %7657 = vperm.xlu0 %7656, %v7651
        %v7658 = vpop.permute.xlu0 %7657
        %7661 = vset.pattern.permute.xlu0 0
        %7662 = vperm.xlu0 %7661, %v7652
        %v7663 = vpop.permute.xlu0 %7662
        %7666 = vset.pattern.permute.xlu0 0
        %7667 = vperm.xlu0 %7666, %v7653
        %v7668 = vpop.permute.xlu0 %7667
        %7671 = vset.pattern.permute.xlu0 0
        %7672 = vperm.xlu0 %7671, %v7654
        %v7673 = vpop.permute.xlu0 %7672
        %v7676 = vlaneseq
        %v7677 = vshrl.u32 %v7676, 7
        %v7678 = vsub.s32 0, %v7677
        %v7679 = vrot.slane %v7650, %v7678
        %v7680 = vlaneseq
        %v7681 = vshrl.u32 %v7680, 7
        %v7682 = vsub.s32 1, %v7681
        %v7683 = vrot.slane %v7650, %v7682
        %v7684 = vlaneseq
        %v7685 = vshrl.u32 %v7684, 7
        %v7686 = vsub.s32 2, %v7685
        %v7687 = vrot.slane %v7650, %v7686
        %v7691 = vmul.f32 %v7658, %v7679
        %v7692 = vmul.f32 %v7658, %v7683
        %v7693 = vmul.f32 %v7658, %v7687
        %v7694 = vmul.f32 %v7663, %v7679
        %v7695 = vmul.f32 %v7663, %v7683
        %v7696 = vmul.f32 %v7663, %v7687
        %v7697 = vmul.f32 %v7668, %v7679
        %v7698 = vmul.f32 %v7668, %v7683
        %v7699 = vmul.f32 %v7668, %v7687
        %v7700 = vmul.f32 %v7673, %v7679
        %v7701 = vmul.f32 %v7673, %v7683
        %v7702 = vmul.f32 %v7673, %v7687
        %7715 = vrot.lane.b32.xlu0 %v7691, 126
        %v7716 = vpop.permute.xlu0 %7715
        %7717 = vrot.lane.b32.xlu0 %v7692, 126
        %v7718 = vpop.permute.xlu0 %7717
        %7719 = vrot.lane.b32.xlu0 %v7693, 126
        %v7720 = vpop.permute.xlu0 %7719
        %7721 = vrot.lane.b32.xlu0 %v7694, 126
        %v7722 = vpop.permute.xlu0 %7721
        %7723 = vrot.lane.b32.xlu0 %v7695, 126
        %v7724 = vpop.permute.xlu0 %7723
        %7725 = vrot.lane.b32.xlu0 %v7696, 126
        %v7726 = vpop.permute.xlu0 %7725
        %7727 = vrot.lane.b32.xlu0 %v7697, 126
        %v7728 = vpop.permute.xlu0 %7727
        %7729 = vrot.lane.b32.xlu0 %v7698, 126
        %v7730 = vpop.permute.xlu0 %7729
        %7731 = vrot.lane.b32.xlu0 %v7699, 126
        %v7732 = vpop.permute.xlu0 %7731
        %7733 = vrot.lane.b32.xlu0 %v7700, 126
        %v7734 = vpop.permute.xlu0 %7733
        %7735 = vrot.lane.b32.xlu0 %v7701, 126
        %v7736 = vpop.permute.xlu0 %7735
        %7737 = vrot.lane.b32.xlu0 %v7702, 126
        %v7738 = vpop.permute.xlu0 %7737
        %v7739 = vsel %vm524, %v7716, %v7718
        %v7740 = vsel %vm524, %v7718, %v7720
        %v7741 = vsel %vm524, %v7722, %v7724
        %v7742 = vsel %vm524, %v7724, %v7726
        %v7743 = vsel %vm524, %v7728, %v7730
        %v7744 = vsel %vm524, %v7730, %v7732
        %v7745 = vsel %vm524, %v7734, %v7736
        %v7746 = vsel %vm524, %v7736, %v7738
        %v7759 = vadd.f32 %v7632, %v7739
        %v7760 = vadd.f32 %v7633, %v7740
        %v7761 = vadd.f32 %v7634, %v7720
        %v7762 = vadd.f32 %v7635, %v7741
        %v7763 = vadd.f32 %v7636, %v7742
        %v7764 = vadd.f32 %v7637, %v7726
        %v7765 = vadd.f32 %v7638, %v7743
        %v7766 = vadd.f32 %v7639, %v7744
        %v7767 = vadd.f32 %v7640, %v7732
        %v7768 = vadd.f32 %v7641, %v7745
        %v7769 = vadd.f32 %v7642, %v7746
        %v7770 = vadd.f32 %v7643, %v7738
        %7771 = vrot.lane.b32.xlu0 %v7449, 127
        %v7772 = vpop.permute.xlu0 %7771
        %v7773 = vrot.slane %v7772, 7
        %v7774 = vsel %vm394, %v7773, %v7772
        %v7776 = vmul.f32 %v7452, %v7774
        %v7777 = vld [vmem:[%s563] sm:$0xff]
        %v7778 = vld [vmem:[%s563 + $0x8] sm:$0xff]
        %v7779 = vld [vmem:[%s563 + $0x10] sm:$0xff]
        %v7780 = vld [vmem:[%s563 + $0x18] sm:$0xff]
        %7782 = vset.pattern.permute.xlu0 0
        %7783 = vperm.xlu0 %7782, %v7777
        %v7784 = vpop.permute.xlu0 %7783
        %7787 = vset.pattern.permute.xlu0 0
        %7788 = vperm.xlu0 %7787, %v7778
        %v7789 = vpop.permute.xlu0 %7788
        %7792 = vset.pattern.permute.xlu0 0
        %7793 = vperm.xlu0 %7792, %v7779
        %v7794 = vpop.permute.xlu0 %7793
        %7797 = vset.pattern.permute.xlu0 0
        %7798 = vperm.xlu0 %7797, %v7780
        %v7799 = vpop.permute.xlu0 %7798
        %v7802 = vlaneseq
        %v7803 = vshrl.u32 %v7802, 7
        %v7804 = vsub.s32 0, %v7803
        %v7805 = vrot.slane %v7776, %v7804
        %v7806 = vlaneseq
        %v7807 = vshrl.u32 %v7806, 7
        %v7808 = vsub.s32 1, %v7807
        %v7809 = vrot.slane %v7776, %v7808
        %v7810 = vlaneseq
        %v7811 = vshrl.u32 %v7810, 7
        %v7812 = vsub.s32 2, %v7811
        %v7813 = vrot.slane %v7776, %v7812
        %v7817 = vmul.f32 %v7784, %v7805
        %v7818 = vmul.f32 %v7784, %v7809
        %v7819 = vmul.f32 %v7784, %v7813
        %v7820 = vmul.f32 %v7789, %v7805
        %v7821 = vmul.f32 %v7789, %v7809
        %v7822 = vmul.f32 %v7789, %v7813
        %v7823 = vmul.f32 %v7794, %v7805
        %v7824 = vmul.f32 %v7794, %v7809
        %v7825 = vmul.f32 %v7794, %v7813
        %v7826 = vmul.f32 %v7799, %v7805
        %v7827 = vmul.f32 %v7799, %v7809
        %v7828 = vmul.f32 %v7799, %v7813
        %7841 = vrot.lane.b32.xlu0 %v7817, 73
        %v7842 = vpop.permute.xlu0 %7841
        %7843 = vrot.lane.b32.xlu0 %v7818, 73
        %v7844 = vpop.permute.xlu0 %7843
        %7845 = vrot.lane.b32.xlu0 %v7819, 73
        %v7846 = vpop.permute.xlu0 %7845
        %7847 = vrot.lane.b32.xlu0 %v7820, 73
        %v7848 = vpop.permute.xlu0 %7847
        %7849 = vrot.lane.b32.xlu0 %v7821, 73
        %v7850 = vpop.permute.xlu0 %7849
        %7851 = vrot.lane.b32.xlu0 %v7822, 73
        %v7852 = vpop.permute.xlu0 %7851
        %7853 = vrot.lane.b32.xlu0 %v7823, 73
        %v7854 = vpop.permute.xlu0 %7853
        %7855 = vrot.lane.b32.xlu0 %v7824, 73
        %v7856 = vpop.permute.xlu0 %7855
        %7857 = vrot.lane.b32.xlu0 %v7825, 73
        %v7858 = vpop.permute.xlu0 %7857
        %7859 = vrot.lane.b32.xlu0 %v7826, 73
        %v7860 = vpop.permute.xlu0 %7859
        %7861 = vrot.lane.b32.xlu0 %v7827, 73
        %v7862 = vpop.permute.xlu0 %7861
        %7863 = vrot.lane.b32.xlu0 %v7828, 73
        %v7864 = vpop.permute.xlu0 %7863
        %v7865 = vsel %vm652, %v7842, %v7844
        %v7866 = vsel %vm652, %v7844, %v7846
        %v7867 = vsel %vm652, %v7848, %v7850
        %v7868 = vsel %vm652, %v7850, %v7852
        %v7869 = vsel %vm652, %v7854, %v7856
        %v7870 = vsel %vm652, %v7856, %v7858
        %v7871 = vsel %vm652, %v7860, %v7862
        %v7872 = vsel %vm652, %v7862, %v7864
        %v7885 = vadd.f32 %v7759, %v7865
        %v7886 = vadd.f32 %v7760, %v7866
        %v7887 = vadd.f32 %v7761, %v7846
        %v7888 = vadd.f32 %v7762, %v7867
        %v7889 = vadd.f32 %v7763, %v7868
        %v7890 = vadd.f32 %v7764, %v7852
        %v7891 = vadd.f32 %v7765, %v7869
        %v7892 = vadd.f32 %v7766, %v7870
        %v7893 = vadd.f32 %v7767, %v7858
        %v7894 = vadd.f32 %v7768, %v7871
        %v7895 = vadd.f32 %v7769, %v7872
        %v7896 = vadd.f32 %v7770, %v7864
        %v7897 = vld [vmem:[%s192 + $0xd] sm:$0x3]
        %v7898 = vld [vmem:[%s686] sm:$0xff]
        %v7899 = vld [vmem:[%s686 + $0x8] sm:$0xff]
        %v7900 = vld [vmem:[%s686 + $0x10] sm:$0xff]
        %v7901 = vld [vmem:[%s686 + $0x18] sm:$0xff]
        %7903 = vset.pattern.permute.xlu0 0
        %7904 = vperm.xlu0 %7903, %v7898
        %v7905 = vpop.permute.xlu0 %7904
        %7908 = vset.pattern.permute.xlu0 0
        %7909 = vperm.xlu0 %7908, %v7899
        %v7910 = vpop.permute.xlu0 %7909
        %7913 = vset.pattern.permute.xlu0 0
        %7914 = vperm.xlu0 %7913, %v7900
        %v7915 = vpop.permute.xlu0 %7914
        %7918 = vset.pattern.permute.xlu0 0
        %7919 = vperm.xlu0 %7918, %v7901
        %v7920 = vpop.permute.xlu0 %7919
        %v7923 = vlaneseq
        %v7924 = vshrl.u32 %v7923, 7
        %v7925 = vsub.s32 0, %v7924
        %v7926 = vrot.slane %v7897, %v7925
        %v7927 = vlaneseq
        %v7928 = vshrl.u32 %v7927, 7
        %v7929 = vsub.s32 1, %v7928
        %v7930 = vrot.slane %v7897, %v7929
        %v7933 = vmul.f32 %v7905, %v7926
        %v7934 = vmul.f32 %v7905, %v7930
        %v7935 = vmul.f32 %v7910, %v7926
        %v7936 = vmul.f32 %v7910, %v7930
        %v7937 = vmul.f32 %v7915, %v7926
        %v7938 = vmul.f32 %v7915, %v7930
        %v7939 = vmul.f32 %v7920, %v7926
        %v7940 = vmul.f32 %v7920, %v7930
        %7949 = vrot.lane.b32.xlu0 %v7933, 72
        %v7950 = vpop.permute.xlu0 %7949
        %7951 = vrot.lane.b32.xlu0 %v7934, 72
        %v7952 = vpop.permute.xlu0 %7951
        %7953 = vrot.lane.b32.xlu0 %v7935, 72
        %v7954 = vpop.permute.xlu0 %7953
        %7955 = vrot.lane.b32.xlu0 %v7936, 72
        %v7956 = vpop.permute.xlu0 %7955
        %7957 = vrot.lane.b32.xlu0 %v7937, 72
        %v7958 = vpop.permute.xlu0 %7957
        %7959 = vrot.lane.b32.xlu0 %v7938, 72
        %v7960 = vpop.permute.xlu0 %7959
        %7961 = vrot.lane.b32.xlu0 %v7939, 72
        %v7962 = vpop.permute.xlu0 %7961
        %7963 = vrot.lane.b32.xlu0 %v7940, 72
        %v7964 = vpop.permute.xlu0 %7963
        %v7965 = vsel %vm237, %v7950, %v7952
        %v7966 = vsel %vm237, %v7954, %v7956
        %v7967 = vsel %vm237, %v7958, %v7960
        %v7968 = vsel %vm237, %v7962, %v7964
        %v7981 = vadd.f32 %v7885, %v7950
        %v7982 = vadd.f32 %v7886, %v7965
        %v7983 = vadd.f32 %v7887, %v7952
        %v7984 = vadd.f32 %v7888, %v7954
        %v7985 = vadd.f32 %v7889, %v7966
        %v7986 = vadd.f32 %v7890, %v7956
        %v7987 = vadd.f32 %v7891, %v7958
        %v7988 = vadd.f32 %v7892, %v7967
        %v7989 = vadd.f32 %v7893, %v7960
        %v7990 = vadd.f32 %v7894, %v7962
        %v7991 = vadd.f32 %v7895, %v7968
        %v7992 = vadd.f32 %v7896, %v7964
        %v7993 = vld [vmem:[%s192 + $0xd] sm:$0x7]
        %7994 = vrot.lane.b32.xlu0 %v7451, 1
        %v7995 = vpop.permute.xlu0 %7994
        %v7996 = vrot.slane %v7995, 7
        %v7997 = vsel %vm786, %v7996, %v7995
        %v7999 = vmul.f32 %v7993, %v7997
        %v8000 = vld [vmem:[%s790] sm:$0xff]
        %v8001 = vld [vmem:[%s790 + $0x8] sm:$0xff]
        %v8002 = vld [vmem:[%s790 + $0x10] sm:$0xff]
        %v8003 = vld [vmem:[%s790 + $0x18] sm:$0xff]
        %8005 = vset.pattern.permute.xlu0 0
        %8006 = vperm.xlu0 %8005, %v8000
        %v8007 = vpop.permute.xlu0 %8006
        %8010 = vset.pattern.permute.xlu0 0
        %8011 = vperm.xlu0 %8010, %v8001
        %v8012 = vpop.permute.xlu0 %8011
        %8015 = vset.pattern.permute.xlu0 0
        %8016 = vperm.xlu0 %8015, %v8002
        %v8017 = vpop.permute.xlu0 %8016
        %8020 = vset.pattern.permute.xlu0 0
        %8021 = vperm.xlu0 %8020, %v8003
        %v8022 = vpop.permute.xlu0 %8021
        %v8025 = vlaneseq
        %v8026 = vshrl.u32 %v8025, 7
        %v8027 = vsub.s32 0, %v8026
        %v8028 = vrot.slane %v7999, %v8027
        %v8029 = vlaneseq
        %v8030 = vshrl.u32 %v8029, 7
        %v8031 = vsub.s32 1, %v8030
        %v8032 = vrot.slane %v7999, %v8031
        %v8033 = vlaneseq
        %v8034 = vshrl.u32 %v8033, 7
        %v8035 = vsub.s32 2, %v8034
        %v8036 = vrot.slane %v7999, %v8035
        %v8040 = vmul.f32 %v8007, %v8028
        %v8041 = vmul.f32 %v8007, %v8032
        %v8042 = vmul.f32 %v8007, %v8036
        %v8043 = vmul.f32 %v8012, %v8028
        %v8044 = vmul.f32 %v8012, %v8032
        %v8045 = vmul.f32 %v8012, %v8036
        %v8046 = vmul.f32 %v8017, %v8028
        %v8047 = vmul.f32 %v8017, %v8032
        %v8048 = vmul.f32 %v8017, %v8036
        %v8049 = vmul.f32 %v8022, %v8028
        %v8050 = vmul.f32 %v8022, %v8032
        %v8051 = vmul.f32 %v8022, %v8036
        %8064 = vrot.lane.b32.xlu0 %v8040, 71
        %v8065 = vpop.permute.xlu0 %8064
        %8066 = vrot.lane.b32.xlu0 %v8041, 71
        %v8067 = vpop.permute.xlu0 %8066
        %8068 = vrot.lane.b32.xlu0 %v8042, 71
        %v8069 = vpop.permute.xlu0 %8068
        %8070 = vrot.lane.b32.xlu0 %v8043, 71
        %v8071 = vpop.permute.xlu0 %8070
        %8072 = vrot.lane.b32.xlu0 %v8044, 71
        %v8073 = vpop.permute.xlu0 %8072
        %8074 = vrot.lane.b32.xlu0 %v8045, 71
        %v8075 = vpop.permute.xlu0 %8074
        %8076 = vrot.lane.b32.xlu0 %v8046, 71
        %v8077 = vpop.permute.xlu0 %8076
        %8078 = vrot.lane.b32.xlu0 %v8047, 71
        %v8079 = vpop.permute.xlu0 %8078
        %8080 = vrot.lane.b32.xlu0 %v8048, 71
        %v8081 = vpop.permute.xlu0 %8080
        %8082 = vrot.lane.b32.xlu0 %v8049, 71
        %v8083 = vpop.permute.xlu0 %8082
        %8084 = vrot.lane.b32.xlu0 %v8050, 71
        %v8085 = vpop.permute.xlu0 %8084
        %8086 = vrot.lane.b32.xlu0 %v8051, 71
        %v8087 = vpop.permute.xlu0 %8086
        %v8088 = vsel %vm879, %v8065, %v8067
        %v8089 = vsel %vm879, %v8067, %v8069
        %v8090 = vsel %vm879, %v8071, %v8073
        %v8091 = vsel %vm879, %v8073, %v8075
        %v8092 = vsel %vm879, %v8077, %v8079
        %v8093 = vsel %vm879, %v8079, %v8081
        %v8094 = vsel %vm879, %v8083, %v8085
        %v8095 = vsel %vm879, %v8085, %v8087
        %v8108 = vadd.f32 %v7981, %v8065
        %v8109 = vadd.f32 %v7982, %v8088
        %v8110 = vadd.f32 %v7983, %v8089
        %v8111 = vadd.f32 %v7984, %v8071
        %v8112 = vadd.f32 %v7985, %v8090
        %v8113 = vadd.f32 %v7986, %v8091
        %v8114 = vadd.f32 %v7987, %v8077
        %v8115 = vadd.f32 %v7988, %v8092
        %v8116 = vadd.f32 %v7989, %v8093
        %v8117 = vadd.f32 %v7990, %v8083
        %v8118 = vadd.f32 %v7991, %v8094
        %v8119 = vadd.f32 %v7992, %v8095
        %8120 = vrot.lane.b32.xlu0 %v7449, 54
        %v8121 = vpop.permute.xlu0 %8120
        %v8122 = vrot.slane %v8121, 7
        %v8123 = vsel %vm915, %v8122, %v8121
        %v8125 = vmul.f32 %v7993, %v8123
        %v8126 = vld [vmem:[%s919] sm:$0xff]
        %v8127 = vld [vmem:[%s919 + $0x8] sm:$0xff]
        %v8128 = vld [vmem:[%s919 + $0x10] sm:$0xff]
        %v8129 = vld [vmem:[%s919 + $0x18] sm:$0xff]
        %8131 = vset.pattern.permute.xlu0 0
        %8132 = vperm.xlu0 %8131, %v8126
        %v8133 = vpop.permute.xlu0 %8132
        %8136 = vset.pattern.permute.xlu0 0
        %8137 = vperm.xlu0 %8136, %v8127
        %v8138 = vpop.permute.xlu0 %8137
        %8141 = vset.pattern.permute.xlu0 0
        %8142 = vperm.xlu0 %8141, %v8128
        %v8143 = vpop.permute.xlu0 %8142
        %8146 = vset.pattern.permute.xlu0 0
        %8147 = vperm.xlu0 %8146, %v8129
        %v8148 = vpop.permute.xlu0 %8147
        %v8151 = vlaneseq
        %v8152 = vshrl.u32 %v8151, 7
        %v8153 = vsub.s32 0, %v8152
        %v8154 = vrot.slane %v8125, %v8153
        %v8155 = vlaneseq
        %v8156 = vshrl.u32 %v8155, 7
        %v8157 = vsub.s32 1, %v8156
        %v8158 = vrot.slane %v8125, %v8157
        %v8159 = vlaneseq
        %v8160 = vshrl.u32 %v8159, 7
        %v8161 = vsub.s32 2, %v8160
        %v8162 = vrot.slane %v8125, %v8161
        %v8166 = vmul.f32 %v8133, %v8154
        %v8167 = vmul.f32 %v8133, %v8158
        %v8168 = vmul.f32 %v8133, %v8162
        %v8169 = vmul.f32 %v8138, %v8154
        %v8170 = vmul.f32 %v8138, %v8158
        %v8171 = vmul.f32 %v8138, %v8162
        %v8172 = vmul.f32 %v8143, %v8154
        %v8173 = vmul.f32 %v8143, %v8158
        %v8174 = vmul.f32 %v8143, %v8162
        %v8175 = vmul.f32 %v8148, %v8154
        %v8176 = vmul.f32 %v8148, %v8158
        %v8177 = vmul.f32 %v8148, %v8162
        %8190 = vrot.lane.b32.xlu0 %v8166, 18
        %v8191 = vpop.permute.xlu0 %8190
        %8192 = vrot.lane.b32.xlu0 %v8167, 18
        %v8193 = vpop.permute.xlu0 %8192
        %8194 = vrot.lane.b32.xlu0 %v8168, 18
        %v8195 = vpop.permute.xlu0 %8194
        %8196 = vrot.lane.b32.xlu0 %v8169, 18
        %v8197 = vpop.permute.xlu0 %8196
        %8198 = vrot.lane.b32.xlu0 %v8170, 18
        %v8199 = vpop.permute.xlu0 %8198
        %8200 = vrot.lane.b32.xlu0 %v8171, 18
        %v8201 = vpop.permute.xlu0 %8200
        %8202 = vrot.lane.b32.xlu0 %v8172, 18
        %v8203 = vpop.permute.xlu0 %8202
        %8204 = vrot.lane.b32.xlu0 %v8173, 18
        %v8205 = vpop.permute.xlu0 %8204
        %8206 = vrot.lane.b32.xlu0 %v8174, 18
        %v8207 = vpop.permute.xlu0 %8206
        %8208 = vrot.lane.b32.xlu0 %v8175, 18
        %v8209 = vpop.permute.xlu0 %8208
        %8210 = vrot.lane.b32.xlu0 %v8176, 18
        %v8211 = vpop.permute.xlu0 %8210
        %8212 = vrot.lane.b32.xlu0 %v8177, 18
        %v8213 = vpop.permute.xlu0 %8212
        %v8214 = vsel %vm1008, %v8191, %v8193
        %v8215 = vsel %vm1008, %v8193, %v8195
        %v8216 = vsel %vm1008, %v8197, %v8199
        %v8217 = vsel %vm1008, %v8199, %v8201
        %v8218 = vsel %vm1008, %v8203, %v8205
        %v8219 = vsel %vm1008, %v8205, %v8207
        %v8220 = vsel %vm1008, %v8209, %v8211
        %v8221 = vsel %vm1008, %v8211, %v8213
        %v8234 = vadd.f32 %v8108, %v8191
        %v8235 = vadd.f32 %v8109, %v8214
        %v8236 = vadd.f32 %v8110, %v8215
        %v8237 = vadd.f32 %v8111, %v8197
        %v8238 = vadd.f32 %v8112, %v8216
        %v8239 = vadd.f32 %v8113, %v8217
        %v8240 = vadd.f32 %v8114, %v8203
        %v8241 = vadd.f32 %v8115, %v8218
        %v8242 = vadd.f32 %v8116, %v8219
        %v8243 = vadd.f32 %v8117, %v8209
        %v8244 = vadd.f32 %v8118, %v8220
        %v8245 = vadd.f32 %v8119, %v8221
        %v8246 = vld [vmem:[%s1041] sm:$0xff]
        %v8247 = vld [vmem:[%s1041 + $0x8] sm:$0xff]
        %v8248 = vld [vmem:[%s1041 + $0x10] sm:$0xff]
        %v8249 = vld [vmem:[%s1041 + $0x18] sm:$0xff]
        %8251 = vset.pattern.permute.xlu0 0
        %8252 = vperm.xlu0 %8251, %v8246
        %v8253 = vpop.permute.xlu0 %8252
        %8256 = vset.pattern.permute.xlu0 0
        %8257 = vperm.xlu0 %8256, %v8247
        %v8258 = vpop.permute.xlu0 %8257
        %8261 = vset.pattern.permute.xlu0 0
        %8262 = vperm.xlu0 %8261, %v8248
        %v8263 = vpop.permute.xlu0 %8262
        %8266 = vset.pattern.permute.xlu0 0
        %8267 = vperm.xlu0 %8266, %v8249
        %v8268 = vpop.permute.xlu0 %8267
        %v8271 = vlaneseq
        %v8272 = vshrl.u32 %v8271, 7
        %v8273 = vsub.s32 0, %v8272
        %v8274 = vrot.slane %v7993, %v8273
        %v8275 = vlaneseq
        %v8276 = vshrl.u32 %v8275, 7
        %v8277 = vsub.s32 1, %v8276
        %v8278 = vrot.slane %v7993, %v8277
        %v8279 = vlaneseq
        %v8280 = vshrl.u32 %v8279, 7
        %v8281 = vsub.s32 2, %v8280
        %v8282 = vrot.slane %v7993, %v8281
        %v8286 = vmul.f32 %v8253, %v8274
        %v8287 = vmul.f32 %v8253, %v8278
        %v8288 = vmul.f32 %v8253, %v8282
        %v8289 = vmul.f32 %v8258, %v8274
        %v8290 = vmul.f32 %v8258, %v8278
        %v8291 = vmul.f32 %v8258, %v8282
        %v8292 = vmul.f32 %v8263, %v8274
        %v8293 = vmul.f32 %v8263, %v8278
        %v8294 = vmul.f32 %v8263, %v8282
        %v8295 = vmul.f32 %v8268, %v8274
        %v8296 = vmul.f32 %v8268, %v8278
        %v8297 = vmul.f32 %v8268, %v8282
        %8310 = vrot.lane.b32.xlu0 %v8286, 17
        %v8311 = vpop.permute.xlu0 %8310
        %8312 = vrot.lane.b32.xlu0 %v8287, 17
        %v8313 = vpop.permute.xlu0 %8312
        %8314 = vrot.lane.b32.xlu0 %v8288, 17
        %v8315 = vpop.permute.xlu0 %8314
        %8316 = vrot.lane.b32.xlu0 %v8289, 17
        %v8317 = vpop.permute.xlu0 %8316
        %8318 = vrot.lane.b32.xlu0 %v8290, 17
        %v8319 = vpop.permute.xlu0 %8318
        %8320 = vrot.lane.b32.xlu0 %v8291, 17
        %v8321 = vpop.permute.xlu0 %8320
        %8322 = vrot.lane.b32.xlu0 %v8292, 17
        %v8323 = vpop.permute.xlu0 %8322
        %8324 = vrot.lane.b32.xlu0 %v8293, 17
        %v8325 = vpop.permute.xlu0 %8324
        %8326 = vrot.lane.b32.xlu0 %v8294, 17
        %v8327 = vpop.permute.xlu0 %8326
        %8328 = vrot.lane.b32.xlu0 %v8295, 17
        %v8329 = vpop.permute.xlu0 %8328
        %8330 = vrot.lane.b32.xlu0 %v8296, 17
        %v8331 = vpop.permute.xlu0 %8330
        %8332 = vrot.lane.b32.xlu0 %v8297, 17
        %v8333 = vpop.permute.xlu0 %8332
        %v8334 = vsel %vm1130, %v8311, %v8313
        %v8335 = vsel %vm1130, %v8313, %v8315
        %v8336 = vsel %vm1130, %v8317, %v8319
        %v8337 = vsel %vm1130, %v8319, %v8321
        %v8338 = vsel %vm1130, %v8323, %v8325
        %v8339 = vsel %vm1130, %v8325, %v8327
        %v8340 = vsel %vm1130, %v8329, %v8331
        %v8341 = vsel %vm1130, %v8331, %v8333
        %v8354 = vadd.f32 %v8234, %v8311
        %v8355 = vadd.f32 %v8235, %v8334
        %v8356 = vadd.f32 %v8236, %v8335
        %v8357 = vadd.f32 %v8237, %v8317
        %v8358 = vadd.f32 %v8238, %v8336
        %v8359 = vadd.f32 %v8239, %v8337
        %v8360 = vadd.f32 %v8240, %v8323
        %v8361 = vadd.f32 %v8241, %v8338
        %v8362 = vadd.f32 %v8242, %v8339
        %v8363 = vadd.f32 %v8243, %v8329
        %v8364 = vadd.f32 %v8244, %v8340
        %v8365 = vadd.f32 %v8245, %v8341
        %8366 = vrot.lane.b32.xlu0 %v7451, 56
        %v8367 = vpop.permute.xlu0 %8366
        %v8368 = vrot.slane %v8367, 7
        %v8369 = vsel %vm1166, %v8368, %v8367
        %v8371 = vmul.f32 %v7993, %v8369
        %v8372 = vld [vmem:[%s1170] sm:$0xff]
        %v8373 = vld [vmem:[%s1170 + $0x8] sm:$0xff]
        %v8374 = vld [vmem:[%s1170 + $0x10] sm:$0xff]
        %v8375 = vld [vmem:[%s1170 + $0x18] sm:$0xff]
        %8377 = vset.pattern.permute.xlu0 0
        %8378 = vperm.xlu0 %8377, %v8372
        %v8379 = vpop.permute.xlu0 %8378
        %8382 = vset.pattern.permute.xlu0 0
        %8383 = vperm.xlu0 %8382, %v8373
        %v8384 = vpop.permute.xlu0 %8383
        %8387 = vset.pattern.permute.xlu0 0
        %8388 = vperm.xlu0 %8387, %v8374
        %v8389 = vpop.permute.xlu0 %8388
        %8392 = vset.pattern.permute.xlu0 0
        %8393 = vperm.xlu0 %8392, %v8375
        %v8394 = vpop.permute.xlu0 %8393
        %v8397 = vlaneseq
        %v8398 = vshrl.u32 %v8397, 7
        %v8399 = vsub.s32 0, %v8398
        %v8400 = vrot.slane %v8371, %v8399
        %v8401 = vlaneseq
        %v8402 = vshrl.u32 %v8401, 7
        %v8403 = vsub.s32 1, %v8402
        %v8404 = vrot.slane %v8371, %v8403
        %v8405 = vlaneseq
        %v8406 = vshrl.u32 %v8405, 7
        %v8407 = vsub.s32 2, %v8406
        %v8408 = vrot.slane %v8371, %v8407
        %v8412 = vmul.f32 %v8379, %v8400
        %v8413 = vmul.f32 %v8379, %v8404
        %v8414 = vmul.f32 %v8379, %v8408
        %v8415 = vmul.f32 %v8384, %v8400
        %v8416 = vmul.f32 %v8384, %v8404
        %v8417 = vmul.f32 %v8384, %v8408
        %v8418 = vmul.f32 %v8389, %v8400
        %v8419 = vmul.f32 %v8389, %v8404
        %v8420 = vmul.f32 %v8389, %v8408
        %v8421 = vmul.f32 %v8394, %v8400
        %v8422 = vmul.f32 %v8394, %v8404
        %v8423 = vmul.f32 %v8394, %v8408
        %8436 = vrot.lane.b32.xlu0 %v8412, 16
        %v8437 = vpop.permute.xlu0 %8436
        %8438 = vrot.lane.b32.xlu0 %v8413, 16
        %v8439 = vpop.permute.xlu0 %8438
        %8440 = vrot.lane.b32.xlu0 %v8414, 16
        %v8441 = vpop.permute.xlu0 %8440
        %8442 = vrot.lane.b32.xlu0 %v8415, 16
        %v8443 = vpop.permute.xlu0 %8442
        %8444 = vrot.lane.b32.xlu0 %v8416, 16
        %v8445 = vpop.permute.xlu0 %8444
        %8446 = vrot.lane.b32.xlu0 %v8417, 16
        %v8447 = vpop.permute.xlu0 %8446
        %8448 = vrot.lane.b32.xlu0 %v8418, 16
        %v8449 = vpop.permute.xlu0 %8448
        %8450 = vrot.lane.b32.xlu0 %v8419, 16
        %v8451 = vpop.permute.xlu0 %8450
        %8452 = vrot.lane.b32.xlu0 %v8420, 16
        %v8453 = vpop.permute.xlu0 %8452
        %8454 = vrot.lane.b32.xlu0 %v8421, 16
        %v8455 = vpop.permute.xlu0 %8454
        %8456 = vrot.lane.b32.xlu0 %v8422, 16
        %v8457 = vpop.permute.xlu0 %8456
        %8458 = vrot.lane.b32.xlu0 %v8423, 16
        %v8459 = vpop.permute.xlu0 %8458
        %v8460 = vsel %vm1259, %v8437, %v8439
        %v8461 = vsel %vm1259, %v8439, %v8441
        %v8462 = vsel %vm1259, %v8443, %v8445
        %v8463 = vsel %vm1259, %v8445, %v8447
        %v8464 = vsel %vm1259, %v8449, %v8451
        %v8465 = vsel %vm1259, %v8451, %v8453
        %v8466 = vsel %vm1259, %v8455, %v8457
        %v8467 = vsel %vm1259, %v8457, %v8459
        %v8480 = vadd.f32 %v8354, %v8437
        %v8481 = vadd.f32 %v8355, %v8460
        %v8482 = vadd.f32 %v8356, %v8461
        %v8483 = vadd.f32 %v8357, %v8443
        %v8484 = vadd.f32 %v8358, %v8462
        %v8485 = vadd.f32 %v8359, %v8463
        %v8486 = vadd.f32 %v8360, %v8449
        %v8487 = vadd.f32 %v8361, %v8464
        %v8488 = vadd.f32 %v8362, %v8465
        %v8489 = vadd.f32 %v8363, %v8455
        %v8490 = vadd.f32 %v8364, %v8466
        %v8491 = vadd.f32 %v8365, %v8467
        %8504 = vrot.lane.b32.xlu0 %v8480, 56
        %v8505 = vpop.permute.xlu0 %8504
        %8506 = vrot.lane.b32.xlu0 %v8481, 56
        %v8507 = vpop.permute.xlu0 %8506
        %8508 = vrot.lane.b32.xlu0 %v8482, 56
        %v8509 = vpop.permute.xlu0 %8508
        %8510 = vrot.lane.b32.xlu0 %v8483, 56
        %v8511 = vpop.permute.xlu0 %8510
        %8512 = vrot.lane.b32.xlu0 %v8484, 56
        %v8513 = vpop.permute.xlu0 %8512
        %8514 = vrot.lane.b32.xlu0 %v8485, 56
        %v8515 = vpop.permute.xlu0 %8514
        %8516 = vrot.lane.b32.xlu0 %v8486, 56
        %v8517 = vpop.permute.xlu0 %8516
        %8518 = vrot.lane.b32.xlu0 %v8487, 56
        %v8519 = vpop.permute.xlu0 %8518
        %8520 = vrot.lane.b32.xlu0 %v8488, 56
        %v8521 = vpop.permute.xlu0 %8520
        %8522 = vrot.lane.b32.xlu0 %v8489, 56
        %v8523 = vpop.permute.xlu0 %8522
        %8524 = vrot.lane.b32.xlu0 %v8490, 56
        %v8525 = vpop.permute.xlu0 %8524
        %8526 = vrot.lane.b32.xlu0 %v8491, 56
        %v8527 = vpop.permute.xlu0 %8526
        %v8528 = vsel %vm1166, %v8505, %v8507
        %v8529 = vsel %vm1166, %v8507, %v8509
        %v8530 = vsel %vm1166, %v8511, %v8513
        %v8531 = vsel %vm1166, %v8513, %v8515
        %v8532 = vsel %vm1166, %v8517, %v8519
        %v8533 = vsel %vm1166, %v8519, %v8521
        %v8534 = vsel %vm1166, %v8523, %v8525
        %v8535 = vsel %vm1166, %v8525, %v8527
        %v8544 = vadd.f32 %v8528, %v8529
        %8545 = vadd.xlane.f32.xlu0 %v8544
        %v8546 = vpop.xlane.xlu0 %8545
        %v8547 = vadd.f32 %v8530, %v8531
        %8548 = vadd.xlane.f32.xlu0 %v8547
        %v8549 = vpop.xlane.xlu0 %8548
        %v8550 = vadd.f32 %v8532, %v8533
        %8551 = vadd.xlane.f32.xlu0 %v8550
        %v8552 = vpop.xlane.xlu0 %8551
        %v8553 = vadd.f32 %v8534, %v8535
        %8554 = vadd.xlane.f32.xlu0 %v8553
        %v8555 = vpop.xlane.xlu0 %8554
        %v8556 = vadd.f32 %v7356, %v8546
        %v8557 = vadd.f32 %v7357, %v8549
        %v8558 = vadd.f32 %v7358, %v8552
        %v8559 = vadd.f32 %v7359, %v8555
        %v8560 = vmul.f32 %v8480, %v8480
        %v8561 = vmul.f32 %v8481, %v8481
        %v8562 = vmul.f32 %v8482, %v8482
        %v8563 = vmul.f32 %v8483, %v8483
        %v8564 = vmul.f32 %v8484, %v8484
        %v8565 = vmul.f32 %v8485, %v8485
        %v8566 = vmul.f32 %v8486, %v8486
        %v8567 = vmul.f32 %v8487, %v8487
        %v8568 = vmul.f32 %v8488, %v8488
        %v8569 = vmul.f32 %v8489, %v8489
        %v8570 = vmul.f32 %v8490, %v8490
        %v8571 = vmul.f32 %v8491, %v8491
        %8584 = vrot.lane.b32.xlu0 %v8560, 56
        %v8585 = vpop.permute.xlu0 %8584
        %8586 = vrot.lane.b32.xlu0 %v8561, 56
        %v8587 = vpop.permute.xlu0 %8586
        %8588 = vrot.lane.b32.xlu0 %v8562, 56
        %v8589 = vpop.permute.xlu0 %8588
        %8590 = vrot.lane.b32.xlu0 %v8563, 56
        %v8591 = vpop.permute.xlu0 %8590
        %8592 = vrot.lane.b32.xlu0 %v8564, 56
        %v8593 = vpop.permute.xlu0 %8592
        %8594 = vrot.lane.b32.xlu0 %v8565, 56
        %v8595 = vpop.permute.xlu0 %8594
        %8596 = vrot.lane.b32.xlu0 %v8566, 56
        %v8597 = vpop.permute.xlu0 %8596
        %8598 = vrot.lane.b32.xlu0 %v8567, 56
        %v8599 = vpop.permute.xlu0 %8598
        %8600 = vrot.lane.b32.xlu0 %v8568, 56
        %v8601 = vpop.permute.xlu0 %8600
        %8602 = vrot.lane.b32.xlu0 %v8569, 56
        %v8603 = vpop.permute.xlu0 %8602
        %8604 = vrot.lane.b32.xlu0 %v8570, 56
        %v8605 = vpop.permute.xlu0 %8604
        %8606 = vrot.lane.b32.xlu0 %v8571, 56
        %v8607 = vpop.permute.xlu0 %8606
        %v8608 = vsel %vm1166, %v8585, %v8587
        %v8609 = vsel %vm1166, %v8587, %v8589
        %v8610 = vsel %vm1166, %v8591, %v8593
        %v8611 = vsel %vm1166, %v8593, %v8595
        %v8612 = vsel %vm1166, %v8597, %v8599
        %v8613 = vsel %vm1166, %v8599, %v8601
        %v8614 = vsel %vm1166, %v8603, %v8605
        %v8615 = vsel %vm1166, %v8605, %v8607
        %v8624 = vadd.f32 %v8608, %v8609
        %8625 = vadd.xlane.f32.xlu0 %v8624
        %v8626 = vpop.xlane.xlu0 %8625
        %v8627 = vadd.f32 %v8610, %v8611
        %8628 = vadd.xlane.f32.xlu0 %v8627
        %v8629 = vpop.xlane.xlu0 %8628
        %v8630 = vadd.f32 %v8612, %v8613
        %8631 = vadd.xlane.f32.xlu0 %v8630
        %v8632 = vpop.xlane.xlu0 %8631
        %v8633 = vadd.f32 %v8614, %v8615
        %8634 = vadd.xlane.f32.xlu0 %v8633
        %v8635 = vpop.xlane.xlu0 %8634
        %v8636 = vadd.f32 %v7436, %v8626
        %v8637 = vadd.f32 %v7437, %v8629
        %v8638 = vadd.f32 %v7438, %v8632
        %v8639 = vadd.f32 %v7439, %v8635
        %8640 = vst [vmem:[%s188 + $0x68] sm:$0xff] %v8528
        %8641 = vst [vmem:[%s188 + $0x70] sm:$0xff] %v8529
        %8642 = vst [vmem:[%s188 + $0xf8] sm:$0xff] %v8530
        %8643 = vst [vmem:[%s188 + $0x100] sm:$0xff] %v8531
        %8644 = vst [vmem:[%s188 + $0x188] sm:$0xff] %v8532
        %8645 = vst [vmem:[%s188 + $0x190] sm:$0xff] %v8533
        %8646 = vst [vmem:[%s188 + $0x218] sm:$0xff] %v8534
        %8647 = vst [vmem:[%s188 + $0x220] sm:$0xff] %v8535
        %s8648 = scalar_lea.vmem %s3, 56
        %v8649 = vld [vmem:[%s8648] ss:$4 sm:$0x3]
        %s8650 = scalar_lea.vmem %s3, 57
        %v8651 = vld [vmem:[%s8650] ss:$4 sm:$0x3]
        %v8652 = vld [vmem:[%s192 + $0xe] sm:$0x7]
        %8654 = vrot.lane.b32.xlu0 %v8649, 72
        %v8655 = vpop.permute.xlu0 %8654
        %v8656 = vrot.slane %v8655, 7
        %v8657 = vsel %vm237, %v8656, %v8655
        %v8659 = vmul.f32 %v8652, %v8657
        %v8660 = vld [vmem:[%s1] sm:$0xff]
        %v8661 = vld [vmem:[%s1 + $0x8] sm:$0xff]
        %v8662 = vld [vmem:[%s1 + $0x10] sm:$0xff]
        %v8663 = vld [vmem:[%s1 + $0x18] sm:$0xff]
        %8665 = vset.pattern.permute.xlu0 0
        %8666 = vperm.xlu0 %8665, %v8660
        %v8667 = vpop.permute.xlu0 %8666
        %8670 = vset.pattern.permute.xlu0 0
        %8671 = vperm.xlu0 %8670, %v8661
        %v8672 = vpop.permute.xlu0 %8671
        %8675 = vset.pattern.permute.xlu0 0
        %8676 = vperm.xlu0 %8675, %v8662
        %v8677 = vpop.permute.xlu0 %8676
        %8680 = vset.pattern.permute.xlu0 0
        %8681 = vperm.xlu0 %8680, %v8663
        %v8682 = vpop.permute.xlu0 %8681
        %v8685 = vlaneseq
        %v8686 = vshrl.u32 %v8685, 7
        %v8687 = vsub.s32 0, %v8686
        %v8688 = vrot.slane %v8659, %v8687
        %v8689 = vlaneseq
        %v8690 = vshrl.u32 %v8689, 7
        %v8691 = vsub.s32 1, %v8690
        %v8692 = vrot.slane %v8659, %v8691
        %v8693 = vlaneseq
        %v8694 = vshrl.u32 %v8693, 7
        %v8695 = vsub.s32 2, %v8694
        %v8696 = vrot.slane %v8659, %v8695
        %v8700 = vmul.f32 %v8667, %v8688
        %v8701 = vmul.f32 %v8667, %v8692
        %v8702 = vmul.f32 %v8667, %v8696
        %v8703 = vmul.f32 %v8672, %v8688
        %v8704 = vmul.f32 %v8672, %v8692
        %v8705 = vmul.f32 %v8672, %v8696
        %v8706 = vmul.f32 %v8677, %v8688
        %v8707 = vmul.f32 %v8677, %v8692
        %v8708 = vmul.f32 %v8677, %v8696
        %v8709 = vmul.f32 %v8682, %v8688
        %v8710 = vmul.f32 %v8682, %v8692
        %v8711 = vmul.f32 %v8682, %v8696
        %v8712 = vadd.f32 %v228, %v8700
        %v8713 = vadd.f32 %v228, %v8701
        %v8714 = vadd.f32 %v228, %v8702
        %v8715 = vadd.f32 %v229, %v8703
        %v8716 = vadd.f32 %v229, %v8704
        %v8717 = vadd.f32 %v229, %v8705
        %v8718 = vadd.f32 %v230, %v8706
        %v8719 = vadd.f32 %v230, %v8707
        %v8720 = vadd.f32 %v230, %v8708
        %v8721 = vadd.f32 %v231, %v8709
        %v8722 = vadd.f32 %v231, %v8710
        %v8723 = vadd.f32 %v231, %v8711
        %v8724 = vld [vmem:[%s305] sm:$0xff]
        %v8725 = vld [vmem:[%s305 + $0x8] sm:$0xff]
        %v8726 = vld [vmem:[%s305 + $0x10] sm:$0xff]
        %v8727 = vld [vmem:[%s305 + $0x18] sm:$0xff]
        %8729 = vset.pattern.permute.xlu0 0
        %8730 = vperm.xlu0 %8729, %v8724
        %v8731 = vpop.permute.xlu0 %8730
        %8734 = vset.pattern.permute.xlu0 0
        %8735 = vperm.xlu0 %8734, %v8725
        %v8736 = vpop.permute.xlu0 %8735
        %8739 = vset.pattern.permute.xlu0 0
        %8740 = vperm.xlu0 %8739, %v8726
        %v8741 = vpop.permute.xlu0 %8740
        %8744 = vset.pattern.permute.xlu0 0
        %8745 = vperm.xlu0 %8744, %v8727
        %v8746 = vpop.permute.xlu0 %8745
        %v8749 = vlaneseq
        %v8750 = vshrl.u32 %v8749, 7
        %v8751 = vsub.s32 0, %v8750
        %v8752 = vrot.slane %v8652, %v8751
        %v8753 = vlaneseq
        %v8754 = vshrl.u32 %v8753, 7
        %v8755 = vsub.s32 1, %v8754
        %v8756 = vrot.slane %v8652, %v8755
        %v8757 = vlaneseq
        %v8758 = vshrl.u32 %v8757, 7
        %v8759 = vsub.s32 2, %v8758
        %v8760 = vrot.slane %v8652, %v8759
        %v8764 = vmul.f32 %v8731, %v8752
        %v8765 = vmul.f32 %v8731, %v8756
        %v8766 = vmul.f32 %v8731, %v8760
        %v8767 = vmul.f32 %v8736, %v8752
        %v8768 = vmul.f32 %v8736, %v8756
        %v8769 = vmul.f32 %v8736, %v8760
        %v8770 = vmul.f32 %v8741, %v8752
        %v8771 = vmul.f32 %v8741, %v8756
        %v8772 = vmul.f32 %v8741, %v8760
        %v8773 = vmul.f32 %v8746, %v8752
        %v8774 = vmul.f32 %v8746, %v8756
        %v8775 = vmul.f32 %v8746, %v8760
        %8788 = vrot.lane.b32.xlu0 %v8764, 127
        %v8789 = vpop.permute.xlu0 %8788
        %8790 = vrot.lane.b32.xlu0 %v8765, 127
        %v8791 = vpop.permute.xlu0 %8790
        %8792 = vrot.lane.b32.xlu0 %v8766, 127
        %v8793 = vpop.permute.xlu0 %8792
        %8794 = vrot.lane.b32.xlu0 %v8767, 127
        %v8795 = vpop.permute.xlu0 %8794
        %8796 = vrot.lane.b32.xlu0 %v8768, 127
        %v8797 = vpop.permute.xlu0 %8796
        %8798 = vrot.lane.b32.xlu0 %v8769, 127
        %v8799 = vpop.permute.xlu0 %8798
        %8800 = vrot.lane.b32.xlu0 %v8770, 127
        %v8801 = vpop.permute.xlu0 %8800
        %8802 = vrot.lane.b32.xlu0 %v8771, 127
        %v8803 = vpop.permute.xlu0 %8802
        %8804 = vrot.lane.b32.xlu0 %v8772, 127
        %v8805 = vpop.permute.xlu0 %8804
        %8806 = vrot.lane.b32.xlu0 %v8773, 127
        %v8807 = vpop.permute.xlu0 %8806
        %8808 = vrot.lane.b32.xlu0 %v8774, 127
        %v8809 = vpop.permute.xlu0 %8808
        %8810 = vrot.lane.b32.xlu0 %v8775, 127
        %v8811 = vpop.permute.xlu0 %8810
        %v8812 = vsel %vm394, %v8789, %v8791
        %v8813 = vsel %vm394, %v8791, %v8793
        %v8814 = vsel %vm394, %v8795, %v8797
        %v8815 = vsel %vm394, %v8797, %v8799
        %v8816 = vsel %vm394, %v8801, %v8803
        %v8817 = vsel %vm394, %v8803, %v8805
        %v8818 = vsel %vm394, %v8807, %v8809
        %v8819 = vsel %vm394, %v8809, %v8811
        %v8832 = vadd.f32 %v8712, %v8812
        %v8833 = vadd.f32 %v8713, %v8813
        %v8834 = vadd.f32 %v8714, %v8793
        %v8835 = vadd.f32 %v8715, %v8814
        %v8836 = vadd.f32 %v8716, %v8815
        %v8837 = vadd.f32 %v8717, %v8799
        %v8838 = vadd.f32 %v8718, %v8816
        %v8839 = vadd.f32 %v8719, %v8817
        %v8840 = vadd.f32 %v8720, %v8805
        %v8841 = vadd.f32 %v8721, %v8818
        %v8842 = vadd.f32 %v8722, %v8819
        %v8843 = vadd.f32 %v8723, %v8811
        %8845 = vrot.lane.b32.xlu0 %v8651, 74
        %v8846 = vpop.permute.xlu0 %8845
        %v8847 = vrot.slane %v8846, 7
        %v8848 = vsel %vm431, %v8847, %v8846
        %v8850 = vmul.f32 %v8652, %v8848
        %v8851 = vld [vmem:[%s435] sm:$0xff]
        %v8852 = vld [vmem:[%s435 + $0x8] sm:$0xff]
        %v8853 = vld [vmem:[%s435 + $0x10] sm:$0xff]
        %v8854 = vld [vmem:[%s435 + $0x18] sm:$0xff]
        %8856 = vset.pattern.permute.xlu0 0
        %8857 = vperm.xlu0 %8856, %v8851
        %v8858 = vpop.permute.xlu0 %8857
        %8861 = vset.pattern.permute.xlu0 0
        %8862 = vperm.xlu0 %8861, %v8852
        %v8863 = vpop.permute.xlu0 %8862
        %8866 = vset.pattern.permute.xlu0 0
        %8867 = vperm.xlu0 %8866, %v8853
        %v8868 = vpop.permute.xlu0 %8867
        %8871 = vset.pattern.permute.xlu0 0
        %8872 = vperm.xlu0 %8871, %v8854
        %v8873 = vpop.permute.xlu0 %8872
        %v8876 = vlaneseq
        %v8877 = vshrl.u32 %v8876, 7
        %v8878 = vsub.s32 0, %v8877
        %v8879 = vrot.slane %v8850, %v8878
        %v8880 = vlaneseq
        %v8881 = vshrl.u32 %v8880, 7
        %v8882 = vsub.s32 1, %v8881
        %v8883 = vrot.slane %v8850, %v8882
        %v8884 = vlaneseq
        %v8885 = vshrl.u32 %v8884, 7
        %v8886 = vsub.s32 2, %v8885
        %v8887 = vrot.slane %v8850, %v8886
        %v8891 = vmul.f32 %v8858, %v8879
        %v8892 = vmul.f32 %v8858, %v8883
        %v8893 = vmul.f32 %v8858, %v8887
        %v8894 = vmul.f32 %v8863, %v8879
        %v8895 = vmul.f32 %v8863, %v8883
        %v8896 = vmul.f32 %v8863, %v8887
        %v8897 = vmul.f32 %v8868, %v8879
        %v8898 = vmul.f32 %v8868, %v8883
        %v8899 = vmul.f32 %v8868, %v8887
        %v8900 = vmul.f32 %v8873, %v8879
        %v8901 = vmul.f32 %v8873, %v8883
        %v8902 = vmul.f32 %v8873, %v8887
        %8915 = vrot.lane.b32.xlu0 %v8891, 126
        %v8916 = vpop.permute.xlu0 %8915
        %8917 = vrot.lane.b32.xlu0 %v8892, 126
        %v8918 = vpop.permute.xlu0 %8917
        %8919 = vrot.lane.b32.xlu0 %v8893, 126
        %v8920 = vpop.permute.xlu0 %8919
        %8921 = vrot.lane.b32.xlu0 %v8894, 126
        %v8922 = vpop.permute.xlu0 %8921
        %8923 = vrot.lane.b32.xlu0 %v8895, 126
        %v8924 = vpop.permute.xlu0 %8923
        %8925 = vrot.lane.b32.xlu0 %v8896, 126
        %v8926 = vpop.permute.xlu0 %8925
        %8927 = vrot.lane.b32.xlu0 %v8897, 126
        %v8928 = vpop.permute.xlu0 %8927
        %8929 = vrot.lane.b32.xlu0 %v8898, 126
        %v8930 = vpop.permute.xlu0 %8929
        %8931 = vrot.lane.b32.xlu0 %v8899, 126
        %v8932 = vpop.permute.xlu0 %8931
        %8933 = vrot.lane.b32.xlu0 %v8900, 126
        %v8934 = vpop.permute.xlu0 %8933
        %8935 = vrot.lane.b32.xlu0 %v8901, 126
        %v8936 = vpop.permute.xlu0 %8935
        %8937 = vrot.lane.b32.xlu0 %v8902, 126
        %v8938 = vpop.permute.xlu0 %8937
        %v8939 = vsel %vm524, %v8916, %v8918
        %v8940 = vsel %vm524, %v8918, %v8920
        %v8941 = vsel %vm524, %v8922, %v8924
        %v8942 = vsel %vm524, %v8924, %v8926
        %v8943 = vsel %vm524, %v8928, %v8930
        %v8944 = vsel %vm524, %v8930, %v8932
        %v8945 = vsel %vm524, %v8934, %v8936
        %v8946 = vsel %vm524, %v8936, %v8938
        %v8959 = vadd.f32 %v8832, %v8939
        %v8960 = vadd.f32 %v8833, %v8940
        %v8961 = vadd.f32 %v8834, %v8920
        %v8962 = vadd.f32 %v8835, %v8941
        %v8963 = vadd.f32 %v8836, %v8942
        %v8964 = vadd.f32 %v8837, %v8926
        %v8965 = vadd.f32 %v8838, %v8943
        %v8966 = vadd.f32 %v8839, %v8944
        %v8967 = vadd.f32 %v8840, %v8932
        %v8968 = vadd.f32 %v8841, %v8945
        %v8969 = vadd.f32 %v8842, %v8946
        %v8970 = vadd.f32 %v8843, %v8938
        %8971 = vrot.lane.b32.xlu0 %v8649, 127
        %v8972 = vpop.permute.xlu0 %8971
        %v8973 = vrot.slane %v8972, 7
        %v8974 = vsel %vm394, %v8973, %v8972
        %v8976 = vmul.f32 %v8652, %v8974
        %v8977 = vld [vmem:[%s563] sm:$0xff]
        %v8978 = vld [vmem:[%s563 + $0x8] sm:$0xff]
        %v8979 = vld [vmem:[%s563 + $0x10] sm:$0xff]
        %v8980 = vld [vmem:[%s563 + $0x18] sm:$0xff]
        %8982 = vset.pattern.permute.xlu0 0
        %8983 = vperm.xlu0 %8982, %v8977
        %v8984 = vpop.permute.xlu0 %8983
        %8987 = vset.pattern.permute.xlu0 0
        %8988 = vperm.xlu0 %8987, %v8978
        %v8989 = vpop.permute.xlu0 %8988
        %8992 = vset.pattern.permute.xlu0 0
        %8993 = vperm.xlu0 %8992, %v8979
        %v8994 = vpop.permute.xlu0 %8993
        %8997 = vset.pattern.permute.xlu0 0
        %8998 = vperm.xlu0 %8997, %v8980
        %v8999 = vpop.permute.xlu0 %8998
        %v9002 = vlaneseq
        %v9003 = vshrl.u32 %v9002, 7
        %v9004 = vsub.s32 0, %v9003
        %v9005 = vrot.slane %v8976, %v9004
        %v9006 = vlaneseq
        %v9007 = vshrl.u32 %v9006, 7
        %v9008 = vsub.s32 1, %v9007
        %v9009 = vrot.slane %v8976, %v9008
        %v9010 = vlaneseq
        %v9011 = vshrl.u32 %v9010, 7
        %v9012 = vsub.s32 2, %v9011
        %v9013 = vrot.slane %v8976, %v9012
        %v9017 = vmul.f32 %v8984, %v9005
        %v9018 = vmul.f32 %v8984, %v9009
        %v9019 = vmul.f32 %v8984, %v9013
        %v9020 = vmul.f32 %v8989, %v9005
        %v9021 = vmul.f32 %v8989, %v9009
        %v9022 = vmul.f32 %v8989, %v9013
        %v9023 = vmul.f32 %v8994, %v9005
        %v9024 = vmul.f32 %v8994, %v9009
        %v9025 = vmul.f32 %v8994, %v9013
        %v9026 = vmul.f32 %v8999, %v9005
        %v9027 = vmul.f32 %v8999, %v9009
        %v9028 = vmul.f32 %v8999, %v9013
        %9041 = vrot.lane.b32.xlu0 %v9017, 73
        %v9042 = vpop.permute.xlu0 %9041
        %9043 = vrot.lane.b32.xlu0 %v9018, 73
        %v9044 = vpop.permute.xlu0 %9043
        %9045 = vrot.lane.b32.xlu0 %v9019, 73
        %v9046 = vpop.permute.xlu0 %9045
        %9047 = vrot.lane.b32.xlu0 %v9020, 73
        %v9048 = vpop.permute.xlu0 %9047
        %9049 = vrot.lane.b32.xlu0 %v9021, 73
        %v9050 = vpop.permute.xlu0 %9049
        %9051 = vrot.lane.b32.xlu0 %v9022, 73
        %v9052 = vpop.permute.xlu0 %9051
        %9053 = vrot.lane.b32.xlu0 %v9023, 73
        %v9054 = vpop.permute.xlu0 %9053
        %9055 = vrot.lane.b32.xlu0 %v9024, 73
        %v9056 = vpop.permute.xlu0 %9055
        %9057 = vrot.lane.b32.xlu0 %v9025, 73
        %v9058 = vpop.permute.xlu0 %9057
        %9059 = vrot.lane.b32.xlu0 %v9026, 73
        %v9060 = vpop.permute.xlu0 %9059
        %9061 = vrot.lane.b32.xlu0 %v9027, 73
        %v9062 = vpop.permute.xlu0 %9061
        %9063 = vrot.lane.b32.xlu0 %v9028, 73
        %v9064 = vpop.permute.xlu0 %9063
        %v9065 = vsel %vm652, %v9042, %v9044
        %v9066 = vsel %vm652, %v9044, %v9046
        %v9067 = vsel %vm652, %v9048, %v9050
        %v9068 = vsel %vm652, %v9050, %v9052
        %v9069 = vsel %vm652, %v9054, %v9056
        %v9070 = vsel %vm652, %v9056, %v9058
        %v9071 = vsel %vm652, %v9060, %v9062
        %v9072 = vsel %vm652, %v9062, %v9064
        %v9085 = vadd.f32 %v8959, %v9065
        %v9086 = vadd.f32 %v8960, %v9066
        %v9087 = vadd.f32 %v8961, %v9046
        %v9088 = vadd.f32 %v8962, %v9067
        %v9089 = vadd.f32 %v8963, %v9068
        %v9090 = vadd.f32 %v8964, %v9052
        %v9091 = vadd.f32 %v8965, %v9069
        %v9092 = vadd.f32 %v8966, %v9070
        %v9093 = vadd.f32 %v8967, %v9058
        %v9094 = vadd.f32 %v8968, %v9071
        %v9095 = vadd.f32 %v8969, %v9072
        %v9096 = vadd.f32 %v8970, %v9064
        %v9097 = vld [vmem:[%s192 + $0xf] sm:$0x3]
        %v9098 = vld [vmem:[%s686] sm:$0xff]
        %v9099 = vld [vmem:[%s686 + $0x8] sm:$0xff]
        %v9100 = vld [vmem:[%s686 + $0x10] sm:$0xff]
        %v9101 = vld [vmem:[%s686 + $0x18] sm:$0xff]
        %9103 = vset.pattern.permute.xlu0 0
        %9104 = vperm.xlu0 %9103, %v9098
        %v9105 = vpop.permute.xlu0 %9104
        %9108 = vset.pattern.permute.xlu0 0
        %9109 = vperm.xlu0 %9108, %v9099
        %v9110 = vpop.permute.xlu0 %9109
        %9113 = vset.pattern.permute.xlu0 0
        %9114 = vperm.xlu0 %9113, %v9100
        %v9115 = vpop.permute.xlu0 %9114
        %9118 = vset.pattern.permute.xlu0 0
        %9119 = vperm.xlu0 %9118, %v9101
        %v9120 = vpop.permute.xlu0 %9119
        %v9123 = vlaneseq
        %v9124 = vshrl.u32 %v9123, 7
        %v9125 = vsub.s32 0, %v9124
        %v9126 = vrot.slane %v9097, %v9125
        %v9127 = vlaneseq
        %v9128 = vshrl.u32 %v9127, 7
        %v9129 = vsub.s32 1, %v9128
        %v9130 = vrot.slane %v9097, %v9129
        %v9133 = vmul.f32 %v9105, %v9126
        %v9134 = vmul.f32 %v9105, %v9130
        %v9135 = vmul.f32 %v9110, %v9126
        %v9136 = vmul.f32 %v9110, %v9130
        %v9137 = vmul.f32 %v9115, %v9126
        %v9138 = vmul.f32 %v9115, %v9130
        %v9139 = vmul.f32 %v9120, %v9126
        %v9140 = vmul.f32 %v9120, %v9130
        %9149 = vrot.lane.b32.xlu0 %v9133, 72
        %v9150 = vpop.permute.xlu0 %9149
        %9151 = vrot.lane.b32.xlu0 %v9134, 72
        %v9152 = vpop.permute.xlu0 %9151
        %9153 = vrot.lane.b32.xlu0 %v9135, 72
        %v9154 = vpop.permute.xlu0 %9153
        %9155 = vrot.lane.b32.xlu0 %v9136, 72
        %v9156 = vpop.permute.xlu0 %9155
        %9157 = vrot.lane.b32.xlu0 %v9137, 72
        %v9158 = vpop.permute.xlu0 %9157
        %9159 = vrot.lane.b32.xlu0 %v9138, 72
        %v9160 = vpop.permute.xlu0 %9159
        %9161 = vrot.lane.b32.xlu0 %v9139, 72
        %v9162 = vpop.permute.xlu0 %9161
        %9163 = vrot.lane.b32.xlu0 %v9140, 72
        %v9164 = vpop.permute.xlu0 %9163
        %v9165 = vsel %vm237, %v9150, %v9152
        %v9166 = vsel %vm237, %v9154, %v9156
        %v9167 = vsel %vm237, %v9158, %v9160
        %v9168 = vsel %vm237, %v9162, %v9164
        %v9181 = vadd.f32 %v9085, %v9150
        %v9182 = vadd.f32 %v9086, %v9165
        %v9183 = vadd.f32 %v9087, %v9152
        %v9184 = vadd.f32 %v9088, %v9154
        %v9185 = vadd.f32 %v9089, %v9166
        %v9186 = vadd.f32 %v9090, %v9156
        %v9187 = vadd.f32 %v9091, %v9158
        %v9188 = vadd.f32 %v9092, %v9167
        %v9189 = vadd.f32 %v9093, %v9160
        %v9190 = vadd.f32 %v9094, %v9162
        %v9191 = vadd.f32 %v9095, %v9168
        %v9192 = vadd.f32 %v9096, %v9164
        %v9193 = vld [vmem:[%s192 + $0xf] sm:$0x7]
        %9194 = vrot.lane.b32.xlu0 %v8651, 1
        %v9195 = vpop.permute.xlu0 %9194
        %v9196 = vrot.slane %v9195, 7
        %v9197 = vsel %vm786, %v9196, %v9195
        %v9199 = vmul.f32 %v9193, %v9197
        %v9200 = vld [vmem:[%s790] sm:$0xff]
        %v9201 = vld [vmem:[%s790 + $0x8] sm:$0xff]
        %v9202 = vld [vmem:[%s790 + $0x10] sm:$0xff]
        %v9203 = vld [vmem:[%s790 + $0x18] sm:$0xff]
        %9205 = vset.pattern.permute.xlu0 0
        %9206 = vperm.xlu0 %9205, %v9200
        %v9207 = vpop.permute.xlu0 %9206
        %9210 = vset.pattern.permute.xlu0 0
        %9211 = vperm.xlu0 %9210, %v9201
        %v9212 = vpop.permute.xlu0 %9211
        %9215 = vset.pattern.permute.xlu0 0
        %9216 = vperm.xlu0 %9215, %v9202
        %v9217 = vpop.permute.xlu0 %9216
        %9220 = vset.pattern.permute.xlu0 0
        %9221 = vperm.xlu0 %9220, %v9203
        %v9222 = vpop.permute.xlu0 %9221
        %v9225 = vlaneseq
        %v9226 = vshrl.u32 %v9225, 7
        %v9227 = vsub.s32 0, %v9226
        %v9228 = vrot.slane %v9199, %v9227
        %v9229 = vlaneseq
        %v9230 = vshrl.u32 %v9229, 7
        %v9231 = vsub.s32 1, %v9230
        %v9232 = vrot.slane %v9199, %v9231
        %v9233 = vlaneseq
        %v9234 = vshrl.u32 %v9233, 7
        %v9235 = vsub.s32 2, %v9234
        %v9236 = vrot.slane %v9199, %v9235
        %v9240 = vmul.f32 %v9207, %v9228
        %v9241 = vmul.f32 %v9207, %v9232
        %v9242 = vmul.f32 %v9207, %v9236
        %v9243 = vmul.f32 %v9212, %v9228
        %v9244 = vmul.f32 %v9212, %v9232
        %v9245 = vmul.f32 %v9212, %v9236
        %v9246 = vmul.f32 %v9217, %v9228
        %v9247 = vmul.f32 %v9217, %v9232
        %v9248 = vmul.f32 %v9217, %v9236
        %v9249 = vmul.f32 %v9222, %v9228
        %v9250 = vmul.f32 %v9222, %v9232
        %v9251 = vmul.f32 %v9222, %v9236
        %9264 = vrot.lane.b32.xlu0 %v9240, 71
        %v9265 = vpop.permute.xlu0 %9264
        %9266 = vrot.lane.b32.xlu0 %v9241, 71
        %v9267 = vpop.permute.xlu0 %9266
        %9268 = vrot.lane.b32.xlu0 %v9242, 71
        %v9269 = vpop.permute.xlu0 %9268
        %9270 = vrot.lane.b32.xlu0 %v9243, 71
        %v9271 = vpop.permute.xlu0 %9270
        %9272 = vrot.lane.b32.xlu0 %v9244, 71
        %v9273 = vpop.permute.xlu0 %9272
        %9274 = vrot.lane.b32.xlu0 %v9245, 71
        %v9275 = vpop.permute.xlu0 %9274
        %9276 = vrot.lane.b32.xlu0 %v9246, 71
        %v9277 = vpop.permute.xlu0 %9276
        %9278 = vrot.lane.b32.xlu0 %v9247, 71
        %v9279 = vpop.permute.xlu0 %9278
        %9280 = vrot.lane.b32.xlu0 %v9248, 71
        %v9281 = vpop.permute.xlu0 %9280
        %9282 = vrot.lane.b32.xlu0 %v9249, 71
        %v9283 = vpop.permute.xlu0 %9282
        %9284 = vrot.lane.b32.xlu0 %v9250, 71
        %v9285 = vpop.permute.xlu0 %9284
        %9286 = vrot.lane.b32.xlu0 %v9251, 71
        %v9287 = vpop.permute.xlu0 %9286
        %v9288 = vsel %vm879, %v9265, %v9267
        %v9289 = vsel %vm879, %v9267, %v9269
        %v9290 = vsel %vm879, %v9271, %v9273
        %v9291 = vsel %vm879, %v9273, %v9275
        %v9292 = vsel %vm879, %v9277, %v9279
        %v9293 = vsel %vm879, %v9279, %v9281
        %v9294 = vsel %vm879, %v9283, %v9285
        %v9295 = vsel %vm879, %v9285, %v9287
        %v9308 = vadd.f32 %v9181, %v9265
        %v9309 = vadd.f32 %v9182, %v9288
        %v9310 = vadd.f32 %v9183, %v9289
        %v9311 = vadd.f32 %v9184, %v9271
        %v9312 = vadd.f32 %v9185, %v9290
        %v9313 = vadd.f32 %v9186, %v9291
        %v9314 = vadd.f32 %v9187, %v9277
        %v9315 = vadd.f32 %v9188, %v9292
        %v9316 = vadd.f32 %v9189, %v9293
        %v9317 = vadd.f32 %v9190, %v9283
        %v9318 = vadd.f32 %v9191, %v9294
        %v9319 = vadd.f32 %v9192, %v9295
        %9320 = vrot.lane.b32.xlu0 %v8649, 54
        %v9321 = vpop.permute.xlu0 %9320
        %v9322 = vrot.slane %v9321, 7
        %v9323 = vsel %vm915, %v9322, %v9321
        %v9325 = vmul.f32 %v9193, %v9323
        %v9326 = vld [vmem:[%s919] sm:$0xff]
        %v9327 = vld [vmem:[%s919 + $0x8] sm:$0xff]
        %v9328 = vld [vmem:[%s919 + $0x10] sm:$0xff]
        %v9329 = vld [vmem:[%s919 + $0x18] sm:$0xff]
        %9331 = vset.pattern.permute.xlu0 0
        %9332 = vperm.xlu0 %9331, %v9326
        %v9333 = vpop.permute.xlu0 %9332
        %9336 = vset.pattern.permute.xlu0 0
        %9337 = vperm.xlu0 %9336, %v9327
        %v9338 = vpop.permute.xlu0 %9337
        %9341 = vset.pattern.permute.xlu0 0
        %9342 = vperm.xlu0 %9341, %v9328
        %v9343 = vpop.permute.xlu0 %9342
        %9346 = vset.pattern.permute.xlu0 0
        %9347 = vperm.xlu0 %9346, %v9329
        %v9348 = vpop.permute.xlu0 %9347
        %v9351 = vlaneseq
        %v9352 = vshrl.u32 %v9351, 7
        %v9353 = vsub.s32 0, %v9352
        %v9354 = vrot.slane %v9325, %v9353
        %v9355 = vlaneseq
        %v9356 = vshrl.u32 %v9355, 7
        %v9357 = vsub.s32 1, %v9356
        %v9358 = vrot.slane %v9325, %v9357
        %v9359 = vlaneseq
        %v9360 = vshrl.u32 %v9359, 7
        %v9361 = vsub.s32 2, %v9360
        %v9362 = vrot.slane %v9325, %v9361
        %v9366 = vmul.f32 %v9333, %v9354
        %v9367 = vmul.f32 %v9333, %v9358
        %v9368 = vmul.f32 %v9333, %v9362
        %v9369 = vmul.f32 %v9338, %v9354
        %v9370 = vmul.f32 %v9338, %v9358
        %v9371 = vmul.f32 %v9338, %v9362
        %v9372 = vmul.f32 %v9343, %v9354
        %v9373 = vmul.f32 %v9343, %v9358
        %v9374 = vmul.f32 %v9343, %v9362
        %v9375 = vmul.f32 %v9348, %v9354
        %v9376 = vmul.f32 %v9348, %v9358
        %v9377 = vmul.f32 %v9348, %v9362
        %9390 = vrot.lane.b32.xlu0 %v9366, 18
        %v9391 = vpop.permute.xlu0 %9390
        %9392 = vrot.lane.b32.xlu0 %v9367, 18
        %v9393 = vpop.permute.xlu0 %9392
        %9394 = vrot.lane.b32.xlu0 %v9368, 18
        %v9395 = vpop.permute.xlu0 %9394
        %9396 = vrot.lane.b32.xlu0 %v9369, 18
        %v9397 = vpop.permute.xlu0 %9396
        %9398 = vrot.lane.b32.xlu0 %v9370, 18
        %v9399 = vpop.permute.xlu0 %9398
        %9400 = vrot.lane.b32.xlu0 %v9371, 18
        %v9401 = vpop.permute.xlu0 %9400
        %9402 = vrot.lane.b32.xlu0 %v9372, 18
        %v9403 = vpop.permute.xlu0 %9402
        %9404 = vrot.lane.b32.xlu0 %v9373, 18
        %v9405 = vpop.permute.xlu0 %9404
        %9406 = vrot.lane.b32.xlu0 %v9374, 18
        %v9407 = vpop.permute.xlu0 %9406
        %9408 = vrot.lane.b32.xlu0 %v9375, 18
        %v9409 = vpop.permute.xlu0 %9408
        %9410 = vrot.lane.b32.xlu0 %v9376, 18
        %v9411 = vpop.permute.xlu0 %9410
        %9412 = vrot.lane.b32.xlu0 %v9377, 18
        %v9413 = vpop.permute.xlu0 %9412
        %v9414 = vsel %vm1008, %v9391, %v9393
        %v9415 = vsel %vm1008, %v9393, %v9395
        %v9416 = vsel %vm1008, %v9397, %v9399
        %v9417 = vsel %vm1008, %v9399, %v9401
        %v9418 = vsel %vm1008, %v9403, %v9405
        %v9419 = vsel %vm1008, %v9405, %v9407
        %v9420 = vsel %vm1008, %v9409, %v9411
        %v9421 = vsel %vm1008, %v9411, %v9413
        %v9434 = vadd.f32 %v9308, %v9391
        %v9435 = vadd.f32 %v9309, %v9414
        %v9436 = vadd.f32 %v9310, %v9415
        %v9437 = vadd.f32 %v9311, %v9397
        %v9438 = vadd.f32 %v9312, %v9416
        %v9439 = vadd.f32 %v9313, %v9417
        %v9440 = vadd.f32 %v9314, %v9403
        %v9441 = vadd.f32 %v9315, %v9418
        %v9442 = vadd.f32 %v9316, %v9419
        %v9443 = vadd.f32 %v9317, %v9409
        %v9444 = vadd.f32 %v9318, %v9420
        %v9445 = vadd.f32 %v9319, %v9421
        %v9446 = vld [vmem:[%s1041] sm:$0xff]
        %v9447 = vld [vmem:[%s1041 + $0x8] sm:$0xff]
        %v9448 = vld [vmem:[%s1041 + $0x10] sm:$0xff]
        %v9449 = vld [vmem:[%s1041 + $0x18] sm:$0xff]
        %9451 = vset.pattern.permute.xlu0 0
        %9452 = vperm.xlu0 %9451, %v9446
        %v9453 = vpop.permute.xlu0 %9452
        %9456 = vset.pattern.permute.xlu0 0
        %9457 = vperm.xlu0 %9456, %v9447
        %v9458 = vpop.permute.xlu0 %9457
        %9461 = vset.pattern.permute.xlu0 0
        %9462 = vperm.xlu0 %9461, %v9448
        %v9463 = vpop.permute.xlu0 %9462
        %9466 = vset.pattern.permute.xlu0 0
        %9467 = vperm.xlu0 %9466, %v9449
        %v9468 = vpop.permute.xlu0 %9467
        %v9471 = vlaneseq
        %v9472 = vshrl.u32 %v9471, 7
        %v9473 = vsub.s32 0, %v9472
        %v9474 = vrot.slane %v9193, %v9473
        %v9475 = vlaneseq
        %v9476 = vshrl.u32 %v9475, 7
        %v9477 = vsub.s32 1, %v9476
        %v9478 = vrot.slane %v9193, %v9477
        %v9479 = vlaneseq
        %v9480 = vshrl.u32 %v9479, 7
        %v9481 = vsub.s32 2, %v9480
        %v9482 = vrot.slane %v9193, %v9481
        %v9486 = vmul.f32 %v9453, %v9474
        %v9487 = vmul.f32 %v9453, %v9478
        %v9488 = vmul.f32 %v9453, %v9482
        %v9489 = vmul.f32 %v9458, %v9474
        %v9490 = vmul.f32 %v9458, %v9478
        %v9491 = vmul.f32 %v9458, %v9482
        %v9492 = vmul.f32 %v9463, %v9474
        %v9493 = vmul.f32 %v9463, %v9478
        %v9494 = vmul.f32 %v9463, %v9482
        %v9495 = vmul.f32 %v9468, %v9474
        %v9496 = vmul.f32 %v9468, %v9478
        %v9497 = vmul.f32 %v9468, %v9482
        %9510 = vrot.lane.b32.xlu0 %v9486, 17
        %v9511 = vpop.permute.xlu0 %9510
        %9512 = vrot.lane.b32.xlu0 %v9487, 17
        %v9513 = vpop.permute.xlu0 %9512
        %9514 = vrot.lane.b32.xlu0 %v9488, 17
        %v9515 = vpop.permute.xlu0 %9514
        %9516 = vrot.lane.b32.xlu0 %v9489, 17
        %v9517 = vpop.permute.xlu0 %9516
        %9518 = vrot.lane.b32.xlu0 %v9490, 17
        %v9519 = vpop.permute.xlu0 %9518
        %9520 = vrot.lane.b32.xlu0 %v9491, 17
        %v9521 = vpop.permute.xlu0 %9520
        %9522 = vrot.lane.b32.xlu0 %v9492, 17
        %v9523 = vpop.permute.xlu0 %9522
        %9524 = vrot.lane.b32.xlu0 %v9493, 17
        %v9525 = vpop.permute.xlu0 %9524
        %9526 = vrot.lane.b32.xlu0 %v9494, 17
        %v9527 = vpop.permute.xlu0 %9526
        %9528 = vrot.lane.b32.xlu0 %v9495, 17
        %v9529 = vpop.permute.xlu0 %9528
        %9530 = vrot.lane.b32.xlu0 %v9496, 17
        %v9531 = vpop.permute.xlu0 %9530
        %9532 = vrot.lane.b32.xlu0 %v9497, 17
        %v9533 = vpop.permute.xlu0 %9532
        %v9534 = vsel %vm1130, %v9511, %v9513
        %v9535 = vsel %vm1130, %v9513, %v9515
        %v9536 = vsel %vm1130, %v9517, %v9519
        %v9537 = vsel %vm1130, %v9519, %v9521
        %v9538 = vsel %vm1130, %v9523, %v9525
        %v9539 = vsel %vm1130, %v9525, %v9527
        %v9540 = vsel %vm1130, %v9529, %v9531
        %v9541 = vsel %vm1130, %v9531, %v9533
        %v9554 = vadd.f32 %v9434, %v9511
        %v9555 = vadd.f32 %v9435, %v9534
        %v9556 = vadd.f32 %v9436, %v9535
        %v9557 = vadd.f32 %v9437, %v9517
        %v9558 = vadd.f32 %v9438, %v9536
        %v9559 = vadd.f32 %v9439, %v9537
        %v9560 = vadd.f32 %v9440, %v9523
        %v9561 = vadd.f32 %v9441, %v9538
        %v9562 = vadd.f32 %v9442, %v9539
        %v9563 = vadd.f32 %v9443, %v9529
        %v9564 = vadd.f32 %v9444, %v9540
        %v9565 = vadd.f32 %v9445, %v9541
        %9566 = vrot.lane.b32.xlu0 %v8651, 56
        %v9567 = vpop.permute.xlu0 %9566
        %v9568 = vrot.slane %v9567, 7
        %v9569 = vsel %vm1166, %v9568, %v9567
        %v9571 = vmul.f32 %v9193, %v9569
        %v9572 = vld [vmem:[%s1170] sm:$0xff]
        %v9573 = vld [vmem:[%s1170 + $0x8] sm:$0xff]
        %v9574 = vld [vmem:[%s1170 + $0x10] sm:$0xff]
        %v9575 = vld [vmem:[%s1170 + $0x18] sm:$0xff]
        %9577 = vset.pattern.permute.xlu0 0
        %9578 = vperm.xlu0 %9577, %v9572
        %v9579 = vpop.permute.xlu0 %9578
        %9582 = vset.pattern.permute.xlu0 0
        %9583 = vperm.xlu0 %9582, %v9573
        %v9584 = vpop.permute.xlu0 %9583
        %9587 = vset.pattern.permute.xlu0 0
        %9588 = vperm.xlu0 %9587, %v9574
        %v9589 = vpop.permute.xlu0 %9588
        %9592 = vset.pattern.permute.xlu0 0
        %9593 = vperm.xlu0 %9592, %v9575
        %v9594 = vpop.permute.xlu0 %9593
        %v9597 = vlaneseq
        %v9598 = vshrl.u32 %v9597, 7
        %v9599 = vsub.s32 0, %v9598
        %v9600 = vrot.slane %v9571, %v9599
        %v9601 = vlaneseq
        %v9602 = vshrl.u32 %v9601, 7
        %v9603 = vsub.s32 1, %v9602
        %v9604 = vrot.slane %v9571, %v9603
        %v9605 = vlaneseq
        %v9606 = vshrl.u32 %v9605, 7
        %v9607 = vsub.s32 2, %v9606
        %v9608 = vrot.slane %v9571, %v9607
        %v9612 = vmul.f32 %v9579, %v9600
        %v9613 = vmul.f32 %v9579, %v9604
        %v9614 = vmul.f32 %v9579, %v9608
        %v9615 = vmul.f32 %v9584, %v9600
        %v9616 = vmul.f32 %v9584, %v9604
        %v9617 = vmul.f32 %v9584, %v9608
        %v9618 = vmul.f32 %v9589, %v9600
        %v9619 = vmul.f32 %v9589, %v9604
        %v9620 = vmul.f32 %v9589, %v9608
        %v9621 = vmul.f32 %v9594, %v9600
        %v9622 = vmul.f32 %v9594, %v9604
        %v9623 = vmul.f32 %v9594, %v9608
        %9636 = vrot.lane.b32.xlu0 %v9612, 16
        %v9637 = vpop.permute.xlu0 %9636
        %9638 = vrot.lane.b32.xlu0 %v9613, 16
        %v9639 = vpop.permute.xlu0 %9638
        %9640 = vrot.lane.b32.xlu0 %v9614, 16
        %v9641 = vpop.permute.xlu0 %9640
        %9642 = vrot.lane.b32.xlu0 %v9615, 16
        %v9643 = vpop.permute.xlu0 %9642
        %9644 = vrot.lane.b32.xlu0 %v9616, 16
        %v9645 = vpop.permute.xlu0 %9644
        %9646 = vrot.lane.b32.xlu0 %v9617, 16
        %v9647 = vpop.permute.xlu0 %9646
        %9648 = vrot.lane.b32.xlu0 %v9618, 16
        %v9649 = vpop.permute.xlu0 %9648
        %9650 = vrot.lane.b32.xlu0 %v9619, 16
        %v9651 = vpop.permute.xlu0 %9650
        %9652 = vrot.lane.b32.xlu0 %v9620, 16
        %v9653 = vpop.permute.xlu0 %9652
        %9654 = vrot.lane.b32.xlu0 %v9621, 16
        %v9655 = vpop.permute.xlu0 %9654
        %9656 = vrot.lane.b32.xlu0 %v9622, 16
        %v9657 = vpop.permute.xlu0 %9656
        %9658 = vrot.lane.b32.xlu0 %v9623, 16
        %v9659 = vpop.permute.xlu0 %9658
        %v9660 = vsel %vm1259, %v9637, %v9639
        %v9661 = vsel %vm1259, %v9639, %v9641
        %v9662 = vsel %vm1259, %v9643, %v9645
        %v9663 = vsel %vm1259, %v9645, %v9647
        %v9664 = vsel %vm1259, %v9649, %v9651
        %v9665 = vsel %vm1259, %v9651, %v9653
        %v9666 = vsel %vm1259, %v9655, %v9657
        %v9667 = vsel %vm1259, %v9657, %v9659
        %v9680 = vadd.f32 %v9554, %v9637
        %v9681 = vadd.f32 %v9555, %v9660
        %v9682 = vadd.f32 %v9556, %v9661
        %v9683 = vadd.f32 %v9557, %v9643
        %v9684 = vadd.f32 %v9558, %v9662
        %v9685 = vadd.f32 %v9559, %v9663
        %v9686 = vadd.f32 %v9560, %v9649
        %v9687 = vadd.f32 %v9561, %v9664
        %v9688 = vadd.f32 %v9562, %v9665
        %v9689 = vadd.f32 %v9563, %v9655
        %v9690 = vadd.f32 %v9564, %v9666
        %v9691 = vadd.f32 %v9565, %v9667
        %s9692 = scalar_lea.vmem %s3, 58
        %v9693 = vld [vmem:[%s9692] ss:$4 sm:$0x3]
        %v9695 = vlaneseq
        %v9696 = vshrl.u32 %v9695, 7
        %v9697 = vsub.s32 0, %v9696
        %v9698 = vrot.slane %v9693, %v9697
        %v9699 = vlaneseq
        %v9700 = vshrl.u32 %v9699, 7
        %v9701 = vsub.s32 1, %v9700
        %v9702 = vrot.slane %v9693, %v9701
        %9703 = vrot.lane.b32.xlu0 %v9698, 72
        %v9704 = vpop.permute.xlu0 %9703
        %9705 = vrot.lane.b32.xlu0 %v9702, 72
        %v9706 = vpop.permute.xlu0 %9705
        %v9707 = vsel %vm237, %v9704, %v9706
        %v9711 = vmul.f32 %v9680, %v9704
        %v9712 = vmul.f32 %v9681, %v9707
        %v9713 = vmul.f32 %v9682, %v9706
        %v9714 = vmul.f32 %v9683, %v9704
        %v9715 = vmul.f32 %v9684, %v9707
        %v9716 = vmul.f32 %v9685, %v9706
        %v9717 = vmul.f32 %v9686, %v9704
        %v9718 = vmul.f32 %v9687, %v9707
        %v9719 = vmul.f32 %v9688, %v9706
        %v9720 = vmul.f32 %v9689, %v9704
        %v9721 = vmul.f32 %v9690, %v9707
        %v9722 = vmul.f32 %v9691, %v9706
        %9735 = vrot.lane.b32.xlu0 %v9711, 56
        %v9736 = vpop.permute.xlu0 %9735
        %9737 = vrot.lane.b32.xlu0 %v9712, 56
        %v9738 = vpop.permute.xlu0 %9737
        %9739 = vrot.lane.b32.xlu0 %v9713, 56
        %v9740 = vpop.permute.xlu0 %9739
        %9741 = vrot.lane.b32.xlu0 %v9714, 56
        %v9742 = vpop.permute.xlu0 %9741
        %9743 = vrot.lane.b32.xlu0 %v9715, 56
        %v9744 = vpop.permute.xlu0 %9743
        %9745 = vrot.lane.b32.xlu0 %v9716, 56
        %v9746 = vpop.permute.xlu0 %9745
        %9747 = vrot.lane.b32.xlu0 %v9717, 56
        %v9748 = vpop.permute.xlu0 %9747
        %9749 = vrot.lane.b32.xlu0 %v9718, 56
        %v9750 = vpop.permute.xlu0 %9749
        %9751 = vrot.lane.b32.xlu0 %v9719, 56
        %v9752 = vpop.permute.xlu0 %9751
        %9753 = vrot.lane.b32.xlu0 %v9720, 56
        %v9754 = vpop.permute.xlu0 %9753
        %9755 = vrot.lane.b32.xlu0 %v9721, 56
        %v9756 = vpop.permute.xlu0 %9755
        %9757 = vrot.lane.b32.xlu0 %v9722, 56
        %v9758 = vpop.permute.xlu0 %9757
        %v9759 = vsel %vm1166, %v9736, %v9738
        %v9760 = vsel %vm1166, %v9738, %v9740
        %v9761 = vsel %vm1166, %v9742, %v9744
        %v9762 = vsel %vm1166, %v9744, %v9746
        %v9763 = vsel %vm1166, %v9748, %v9750
        %v9764 = vsel %vm1166, %v9750, %v9752
        %v9765 = vsel %vm1166, %v9754, %v9756
        %v9766 = vsel %vm1166, %v9756, %v9758
        %v9775 = vadd.f32 %v9759, %v9760
        %9776 = vadd.xlane.f32.xlu0 %v9775
        %v9777 = vpop.xlane.xlu0 %9776
        %v9778 = vadd.f32 %v9761, %v9762
        %9779 = vadd.xlane.f32.xlu0 %v9778
        %v9780 = vpop.xlane.xlu0 %9779
        %v9781 = vadd.f32 %v9763, %v9764
        %9782 = vadd.xlane.f32.xlu0 %v9781
        %v9783 = vpop.xlane.xlu0 %9782
        %v9784 = vadd.f32 %v9765, %v9766
        %9785 = vadd.xlane.f32.xlu0 %v9784
        %v9786 = vpop.xlane.xlu0 %9785
        %v9787 = vadd.f32 %v8556, %v9777
        %v9788 = vadd.f32 %v8557, %v9780
        %v9789 = vadd.f32 %v8558, %v9783
        %v9790 = vadd.f32 %v8559, %v9786
        %v9791 = vmul.f32 %v9711, %v9711
        %v9792 = vmul.f32 %v9712, %v9712
        %v9793 = vmul.f32 %v9713, %v9713
        %v9794 = vmul.f32 %v9714, %v9714
        %v9795 = vmul.f32 %v9715, %v9715
        %v9796 = vmul.f32 %v9716, %v9716
        %v9797 = vmul.f32 %v9717, %v9717
        %v9798 = vmul.f32 %v9718, %v9718
        %v9799 = vmul.f32 %v9719, %v9719
        %v9800 = vmul.f32 %v9720, %v9720
        %v9801 = vmul.f32 %v9721, %v9721
        %v9802 = vmul.f32 %v9722, %v9722
        %9815 = vrot.lane.b32.xlu0 %v9791, 56
        %v9816 = vpop.permute.xlu0 %9815
        %9817 = vrot.lane.b32.xlu0 %v9792, 56
        %v9818 = vpop.permute.xlu0 %9817
        %9819 = vrot.lane.b32.xlu0 %v9793, 56
        %v9820 = vpop.permute.xlu0 %9819
        %9821 = vrot.lane.b32.xlu0 %v9794, 56
        %v9822 = vpop.permute.xlu0 %9821
        %9823 = vrot.lane.b32.xlu0 %v9795, 56
        %v9824 = vpop.permute.xlu0 %9823
        %9825 = vrot.lane.b32.xlu0 %v9796, 56
        %v9826 = vpop.permute.xlu0 %9825
        %9827 = vrot.lane.b32.xlu0 %v9797, 56
        %v9828 = vpop.permute.xlu0 %9827
        %9829 = vrot.lane.b32.xlu0 %v9798, 56
        %v9830 = vpop.permute.xlu0 %9829
        %9831 = vrot.lane.b32.xlu0 %v9799, 56
        %v9832 = vpop.permute.xlu0 %9831
        %9833 = vrot.lane.b32.xlu0 %v9800, 56
        %v9834 = vpop.permute.xlu0 %9833
        %9835 = vrot.lane.b32.xlu0 %v9801, 56
        %v9836 = vpop.permute.xlu0 %9835
        %9837 = vrot.lane.b32.xlu0 %v9802, 56
        %v9838 = vpop.permute.xlu0 %9837
        %v9839 = vsel %vm1166, %v9816, %v9818
        %v9840 = vsel %vm1166, %v9818, %v9820
        %v9841 = vsel %vm1166, %v9822, %v9824
        %v9842 = vsel %vm1166, %v9824, %v9826
        %v9843 = vsel %vm1166, %v9828, %v9830
        %v9844 = vsel %vm1166, %v9830, %v9832
        %v9845 = vsel %vm1166, %v9834, %v9836
        %v9846 = vsel %vm1166, %v9836, %v9838
        %v9855 = vadd.f32 %v9839, %v9840
        %9856 = vadd.xlane.f32.xlu0 %v9855
        %v9857 = vpop.xlane.xlu0 %9856
        %v9858 = vadd.f32 %v9841, %v9842
        %9859 = vadd.xlane.f32.xlu0 %v9858
        %v9860 = vpop.xlane.xlu0 %9859
        %v9861 = vadd.f32 %v9843, %v9844
        %9862 = vadd.xlane.f32.xlu0 %v9861
        %v9863 = vpop.xlane.xlu0 %9862
        %v9864 = vadd.f32 %v9845, %v9846
        %9865 = vadd.xlane.f32.xlu0 %v9864
        %v9866 = vpop.xlane.xlu0 %9865
        %v9867 = vadd.f32 %v8636, %v9857
        %v9868 = vadd.f32 %v8637, %v9860
        %v9869 = vadd.f32 %v8638, %v9863
        %v9870 = vadd.f32 %v8639, %v9866
        %9871 = vst [vmem:[%s188 + $0x78] sm:$0xff] %v9759
        %9872 = vst [vmem:[%s188 + $0x80] sm:$0xff] %v9760
        %9873 = vst [vmem:[%s188 + $0x108] sm:$0xff] %v9761
        %9874 = vst [vmem:[%s188 + $0x110] sm:$0xff] %v9762
        %9875 = vst [vmem:[%s188 + $0x198] sm:$0xff] %v9763
        %9876 = vst [vmem:[%s188 + $0x1a0] sm:$0xff] %v9764
        %9877 = vst [vmem:[%s188 + $0x228] sm:$0xff] %v9765
        %9878 = vst [vmem:[%s188 + $0x230] sm:$0xff] %v9766
        %v9879 = vmul.f32 %v9787, 0.0005194805
        %v9880 = vmul.f32 %v9788, 0.0005194805
        %v9881 = vmul.f32 %v9789, 0.0005194805
        %v9882 = vmul.f32 %v9790, 0.0005194805
        %v9883 = vmul.f32 %v9867, 0.0005194805
        %v9884 = vmul.f32 %v9868, 0.0005194805
        %v9885 = vmul.f32 %v9869, 0.0005194805
        %v9886 = vmul.f32 %v9870, 0.0005194805
        %v9887 = vmul.f32 %v9879, %v9879
        %v9888 = vmul.f32 %v9880, %v9880
        %v9889 = vmul.f32 %v9881, %v9881
        %v9890 = vmul.f32 %v9882, %v9882
        %v9891 = vsub.f32 %v9883, %v9887
        %v9892 = vsub.f32 %v9884, %v9888
        %v9893 = vsub.f32 %v9885, %v9889
        %v9894 = vsub.f32 %v9886, %v9890
        %v9895 = vadd.f32 %v9891, 1e-05
        %v9896 = vadd.f32 %v9892, 1e-05
        %v9897 = vadd.f32 %v9893, 1e-05
        %v9898 = vadd.f32 %v9894, 1e-05
        %v9899 = vrsqrt.pop %v9895
        %v9900 = vrsqrt.pop %v9896
        %v9901 = vrsqrt.pop %v9897
        %v9902 = vrsqrt.pop %v9898
        %v9903 = vld [vmem:[%s188 + $0x8] sm:$0xff]
        %v9904 = vld [vmem:[%s188 + $0x10] sm:$0xff]
        %v9905 = vld [vmem:[%s188 + $0x98] sm:$0xff]
        %v9906 = vld [vmem:[%s188 + $0xa0] sm:$0xff]
        %v9907 = vld [vmem:[%s188 + $0x128] sm:$0xff]
        %v9908 = vld [vmem:[%s188 + $0x130] sm:$0xff]
        %v9909 = vld [vmem:[%s188 + $0x1b8] sm:$0xff]
        %v9910 = vld [vmem:[%s188 + $0x1c0] sm:$0xff]
        %v9911 = vsub.f32 %v9903, %v9879
        %v9912 = vsub.f32 %v9904, %v9879
        %v9913 = vsub.f32 %v9905, %v9880
        %v9914 = vsub.f32 %v9906, %v9880
        %v9915 = vsub.f32 %v9907, %v9881
        %v9916 = vsub.f32 %v9908, %v9881
        %v9917 = vsub.f32 %v9909, %v9882
        %v9918 = vsub.f32 %v9910, %v9882
        %v9919 = vmul.f32 %v9911, %v9899
        %v9920 = vmul.f32 %v9912, %v9899
        %v9921 = vmul.f32 %v9913, %v9900
        %v9922 = vmul.f32 %v9914, %v9900
        %v9923 = vmul.f32 %v9915, %v9901
        %v9924 = vmul.f32 %v9916, %v9901
        %v9925 = vmul.f32 %v9917, %v9902
        %v9926 = vmul.f32 %v9918, %v9902
        %v9927 = vmul.f32 %v9919, 0.01
        %v9928 = vmul.f32 %v9920, 0.01
        %v9929 = vmul.f32 %v9921, 0.01
        %v9930 = vmul.f32 %v9922, 0.01
        %v9931 = vmul.f32 %v9923, 0.01
        %v9932 = vmul.f32 %v9924, 0.01
        %v9933 = vmul.f32 %v9925, 0.01
        %v9934 = vmul.f32 %v9926, 0.01
        %v9935 = vmax.f32 %v9919, %v9927
        %v9936 = vmax.f32 %v9920, %v9928
        %v9937 = vmax.f32 %v9921, %v9929
        %v9938 = vmax.f32 %v9922, %v9930
        %v9939 = vmax.f32 %v9923, %v9931
        %v9940 = vmax.f32 %v9924, %v9932
        %v9941 = vmax.f32 %v9925, %v9933
        %v9942 = vmax.f32 %v9926, %v9934
        %9943 = vst [vmem:[%s188 + $0x8] sm:$0xff] %v9935
        %9944 = vst [vmem:[%s188 + $0x10] sm:$0xff] %v9936
        %9945 = vst [vmem:[%s188 + $0x98] sm:$0xff] %v9937
        %9946 = vst [vmem:[%s188 + $0xa0] sm:$0xff] %v9938
        %9947 = vst [vmem:[%s188 + $0x128] sm:$0xff] %v9939
        %9948 = vst [vmem:[%s188 + $0x130] sm:$0xff] %v9940
        %9949 = vst [vmem:[%s188 + $0x1b8] sm:$0xff] %v9941
        %9950 = vst [vmem:[%s188 + $0x1c0] sm:$0xff] %v9942
        %v9951 = vld [vmem:[%s188 + $0x18] sm:$0xff]
        %v9952 = vld [vmem:[%s188 + $0x20] sm:$0xff]
        %v9953 = vld [vmem:[%s188 + $0xa8] sm:$0xff]
        %v9954 = vld [vmem:[%s188 + $0xb0] sm:$0xff]
        %v9955 = vld [vmem:[%s188 + $0x138] sm:$0xff]
        %v9956 = vld [vmem:[%s188 + $0x140] sm:$0xff]
        %v9957 = vld [vmem:[%s188 + $0x1c8] sm:$0xff]
        %v9958 = vld [vmem:[%s188 + $0x1d0] sm:$0xff]
        %v9959 = vsub.f32 %v9951, %v9879
        %v9960 = vsub.f32 %v9952, %v9879
        %v9961 = vsub.f32 %v9953, %v9880
        %v9962 = vsub.f32 %v9954, %v9880
        %v9963 = vsub.f32 %v9955, %v9881
        %v9964 = vsub.f32 %v9956, %v9881
        %v9965 = vsub.f32 %v9957, %v9882
        %v9966 = vsub.f32 %v9958, %v9882
        %v9967 = vmul.f32 %v9959, %v9899
        %v9968 = vmul.f32 %v9960, %v9899
        %v9969 = vmul.f32 %v9961, %v9900
        %v9970 = vmul.f32 %v9962, %v9900
        %v9971 = vmul.f32 %v9963, %v9901
        %v9972 = vmul.f32 %v9964, %v9901
        %v9973 = vmul.f32 %v9965, %v9902
        %v9974 = vmul.f32 %v9966, %v9902
        %v9975 = vmul.f32 %v9967, 0.01
        %v9976 = vmul.f32 %v9968, 0.01
        %v9977 = vmul.f32 %v9969, 0.01
        %v9978 = vmul.f32 %v9970, 0.01
        %v9979 = vmul.f32 %v9971, 0.01
        %v9980 = vmul.f32 %v9972, 0.01
        %v9981 = vmul.f32 %v9973, 0.01
        %v9982 = vmul.f32 %v9974, 0.01
        %v9983 = vmax.f32 %v9967, %v9975
        %v9984 = vmax.f32 %v9968, %v9976
        %v9985 = vmax.f32 %v9969, %v9977
        %v9986 = vmax.f32 %v9970, %v9978
        %v9987 = vmax.f32 %v9971, %v9979
        %v9988 = vmax.f32 %v9972, %v9980
        %v9989 = vmax.f32 %v9973, %v9981
        %v9990 = vmax.f32 %v9974, %v9982
        %9991 = vst [vmem:[%s188 + $0x18] sm:$0xff] %v9983
        %9992 = vst [vmem:[%s188 + $0x20] sm:$0xff] %v9984
        %9993 = vst [vmem:[%s188 + $0xa8] sm:$0xff] %v9985
        %9994 = vst [vmem:[%s188 + $0xb0] sm:$0xff] %v9986
        %9995 = vst [vmem:[%s188 + $0x138] sm:$0xff] %v9987
        %9996 = vst [vmem:[%s188 + $0x140] sm:$0xff] %v9988
        %9997 = vst [vmem:[%s188 + $0x1c8] sm:$0xff] %v9989
        %9998 = vst [vmem:[%s188 + $0x1d0] sm:$0xff] %v9990
        %v9999 = vld [vmem:[%s188 + $0x28] sm:$0xff]
        %v10000 = vld [vmem:[%s188 + $0x30] sm:$0xff]
        %v10001 = vld [vmem:[%s188 + $0xb8] sm:$0xff]
        %v10002 = vld [vmem:[%s188 + $0xc0] sm:$0xff]
        %v10003 = vld [vmem:[%s188 + $0x148] sm:$0xff]
        %v10004 = vld [vmem:[%s188 + $0x150] sm:$0xff]
        %v10005 = vld [vmem:[%s188 + $0x1d8] sm:$0xff]
        %v10006 = vld [vmem:[%s188 + $0x1e0] sm:$0xff]
        %v10007 = vsub.f32 %v9999, %v9879
        %v10008 = vsub.f32 %v10000, %v9879
        %v10009 = vsub.f32 %v10001, %v9880
        %v10010 = vsub.f32 %v10002, %v9880
        %v10011 = vsub.f32 %v10003, %v9881
        %v10012 = vsub.f32 %v10004, %v9881
        %v10013 = vsub.f32 %v10005, %v9882
        %v10014 = vsub.f32 %v10006, %v9882
        %v10015 = vmul.f32 %v10007, %v9899
        %v10016 = vmul.f32 %v10008, %v9899
        %v10017 = vmul.f32 %v10009, %v9900
        %v10018 = vmul.f32 %v10010, %v9900
        %v10019 = vmul.f32 %v10011, %v9901
        %v10020 = vmul.f32 %v10012, %v9901
        %v10021 = vmul.f32 %v10013, %v9902
        %v10022 = vmul.f32 %v10014, %v9902
        %v10023 = vmul.f32 %v10015, 0.01
        %v10024 = vmul.f32 %v10016, 0.01
        %v10025 = vmul.f32 %v10017, 0.01
        %v10026 = vmul.f32 %v10018, 0.01
        %v10027 = vmul.f32 %v10019, 0.01
        %v10028 = vmul.f32 %v10020, 0.01
        %v10029 = vmul.f32 %v10021, 0.01
        %v10030 = vmul.f32 %v10022, 0.01
        %v10031 = vmax.f32 %v10015, %v10023
        %v10032 = vmax.f32 %v10016, %v10024
        %v10033 = vmax.f32 %v10017, %v10025
        %v10034 = vmax.f32 %v10018, %v10026
        %v10035 = vmax.f32 %v10019, %v10027
        %v10036 = vmax.f32 %v10020, %v10028
        %v10037 = vmax.f32 %v10021, %v10029
        %v10038 = vmax.f32 %v10022, %v10030
        %10039 = vst [vmem:[%s188 + $0x28] sm:$0xff] %v10031
        %10040 = vst [vmem:[%s188 + $0x30] sm:$0xff] %v10032
        %10041 = vst [vmem:[%s188 + $0xb8] sm:$0xff] %v10033
        %10042 = vst [vmem:[%s188 + $0xc0] sm:$0xff] %v10034
        %10043 = vst [vmem:[%s188 + $0x148] sm:$0xff] %v10035
        %10044 = vst [vmem:[%s188 + $0x150] sm:$0xff] %v10036
        %10045 = vst [vmem:[%s188 + $0x1d8] sm:$0xff] %v10037
        %10046 = vst [vmem:[%s188 + $0x1e0] sm:$0xff] %v10038
        %v10047 = vld [vmem:[%s188 + $0x38] sm:$0xff]
        %v10048 = vld [vmem:[%s188 + $0x40] sm:$0xff]
        %v10049 = vld [vmem:[%s188 + $0xc8] sm:$0xff]
        %v10050 = vld [vmem:[%s188 + $0xd0] sm:$0xff]
        %v10051 = vld [vmem:[%s188 + $0x158] sm:$0xff]
        %v10052 = vld [vmem:[%s188 + $0x160] sm:$0xff]
        %v10053 = vld [vmem:[%s188 + $0x1e8] sm:$0xff]
        %v10054 = vld [vmem:[%s188 + $0x1f0] sm:$0xff]
        %v10055 = vsub.f32 %v10047, %v9879
        %v10056 = vsub.f32 %v10048, %v9879
        %v10057 = vsub.f32 %v10049, %v9880
        %v10058 = vsub.f32 %v10050, %v9880
        %v10059 = vsub.f32 %v10051, %v9881
        %v10060 = vsub.f32 %v10052, %v9881
        %v10061 = vsub.f32 %v10053, %v9882
        %v10062 = vsub.f32 %v10054, %v9882
        %v10063 = vmul.f32 %v10055, %v9899
        %v10064 = vmul.f32 %v10056, %v9899
        %v10065 = vmul.f32 %v10057, %v9900
        %v10066 = vmul.f32 %v10058, %v9900
        %v10067 = vmul.f32 %v10059, %v9901
        %v10068 = vmul.f32 %v10060, %v9901
        %v10069 = vmul.f32 %v10061, %v9902
        %v10070 = vmul.f32 %v10062, %v9902
        %v10071 = vmul.f32 %v10063, 0.01
        %v10072 = vmul.f32 %v10064, 0.01
        %v10073 = vmul.f32 %v10065, 0.01
        %v10074 = vmul.f32 %v10066, 0.01
        %v10075 = vmul.f32 %v10067, 0.01
        %v10076 = vmul.f32 %v10068, 0.01
        %v10077 = vmul.f32 %v10069, 0.01
        %v10078 = vmul.f32 %v10070, 0.01
        %v10079 = vmax.f32 %v10063, %v10071
        %v10080 = vmax.f32 %v10064, %v10072
        %v10081 = vmax.f32 %v10065, %v10073
        %v10082 = vmax.f32 %v10066, %v10074
        %v10083 = vmax.f32 %v10067, %v10075
        %v10084 = vmax.f32 %v10068, %v10076
        %v10085 = vmax.f32 %v10069, %v10077
        %v10086 = vmax.f32 %v10070, %v10078
        %10087 = vst [vmem:[%s188 + $0x38] sm:$0xff] %v10079
        %10088 = vst [vmem:[%s188 + $0x40] sm:$0xff] %v10080
        %10089 = vst [vmem:[%s188 + $0xc8] sm:$0xff] %v10081
        %10090 = vst [vmem:[%s188 + $0xd0] sm:$0xff] %v10082
        %10091 = vst [vmem:[%s188 + $0x158] sm:$0xff] %v10083
        %10092 = vst [vmem:[%s188 + $0x160] sm:$0xff] %v10084
        %10093 = vst [vmem:[%s188 + $0x1e8] sm:$0xff] %v10085
        %10094 = vst [vmem:[%s188 + $0x1f0] sm:$0xff] %v10086
        %v10095 = vld [vmem:[%s188 + $0x48] sm:$0xff]
        %v10096 = vld [vmem:[%s188 + $0x50] sm:$0xff]
        %v10097 = vld [vmem:[%s188 + $0xd8] sm:$0xff]
        %v10098 = vld [vmem:[%s188 + $0xe0] sm:$0xff]
        %v10099 = vld [vmem:[%s188 + $0x168] sm:$0xff]
        %v10100 = vld [vmem:[%s188 + $0x170] sm:$0xff]
        %v10101 = vld [vmem:[%s188 + $0x1f8] sm:$0xff]
        %v10102 = vld [vmem:[%s188 + $0x200] sm:$0xff]
        %v10103 = vsub.f32 %v10095, %v9879
        %v10104 = vsub.f32 %v10096, %v9879
        %v10105 = vsub.f32 %v10097, %v9880
        %v10106 = vsub.f32 %v10098, %v9880
        %v10107 = vsub.f32 %v10099, %v9881
        %v10108 = vsub.f32 %v10100, %v9881
        %v10109 = vsub.f32 %v10101, %v9882
        %v10110 = vsub.f32 %v10102, %v9882
        %v10111 = vmul.f32 %v10103, %v9899
        %v10112 = vmul.f32 %v10104, %v9899
        %v10113 = vmul.f32 %v10105, %v9900
        %v10114 = vmul.f32 %v10106, %v9900
        %v10115 = vmul.f32 %v10107, %v9901
        %v10116 = vmul.f32 %v10108, %v9901
        %v10117 = vmul.f32 %v10109, %v9902
        %v10118 = vmul.f32 %v10110, %v9902
        %v10119 = vmul.f32 %v10111, 0.01
        %v10120 = vmul.f32 %v10112, 0.01
        %v10121 = vmul.f32 %v10113, 0.01
        %v10122 = vmul.f32 %v10114, 0.01
        %v10123 = vmul.f32 %v10115, 0.01
        %v10124 = vmul.f32 %v10116, 0.01
        %v10125 = vmul.f32 %v10117, 0.01
        %v10126 = vmul.f32 %v10118, 0.01
        %v10127 = vmax.f32 %v10111, %v10119
        %v10128 = vmax.f32 %v10112, %v10120
        %v10129 = vmax.f32 %v10113, %v10121
        %v10130 = vmax.f32 %v10114, %v10122
        %v10131 = vmax.f32 %v10115, %v10123
        %v10132 = vmax.f32 %v10116, %v10124
        %v10133 = vmax.f32 %v10117, %v10125
        %v10134 = vmax.f32 %v10118, %v10126
        %10135 = vst [vmem:[%s188 + $0x48] sm:$0xff] %v10127
        %10136 = vst [vmem:[%s188 + $0x50] sm:$0xff] %v10128
        %10137 = vst [vmem:[%s188 + $0xd8] sm:$0xff] %v10129
        %10138 = vst [vmem:[%s188 + $0xe0] sm:$0xff] %v10130
        %10139 = vst [vmem:[%s188 + $0x168] sm:$0xff] %v10131
        %10140 = vst [vmem:[%s188 + $0x170] sm:$0xff] %v10132
        %10141 = vst [vmem:[%s188 + $0x1f8] sm:$0xff] %v10133
        %10142 = vst [vmem:[%s188 + $0x200] sm:$0xff] %v10134
        %v10143 = vld [vmem:[%s188 + $0x58] sm:$0xff]
        %v10144 = vld [vmem:[%s188 + $0x60] sm:$0xff]
        %v10145 = vld [vmem:[%s188 + $0xe8] sm:$0xff]
        %v10146 = vld [vmem:[%s188 + $0xf0] sm:$0xff]
        %v10147 = vld [vmem:[%s188 + $0x178] sm:$0xff]
        %v10148 = vld [vmem:[%s188 + $0x180] sm:$0xff]
        %v10149 = vld [vmem:[%s188 + $0x208] sm:$0xff]
        %v10150 = vld [vmem:[%s188 + $0x210] sm:$0xff]
        %v10151 = vsub.f32 %v10143, %v9879
        %v10152 = vsub.f32 %v10144, %v9879
        %v10153 = vsub.f32 %v10145, %v9880
        %v10154 = vsub.f32 %v10146, %v9880
        %v10155 = vsub.f32 %v10147, %v9881
        %v10156 = vsub.f32 %v10148, %v9881
        %v10157 = vsub.f32 %v10149, %v9882
        %v10158 = vsub.f32 %v10150, %v9882
        %v10159 = vmul.f32 %v10151, %v9899
        %v10160 = vmul.f32 %v10152, %v9899
        %v10161 = vmul.f32 %v10153, %v9900
        %v10162 = vmul.f32 %v10154, %v9900
        %v10163 = vmul.f32 %v10155, %v9901
        %v10164 = vmul.f32 %v10156, %v9901
        %v10165 = vmul.f32 %v10157, %v9902
        %v10166 = vmul.f32 %v10158, %v9902
        %v10167 = vmul.f32 %v10159, 0.01
        %v10168 = vmul.f32 %v10160, 0.01
        %v10169 = vmul.f32 %v10161, 0.01
        %v10170 = vmul.f32 %v10162, 0.01
        %v10171 = vmul.f32 %v10163, 0.01
        %v10172 = vmul.f32 %v10164, 0.01
        %v10173 = vmul.f32 %v10165, 0.01
        %v10174 = vmul.f32 %v10166, 0.01
        %v10175 = vmax.f32 %v10159, %v10167
        %v10176 = vmax.f32 %v10160, %v10168
        %v10177 = vmax.f32 %v10161, %v10169
        %v10178 = vmax.f32 %v10162, %v10170
        %v10179 = vmax.f32 %v10163, %v10171
        %v10180 = vmax.f32 %v10164, %v10172
        %v10181 = vmax.f32 %v10165, %v10173
        %v10182 = vmax.f32 %v10166, %v10174
        %10183 = vst [vmem:[%s188 + $0x58] sm:$0xff] %v10175
        %10184 = vst [vmem:[%s188 + $0x60] sm:$0xff] %v10176
        %10185 = vst [vmem:[%s188 + $0xe8] sm:$0xff] %v10177
        %10186 = vst [vmem:[%s188 + $0xf0] sm:$0xff] %v10178
        %10187 = vst [vmem:[%s188 + $0x178] sm:$0xff] %v10179
        %10188 = vst [vmem:[%s188 + $0x180] sm:$0xff] %v10180
        %10189 = vst [vmem:[%s188 + $0x208] sm:$0xff] %v10181
        %10190 = vst [vmem:[%s188 + $0x210] sm:$0xff] %v10182
        %v10191 = vld [vmem:[%s188 + $0x68] sm:$0xff]
        %v10192 = vld [vmem:[%s188 + $0x70] sm:$0xff]
        %v10193 = vld [vmem:[%s188 + $0xf8] sm:$0xff]
        %v10194 = vld [vmem:[%s188 + $0x100] sm:$0xff]
        %v10195 = vld [vmem:[%s188 + $0x188] sm:$0xff]
        %v10196 = vld [vmem:[%s188 + $0x190] sm:$0xff]
        %v10197 = vld [vmem:[%s188 + $0x218] sm:$0xff]
        %v10198 = vld [vmem:[%s188 + $0x220] sm:$0xff]
        %v10199 = vsub.f32 %v10191, %v9879
        %v10200 = vsub.f32 %v10192, %v9879
        %v10201 = vsub.f32 %v10193, %v9880
        %v10202 = vsub.f32 %v10194, %v9880
        %v10203 = vsub.f32 %v10195, %v9881
        %v10204 = vsub.f32 %v10196, %v9881
        %v10205 = vsub.f32 %v10197, %v9882
        %v10206 = vsub.f32 %v10198, %v9882
        %v10207 = vmul.f32 %v10199, %v9899
        %v10208 = vmul.f32 %v10200, %v9899
        %v10209 = vmul.f32 %v10201, %v9900
        %v10210 = vmul.f32 %v10202, %v9900
        %v10211 = vmul.f32 %v10203, %v9901
        %v10212 = vmul.f32 %v10204, %v9901
        %v10213 = vmul.f32 %v10205, %v9902
        %v10214 = vmul.f32 %v10206, %v9902
        %v10215 = vmul.f32 %v10207, 0.01
        %v10216 = vmul.f32 %v10208, 0.01
        %v10217 = vmul.f32 %v10209, 0.01
        %v10218 = vmul.f32 %v10210, 0.01
        %v10219 = vmul.f32 %v10211, 0.01
        %v10220 = vmul.f32 %v10212, 0.01
        %v10221 = vmul.f32 %v10213, 0.01
        %v10222 = vmul.f32 %v10214, 0.01
        %v10223 = vmax.f32 %v10207, %v10215
        %v10224 = vmax.f32 %v10208, %v10216
        %v10225 = vmax.f32 %v10209, %v10217
        %v10226 = vmax.f32 %v10210, %v10218
        %v10227 = vmax.f32 %v10211, %v10219
        %v10228 = vmax.f32 %v10212, %v10220
        %v10229 = vmax.f32 %v10213, %v10221
        %v10230 = vmax.f32 %v10214, %v10222
        %10231 = vst [vmem:[%s188 + $0x68] sm:$0xff] %v10223
        %10232 = vst [vmem:[%s188 + $0x70] sm:$0xff] %v10224
        %10233 = vst [vmem:[%s188 + $0xf8] sm:$0xff] %v10225
        %10234 = vst [vmem:[%s188 + $0x100] sm:$0xff] %v10226
        %10235 = vst [vmem:[%s188 + $0x188] sm:$0xff] %v10227
        %10236 = vst [vmem:[%s188 + $0x190] sm:$0xff] %v10228
        %10237 = vst [vmem:[%s188 + $0x218] sm:$0xff] %v10229
        %10238 = vst [vmem:[%s188 + $0x220] sm:$0xff] %v10230
        %v10239 = vld [vmem:[%s188 + $0x78] sm:$0xff]
        %v10240 = vld [vmem:[%s188 + $0x80] sm:$0xff]
        %v10241 = vld [vmem:[%s188 + $0x108] sm:$0xff]
        %v10242 = vld [vmem:[%s188 + $0x110] sm:$0xff]
        %v10243 = vld [vmem:[%s188 + $0x198] sm:$0xff]
        %v10244 = vld [vmem:[%s188 + $0x1a0] sm:$0xff]
        %v10245 = vld [vmem:[%s188 + $0x228] sm:$0xff]
        %v10246 = vld [vmem:[%s188 + $0x230] sm:$0xff]
        %v10247 = vsub.f32 %v10239, %v9879
        %v10248 = vsub.f32 %v10240, %v9879
        %v10249 = vsub.f32 %v10241, %v9880
        %v10250 = vsub.f32 %v10242, %v9880
        %v10251 = vsub.f32 %v10243, %v9881
        %v10252 = vsub.f32 %v10244, %v9881
        %v10253 = vsub.f32 %v10245, %v9882
        %v10254 = vsub.f32 %v10246, %v9882
        %v10255 = vmul.f32 %v10247, %v9899
        %v10256 = vmul.f32 %v10248, %v9899
        %v10257 = vmul.f32 %v10249, %v9900
        %v10258 = vmul.f32 %v10250, %v9900
        %v10259 = vmul.f32 %v10251, %v9901
        %v10260 = vmul.f32 %v10252, %v9901
        %v10261 = vmul.f32 %v10253, %v9902
        %v10262 = vmul.f32 %v10254, %v9902
        %v10263 = vmul.f32 %v10255, 0.01
        %v10264 = vmul.f32 %v10256, 0.01
        %v10265 = vmul.f32 %v10257, 0.01
        %v10266 = vmul.f32 %v10258, 0.01
        %v10267 = vmul.f32 %v10259, 0.01
        %v10268 = vmul.f32 %v10260, 0.01
        %v10269 = vmul.f32 %v10261, 0.01
        %v10270 = vmul.f32 %v10262, 0.01
        %v10271 = vmax.f32 %v10255, %v10263
        %v10272 = vmax.f32 %v10256, %v10264
        %v10273 = vmax.f32 %v10257, %v10265
        %v10274 = vmax.f32 %v10258, %v10266
        %v10275 = vmax.f32 %v10259, %v10267
        %v10276 = vmax.f32 %v10260, %v10268
        %v10277 = vmax.f32 %v10261, %v10269
        %v10278 = vmax.f32 %v10262, %v10270
        %v10279 = vld [vmem:[%s9692] ss:$4 sm:$0x3]
        %v10281 = vlaneseq
        %v10282 = vshrl.u32 %v10281, 7
        %v10283 = vsub.s32 0, %v10282
        %v10284 = vrot.slane %v10279, %v10283
        %v10285 = vlaneseq
        %v10286 = vshrl.u32 %v10285, 7
        %v10287 = vsub.s32 1, %v10286
        %v10288 = vrot.slane %v10279, %v10287
        %v10291 = vmul.f32 %v10271, %v10284
        %v10292 = vmul.f32 %v10272, %v10288
        %v10293 = vmul.f32 %v10273, %v10284
        %v10294 = vmul.f32 %v10274, %v10288
        %v10295 = vmul.f32 %v10275, %v10284
        %v10296 = vmul.f32 %v10276, %v10288
        %v10297 = vmul.f32 %v10277, %v10284
        %v10298 = vmul.f32 %v10278, %v10288
        %10299 = vst [vmem:[%s188 + $0x78] sm:$0xff] %v10291
        %10300 = vst [vmem:[%s188 + $0x80] sm:$0xff] %v10292
        %10301 = vst [vmem:[%s188 + $0x108] sm:$0xff] %v10293
        %10302 = vst [vmem:[%s188 + $0x110] sm:$0xff] %v10294
        %10303 = vst [vmem:[%s188 + $0x198] sm:$0xff] %v10295
        %10304 = vst [vmem:[%s188 + $0x1a0] sm:$0xff] %v10296
        %10305 = vst [vmem:[%s188 + $0x228] sm:$0xff] %v10297
        %10306 = vst [vmem:[%s188 + $0x230] sm:$0xff] %v10298
        %s10307 = sand.u32 %s115, 1
        %s10308 = scalar_lea.sflag [#allocation3], %s10307
        %s10309 = sand.u32 %s115, 1
        %s10310 = smul.addr %s10309, 576
        %s10311 = scalar_lea.vmem [#allocation2], %s10310
        // Predicated region
        $region37: #{tpu_custom_call.1} parent=35 // pred_check
          %p10312 = pneg %p125
        $region38: #{tpu_custom_call.1} parent=35 // pred_check_branch
          %10314 = sbr.rel (%p10312) target = $region40
        $region39: #{tpu_custom_call.1} parent=35 // pred_region
          %s10316 = ssub.s32 9216, 9216
          %10317 = vsyncadd %s10308, %s10316
          %s10318 = smul.addr %s18, 72
          %s10319 = smul.addr %s10318, 128
          %s10320 = scalar_lea.hbm %s4, %s10319
          %s10321 = sshll.u32 %s10311, 4
          %s10322 = int_to_ptr.vmem [resolvable:$true] %s10321
          %10327 = dma.vmem_to_hbm [thread:$0]  %s10322, 9216, %s10320, %s10308, 2304, 2304, 144
        $region40: #{tpu_custom_call.1} parent=35 // pred_fallthru
          _
      $region36: #{tpu_custom_call.1} parent=5 // pred_fallthru
        _
      %p10328 = scmp.le.s32.totalorder 2, %s13
      // Predicated region
      $region41: #{tpu_custom_call.1} parent=5 // pred_check
        %p10329 = pneg %p10328
      $region42: #{tpu_custom_call.1} parent=5 // pred_check_branch
        %10331 = sbr.rel (%p10329) target = $region44
      $region43: #{tpu_custom_call.1} parent=5 // pred_region
        %s10332 = ssub.s32 %s13, 2
        // Predicated region
        $region45: #{tpu_custom_call.1} parent=43 // pred_check
          %p10333 = pneg %p131
        $region46: #{tpu_custom_call.1} parent=43 // pred_check_branch
          %10335 = sbr.rel (%p10333) target = $region48
        $region47: #{tpu_custom_call.1} parent=43 // pred_region
          %s10336 = sand.u32 %s116, 1
          %s10337 = scalar_lea.sflag [#allocation3], %s10336
          %s10338 = sand.u32 %s116, 1
          %s10339 = smul.addr %s10338, 576
          %s10340 = scalar_lea.vmem [#allocation2], %s10339
          %10341 = dma.done %s10337, 9216
        $region48: #{tpu_custom_call.1} parent=43 // pred_fallthru
          _
      $region44: #{tpu_custom_call.1} parent=5 // pred_fallthru
        _
    $region6: #{tpu_custom_call.1} parent=1 // loop_footer
      %s17 = sadd.s32 1, %s13
    $region7: #{tpu_custom_call.1} parent=1 // loop_footer_branch
      %12 = sbr.rel target = $region3
    $region8: #{tpu_custom_call.1} parent=1 // loop_exit
      _
    %10342 = vsyncpa [#allocation3], 1
    %s10343 = scalar_lea.sflag [#allocation3], 1
    %10344 = vsyncpa %s10343, 1

</llo_original>
